<compile_context>
chip_gen: v7x
topology: tpu7x:2x2x1
jax: 0.10.0
libtpu: 0.0.40
codegen_flags: <defaults>
</compile_context>

<pallas_src>
import math

import numpy as np

import jax
import jax.numpy as jnp
from jax.experimental import pallas as pl
from jax.experimental.pallas import tpu as pltpu

# ----------------------------- configuration --------------------------------
B = 2            # batch
C = 256          # stand-in for the 2048 backbone channels (kept small)
F = 128          # stand-in for REFC feat_out=256
K = 8            # num_classes
H = W = 18       # spatial size fixed by the pooling structure:
                 #   MaxPool(18,18)->1x1, MaxPool(9,9)->2x2, MaxPool(6,6)->3x3
HW = H * W
NUM_HEADS = 14
WA = 88          # branch-2 window rows after dup-padding (81 -> 88, 8-aligned)
WB = 40          # branch-3 window rows after dup-padding (36 -> 40, 8-aligned)
RA = 4 * WA      # 352 rows / batch in branch-1/2 ordering
RB = 9 * WB      # 360 rows / batch in branch-3 ordering
KP = 128         # fc output lanes (14*K = 112 padded to 128 -> lane-dense store)
EPS = 1e-5       # BatchNorm1d eps


def _build_window_indices():
    """Window-major pixel orderings (with duplicate-pixel padding) so every
    max-pool window is a contiguous 8-aligned row range inside the kernel."""
    idx_a = []
    # branch-2 9x9 windows, row-major (matches pool2.view(...).chunk(4, dim=2));
    # the same rows also serve branch-1's global 18x18 max (order-invariant).
    for oi in range(2):
        for oj in range(2):
            win = [(9 * oi + r) * W + (9 * oj + c) for r in range(9) for c in range(9)]
            idx_a.extend(win + win[:WA - len(win)])        # 81 -> 88 (dup pixels)
    idx_b = []
    # branch-3 6x6 windows, row-major (matches pool3.view(...).chunk(9, dim=2)).
    for oi in range(3):
        for oj in range(3):
            win = [(6 * oi + r) * W + (6 * oj + c) for r in range(6) for c in range(6)]
            idx_b.extend(win + win[:WB - len(win)])        # 36 -> 40 (dup pixels)
    return np.asarray(idx_a, np.int32), np.asarray(idx_b, np.int32)


IDX_A, IDX_B = _build_window_indices()


# ------------------------------- fused kernel --------------------------------
def spark1_kernel(xa_ref, xb_ref, wb12_ref, w3_ref, wc_ref, gamma_ref, beta_ref,
                  wfbd_ref, red_ref, predict_ref, fc_ref, ya_s, yb_s):
    """Fused Spark1 head.

    xa_ref     : (B*RA, C)      bf16  pixels in branch-2 window order (dup-padded)
    xb_ref     : (B*RB, C)      bf16  pixels in branch-3 window order (dup-padded)
    wb12_ref   : (C, 2C)        bf16  branch1|branch2 1x1-conv weights (fused)
    w3_ref     : (C, C)         bf16  branch3 1x1-conv weight
    wc_ref     : (14, C, F)     bf16  REFC conv1 weights
    gamma_ref  : (1, 14*F)      f32   BatchNorm1d weight (lane-dense)
    beta_ref   : (1, 14*F)      f32   BatchNorm1d bias   (lane-dense)
    wfbd_ref   : (14*F, 128)    bf16  block-diagonal fc weight (zero-padded cols)
    red_ref    : (B, 14*F)      f32   conv1 outputs  (ft1..ft14, lane-dense)
    predict_ref: (B, 14*F)      f32   cat([bn1..bn14], dim=1)  == `predict`
    fc_ref     : (B, 128)       f32   all fc outputs, lane-dense (cols 112.. are 0)
    ya_s       : (B*RA, 2C)     f32   VMEM scratch: branch1|branch2 conv output
    yb_s       : (B*RB, C)      f32   VMEM scratch: branch3 conv output
    """
    # ---- branch 1x1 convs: two batch-fused MXU matmuls (bf16 in, f32 acc) ----
    ya_s[...] = jnp.dot(xa_ref[...], wb12_ref[...],
                        preferred_element_type=jnp.float32)      # (B*RA, 2C)
    yb_s[...] = jnp.dot(xb_ref[...], w3_ref[...],
                        preferred_element_type=jnp.float32)      # (B*RB, C)

    # ---- region max-pools: one contiguous 8-aligned slice + reduce per
    #      (head, batch); dup-padded rows are copies of in-window pixels so
    #      they never change the max. -----------------------------------------
    def pooled_feature(i):
        rows = []
        for b in range(B):
            if i == 0:                          # branch1: global 18x18 max
                blk = ya_s[b * RA:(b + 1) * RA, 0:C]
            elif i <= 4:                        # branch2: 9x9 windows (2x2 grid)
                r0 = b * RA + (i - 1) * WA
                blk = ya_s[r0:r0 + WA, C:2 * C]
            else:                               # branch3: 6x6 windows (3x3 grid)
                r0 = b * RB + (i - 5) * WB
                blk = yb_s[r0:r0 + WB, :]
            rows.append(jnp.max(blk, axis=0, keepdims=True))     # (1, C)
        return jnp.concatenate(rows, axis=0)                     # (B, C)

    # ---- REFC conv1 per head; results land lane-dense in red_ref (B, 14*F) --
    for i in range(NUM_HEADS):
        f_i = pooled_feature(i).astype(jnp.bfloat16)
        red_ref[:, i * F:(i + 1) * F] = jnp.dot(
            f_i, wc_ref[i], preferred_element_type=jnp.float32)  # (B, F)

    # ---- BatchNorm1d (training mode, batch stats) hoisted into ONE lane-dense
    #      pass over the whole (B, 14*F) slab (columns are independent). ------
    red = red_ref[...]
    mean = jnp.mean(red, axis=0, keepdims=True)                  # (1, 14F)
    diff = red - mean
    var = jnp.mean(diff * diff, axis=0, keepdims=True)           # biased var
    bn = diff * jax.lax.rsqrt(var + EPS) * gamma_ref[...] + beta_ref[...]
    predict_ref[...] = bn                                        # one store

    # ---- all 14 fc heads as ONE block-diagonal matmul, lane-dense output ----
    fc_ref[...] = jnp.dot(bn.astype(jnp.bfloat16), wfbd_ref[...],
                          preferred_element_type=jnp.float32)    # (B, 128)


# ------------------------------ wrapper ---------------------------------------
def spark1_forward(feat_nchw, w_branch, wc, gamma, beta, wf):
    """feat_nchw: (B, C, 18, 18) backbone feature map (NCHW, like PyTorch)."""
    bsz, ch, hh, ww = feat_nchw.shape
    assert (bsz, ch, hh, ww) == (B, C, H, W)

    # NCHW -> NHWC -> (B, H*W, C)
    x_flat = jnp.transpose(feat_nchw, (0, 2, 3, 1)).reshape(bsz, hh * ww, ch)

    # Window-major / dup-padded pixel orderings (max-invariant), flattened over
    # batch so the branch matmuls are batch-fused.  Cast to bf16 for the MXU.
    xa = jnp.take(x_flat, jnp.asarray(IDX_A), axis=1).reshape(bsz * RA, ch)
    xb = jnp.take(x_flat, jnp.asarray(IDX_B), axis=1).reshape(bsz * RB, ch)
    xa = xa.astype(jnp.bfloat16)
    xb = xb.astype(jnp.bfloat16)

    # branch1/branch2 weights fused along the output-channel axis.
    wb12 = jnp.concatenate([w_branch[0], w_branch[1]], axis=1).astype(jnp.bfloat16)
    w3 = w_branch[2].astype(jnp.bfloat16)
    wc_b = wc.astype(jnp.bfloat16)

    # BN affine params as one lane-dense (1, 14F) row each.
    gamma_r = gamma.reshape(1, NUM_HEADS * F)
    beta_r = beta.reshape(1, NUM_HEADS * F)

    # Block-diagonal fc weight so all heads' classifiers are a single matmul
    # with a lane-dense (B, 128) output (14*K = 112 real cols, rest zero).
    wf_bd = jnp.zeros((NUM_HEADS * F, KP), jnp.float32)
    for i in range(NUM_HEADS):
        wf_bd = wf_bd.at[i * F:(i + 1) * F, i * K:(i + 1) * K].set(wf[i])
    wf_bd = wf_bd.astype(jnp.bfloat16)

    red, predict, fc_out = pl.pallas_call(
        spark1_kernel,
        out_shape=(
            jax.ShapeDtypeStruct((bsz, NUM_HEADS * F), jnp.float32),   # reduce
            jax.ShapeDtypeStruct((bsz, NUM_HEADS * F), jnp.float32),   # predict
            jax.ShapeDtypeStruct((bsz, KP), jnp.float32),              # fc (packed)
        ),
        grid=(1,),
        in_specs=[
            pl.BlockSpec((bsz * RA, ch), lambda i: (0, 0)),            # xa
            pl.BlockSpec((bsz * RB, ch), lambda i: (0, 0)),            # xb
            pl.BlockSpec((ch, 2 * ch), lambda i: (0, 0)),              # wb12
            pl.BlockSpec((ch, ch), lambda i: (0, 0)),                  # w3
            pl.BlockSpec((NUM_HEADS, ch, F), lambda i: (0, 0, 0)),     # wc
            pl.BlockSpec((1, NUM_HEADS * F), lambda i: (0, 0)),        # gamma
            pl.BlockSpec((1, NUM_HEADS * F), lambda i: (0, 0)),        # beta
            pl.BlockSpec((NUM_HEADS * F, KP), lambda i: (0, 0)),       # wf blockdiag
        ],
        out_specs=(
            pl.BlockSpec((bsz, NUM_HEADS * F), lambda i: (0, 0)),
            pl.BlockSpec((bsz, NUM_HEADS * F), lambda i: (0, 0)),
            pl.BlockSpec((bsz, KP), lambda i: (0, 0)),
        ),
        scratch_shapes=[
            pltpu.VMEM((bsz * RA, 2 * ch), jnp.float32),   # branch1|2 conv output
            pltpu.VMEM((bsz * RB, ch), jnp.float32),       # branch3   conv output
        ],
        compiler_params=pltpu.CompilerParams(
            dimension_semantics=("arbitrary",)),
    )(xa, xb, wb12, w3, wc_b, gamma_r, beta_r, wf_bd)

    # ft_i = conv1(feat_i).view(B, -1); fc_i = per-head classifier output.
    fts = tuple(red[:, i * F:(i + 1) * F] for i in range(NUM_HEADS))
    fcs = tuple(fc_out[:, i * K:(i + 1) * K] for i in range(NUM_HEADS))
    return fts, fcs, predict


# --------------------------------- main ---------------------------------------
if __name__ == "__main__":
    key = jax.random.PRNGKey(0)
    k_feat, k_br, k_wc, k_g, k_wf = jax.random.split(key, 5)

    # backbone feature map stand-in (TODO(synk): real ResNet-50 backbone omitted)
    feat = jax.random.normal(k_feat, (B, C, H, W), dtype=jnp.float32)

    # branch convs: (Cin, Cout) layout per branch (already transposed for x @ W)
    w_branch = jax.random.normal(k_br, (3, C, C), jnp.float32) / math.sqrt(C)
    # REFC conv1 weights (kaiming fan_in), layout (Cin, Fout)
    wc = jax.random.normal(k_wc, (NUM_HEADS, C, F), jnp.float32) * math.sqrt(2.0 / C)
    # BatchNorm1d affine params: weight ~ N(1, 0.02), bias = 0
    gamma = 1.0 + 0.02 * jax.random.normal(k_g, (NUM_HEADS, F), jnp.float32)
    beta = jnp.zeros((NUM_HEADS, F), jnp.float32)
    # fc weights (kaiming fan_out), layout (F, K)
    wf = jax.random.normal(k_wf, (NUM_HEADS, F, K), jnp.float32) * math.sqrt(2.0 / K)

    fwd = jax.jit(spark1_forward)
    fts, fcs, predict = fwd(feat, w_branch, wc, gamma, beta, wf)
    jax.block_until_ready(predict)

    assert len(fts) == NUM_HEADS and len(fcs) == NUM_HEADS
    assert all(t.shape == (B, F) for t in fts)
    assert all(t.shape == (B, K) for t in fcs)
    assert predict.shape == (B, NUM_HEADS * F)
    assert bool(jnp.isfinite(predict).all())
    assert bool(jnp.isfinite(jnp.stack(fcs)).all())
    assert bool(jnp.isfinite(jnp.stack(fts)).all())

    print("KERNEL_OK")
</pallas_src>

<mosaic_0001>
module attributes {stable_mosaic.version = 11 : i64} {
  func.func @spark1_kernel(%arg0: i32, %arg1: memref<704x256xbf16, #tpu.memory_space<vmem>>, %arg2: memref<720x256xbf16, #tpu.memory_space<vmem>>, %arg3: memref<256x512xbf16, #tpu.memory_space<vmem>>, %arg4: memref<256x256xbf16, #tpu.memory_space<vmem>>, %arg5: memref<14x256x128xbf16, #tpu.memory_space<vmem>>, %arg6: memref<1x1792xf32, #tpu.memory_space<vmem>>, %arg7: memref<1x1792xf32, #tpu.memory_space<vmem>>, %arg8: memref<1792x128xbf16, #tpu.memory_space<vmem>>, %arg9: memref<2x1792xf32, #tpu.memory_space<vmem>>, %arg10: memref<2x1792xf32, #tpu.memory_space<vmem>>, %arg11: memref<2x128xf32, #tpu.memory_space<vmem>>, %arg12: memref<704x512xf32, #tpu.memory_space<vmem>>, %arg13: memref<720x256xf32, #tpu.memory_space<vmem>>) attributes {dimension_semantics = [#tpu.dimension_semantics<arbitrary>], iteration_bounds = array<i64: 1>, scalar_prefetch = 0 : i64, scratch_operands = 2 : i64, tpu.core_type = #tpu.core_type<tc>, window_params = [{pipeline_mode = #tpu.pipeline_mode<synchronous>, transform_indices = @transform_0, window_bounds = array<i64: 704, 256>}, {pipeline_mode = #tpu.pipeline_mode<synchronous>, transform_indices = @transform_1, window_bounds = array<i64: 720, 256>}, {pipeline_mode = #tpu.pipeline_mode<synchronous>, transform_indices = @transform_2, window_bounds = array<i64: 256, 512>}, {pipeline_mode = #tpu.pipeline_mode<synchronous>, transform_indices = @transform_3, window_bounds = array<i64: 256, 256>}, {pipeline_mode = #tpu.pipeline_mode<synchronous>, transform_indices = @transform_4, window_bounds = array<i64: 14, 256, 128>}, {pipeline_mode = #tpu.pipeline_mode<synchronous>, transform_indices = @transform_5, window_bounds = array<i64: 1, 1792>}, {pipeline_mode = #tpu.pipeline_mode<synchronous>, transform_indices = @transform_6, window_bounds = array<i64: 1, 1792>}, {pipeline_mode = #tpu.pipeline_mode<synchronous>, transform_indices = @transform_7, window_bounds = array<i64: 1792, 128>}, {pipeline_mode = #tpu.pipeline_mode<synchronous>, transform_indices = @transform_8, window_bounds = array<i64: 2, 1792>}, {pipeline_mode = #tpu.pipeline_mode<synchronous>, transform_indices = @transform_9, window_bounds = array<i64: 2, 1792>}, {pipeline_mode = #tpu.pipeline_mode<synchronous>, transform_indices = @transform_10, window_bounds = array<i64: 2, 128>}]} {
    %c0 = arith.constant 0 : index
    %c0_0 = arith.constant 0 : index
    %0 = vector.load %arg1[%c0, %c0_0] : memref<704x256xbf16, #tpu.memory_space<vmem>>, vector<704x256xbf16>
    %c0_1 = arith.constant 0 : index
    %c0_2 = arith.constant 0 : index
    %1 = vector.load %arg3[%c0_1, %c0_2] : memref<256x512xbf16, #tpu.memory_space<vmem>>, vector<256x512xbf16>
    %cst = arith.constant dense<0.000000e+00> : vector<704x512xf32>
    %2 = tpu.matmul %0, %1, %cst {dimension_numbers = #tpu.dot_dimension_numbers<[1], [0], [0], [1], [0, 0, 1, 1], [], []>} : vector<704x256xbf16>, vector<256x512xbf16>, vector<704x512xf32> -> vector<704x512xf32>
    %c0_3 = arith.constant 0 : index
    %c0_4 = arith.constant 0 : index
    %3 = vector.load %arg12[%c0_3, %c0_4] : memref<704x512xf32, #tpu.memory_space<vmem>>, vector<704x512xf32>
    tpu.vector_store %arg12[%c0_3, %c0_4], %2 {strides = array<i32>} : memref<704x512xf32, #tpu.memory_space<vmem>>, vector<704x512xf32>,
    %c0_5 = arith.constant 0 : index
    %c0_6 = arith.constant 0 : index
    %4 = vector.load %arg2[%c0_5, %c0_6] : memref<720x256xbf16, #tpu.memory_space<vmem>>, vector<720x256xbf16>
    %c0_7 = arith.constant 0 : index
    %c0_8 = arith.constant 0 : index
    %5 = vector.load %arg4[%c0_7, %c0_8] : memref<256x256xbf16, #tpu.memory_space<vmem>>, vector<256x256xbf16>
    %cst_9 = arith.constant dense<0.000000e+00> : vector<720x256xf32>
    %6 = tpu.matmul %4, %5, %cst_9 {dimension_numbers = #tpu.dot_dimension_numbers<[1], [0], [0], [1], [0, 0, 1, 1], [], []>} : vector<720x256xbf16>, vector<256x256xbf16>, vector<720x256xf32> -> vector<720x256xf32>
    %c0_10 = arith.constant 0 : index
    %c0_11 = arith.constant 0 : index
    %7 = vector.load %arg13[%c0_10, %c0_11] : memref<720x256xf32, #tpu.memory_space<vmem>>, vector<720x256xf32>
    tpu.vector_store %arg13[%c0_10, %c0_11], %6 {strides = array<i32>} : memref<720x256xf32, #tpu.memory_space<vmem>>, vector<720x256xf32>,
    %c0_12 = arith.constant 0 : index
    %c0_13 = arith.constant 0 : index
    %8 = vector.load %arg12[%c0_12, %c0_13] : memref<704x512xf32, #tpu.memory_space<vmem>>, vector<352x256xf32>
    %cst_14 = arith.constant dense<0xFF800000> : vector<256xf32>
    %9 = vector.multi_reduction <maximumf>, %8, %cst_14 [0] : vector<352x256xf32> to vector<256xf32>
    %10 = vector.shape_cast %9 : vector<256xf32> to vector<1x256xf32>
    %c352 = arith.constant 352 : index
    %c0_15 = arith.constant 0 : index
    %11 = vector.load %arg12[%c352, %c0_15] : memref<704x512xf32, #tpu.memory_space<vmem>>, vector<352x256xf32>
    %cst_16 = arith.constant dense<0xFF800000> : vector<256xf32>
    %12 = vector.multi_reduction <maximumf>, %11, %cst_16 [0] : vector<352x256xf32> to vector<256xf32>
    %13 = vector.shape_cast %12 : vector<256xf32> to vector<1x256xf32>
    %14 = tpu.concatenate %10, %13 in 0 : vector<1x256xf32>, vector<1x256xf32> -> vector<2x256xf32>
    %15 = arith.truncf %14 : vector<2x256xf32> to vector<2x256xbf16>
    %c0_17 = arith.constant 0 : index
    %c0_18 = arith.constant 0 : index
    %c0_19 = arith.constant 0 : index
    %16 = vector.load %arg5[%c0_17, %c0_18, %c0_19] : memref<14x256x128xbf16, #tpu.memory_space<vmem>>, vector<1x256x128xbf16>
    %17 = vector.shape_cast %16 : vector<1x256x128xbf16> to vector<256x128xbf16>
    %cst_20 = arith.constant dense<0.000000e+00> : vector<2x128xf32>
    %18 = tpu.matmul %15, %17, %cst_20 {dimension_numbers = #tpu.dot_dimension_numbers<[1], [0], [0], [1], [0, 0, 1, 1], [], []>} : vector<2x256xbf16>, vector<256x128xbf16>, vector<2x128xf32> -> vector<2x128xf32>
    %c0_21 = arith.constant 0 : index
    %c0_22 = arith.constant 0 : index
    %19 = vector.load %arg9[%c0_21, %c0_22] : memref<2x1792xf32, #tpu.memory_space<vmem>>, vector<2x128xf32>
    tpu.vector_store %arg9[%c0_21, %c0_22], %18 {strides = array<i32>} : memref<2x1792xf32, #tpu.memory_space<vmem>>, vector<2x128xf32>,
    %c0_23 = arith.constant 0 : index
    %c256 = arith.constant 256 : index
    %20 = vector.load %arg12[%c0_23, %c256] : memref<704x512xf32, #tpu.memory_space<vmem>>, vector<88x256xf32>
    %cst_24 = arith.constant dense<0xFF800000> : vector<256xf32>
    %21 = vector.multi_reduction <maximumf>, %20, %cst_24 [0] : vector<88x256xf32> to vector<256xf32>
    %22 = vector.shape_cast %21 : vector<256xf32> to vector<1x256xf32>
    %c352_25 = arith.constant 352 : index
    %c256_26 = arith.constant 256 : index
    %23 = vector.load %arg12[%c352_25, %c256_26] : memref<704x512xf32, #tpu.memory_space<vmem>>, vector<88x256xf32>
    %cst_27 = arith.constant dense<0xFF800000> : vector<256xf32>
    %24 = vector.multi_reduction <maximumf>, %23, %cst_27 [0] : vector<88x256xf32> to vector<256xf32>
    %25 = vector.shape_cast %24 : vector<256xf32> to vector<1x256xf32>
    %26 = tpu.concatenate %22, %25 in 0 : vector<1x256xf32>, vector<1x256xf32> -> vector<2x256xf32>
    %27 = arith.truncf %26 : vector<2x256xf32> to vector<2x256xbf16>
    %c1 = arith.constant 1 : index
    %c0_28 = arith.constant 0 : index
    %c0_29 = arith.constant 0 : index
    %28 = vector.load %arg5[%c1, %c0_28, %c0_29] : memref<14x256x128xbf16, #tpu.memory_space<vmem>>, vector<1x256x128xbf16>
    %29 = vector.shape_cast %28 : vector<1x256x128xbf16> to vector<256x128xbf16>
    %cst_30 = arith.constant dense<0.000000e+00> : vector<2x128xf32>
    %30 = tpu.matmul %27, %29, %cst_30 {dimension_numbers = #tpu.dot_dimension_numbers<[1], [0], [0], [1], [0, 0, 1, 1], [], []>} : vector<2x256xbf16>, vector<256x128xbf16>, vector<2x128xf32> -> vector<2x128xf32>
    %c0_31 = arith.constant 0 : index
    %c128 = arith.constant 128 : index
    %31 = vector.load %arg9[%c0_31, %c128] : memref<2x1792xf32, #tpu.memory_space<vmem>>, vector<2x128xf32>
    tpu.vector_store %arg9[%c0_31, %c128], %30 {strides = array<i32>} : memref<2x1792xf32, #tpu.memory_space<vmem>>, vector<2x128xf32>,
    %c88 = arith.constant 88 : index
    %c256_32 = arith.constant 256 : index
    %32 = vector.load %arg12[%c88, %c256_32] : memref<704x512xf32, #tpu.memory_space<vmem>>, vector<88x256xf32>
    %cst_33 = arith.constant dense<0xFF800000> : vector<256xf32>
    %33 = vector.multi_reduction <maximumf>, %32, %cst_33 [0] : vector<88x256xf32> to vector<256xf32>
    %34 = vector.shape_cast %33 : vector<256xf32> to vector<1x256xf32>
    %c440 = arith.constant 440 : index
    %c256_34 = arith.constant 256 : index
    %35 = vector.load %arg12[%c440, %c256_34] : memref<704x512xf32, #tpu.memory_space<vmem>>, vector<88x256xf32>
    %cst_35 = arith.constant dense<0xFF800000> : vector<256xf32>
    %36 = vector.multi_reduction <maximumf>, %35, %cst_35 [0] : vector<88x256xf32> to vector<256xf32>
    %37 = vector.shape_cast %36 : vector<256xf32> to vector<1x256xf32>
    %38 = tpu.concatenate %34, %37 in 0 : vector<1x256xf32>, vector<1x256xf32> -> vector<2x256xf32>
    %39 = arith.truncf %38 : vector<2x256xf32> to vector<2x256xbf16>
    %c2 = arith.constant 2 : index
    %c0_36 = arith.constant 0 : index
    %c0_37 = arith.constant 0 : index
    %40 = vector.load %arg5[%c2, %c0_36, %c0_37] : memref<14x256x128xbf16, #tpu.memory_space<vmem>>, vector<1x256x128xbf16>
    %41 = vector.shape_cast %40 : vector<1x256x128xbf16> to vector<256x128xbf16>
    %cst_38 = arith.constant dense<0.000000e+00> : vector<2x128xf32>
    %42 = tpu.matmul %39, %41, %cst_38 {dimension_numbers = #tpu.dot_dimension_numbers<[1], [0], [0], [1], [0, 0, 1, 1], [], []>} : vector<2x256xbf16>, vector<256x128xbf16>, vector<2x128xf32> -> vector<2x128xf32>
    %c0_39 = arith.constant 0 : index
    %c256_40 = arith.constant 256 : index
    %43 = vector.load %arg9[%c0_39, %c256_40] : memref<2x1792xf32, #tpu.memory_space<vmem>>, vector<2x128xf32>
    tpu.vector_store %arg9[%c0_39, %c256_40], %42 {strides = array<i32>} : memref<2x1792xf32, #tpu.memory_space<vmem>>, vector<2x128xf32>,
    %c176 = arith.constant 176 : index
    %c256_41 = arith.constant 256 : index
    %44 = vector.load %arg12[%c176, %c256_41] : memref<704x512xf32, #tpu.memory_space<vmem>>, vector<88x256xf32>
    %cst_42 = arith.constant dense<0xFF800000> : vector<256xf32>
    %45 = vector.multi_reduction <maximumf>, %44, %cst_42 [0] : vector<88x256xf32> to vector<256xf32>
    %46 = vector.shape_cast %45 : vector<256xf32> to vector<1x256xf32>
    %c528 = arith.constant 528 : index
    %c256_43 = arith.constant 256 : index
    %47 = vector.load %arg12[%c528, %c256_43] : memref<704x512xf32, #tpu.memory_space<vmem>>, vector<88x256xf32>
    %cst_44 = arith.constant dense<0xFF800000> : vector<256xf32>
    %48 = vector.multi_reduction <maximumf>, %47, %cst_44 [0] : vector<88x256xf32> to vector<256xf32>
    %49 = vector.shape_cast %48 : vector<256xf32> to vector<1x256xf32>
    %50 = tpu.concatenate %46, %49 in 0 : vector<1x256xf32>, vector<1x256xf32> -> vector<2x256xf32>
    %51 = arith.truncf %50 : vector<2x256xf32> to vector<2x256xbf16>
    %c3 = arith.constant 3 : index
    %c0_45 = arith.constant 0 : index
    %c0_46 = arith.constant 0 : index
    %52 = vector.load %arg5[%c3, %c0_45, %c0_46] : memref<14x256x128xbf16, #tpu.memory_space<vmem>>, vector<1x256x128xbf16>
    %53 = vector.shape_cast %52 : vector<1x256x128xbf16> to vector<256x128xbf16>
    %cst_47 = arith.constant dense<0.000000e+00> : vector<2x128xf32>
    %54 = tpu.matmul %51, %53, %cst_47 {dimension_numbers = #tpu.dot_dimension_numbers<[1], [0], [0], [1], [0, 0, 1, 1], [], []>} : vector<2x256xbf16>, vector<256x128xbf16>, vector<2x128xf32> -> vector<2x128xf32>
    %c0_48 = arith.constant 0 : index
    %c384 = arith.constant 384 : index
    %55 = vector.load %arg9[%c0_48, %c384] : memref<2x1792xf32, #tpu.memory_space<vmem>>, vector<2x128xf32>
    tpu.vector_store %arg9[%c0_48, %c384], %54 {strides = array<i32>} : memref<2x1792xf32, #tpu.memory_space<vmem>>, vector<2x128xf32>,
    %c264 = arith.constant 264 : index
    %c256_49 = arith.constant 256 : index
    %56 = vector.load %arg12[%c264, %c256_49] : memref<704x512xf32, #tpu.memory_space<vmem>>, vector<88x256xf32>
    %cst_50 = arith.constant dense<0xFF800000> : vector<256xf32>
    %57 = vector.multi_reduction <maximumf>, %56, %cst_50 [0] : vector<88x256xf32> to vector<256xf32>
    %58 = vector.shape_cast %57 : vector<256xf32> to vector<1x256xf32>
    %c616 = arith.constant 616 : index
    %c256_51 = arith.constant 256 : index
    %59 = vector.load %arg12[%c616, %c256_51] : memref<704x512xf32, #tpu.memory_space<vmem>>, vector<88x256xf32>
    %cst_52 = arith.constant dense<0xFF800000> : vector<256xf32>
    %60 = vector.multi_reduction <maximumf>, %59, %cst_52 [0] : vector<88x256xf32> to vector<256xf32>
    %61 = vector.shape_cast %60 : vector<256xf32> to vector<1x256xf32>
    %62 = tpu.concatenate %58, %61 in 0 : vector<1x256xf32>, vector<1x256xf32> -> vector<2x256xf32>
    %63 = arith.truncf %62 : vector<2x256xf32> to vector<2x256xbf16>
    %c4 = arith.constant 4 : index
    %c0_53 = arith.constant 0 : index
    %c0_54 = arith.constant 0 : index
    %64 = vector.load %arg5[%c4, %c0_53, %c0_54] : memref<14x256x128xbf16, #tpu.memory_space<vmem>>, vector<1x256x128xbf16>
    %65 = vector.shape_cast %64 : vector<1x256x128xbf16> to vector<256x128xbf16>
    %cst_55 = arith.constant dense<0.000000e+00> : vector<2x128xf32>
    %66 = tpu.matmul %63, %65, %cst_55 {dimension_numbers = #tpu.dot_dimension_numbers<[1], [0], [0], [1], [0, 0, 1, 1], [], []>} : vector<2x256xbf16>, vector<256x128xbf16>, vector<2x128xf32> -> vector<2x128xf32>
    %c0_56 = arith.constant 0 : index
    %c512 = arith.constant 512 : index
    %67 = vector.load %arg9[%c0_56, %c512] : memref<2x1792xf32, #tpu.memory_space<vmem>>, vector<2x128xf32>
    tpu.vector_store %arg9[%c0_56, %c512], %66 {strides = array<i32>} : memref<2x1792xf32, #tpu.memory_space<vmem>>, vector<2x128xf32>,
    %c0_57 = arith.constant 0 : index
    %c0_58 = arith.constant 0 : index
    %68 = vector.load %arg13[%c0_57, %c0_58] : memref<720x256xf32, #tpu.memory_space<vmem>>, vector<40x256xf32>
    %cst_59 = arith.constant dense<0xFF800000> : vector<256xf32>
    %69 = vector.multi_reduction <maximumf>, %68, %cst_59 [0] : vector<40x256xf32> to vector<256xf32>
    %70 = vector.shape_cast %69 : vector<256xf32> to vector<1x256xf32>
    %c360 = arith.constant 360 : index
    %c0_60 = arith.constant 0 : index
    %71 = vector.load %arg13[%c360, %c0_60] : memref<720x256xf32, #tpu.memory_space<vmem>>, vector<40x256xf32>
    %cst_61 = arith.constant dense<0xFF800000> : vector<256xf32>
    %72 = vector.multi_reduction <maximumf>, %71, %cst_61 [0] : vector<40x256xf32> to vector<256xf32>
    %73 = vector.shape_cast %72 : vector<256xf32> to vector<1x256xf32>
    %74 = tpu.concatenate %70, %73 in 0 : vector<1x256xf32>, vector<1x256xf32> -> vector<2x256xf32>
    %75 = arith.truncf %74 : vector<2x256xf32> to vector<2x256xbf16>
    %c5 = arith.constant 5 : index
    %c0_62 = arith.constant 0 : index
    %c0_63 = arith.constant 0 : index
    %76 = vector.load %arg5[%c5, %c0_62, %c0_63] : memref<14x256x128xbf16, #tpu.memory_space<vmem>>, vector<1x256x128xbf16>
    %77 = vector.shape_cast %76 : vector<1x256x128xbf16> to vector<256x128xbf16>
    %cst_64 = arith.constant dense<0.000000e+00> : vector<2x128xf32>
    %78 = tpu.matmul %75, %77, %cst_64 {dimension_numbers = #tpu.dot_dimension_numbers<[1], [0], [0], [1], [0, 0, 1, 1], [], []>} : vector<2x256xbf16>, vector<256x128xbf16>, vector<2x128xf32> -> vector<2x128xf32>
    %c0_65 = arith.constant 0 : index
    %c640 = arith.constant 640 : index
    %79 = vector.load %arg9[%c0_65, %c640] : memref<2x1792xf32, #tpu.memory_space<vmem>>, vector<2x128xf32>
    tpu.vector_store %arg9[%c0_65, %c640], %78 {strides = array<i32>} : memref<2x1792xf32, #tpu.memory_space<vmem>>, vector<2x128xf32>,
    %c40 = arith.constant 40 : index
    %c0_66 = arith.constant 0 : index
    %80 = vector.load %arg13[%c40, %c0_66] : memref<720x256xf32, #tpu.memory_space<vmem>>, vector<40x256xf32>
    %cst_67 = arith.constant dense<0xFF800000> : vector<256xf32>
    %81 = vector.multi_reduction <maximumf>, %80, %cst_67 [0] : vector<40x256xf32> to vector<256xf32>
    %82 = vector.shape_cast %81 : vector<256xf32> to vector<1x256xf32>
    %c400 = arith.constant 400 : index
    %c0_68 = arith.constant 0 : index
    %83 = vector.load %arg13[%c400, %c0_68] : memref<720x256xf32, #tpu.memory_space<vmem>>, vector<40x256xf32>
    %cst_69 = arith.constant dense<0xFF800000> : vector<256xf32>
    %84 = vector.multi_reduction <maximumf>, %83, %cst_69 [0] : vector<40x256xf32> to vector<256xf32>
    %85 = vector.shape_cast %84 : vector<256xf32> to vector<1x256xf32>
    %86 = tpu.concatenate %82, %85 in 0 : vector<1x256xf32>, vector<1x256xf32> -> vector<2x256xf32>
    %87 = arith.truncf %86 : vector<2x256xf32> to vector<2x256xbf16>
    %c6 = arith.constant 6 : index
    %c0_70 = arith.constant 0 : index
    %c0_71 = arith.constant 0 : index
    %88 = vector.load %arg5[%c6, %c0_70, %c0_71] : memref<14x256x128xbf16, #tpu.memory_space<vmem>>, vector<1x256x128xbf16>
    %89 = vector.shape_cast %88 : vector<1x256x128xbf16> to vector<256x128xbf16>
    %cst_72 = arith.constant dense<0.000000e+00> : vector<2x128xf32>
    %90 = tpu.matmul %87, %89, %cst_72 {dimension_numbers = #tpu.dot_dimension_numbers<[1], [0], [0], [1], [0, 0, 1, 1], [], []>} : vector<2x256xbf16>, vector<256x128xbf16>, vector<2x128xf32> -> vector<2x128xf32>
    %c0_73 = arith.constant 0 : index
    %c768 = arith.constant 768 : index
    %91 = vector.load %arg9[%c0_73, %c768] : memref<2x1792xf32, #tpu.memory_space<vmem>>, vector<2x128xf32>
    tpu.vector_store %arg9[%c0_73, %c768], %90 {strides = array<i32>} : memref<2x1792xf32, #tpu.memory_space<vmem>>, vector<2x128xf32>,
    %c80 = arith.constant 80 : index
    %c0_74 = arith.constant 0 : index
    %92 = vector.load %arg13[%c80, %c0_74] : memref<720x256xf32, #tpu.memory_space<vmem>>, vector<40x256xf32>
    %cst_75 = arith.constant dense<0xFF800000> : vector<256xf32>
    %93 = vector.multi_reduction <maximumf>, %92, %cst_75 [0] : vector<40x256xf32> to vector<256xf32>
    %94 = vector.shape_cast %93 : vector<256xf32> to vector<1x256xf32>
    %c440_76 = arith.constant 440 : index
    %c0_77 = arith.constant 0 : index
    %95 = vector.load %arg13[%c440_76, %c0_77] : memref<720x256xf32, #tpu.memory_space<vmem>>, vector<40x256xf32>
    %cst_78 = arith.constant dense<0xFF800000> : vector<256xf32>
    %96 = vector.multi_reduction <maximumf>, %95, %cst_78 [0] : vector<40x256xf32> to vector<256xf32>
    %97 = vector.shape_cast %96 : vector<256xf32> to vector<1x256xf32>
    %98 = tpu.concatenate %94, %97 in 0 : vector<1x256xf32>, vector<1x256xf32> -> vector<2x256xf32>
    %99 = arith.truncf %98 : vector<2x256xf32> to vector<2x256xbf16>
    %c7 = arith.constant 7 : index
    %c0_79 = arith.constant 0 : index
    %c0_80 = arith.constant 0 : index
    %100 = vector.load %arg5[%c7, %c0_79, %c0_80] : memref<14x256x128xbf16, #tpu.memory_space<vmem>>, vector<1x256x128xbf16>
    %101 = vector.shape_cast %100 : vector<1x256x128xbf16> to vector<256x128xbf16>
    %cst_81 = arith.constant dense<0.000000e+00> : vector<2x128xf32>
    %102 = tpu.matmul %99, %101, %cst_81 {dimension_numbers = #tpu.dot_dimension_numbers<[1], [0], [0], [1], [0, 0, 1, 1], [], []>} : vector<2x256xbf16>, vector<256x128xbf16>, vector<2x128xf32> -> vector<2x128xf32>
    %c0_82 = arith.constant 0 : index
    %c896 = arith.constant 896 : index
    %103 = vector.load %arg9[%c0_82, %c896] : memref<2x1792xf32, #tpu.memory_space<vmem>>, vector<2x128xf32>
    tpu.vector_store %arg9[%c0_82, %c896], %102 {strides = array<i32>} : memref<2x1792xf32, #tpu.memory_space<vmem>>, vector<2x128xf32>,
    %c120 = arith.constant 120 : index
    %c0_83 = arith.constant 0 : index
    %104 = vector.load %arg13[%c120, %c0_83] : memref<720x256xf32, #tpu.memory_space<vmem>>, vector<40x256xf32>
    %cst_84 = arith.constant dense<0xFF800000> : vector<256xf32>
    %105 = vector.multi_reduction <maximumf>, %104, %cst_84 [0] : vector<40x256xf32> to vector<256xf32>
    %106 = vector.shape_cast %105 : vector<256xf32> to vector<1x256xf32>
    %c480 = arith.constant 480 : index
    %c0_85 = arith.constant 0 : index
    %107 = vector.load %arg13[%c480, %c0_85] : memref<720x256xf32, #tpu.memory_space<vmem>>, vector<40x256xf32>
    %cst_86 = arith.constant dense<0xFF800000> : vector<256xf32>
    %108 = vector.multi_reduction <maximumf>, %107, %cst_86 [0] : vector<40x256xf32> to vector<256xf32>
    %109 = vector.shape_cast %108 : vector<256xf32> to vector<1x256xf32>
    %110 = tpu.concatenate %106, %109 in 0 : vector<1x256xf32>, vector<1x256xf32> -> vector<2x256xf32>
    %111 = arith.truncf %110 : vector<2x256xf32> to vector<2x256xbf16>
    %c8 = arith.constant 8 : index
    %c0_87 = arith.constant 0 : index
    %c0_88 = arith.constant 0 : index
    %112 = vector.load %arg5[%c8, %c0_87, %c0_88] : memref<14x256x128xbf16, #tpu.memory_space<vmem>>, vector<1x256x128xbf16>
    %113 = vector.shape_cast %112 : vector<1x256x128xbf16> to vector<256x128xbf16>
    %cst_89 = arith.constant dense<0.000000e+00> : vector<2x128xf32>
    %114 = tpu.matmul %111, %113, %cst_89 {dimension_numbers = #tpu.dot_dimension_numbers<[1], [0], [0], [1], [0, 0, 1, 1], [], []>} : vector<2x256xbf16>, vector<256x128xbf16>, vector<2x128xf32> -> vector<2x128xf32>
    %c0_90 = arith.constant 0 : index
    %c1024 = arith.constant 1024 : index
    %115 = vector.load %arg9[%c0_90, %c1024] : memref<2x1792xf32, #tpu.memory_space<vmem>>, vector<2x128xf32>
    tpu.vector_store %arg9[%c0_90, %c1024], %114 {strides = array<i32>} : memref<2x1792xf32, #tpu.memory_space<vmem>>, vector<2x128xf32>,
    %c160 = arith.constant 160 : index
    %c0_91 = arith.constant 0 : index
    %116 = vector.load %arg13[%c160, %c0_91] : memref<720x256xf32, #tpu.memory_space<vmem>>, vector<40x256xf32>
    %cst_92 = arith.constant dense<0xFF800000> : vector<256xf32>
    %117 = vector.multi_reduction <maximumf>, %116, %cst_92 [0] : vector<40x256xf32> to vector<256xf32>
    %118 = vector.shape_cast %117 : vector<256xf32> to vector<1x256xf32>
    %c520 = arith.constant 520 : index
    %c0_93 = arith.constant 0 : index
    %119 = vector.load %arg13[%c520, %c0_93] : memref<720x256xf32, #tpu.memory_space<vmem>>, vector<40x256xf32>
    %cst_94 = arith.constant dense<0xFF800000> : vector<256xf32>
    %120 = vector.multi_reduction <maximumf>, %119, %cst_94 [0] : vector<40x256xf32> to vector<256xf32>
    %121 = vector.shape_cast %120 : vector<256xf32> to vector<1x256xf32>
    %122 = tpu.concatenate %118, %121 in 0 : vector<1x256xf32>, vector<1x256xf32> -> vector<2x256xf32>
    %123 = arith.truncf %122 : vector<2x256xf32> to vector<2x256xbf16>
    %c9 = arith.constant 9 : index
    %c0_95 = arith.constant 0 : index
    %c0_96 = arith.constant 0 : index
    %124 = vector.load %arg5[%c9, %c0_95, %c0_96] : memref<14x256x128xbf16, #tpu.memory_space<vmem>>, vector<1x256x128xbf16>
    %125 = vector.shape_cast %124 : vector<1x256x128xbf16> to vector<256x128xbf16>
    %cst_97 = arith.constant dense<0.000000e+00> : vector<2x128xf32>
    %126 = tpu.matmul %123, %125, %cst_97 {dimension_numbers = #tpu.dot_dimension_numbers<[1], [0], [0], [1], [0, 0, 1, 1], [], []>} : vector<2x256xbf16>, vector<256x128xbf16>, vector<2x128xf32> -> vector<2x128xf32>
    %c0_98 = arith.constant 0 : index
    %c1152 = arith.constant 1152 : index
    %127 = vector.load %arg9[%c0_98, %c1152] : memref<2x1792xf32, #tpu.memory_space<vmem>>, vector<2x128xf32>
    tpu.vector_store %arg9[%c0_98, %c1152], %126 {strides = array<i32>} : memref<2x1792xf32, #tpu.memory_space<vmem>>, vector<2x128xf32>,
    %c200 = arith.constant 200 : index
    %c0_99 = arith.constant 0 : index
    %128 = vector.load %arg13[%c200, %c0_99] : memref<720x256xf32, #tpu.memory_space<vmem>>, vector<40x256xf32>
    %cst_100 = arith.constant dense<0xFF800000> : vector<256xf32>
    %129 = vector.multi_reduction <maximumf>, %128, %cst_100 [0] : vector<40x256xf32> to vector<256xf32>
    %130 = vector.shape_cast %129 : vector<256xf32> to vector<1x256xf32>
    %c560 = arith.constant 560 : index
    %c0_101 = arith.constant 0 : index
    %131 = vector.load %arg13[%c560, %c0_101] : memref<720x256xf32, #tpu.memory_space<vmem>>, vector<40x256xf32>
    %cst_102 = arith.constant dense<0xFF800000> : vector<256xf32>
    %132 = vector.multi_reduction <maximumf>, %131, %cst_102 [0] : vector<40x256xf32> to vector<256xf32>
    %133 = vector.shape_cast %132 : vector<256xf32> to vector<1x256xf32>
    %134 = tpu.concatenate %130, %133 in 0 : vector<1x256xf32>, vector<1x256xf32> -> vector<2x256xf32>
    %135 = arith.truncf %134 : vector<2x256xf32> to vector<2x256xbf16>
    %c10 = arith.constant 10 : index
    %c0_103 = arith.constant 0 : index
    %c0_104 = arith.constant 0 : index
    %136 = vector.load %arg5[%c10, %c0_103, %c0_104] : memref<14x256x128xbf16, #tpu.memory_space<vmem>>, vector<1x256x128xbf16>
    %137 = vector.shape_cast %136 : vector<1x256x128xbf16> to vector<256x128xbf16>
    %cst_105 = arith.constant dense<0.000000e+00> : vector<2x128xf32>
    %138 = tpu.matmul %135, %137, %cst_105 {dimension_numbers = #tpu.dot_dimension_numbers<[1], [0], [0], [1], [0, 0, 1, 1], [], []>} : vector<2x256xbf16>, vector<256x128xbf16>, vector<2x128xf32> -> vector<2x128xf32>
    %c0_106 = arith.constant 0 : index
    %c1280 = arith.constant 1280 : index
    %139 = vector.load %arg9[%c0_106, %c1280] : memref<2x1792xf32, #tpu.memory_space<vmem>>, vector<2x128xf32>
    tpu.vector_store %arg9[%c0_106, %c1280], %138 {strides = array<i32>} : memref<2x1792xf32, #tpu.memory_space<vmem>>, vector<2x128xf32>,
    %c240 = arith.constant 240 : index
    %c0_107 = arith.constant 0 : index
    %140 = vector.load %arg13[%c240, %c0_107] : memref<720x256xf32, #tpu.memory_space<vmem>>, vector<40x256xf32>
    %cst_108 = arith.constant dense<0xFF800000> : vector<256xf32>
    %141 = vector.multi_reduction <maximumf>, %140, %cst_108 [0] : vector<40x256xf32> to vector<256xf32>
    %142 = vector.shape_cast %141 : vector<256xf32> to vector<1x256xf32>
    %c600 = arith.constant 600 : index
    %c0_109 = arith.constant 0 : index
    %143 = vector.load %arg13[%c600, %c0_109] : memref<720x256xf32, #tpu.memory_space<vmem>>, vector<40x256xf32>
    %cst_110 = arith.constant dense<0xFF800000> : vector<256xf32>
    %144 = vector.multi_reduction <maximumf>, %143, %cst_110 [0] : vector<40x256xf32> to vector<256xf32>
    %145 = vector.shape_cast %144 : vector<256xf32> to vector<1x256xf32>
    %146 = tpu.concatenate %142, %145 in 0 : vector<1x256xf32>, vector<1x256xf32> -> vector<2x256xf32>
    %147 = arith.truncf %146 : vector<2x256xf32> to vector<2x256xbf16>
    %c11 = arith.constant 11 : index
    %c0_111 = arith.constant 0 : index
    %c0_112 = arith.constant 0 : index
    %148 = vector.load %arg5[%c11, %c0_111, %c0_112] : memref<14x256x128xbf16, #tpu.memory_space<vmem>>, vector<1x256x128xbf16>
    %149 = vector.shape_cast %148 : vector<1x256x128xbf16> to vector<256x128xbf16>
    %cst_113 = arith.constant dense<0.000000e+00> : vector<2x128xf32>
    %150 = tpu.matmul %147, %149, %cst_113 {dimension_numbers = #tpu.dot_dimension_numbers<[1], [0], [0], [1], [0, 0, 1, 1], [], []>} : vector<2x256xbf16>, vector<256x128xbf16>, vector<2x128xf32> -> vector<2x128xf32>
    %c0_114 = arith.constant 0 : index
    %c1408 = arith.constant 1408 : index
    %151 = vector.load %arg9[%c0_114, %c1408] : memref<2x1792xf32, #tpu.memory_space<vmem>>, vector<2x128xf32>
    tpu.vector_store %arg9[%c0_114, %c1408], %150 {strides = array<i32>} : memref<2x1792xf32, #tpu.memory_space<vmem>>, vector<2x128xf32>,
    %c280 = arith.constant 280 : index
    %c0_115 = arith.constant 0 : index
    %152 = vector.load %arg13[%c280, %c0_115] : memref<720x256xf32, #tpu.memory_space<vmem>>, vector<40x256xf32>
    %cst_116 = arith.constant dense<0xFF800000> : vector<256xf32>
    %153 = vector.multi_reduction <maximumf>, %152, %cst_116 [0] : vector<40x256xf32> to vector<256xf32>
    %154 = vector.shape_cast %153 : vector<256xf32> to vector<1x256xf32>
    %c640_117 = arith.constant 640 : index
    %c0_118 = arith.constant 0 : index
    %155 = vector.load %arg13[%c640_117, %c0_118] : memref<720x256xf32, #tpu.memory_space<vmem>>, vector<40x256xf32>
    %cst_119 = arith.constant dense<0xFF800000> : vector<256xf32>
    %156 = vector.multi_reduction <maximumf>, %155, %cst_119 [0] : vector<40x256xf32> to vector<256xf32>
    %157 = vector.shape_cast %156 : vector<256xf32> to vector<1x256xf32>
    %158 = tpu.concatenate %154, %157 in 0 : vector<1x256xf32>, vector<1x256xf32> -> vector<2x256xf32>
    %159 = arith.truncf %158 : vector<2x256xf32> to vector<2x256xbf16>
    %c12 = arith.constant 12 : index
    %c0_120 = arith.constant 0 : index
    %c0_121 = arith.constant 0 : index
    %160 = vector.load %arg5[%c12, %c0_120, %c0_121] : memref<14x256x128xbf16, #tpu.memory_space<vmem>>, vector<1x256x128xbf16>
    %161 = vector.shape_cast %160 : vector<1x256x128xbf16> to vector<256x128xbf16>
    %cst_122 = arith.constant dense<0.000000e+00> : vector<2x128xf32>
    %162 = tpu.matmul %159, %161, %cst_122 {dimension_numbers = #tpu.dot_dimension_numbers<[1], [0], [0], [1], [0, 0, 1, 1], [], []>} : vector<2x256xbf16>, vector<256x128xbf16>, vector<2x128xf32> -> vector<2x128xf32>
    %c0_123 = arith.constant 0 : index
    %c1536 = arith.constant 1536 : index
    %163 = vector.load %arg9[%c0_123, %c1536] : memref<2x1792xf32, #tpu.memory_space<vmem>>, vector<2x128xf32>
    tpu.vector_store %arg9[%c0_123, %c1536], %162 {strides = array<i32>} : memref<2x1792xf32, #tpu.memory_space<vmem>>, vector<2x128xf32>,
    %c320 = arith.constant 320 : index
    %c0_124 = arith.constant 0 : index
    %164 = vector.load %arg13[%c320, %c0_124] : memref<720x256xf32, #tpu.memory_space<vmem>>, vector<40x256xf32>
    %cst_125 = arith.constant dense<0xFF800000> : vector<256xf32>
    %165 = vector.multi_reduction <maximumf>, %164, %cst_125 [0] : vector<40x256xf32> to vector<256xf32>
    %166 = vector.shape_cast %165 : vector<256xf32> to vector<1x256xf32>
    %c680 = arith.constant 680 : index
    %c0_126 = arith.constant 0 : index
    %167 = vector.load %arg13[%c680, %c0_126] : memref<720x256xf32, #tpu.memory_space<vmem>>, vector<40x256xf32>
    %cst_127 = arith.constant dense<0xFF800000> : vector<256xf32>
    %168 = vector.multi_reduction <maximumf>, %167, %cst_127 [0] : vector<40x256xf32> to vector<256xf32>
    %169 = vector.shape_cast %168 : vector<256xf32> to vector<1x256xf32>
    %170 = tpu.concatenate %166, %169 in 0 : vector<1x256xf32>, vector<1x256xf32> -> vector<2x256xf32>
    %171 = arith.truncf %170 : vector<2x256xf32> to vector<2x256xbf16>
    %c13 = arith.constant 13 : index
    %c0_128 = arith.constant 0 : index
    %c0_129 = arith.constant 0 : index
    %172 = vector.load %arg5[%c13, %c0_128, %c0_129] : memref<14x256x128xbf16, #tpu.memory_space<vmem>>, vector<1x256x128xbf16>
    %173 = vector.shape_cast %172 : vector<1x256x128xbf16> to vector<256x128xbf16>
    %cst_130 = arith.constant dense<0.000000e+00> : vector<2x128xf32>
    %174 = tpu.matmul %171, %173, %cst_130 {dimension_numbers = #tpu.dot_dimension_numbers<[1], [0], [0], [1], [0, 0, 1, 1], [], []>} : vector<2x256xbf16>, vector<256x128xbf16>, vector<2x128xf32> -> vector<2x128xf32>
    %c0_131 = arith.constant 0 : index
    %c1664 = arith.constant 1664 : index
    %175 = vector.load %arg9[%c0_131, %c1664] : memref<2x1792xf32, #tpu.memory_space<vmem>>, vector<2x128xf32>
    tpu.vector_store %arg9[%c0_131, %c1664], %174 {strides = array<i32>} : memref<2x1792xf32, #tpu.memory_space<vmem>>, vector<2x128xf32>,
    %c0_132 = arith.constant 0 : index
    %c0_133 = arith.constant 0 : index
    %176 = vector.load %arg9[%c0_132, %c0_133] : memref<2x1792xf32, #tpu.memory_space<vmem>>, vector<2x1792xf32>
    %cst_134 = arith.constant dense<0.000000e+00> : vector<1792xf32>
    %177 = vector.multi_reduction <add>, %176, %cst_134 [0] : vector<2x1792xf32> to vector<1792xf32>
    %178 = vector.shape_cast %177 : vector<1792xf32> to vector<1x1792xf32>
    %cst_135 = arith.constant 2.000000e+00 : f32
    %179 = vector.broadcast %cst_135 : f32 to vector<1x1792xf32>
    %180 = arith.divf %178, %179 : vector<1x1792xf32>
    %181 = vector.broadcast %180 : vector<1x1792xf32> to vector<2x1792xf32>
    %182 = arith.subf %176, %181 : vector<2x1792xf32>
    %183 = arith.mulf %182, %182 : vector<2x1792xf32>
    %cst_136 = arith.constant dense<0.000000e+00> : vector<1792xf32>
    %184 = vector.multi_reduction <add>, %183, %cst_136 [0] : vector<2x1792xf32> to vector<1792xf32>
    %185 = vector.shape_cast %184 : vector<1792xf32> to vector<1x1792xf32>
    %cst_137 = arith.constant 2.000000e+00 : f32
    %186 = vector.broadcast %cst_137 : f32 to vector<1x1792xf32>
    %187 = arith.divf %185, %186 : vector<1x1792xf32>
    %cst_138 = arith.constant 9.99999974E-6 : f32
    %188 = vector.broadcast %cst_138 : f32 to vector<1x1792xf32>
    %189 = arith.addf %187, %188 : vector<1x1792xf32>
    %190 = math.rsqrt %189 : vector<1x1792xf32>
    %191 = vector.broadcast %190 : vector<1x1792xf32> to vector<2x1792xf32>
    %192 = arith.mulf %182, %191 : vector<2x1792xf32>
    %c0_139 = arith.constant 0 : index
    %c0_140 = arith.constant 0 : index
    %193 = vector.load %arg6[%c0_139, %c0_140] : memref<1x1792xf32, #tpu.memory_space<vmem>>, vector<1x1792xf32>
    %194 = vector.broadcast %193 : vector<1x1792xf32> to vector<2x1792xf32>
    %195 = arith.mulf %192, %194 : vector<2x1792xf32>
    %c0_141 = arith.constant 0 : index
    %c0_142 = arith.constant 0 : index
    %196 = vector.load %arg7[%c0_141, %c0_142] : memref<1x1792xf32, #tpu.memory_space<vmem>>, vector<1x1792xf32>
    %197 = vector.broadcast %196 : vector<1x1792xf32> to vector<2x1792xf32>
    %198 = arith.addf %195, %197 : vector<2x1792xf32>
    %c0_143 = arith.constant 0 : index
    %c0_144 = arith.constant 0 : index
    %199 = vector.load %arg10[%c0_143, %c0_144] : memref<2x1792xf32, #tpu.memory_space<vmem>>, vector<2x1792xf32>
    tpu.vector_store %arg10[%c0_143, %c0_144], %198 {strides = array<i32>} : memref<2x1792xf32, #tpu.memory_space<vmem>>, vector<2x1792xf32>,
    %200 = arith.truncf %198 : vector<2x1792xf32> to vector<2x1792xbf16>
    %c0_145 = arith.constant 0 : index
    %c0_146 = arith.constant 0 : index
    %201 = vector.load %arg8[%c0_145, %c0_146] : memref<1792x128xbf16, #tpu.memory_space<vmem>>, vector<1792x128xbf16>
    %cst_147 = arith.constant dense<0.000000e+00> : vector<2x128xf32>
    %202 = tpu.matmul %200, %201, %cst_147 {dimension_numbers = #tpu.dot_dimension_numbers<[1], [0], [0], [1], [0, 0, 1, 1], [], []>} : vector<2x1792xbf16>, vector<1792x128xbf16>, vector<2x128xf32> -> vector<2x128xf32>
    %c0_148 = arith.constant 0 : index
    %c0_149 = arith.constant 0 : index
    %203 = vector.load %arg11[%c0_148, %c0_149] : memref<2x128xf32, #tpu.memory_space<vmem>>, vector<2x128xf32>
    tpu.vector_store %arg11[%c0_148, %c0_149], %202 {strides = array<i32>} : memref<2x128xf32, #tpu.memory_space<vmem>>, vector<2x128xf32>,
    return
  }
  func.func @transform_0(%arg0: i32) -> (i32, i32) {
    %c0_i32 = arith.constant 0 : i32
    %c0_i32_0 = arith.constant 0 : i32
    %c0_i32_1 = arith.constant 0 : i32
    return %c0_i32, %c0_i32_0 : i32, i32
  }
  func.func @transform_1(%arg0: i32) -> (i32, i32) {
    %c0_i32 = arith.constant 0 : i32
    %c0_i32_0 = arith.constant 0 : i32
    %c0_i32_1 = arith.constant 0 : i32
    return %c0_i32, %c0_i32_0 : i32, i32
  }
  func.func @transform_2(%arg0: i32) -> (i32, i32) {
    %c0_i32 = arith.constant 0 : i32
    %c0_i32_0 = arith.constant 0 : i32
    %c0_i32_1 = arith.constant 0 : i32
    return %c0_i32, %c0_i32_0 : i32, i32
  }
  func.func @transform_3(%arg0: i32) -> (i32, i32) {
    %c0_i32 = arith.constant 0 : i32
    %c0_i32_0 = arith.constant 0 : i32
    %c0_i32_1 = arith.constant 0 : i32
    return %c0_i32, %c0_i32_0 : i32, i32
  }
  func.func @transform_4(%arg0: i32) -> (i32, i32, i32) {
    %c0_i32 = arith.constant 0 : i32
    %c0_i32_0 = arith.constant 0 : i32
    %c0_i32_1 = arith.constant 0 : i32
    %c0_i32_2 = arith.constant 0 : i32
    return %c0_i32, %c0_i32_0, %c0_i32_1 : i32, i32, i32
  }
  func.func @transform_5(%arg0: i32) -> (i32, i32) {
    %c0_i32 = arith.constant 0 : i32
    %c0_i32_0 = arith.constant 0 : i32
    %c0_i32_1 = arith.constant 0 : i32
    return %c0_i32, %c0_i32_0 : i32, i32
  }
  func.func @transform_6(%arg0: i32) -> (i32, i32) {
    %c0_i32 = arith.constant 0 : i32
    %c0_i32_0 = arith.constant 0 : i32
    %c0_i32_1 = arith.constant 0 : i32
    return %c0_i32, %c0_i32_0 : i32, i32
  }
  func.func @transform_7(%arg0: i32) -> (i32, i32) {
    %c0_i32 = arith.constant 0 : i32
    %c0_i32_0 = arith.constant 0 : i32
    %c0_i32_1 = arith.constant 0 : i32
    return %c0_i32, %c0_i32_0 : i32, i32
  }
  func.func @transform_8(%arg0: i32) -> (i32, i32) {
    %c0_i32 = arith.constant 0 : i32
    %c0_i32_0 = arith.constant 0 : i32
    %c0_i32_1 = arith.constant 0 : i32
    return %c0_i32, %c0_i32_0 : i32, i32
  }
  func.func @transform_9(%arg0: i32) -> (i32, i32) {
    %c0_i32 = arith.constant 0 : i32
    %c0_i32_0 = arith.constant 0 : i32
    %c0_i32_1 = arith.constant 0 : i32
    return %c0_i32, %c0_i32_0 : i32, i32
  }
  func.func @transform_10(%arg0: i32) -> (i32, i32) {
    %c0_i32 = arith.constant 0 : i32
    %c0_i32_0 = arith.constant 0 : i32
    %c0_i32_1 = arith.constant 0 : i32
    return %c0_i32, %c0_i32_0 : i32, i32
  }
}

</mosaic_0001>

<llo_original>
// kernel: spark1_forward.1
$region0: #{spark1_forward.1}
  #allocation0 [shape = 'u32[]', space=smem, size = 0x4, offset = 0x4, fixed_abs, tag = 'smem constant byte address 0x4 - core index']
  #allocation1 [shape = 'u32[144,128]{1,0:T(1,128)}', space=vmem, size = 0x12000, scoped, tag = 'internal scratch']
  #allocation2 [shape = 'f32[704,512]{1,0:T(8,128)}', space=vmem, size = 0x160000, scoped, tag = 'scratch operand']
  #allocation3 [shape = 'f32[720,256]{1,0:T(8,128)}', space=vmem, size = 0xb4000, scoped, tag = 'scratch operand']
  %s0 = inlined_call_operand.vmem [shape: bf16[704,256], index: 0, kind: input, shape index: {}]
  %s1 = inlined_call_operand.vmem [shape: bf16[720,256], index: 1, kind: input, shape index: {}]
  %s2 = inlined_call_operand.vmem [shape: bf16[256,512], index: 2, kind: input, shape index: {}]
  %s3 = inlined_call_operand.vmem [shape: bf16[256,256], index: 3, kind: input, shape index: {}]
  %s4 = inlined_call_operand.vmem [shape: bf16[14,256,128], index: 4, kind: input, shape index: {}]
  %s5 = inlined_call_operand.vmem [shape: f32[1,1792], index: 5, kind: input, shape index: {}]
  %s6 = inlined_call_operand.vmem [shape: f32[1,1792], index: 6, kind: input, shape index: {}]
  %s7 = inlined_call_operand.vmem [shape: bf16[1792,128], index: 7, kind: input, shape index: {}]
  %s8 = inlined_call_operand.vmem [shape: f32[2,1792], index: 8, kind: output, shape index: {0}]
  %s9 = inlined_call_operand.hbm [shape: f32[2,1792], index: 9, kind: output, shape index: {1}]
  %s10 = inlined_call_operand.vmem [shape: f32[2,128], index: 10, kind: output, shape index: {2}]
  %11 = xla_tuple %s8, %s9, %s10
  %s12 = sld [smem:[#allocation0]]
  $region58: #{spark1_forward.1} parent=0
    _
  %s14 = ssub.s32 1, %s12
  %s15 = scalar_select 0, %s14, %s12
  $region1: #{spark1_forward.1} parent=0
    #allocation4 [shape = 'u8[14336]{0}', space=vmem, size = 0x3800, scoped, tag = 'output window, operand 1, single buffered']
    #allocation5 [shape = 's32[1]{0}', space=sflag, size = 0x4, scoped, tag = 'scoped memory for spark1_forward.1']
    %16 = vsyncpa [#allocation5], 0
    // Predicated region
    $region2: #{spark1_forward.1} parent=1 // pred_check
      _
    $region3: #{spark1_forward.1} parent=1 // pred_check_branch
      %18 = sbr.rel (0) target = $region5
    $region4: #{spark1_forward.1} parent=1 // pred_region
      _
    $region5: #{spark1_forward.1} parent=1 // pred_fallthru
      _
    // Predicated region
    $region6: #{spark1_forward.1} parent=1 // pred_check
      _
    $region7: #{spark1_forward.1} parent=1 // pred_check_branch
      %20 = sbr.rel (0) target = $region9
    $region8: #{spark1_forward.1} parent=1 // pred_region
      _
    $region9: #{spark1_forward.1} parent=1 // pred_fallthru
      _
    // Predicated region
    $region10: #{spark1_forward.1} parent=1 // pred_check
      _
    $region11: #{spark1_forward.1} parent=1 // pred_check_branch
      %22 = sbr.rel (0) target = $region13
    $region12: #{spark1_forward.1} parent=1 // pred_region
      _
    $region13: #{spark1_forward.1} parent=1 // pred_fallthru
      _
    // Predicated region
    $region14: #{spark1_forward.1} parent=1 // pred_check
      _
    $region15: #{spark1_forward.1} parent=1 // pred_check_branch
      %24 = sbr.rel (0) target = $region17
    $region16: #{spark1_forward.1} parent=1 // pred_region
      _
    $region17: #{spark1_forward.1} parent=1 // pred_fallthru
      _
    // Predicated region
    $region18: #{spark1_forward.1} parent=1 // pred_check
      _
    $region19: #{spark1_forward.1} parent=1 // pred_check_branch
      %26 = sbr.rel (0) target = $region21
    $region20: #{spark1_forward.1} parent=1 // pred_region
      _
    $region21: #{spark1_forward.1} parent=1 // pred_fallthru
      _
    // Predicated region
    $region22: #{spark1_forward.1} parent=1 // pred_check
      _
    $region23: #{spark1_forward.1} parent=1 // pred_check_branch
      %28 = sbr.rel (0) target = $region25
    $region24: #{spark1_forward.1} parent=1 // pred_region
      _
    $region25: #{spark1_forward.1} parent=1 // pred_fallthru
      _
    // Predicated region
    $region26: #{spark1_forward.1} parent=1 // pred_check
      _
    $region27: #{spark1_forward.1} parent=1 // pred_check_branch
      %30 = sbr.rel (0) target = $region29
    $region28: #{spark1_forward.1} parent=1 // pred_region
      _
    $region29: #{spark1_forward.1} parent=1 // pred_fallthru
      _
    // Predicated region
    $region30: #{spark1_forward.1} parent=1 // pred_check
      _
    $region31: #{spark1_forward.1} parent=1 // pred_check_branch
      %32 = sbr.rel (0) target = $region33
    $region32: #{spark1_forward.1} parent=1 // pred_region
      _
    $region33: #{spark1_forward.1} parent=1 // pred_fallthru
      _
    %v34 = vld [vmem:[%s0] sm:$0xff]
    %v35 = vld [vmem:[%s0 + $0x8] sm:$0xff]
    %v36 = vld [vmem:[%s0 + $0x10] sm:$0xff]
    %v37 = vld [vmem:[%s0 + $0x18] sm:$0xff]
    %v38 = vld [vmem:[%s0 + $0x20] sm:$0xff]
    %v39 = vld [vmem:[%s0 + $0x28] sm:$0xff]
    %v40 = vld [vmem:[%s0 + $0x30] sm:$0xff]
    %v41 = vld [vmem:[%s0 + $0x38] sm:$0xff]
    %v42 = vld [vmem:[%s0 + $0x40] sm:$0xff]
    %v43 = vld [vmem:[%s0 + $0x48] sm:$0xff]
    %v44 = vld [vmem:[%s0 + $0x50] sm:$0xff]
    %v45 = vld [vmem:[%s0 + $0x58] sm:$0xff]
    %v46 = vld [vmem:[%s0 + $0x60] sm:$0xff]
    %v47 = vld [vmem:[%s0 + $0x68] sm:$0xff]
    %v48 = vld [vmem:[%s0 + $0x70] sm:$0xff]
    %v49 = vld [vmem:[%s0 + $0x78] sm:$0xff]
    %v50 = vld [vmem:[%s0 + $0x80] sm:$0xff]
    %v51 = vld [vmem:[%s0 + $0x88] sm:$0xff]
    %v52 = vld [vmem:[%s0 + $0x90] sm:$0xff]
    %v53 = vld [vmem:[%s0 + $0x98] sm:$0xff]
    %v54 = vld [vmem:[%s0 + $0xa0] sm:$0xff]
    %v55 = vld [vmem:[%s0 + $0xa8] sm:$0xff]
    %v56 = vld [vmem:[%s0 + $0xb0] sm:$0xff]
    %v57 = vld [vmem:[%s0 + $0xb8] sm:$0xff]
    %v58 = vld [vmem:[%s0 + $0xc0] sm:$0xff]
    %v59 = vld [vmem:[%s0 + $0xc8] sm:$0xff]
    %v60 = vld [vmem:[%s0 + $0xd0] sm:$0xff]
    %v61 = vld [vmem:[%s0 + $0xd8] sm:$0xff]
    %v62 = vld [vmem:[%s0 + $0xe0] sm:$0xff]
    %v63 = vld [vmem:[%s0 + $0xe8] sm:$0xff]
    %v64 = vld [vmem:[%s0 + $0xf0] sm:$0xff]
    %v65 = vld [vmem:[%s0 + $0xf8] sm:$0xff]
    %v66 = vld [vmem:[%s0 + $0x100] sm:$0xff]
    %v67 = vld [vmem:[%s0 + $0x108] sm:$0xff]
    %v68 = vld [vmem:[%s0 + $0x110] sm:$0xff]
    %v69 = vld [vmem:[%s0 + $0x118] sm:$0xff]
    %v70 = vld [vmem:[%s0 + $0x120] sm:$0xff]
    %v71 = vld [vmem:[%s0 + $0x128] sm:$0xff]
    %v72 = vld [vmem:[%s0 + $0x130] sm:$0xff]
    %v73 = vld [vmem:[%s0 + $0x138] sm:$0xff]
    %v74 = vld [vmem:[%s0 + $0x140] sm:$0xff]
    %v75 = vld [vmem:[%s0 + $0x148] sm:$0xff]
    %v76 = vld [vmem:[%s0 + $0x150] sm:$0xff]
    %v77 = vld [vmem:[%s0 + $0x158] sm:$0xff]
    %v78 = vld [vmem:[%s0 + $0x160] sm:$0xff]
    %v79 = vld [vmem:[%s0 + $0x168] sm:$0xff]
    %v80 = vld [vmem:[%s0 + $0x170] sm:$0xff]
    %v81 = vld [vmem:[%s0 + $0x178] sm:$0xff]
    %v82 = vld [vmem:[%s0 + $0x180] sm:$0xff]
    %v83 = vld [vmem:[%s0 + $0x188] sm:$0xff]
    %v84 = vld [vmem:[%s0 + $0x190] sm:$0xff]
    %v85 = vld [vmem:[%s0 + $0x198] sm:$0xff]
    %v86 = vld [vmem:[%s0 + $0x1a0] sm:$0xff]
    %v87 = vld [vmem:[%s0 + $0x1a8] sm:$0xff]
    %v88 = vld [vmem:[%s0 + $0x1b0] sm:$0xff]
    %v89 = vld [vmem:[%s0 + $0x1b8] sm:$0xff]
    %v90 = vld [vmem:[%s0 + $0x1c0] sm:$0xff]
    %v91 = vld [vmem:[%s0 + $0x1c8] sm:$0xff]
    %v92 = vld [vmem:[%s0 + $0x1d0] sm:$0xff]
    %v93 = vld [vmem:[%s0 + $0x1d8] sm:$0xff]
    %v94 = vld [vmem:[%s0 + $0x1e0] sm:$0xff]
    %v95 = vld [vmem:[%s0 + $0x1e8] sm:$0xff]
    %v96 = vld [vmem:[%s0 + $0x1f0] sm:$0xff]
    %v97 = vld [vmem:[%s0 + $0x1f8] sm:$0xff]
    %v98 = vld [vmem:[%s0 + $0x200] sm:$0xff]
    %v99 = vld [vmem:[%s0 + $0x208] sm:$0xff]
    %v100 = vld [vmem:[%s0 + $0x210] sm:$0xff]
    %v101 = vld [vmem:[%s0 + $0x218] sm:$0xff]
    %v102 = vld [vmem:[%s0 + $0x220] sm:$0xff]
    %v103 = vld [vmem:[%s0 + $0x228] sm:$0xff]
    %v104 = vld [vmem:[%s0 + $0x230] sm:$0xff]
    %v105 = vld [vmem:[%s0 + $0x238] sm:$0xff]
    %v106 = vld [vmem:[%s0 + $0x240] sm:$0xff]
    %v107 = vld [vmem:[%s0 + $0x248] sm:$0xff]
    %v108 = vld [vmem:[%s0 + $0x250] sm:$0xff]
    %v109 = vld [vmem:[%s0 + $0x258] sm:$0xff]
    %v110 = vld [vmem:[%s0 + $0x260] sm:$0xff]
    %v111 = vld [vmem:[%s0 + $0x268] sm:$0xff]
    %v112 = vld [vmem:[%s0 + $0x270] sm:$0xff]
    %v113 = vld [vmem:[%s0 + $0x278] sm:$0xff]
    %v114 = vld [vmem:[%s0 + $0x280] sm:$0xff]
    %v115 = vld [vmem:[%s0 + $0x288] sm:$0xff]
    %v116 = vld [vmem:[%s0 + $0x290] sm:$0xff]
    %v117 = vld [vmem:[%s0 + $0x298] sm:$0xff]
    %v118 = vld [vmem:[%s0 + $0x2a0] sm:$0xff]
    %v119 = vld [vmem:[%s0 + $0x2a8] sm:$0xff]
    %v120 = vld [vmem:[%s0 + $0x2b0] sm:$0xff]
    %v121 = vld [vmem:[%s0 + $0x2b8] sm:$0xff]
    %v122 = vld [vmem:[%s2] sm:$0xff]
    %v123 = vld [vmem:[%s2 + $0x8] sm:$0xff]
    %v124 = vld [vmem:[%s2 + $0x10] sm:$0xff]
    %v125 = vld [vmem:[%s2 + $0x18] sm:$0xff]
    %v126 = vld [vmem:[%s2 + $0x20] sm:$0xff]
    %v127 = vld [vmem:[%s2 + $0x28] sm:$0xff]
    %v128 = vld [vmem:[%s2 + $0x30] sm:$0xff]
    %v129 = vld [vmem:[%s2 + $0x38] sm:$0xff]
    %v130 = vld [vmem:[%s2 + $0x40] sm:$0xff]
    %v131 = vld [vmem:[%s2 + $0x48] sm:$0xff]
    %v132 = vld [vmem:[%s2 + $0x50] sm:$0xff]
    %v133 = vld [vmem:[%s2 + $0x58] sm:$0xff]
    %v134 = vld [vmem:[%s2 + $0x60] sm:$0xff]
    %v135 = vld [vmem:[%s2 + $0x68] sm:$0xff]
    %v136 = vld [vmem:[%s2 + $0x70] sm:$0xff]
    %v137 = vld [vmem:[%s2 + $0x78] sm:$0xff]
    %v138 = vld [vmem:[%s2 + $0x80] sm:$0xff]
    %v139 = vld [vmem:[%s2 + $0x88] sm:$0xff]
    %v140 = vld [vmem:[%s2 + $0x90] sm:$0xff]
    %v141 = vld [vmem:[%s2 + $0x98] sm:$0xff]
    %v142 = vld [vmem:[%s2 + $0xa0] sm:$0xff]
    %v143 = vld [vmem:[%s2 + $0xa8] sm:$0xff]
    %v144 = vld [vmem:[%s2 + $0xb0] sm:$0xff]
    %v145 = vld [vmem:[%s2 + $0xb8] sm:$0xff]
    %v146 = vld [vmem:[%s2 + $0xc0] sm:$0xff]
    %v147 = vld [vmem:[%s2 + $0xc8] sm:$0xff]
    %v148 = vld [vmem:[%s2 + $0xd0] sm:$0xff]
    %v149 = vld [vmem:[%s2 + $0xd8] sm:$0xff]
    %v150 = vld [vmem:[%s2 + $0xe0] sm:$0xff]
    %v151 = vld [vmem:[%s2 + $0xe8] sm:$0xff]
    %v152 = vld [vmem:[%s2 + $0xf0] sm:$0xff]
    %v153 = vld [vmem:[%s2 + $0xf8] sm:$0xff]
    %v154 = vld [vmem:[%s2 + $0x100] sm:$0xff]
    %v155 = vld [vmem:[%s2 + $0x108] sm:$0xff]
    %v156 = vld [vmem:[%s2 + $0x110] sm:$0xff]
    %v157 = vld [vmem:[%s2 + $0x118] sm:$0xff]
    %v158 = vld [vmem:[%s2 + $0x120] sm:$0xff]
    %v159 = vld [vmem:[%s2 + $0x128] sm:$0xff]
    %v160 = vld [vmem:[%s2 + $0x130] sm:$0xff]
    %v161 = vld [vmem:[%s2 + $0x138] sm:$0xff]
    %v162 = vld [vmem:[%s2 + $0x140] sm:$0xff]
    %v163 = vld [vmem:[%s2 + $0x148] sm:$0xff]
    %v164 = vld [vmem:[%s2 + $0x150] sm:$0xff]
    %v165 = vld [vmem:[%s2 + $0x158] sm:$0xff]
    %v166 = vld [vmem:[%s2 + $0x160] sm:$0xff]
    %v167 = vld [vmem:[%s2 + $0x168] sm:$0xff]
    %v168 = vld [vmem:[%s2 + $0x170] sm:$0xff]
    %v169 = vld [vmem:[%s2 + $0x178] sm:$0xff]
    %v170 = vld [vmem:[%s2 + $0x180] sm:$0xff]
    %v171 = vld [vmem:[%s2 + $0x188] sm:$0xff]
    %v172 = vld [vmem:[%s2 + $0x190] sm:$0xff]
    %v173 = vld [vmem:[%s2 + $0x198] sm:$0xff]
    %v174 = vld [vmem:[%s2 + $0x1a0] sm:$0xff]
    %v175 = vld [vmem:[%s2 + $0x1a8] sm:$0xff]
    %v176 = vld [vmem:[%s2 + $0x1b0] sm:$0xff]
    %v177 = vld [vmem:[%s2 + $0x1b8] sm:$0xff]
    %v178 = vld [vmem:[%s2 + $0x1c0] sm:$0xff]
    %v179 = vld [vmem:[%s2 + $0x1c8] sm:$0xff]
    %v180 = vld [vmem:[%s2 + $0x1d0] sm:$0xff]
    %v181 = vld [vmem:[%s2 + $0x1d8] sm:$0xff]
    %v182 = vld [vmem:[%s2 + $0x1e0] sm:$0xff]
    %v183 = vld [vmem:[%s2 + $0x1e8] sm:$0xff]
    %v184 = vld [vmem:[%s2 + $0x1f0] sm:$0xff]
    %v185 = vld [vmem:[%s2 + $0x1f8] sm:$0xff]
    %v274 = vunpack.c.l.b16 %v34
    %v275 = vunpack.c.h.b16 %v34
    %v276 = vunpack.c.l.b16 %v35
    %v277 = vunpack.c.h.b16 %v35
    %v278 = vunpack.c.l.b16 %v36
    %v279 = vunpack.c.h.b16 %v36
    %v280 = vunpack.c.l.b16 %v37
    %v281 = vunpack.c.h.b16 %v37
    %v282 = vunpack.c.l.b16 %v38
    %v283 = vunpack.c.h.b16 %v38
    %v284 = vunpack.c.l.b16 %v39
    %v285 = vunpack.c.h.b16 %v39
    %v286 = vunpack.c.l.b16 %v40
    %v287 = vunpack.c.h.b16 %v40
    %v288 = vunpack.c.l.b16 %v41
    %v289 = vunpack.c.h.b16 %v41
    %v290 = vunpack.c.l.b16 %v42
    %v291 = vunpack.c.h.b16 %v42
    %v292 = vunpack.c.l.b16 %v43
    %v293 = vunpack.c.h.b16 %v43
    %v294 = vunpack.c.l.b16 %v44
    %v295 = vunpack.c.h.b16 %v44
    %v296 = vunpack.c.l.b16 %v45
    %v297 = vunpack.c.h.b16 %v45
    %v298 = vunpack.c.l.b16 %v46
    %v299 = vunpack.c.h.b16 %v46
    %v300 = vunpack.c.l.b16 %v47
    %v301 = vunpack.c.h.b16 %v47
    %v302 = vunpack.c.l.b16 %v48
    %v303 = vunpack.c.h.b16 %v48
    %v304 = vunpack.c.l.b16 %v49
    %v305 = vunpack.c.h.b16 %v49
    %v306 = vunpack.c.l.b16 %v50
    %v307 = vunpack.c.h.b16 %v50
    %v308 = vunpack.c.l.b16 %v51
    %v309 = vunpack.c.h.b16 %v51
    %v310 = vunpack.c.l.b16 %v52
    %v311 = vunpack.c.h.b16 %v52
    %v312 = vunpack.c.l.b16 %v53
    %v313 = vunpack.c.h.b16 %v53
    %v314 = vunpack.c.l.b16 %v54
    %v315 = vunpack.c.h.b16 %v54
    %v316 = vunpack.c.l.b16 %v55
    %v317 = vunpack.c.h.b16 %v55
    %v318 = vunpack.c.l.b16 %v56
    %v319 = vunpack.c.h.b16 %v56
    %v320 = vunpack.c.l.b16 %v57
    %v321 = vunpack.c.h.b16 %v57
    %v322 = vunpack.c.l.b16 %v58
    %v323 = vunpack.c.h.b16 %v58
    %v324 = vunpack.c.l.b16 %v59
    %v325 = vunpack.c.h.b16 %v59
    %v326 = vunpack.c.l.b16 %v60
    %v327 = vunpack.c.h.b16 %v60
    %v328 = vunpack.c.l.b16 %v61
    %v329 = vunpack.c.h.b16 %v61
    %v330 = vunpack.c.l.b16 %v62
    %v331 = vunpack.c.h.b16 %v62
    %v332 = vunpack.c.l.b16 %v63
    %v333 = vunpack.c.h.b16 %v63
    %v334 = vunpack.c.l.b16 %v64
    %v335 = vunpack.c.h.b16 %v64
    %v336 = vunpack.c.l.b16 %v65
    %v337 = vunpack.c.h.b16 %v65
    %v338 = vunpack.c.l.b16 %v66
    %v339 = vunpack.c.h.b16 %v66
    %v340 = vunpack.c.l.b16 %v67
    %v341 = vunpack.c.h.b16 %v67
    %v342 = vunpack.c.l.b16 %v68
    %v343 = vunpack.c.h.b16 %v68
    %v344 = vunpack.c.l.b16 %v69
    %v345 = vunpack.c.h.b16 %v69
    %v346 = vunpack.c.l.b16 %v70
    %v347 = vunpack.c.h.b16 %v70
    %v348 = vunpack.c.l.b16 %v71
    %v349 = vunpack.c.h.b16 %v71
    %v350 = vunpack.c.l.b16 %v72
    %v351 = vunpack.c.h.b16 %v72
    %v352 = vunpack.c.l.b16 %v73
    %v353 = vunpack.c.h.b16 %v73
    %v354 = vunpack.c.l.b16 %v74
    %v355 = vunpack.c.h.b16 %v74
    %v356 = vunpack.c.l.b16 %v75
    %v357 = vunpack.c.h.b16 %v75
    %v358 = vunpack.c.l.b16 %v76
    %v359 = vunpack.c.h.b16 %v76
    %v360 = vunpack.c.l.b16 %v77
    %v361 = vunpack.c.h.b16 %v77
    %v362 = vunpack.c.l.b16 %v78
    %v363 = vunpack.c.h.b16 %v78
    %v364 = vunpack.c.l.b16 %v79
    %v365 = vunpack.c.h.b16 %v79
    %v366 = vunpack.c.l.b16 %v80
    %v367 = vunpack.c.h.b16 %v80
    %v368 = vunpack.c.l.b16 %v81
    %v369 = vunpack.c.h.b16 %v81
    %v370 = vunpack.c.l.b16 %v82
    %v371 = vunpack.c.h.b16 %v82
    %v372 = vunpack.c.l.b16 %v83
    %v373 = vunpack.c.h.b16 %v83
    %v374 = vunpack.c.l.b16 %v84
    %v375 = vunpack.c.h.b16 %v84
    %v376 = vunpack.c.l.b16 %v85
    %v377 = vunpack.c.h.b16 %v85
    %v378 = vunpack.c.l.b16 %v86
    %v379 = vunpack.c.h.b16 %v86
    %v380 = vunpack.c.l.b16 %v87
    %v381 = vunpack.c.h.b16 %v87
    %v382 = vunpack.c.l.b16 %v88
    %v383 = vunpack.c.h.b16 %v88
    %v384 = vunpack.c.l.b16 %v89
    %v385 = vunpack.c.h.b16 %v89
    %v386 = vunpack.c.l.b16 %v90
    %v387 = vunpack.c.h.b16 %v90
    %v388 = vunpack.c.l.b16 %v91
    %v389 = vunpack.c.h.b16 %v91
    %v390 = vunpack.c.l.b16 %v92
    %v391 = vunpack.c.h.b16 %v92
    %v392 = vunpack.c.l.b16 %v93
    %v393 = vunpack.c.h.b16 %v93
    %v394 = vunpack.c.l.b16 %v94
    %v395 = vunpack.c.h.b16 %v94
    %v396 = vunpack.c.l.b16 %v95
    %v397 = vunpack.c.h.b16 %v95
    %v398 = vunpack.c.l.b16 %v96
    %v399 = vunpack.c.h.b16 %v96
    %v400 = vunpack.c.l.b16 %v97
    %v401 = vunpack.c.h.b16 %v97
    %v402 = vunpack.c.l.b16 %v98
    %v403 = vunpack.c.h.b16 %v98
    %v404 = vunpack.c.l.b16 %v99
    %v405 = vunpack.c.h.b16 %v99
    %v406 = vunpack.c.l.b16 %v100
    %v407 = vunpack.c.h.b16 %v100
    %v408 = vunpack.c.l.b16 %v101
    %v409 = vunpack.c.h.b16 %v101
    %v410 = vunpack.c.l.b16 %v102
    %v411 = vunpack.c.h.b16 %v102
    %v412 = vunpack.c.l.b16 %v103
    %v413 = vunpack.c.h.b16 %v103
    %v414 = vunpack.c.l.b16 %v104
    %v415 = vunpack.c.h.b16 %v104
    %v416 = vunpack.c.l.b16 %v105
    %v417 = vunpack.c.h.b16 %v105
    %v418 = vunpack.c.l.b16 %v106
    %v419 = vunpack.c.h.b16 %v106
    %v420 = vunpack.c.l.b16 %v107
    %v421 = vunpack.c.h.b16 %v107
    %v422 = vunpack.c.l.b16 %v108
    %v423 = vunpack.c.h.b16 %v108
    %v424 = vunpack.c.l.b16 %v109
    %v425 = vunpack.c.h.b16 %v109
    %v426 = vunpack.c.l.b16 %v110
    %v427 = vunpack.c.h.b16 %v110
    %v428 = vunpack.c.l.b16 %v111
    %v429 = vunpack.c.h.b16 %v111
    %v430 = vunpack.c.l.b16 %v112
    %v431 = vunpack.c.h.b16 %v112
    %v432 = vunpack.c.l.b16 %v113
    %v433 = vunpack.c.h.b16 %v113
    %v434 = vunpack.c.l.b16 %v114
    %v435 = vunpack.c.h.b16 %v114
    %v436 = vunpack.c.l.b16 %v115
    %v437 = vunpack.c.h.b16 %v115
    %v438 = vunpack.c.l.b16 %v116
    %v439 = vunpack.c.h.b16 %v116
    %v440 = vunpack.c.l.b16 %v117
    %v441 = vunpack.c.h.b16 %v117
    %v442 = vunpack.c.l.b16 %v118
    %v443 = vunpack.c.h.b16 %v118
    %v444 = vunpack.c.l.b16 %v119
    %v445 = vunpack.c.h.b16 %v119
    %v446 = vunpack.c.l.b16 %v120
    %v447 = vunpack.c.h.b16 %v120
    %v448 = vunpack.c.l.b16 %v121
    %v449 = vunpack.c.h.b16 %v121
    %v450 = vpack.c.b16 %v276, %v274
    %v451 = vpack.c.b16 %v277, %v275
    %v452 = vpack.c.b16 %v280, %v278
    %v453 = vpack.c.b16 %v281, %v279
    %v454 = vpack.c.b16 %v284, %v282
    %v455 = vpack.c.b16 %v285, %v283
    %v456 = vpack.c.b16 %v288, %v286
    %v457 = vpack.c.b16 %v289, %v287
    %v458 = vpack.c.b16 %v292, %v290
    %v459 = vpack.c.b16 %v293, %v291
    %v460 = vpack.c.b16 %v296, %v294
    %v461 = vpack.c.b16 %v297, %v295
    %v462 = vpack.c.b16 %v300, %v298
    %v463 = vpack.c.b16 %v301, %v299
    %v464 = vpack.c.b16 %v304, %v302
    %v465 = vpack.c.b16 %v305, %v303
    %v466 = vpack.c.b16 %v308, %v306
    %v467 = vpack.c.b16 %v309, %v307
    %v468 = vpack.c.b16 %v312, %v310
    %v469 = vpack.c.b16 %v313, %v311
    %v470 = vpack.c.b16 %v316, %v314
    %v471 = vpack.c.b16 %v317, %v315
    %v472 = vpack.c.b16 %v320, %v318
    %v473 = vpack.c.b16 %v321, %v319
    %v474 = vpack.c.b16 %v324, %v322
    %v475 = vpack.c.b16 %v325, %v323
    %v476 = vpack.c.b16 %v328, %v326
    %v477 = vpack.c.b16 %v329, %v327
    %v478 = vpack.c.b16 %v332, %v330
    %v479 = vpack.c.b16 %v333, %v331
    %v480 = vpack.c.b16 %v336, %v334
    %v481 = vpack.c.b16 %v337, %v335
    %v482 = vpack.c.b16 %v340, %v338
    %v483 = vpack.c.b16 %v341, %v339
    %v484 = vpack.c.b16 %v344, %v342
    %v485 = vpack.c.b16 %v345, %v343
    %v486 = vpack.c.b16 %v348, %v346
    %v487 = vpack.c.b16 %v349, %v347
    %v488 = vpack.c.b16 %v352, %v350
    %v489 = vpack.c.b16 %v353, %v351
    %v490 = vpack.c.b16 %v356, %v354
    %v491 = vpack.c.b16 %v357, %v355
    %v492 = vpack.c.b16 %v360, %v358
    %v493 = vpack.c.b16 %v361, %v359
    %v494 = vpack.c.b16 %v364, %v362
    %v495 = vpack.c.b16 %v365, %v363
    %v496 = vpack.c.b16 %v368, %v366
    %v497 = vpack.c.b16 %v369, %v367
    %v498 = vpack.c.b16 %v372, %v370
    %v499 = vpack.c.b16 %v373, %v371
    %v500 = vpack.c.b16 %v376, %v374
    %v501 = vpack.c.b16 %v377, %v375
    %v502 = vpack.c.b16 %v380, %v378
    %v503 = vpack.c.b16 %v381, %v379
    %v504 = vpack.c.b16 %v384, %v382
    %v505 = vpack.c.b16 %v385, %v383
    %v506 = vpack.c.b16 %v388, %v386
    %v507 = vpack.c.b16 %v389, %v387
    %v508 = vpack.c.b16 %v392, %v390
    %v509 = vpack.c.b16 %v393, %v391
    %v510 = vpack.c.b16 %v396, %v394
    %v511 = vpack.c.b16 %v397, %v395
    %v512 = vpack.c.b16 %v400, %v398
    %v513 = vpack.c.b16 %v401, %v399
    %v514 = vpack.c.b16 %v404, %v402
    %v515 = vpack.c.b16 %v405, %v403
    %v516 = vpack.c.b16 %v408, %v406
    %v517 = vpack.c.b16 %v409, %v407
    %v518 = vpack.c.b16 %v412, %v410
    %v519 = vpack.c.b16 %v413, %v411
    %v520 = vpack.c.b16 %v416, %v414
    %v521 = vpack.c.b16 %v417, %v415
    %v522 = vpack.c.b16 %v420, %v418
    %v523 = vpack.c.b16 %v421, %v419
    %v524 = vpack.c.b16 %v424, %v422
    %v525 = vpack.c.b16 %v425, %v423
    %v526 = vpack.c.b16 %v428, %v426
    %v527 = vpack.c.b16 %v429, %v427
    %v528 = vpack.c.b16 %v432, %v430
    %v529 = vpack.c.b16 %v433, %v431
    %v530 = vpack.c.b16 %v436, %v434
    %v531 = vpack.c.b16 %v437, %v435
    %v532 = vpack.c.b16 %v440, %v438
    %v533 = vpack.c.b16 %v441, %v439
    %v534 = vpack.c.b16 %v444, %v442
    %v535 = vpack.c.b16 %v445, %v443
    %v536 = vpack.c.b16 %v448, %v446
    %v537 = vpack.c.b16 %v449, %v447
    %v690 = vunpack.c.l.b16 %v122
    %v691 = vunpack.c.h.b16 %v122
    %v692 = vunpack.c.l.b16 %v123
    %v693 = vunpack.c.h.b16 %v123
    %v694 = vunpack.c.l.b16 %v124
    %v695 = vunpack.c.h.b16 %v124
    %v696 = vunpack.c.l.b16 %v125
    %v697 = vunpack.c.h.b16 %v125
    %v698 = vunpack.c.l.b16 %v126
    %v699 = vunpack.c.h.b16 %v126
    %v700 = vunpack.c.l.b16 %v127
    %v701 = vunpack.c.h.b16 %v127
    %v702 = vunpack.c.l.b16 %v128
    %v703 = vunpack.c.h.b16 %v128
    %v704 = vunpack.c.l.b16 %v129
    %v705 = vunpack.c.h.b16 %v129
    %v706 = vunpack.c.l.b16 %v130
    %v707 = vunpack.c.h.b16 %v130
    %v708 = vunpack.c.l.b16 %v131
    %v709 = vunpack.c.h.b16 %v131
    %v710 = vunpack.c.l.b16 %v132
    %v711 = vunpack.c.h.b16 %v132
    %v712 = vunpack.c.l.b16 %v133
    %v713 = vunpack.c.h.b16 %v133
    %v714 = vunpack.c.l.b16 %v134
    %v715 = vunpack.c.h.b16 %v134
    %v716 = vunpack.c.l.b16 %v135
    %v717 = vunpack.c.h.b16 %v135
    %v718 = vunpack.c.l.b16 %v136
    %v719 = vunpack.c.h.b16 %v136
    %v720 = vunpack.c.l.b16 %v137
    %v721 = vunpack.c.h.b16 %v137
    %v722 = vunpack.c.l.b16 %v138
    %v723 = vunpack.c.h.b16 %v138
    %v724 = vunpack.c.l.b16 %v139
    %v725 = vunpack.c.h.b16 %v139
    %v726 = vunpack.c.l.b16 %v140
    %v727 = vunpack.c.h.b16 %v140
    %v728 = vunpack.c.l.b16 %v141
    %v729 = vunpack.c.h.b16 %v141
    %v730 = vunpack.c.l.b16 %v142
    %v731 = vunpack.c.h.b16 %v142
    %v732 = vunpack.c.l.b16 %v143
    %v733 = vunpack.c.h.b16 %v143
    %v734 = vunpack.c.l.b16 %v144
    %v735 = vunpack.c.h.b16 %v144
    %v736 = vunpack.c.l.b16 %v145
    %v737 = vunpack.c.h.b16 %v145
    %v738 = vunpack.c.l.b16 %v146
    %v739 = vunpack.c.h.b16 %v146
    %v740 = vunpack.c.l.b16 %v147
    %v741 = vunpack.c.h.b16 %v147
    %v742 = vunpack.c.l.b16 %v148
    %v743 = vunpack.c.h.b16 %v148
    %v744 = vunpack.c.l.b16 %v149
    %v745 = vunpack.c.h.b16 %v149
    %v746 = vunpack.c.l.b16 %v150
    %v747 = vunpack.c.h.b16 %v150
    %v748 = vunpack.c.l.b16 %v151
    %v749 = vunpack.c.h.b16 %v151
    %v750 = vunpack.c.l.b16 %v152
    %v751 = vunpack.c.h.b16 %v152
    %v752 = vunpack.c.l.b16 %v153
    %v753 = vunpack.c.h.b16 %v153
    %v754 = vunpack.c.l.b16 %v154
    %v755 = vunpack.c.h.b16 %v154
    %v756 = vunpack.c.l.b16 %v155
    %v757 = vunpack.c.h.b16 %v155
    %v758 = vunpack.c.l.b16 %v156
    %v759 = vunpack.c.h.b16 %v156
    %v760 = vunpack.c.l.b16 %v157
    %v761 = vunpack.c.h.b16 %v157
    %v762 = vunpack.c.l.b16 %v158
    %v763 = vunpack.c.h.b16 %v158
    %v764 = vunpack.c.l.b16 %v159
    %v765 = vunpack.c.h.b16 %v159
    %v766 = vunpack.c.l.b16 %v160
    %v767 = vunpack.c.h.b16 %v160
    %v768 = vunpack.c.l.b16 %v161
    %v769 = vunpack.c.h.b16 %v161
    %v770 = vunpack.c.l.b16 %v162
    %v771 = vunpack.c.h.b16 %v162
    %v772 = vunpack.c.l.b16 %v163
    %v773 = vunpack.c.h.b16 %v163
    %v774 = vunpack.c.l.b16 %v164
    %v775 = vunpack.c.h.b16 %v164
    %v776 = vunpack.c.l.b16 %v165
    %v777 = vunpack.c.h.b16 %v165
    %v778 = vunpack.c.l.b16 %v166
    %v779 = vunpack.c.h.b16 %v166
    %v780 = vunpack.c.l.b16 %v167
    %v781 = vunpack.c.h.b16 %v167
    %v782 = vunpack.c.l.b16 %v168
    %v783 = vunpack.c.h.b16 %v168
    %v784 = vunpack.c.l.b16 %v169
    %v785 = vunpack.c.h.b16 %v169
    %v786 = vunpack.c.l.b16 %v170
    %v787 = vunpack.c.h.b16 %v170
    %v788 = vunpack.c.l.b16 %v171
    %v789 = vunpack.c.h.b16 %v171
    %v790 = vunpack.c.l.b16 %v172
    %v791 = vunpack.c.h.b16 %v172
    %v792 = vunpack.c.l.b16 %v173
    %v793 = vunpack.c.h.b16 %v173
    %v794 = vunpack.c.l.b16 %v174
    %v795 = vunpack.c.h.b16 %v174
    %v796 = vunpack.c.l.b16 %v175
    %v797 = vunpack.c.h.b16 %v175
    %v798 = vunpack.c.l.b16 %v176
    %v799 = vunpack.c.h.b16 %v176
    %v800 = vunpack.c.l.b16 %v177
    %v801 = vunpack.c.h.b16 %v177
    %v802 = vunpack.c.l.b16 %v178
    %v803 = vunpack.c.h.b16 %v178
    %v804 = vunpack.c.l.b16 %v179
    %v805 = vunpack.c.h.b16 %v179
    %v806 = vunpack.c.l.b16 %v180
    %v807 = vunpack.c.h.b16 %v180
    %v808 = vunpack.c.l.b16 %v181
    %v809 = vunpack.c.h.b16 %v181
    %v810 = vunpack.c.l.b16 %v182
    %v811 = vunpack.c.h.b16 %v182
    %v812 = vunpack.c.l.b16 %v183
    %v813 = vunpack.c.h.b16 %v183
    %v814 = vunpack.c.l.b16 %v184
    %v815 = vunpack.c.h.b16 %v184
    %v816 = vunpack.c.l.b16 %v185
    %v817 = vunpack.c.h.b16 %v185
    %v818 = vpack.c.b16 %v694, %v690
    %v819 = vpack.c.b16 %v695, %v691
    %v820 = vpack.c.b16 %v696, %v692
    %v821 = vpack.c.b16 %v697, %v693
    %v822 = vpack.c.b16 %v702, %v698
    %v823 = vpack.c.b16 %v703, %v699
    %v824 = vpack.c.b16 %v704, %v700
    %v825 = vpack.c.b16 %v705, %v701
    %v826 = vpack.c.b16 %v710, %v706
    %v827 = vpack.c.b16 %v711, %v707
    %v828 = vpack.c.b16 %v712, %v708
    %v829 = vpack.c.b16 %v713, %v709
    %v830 = vpack.c.b16 %v718, %v714
    %v831 = vpack.c.b16 %v719, %v715
    %v832 = vpack.c.b16 %v720, %v716
    %v833 = vpack.c.b16 %v721, %v717
    %v834 = vpack.c.b16 %v726, %v722
    %v835 = vpack.c.b16 %v727, %v723
    %v836 = vpack.c.b16 %v728, %v724
    %v837 = vpack.c.b16 %v729, %v725
    %v838 = vpack.c.b16 %v734, %v730
    %v839 = vpack.c.b16 %v735, %v731
    %v840 = vpack.c.b16 %v736, %v732
    %v841 = vpack.c.b16 %v737, %v733
    %v842 = vpack.c.b16 %v742, %v738
    %v843 = vpack.c.b16 %v743, %v739
    %v844 = vpack.c.b16 %v744, %v740
    %v845 = vpack.c.b16 %v745, %v741
    %v846 = vpack.c.b16 %v750, %v746
    %v847 = vpack.c.b16 %v751, %v747
    %v848 = vpack.c.b16 %v752, %v748
    %v849 = vpack.c.b16 %v753, %v749
    %v850 = vpack.c.b16 %v758, %v754
    %v851 = vpack.c.b16 %v759, %v755
    %v852 = vpack.c.b16 %v760, %v756
    %v853 = vpack.c.b16 %v761, %v757
    %v854 = vpack.c.b16 %v766, %v762
    %v855 = vpack.c.b16 %v767, %v763
    %v856 = vpack.c.b16 %v768, %v764
    %v857 = vpack.c.b16 %v769, %v765
    %v858 = vpack.c.b16 %v774, %v770
    %v859 = vpack.c.b16 %v775, %v771
    %v860 = vpack.c.b16 %v776, %v772
    %v861 = vpack.c.b16 %v777, %v773
    %v862 = vpack.c.b16 %v782, %v778
    %v863 = vpack.c.b16 %v783, %v779
    %v864 = vpack.c.b16 %v784, %v780
    %v865 = vpack.c.b16 %v785, %v781
    %v866 = vpack.c.b16 %v790, %v786
    %v867 = vpack.c.b16 %v791, %v787
    %v868 = vpack.c.b16 %v792, %v788
    %v869 = vpack.c.b16 %v793, %v789
    %v870 = vpack.c.b16 %v798, %v794
    %v871 = vpack.c.b16 %v799, %v795
    %v872 = vpack.c.b16 %v800, %v796
    %v873 = vpack.c.b16 %v801, %v797
    %v874 = vpack.c.b16 %v806, %v802
    %v875 = vpack.c.b16 %v807, %v803
    %v876 = vpack.c.b16 %v808, %v804
    %v877 = vpack.c.b16 %v809, %v805
    %v878 = vpack.c.b16 %v814, %v810
    %v879 = vpack.c.b16 %v815, %v811
    %v880 = vpack.c.b16 %v816, %v812
    %v881 = vpack.c.b16 %v817, %v813
    %946 = vmatprep.subr.bf16.mxu0 %v819
    %947 = vmatpush1.bf16.msra.mxu0 %v818
    %948 = vmatprep.subr.bf16.mxu0 %v823
    %949 = vmatpush1.bf16.msra.mxu0 %v822
    %950 = vmatprep.subr.bf16.mxu0 %v827
    %951 = vmatpush1.bf16.msra.mxu0 %v826
    %952 = vmatprep.subr.bf16.mxu0 %v831
    %953 = vmatpush1.bf16.msra.mxu0 %v830
    %954 = vmatprep.subr.bf16.mxu0 %v835
    %955 = vmatpush1.bf16.msra.mxu0 %v834
    %956 = vmatprep.subr.bf16.mxu0 %v839
    %957 = vmatpush1.bf16.msra.mxu0 %v838
    %958 = vmatprep.subr.bf16.mxu0 %v843
    %959 = vmatpush1.bf16.msra.mxu0 %v842
    %960 = vmatprep.subr.bf16.mxu0 %v847
    %961 = vmatpush1.bf16.msra.mxu0 %v846
    %962 = vmatprep.subr.bf16.mxu0 %v851
    %963 = vmatpush1.bf16.msra.mxu0 %v850
    %964 = vmatprep.subr.bf16.mxu0 %v855
    %965 = vmatpush1.bf16.msra.mxu0 %v854
    %966 = vmatprep.subr.bf16.mxu0 %v859
    %967 = vmatpush1.bf16.msra.mxu0 %v858
    %968 = vmatprep.subr.bf16.mxu0 %v863
    %969 = vmatpush1.bf16.msra.mxu0 %v862
    %970 = vmatprep.subr.bf16.mxu0 %v867
    %971 = vmatpush1.bf16.msra.mxu0 %v866
    %972 = vmatprep.subr.bf16.mxu0 %v871
    %973 = vmatpush1.bf16.msra.mxu0 %v870
    %974 = vmatprep.subr.bf16.mxu0 %v875
    %975 = vmatpush1.bf16.msra.mxu0 %v874
    %976 = vmatprep.subr.bf16.mxu0 %v879
    %977 = vmatpush1.bf16.msra.mxu0 %v878
    %978 = vmatprep.mubr.bf16.mxu0 %v451
    %979 = vmatmul.mubr.bf16.gmra.mrb[0].mxu0 %v450
    %v980 = vpop.f32.mrb[0].mxu0
    %v981 = vadd.f32 0.0, %v980
    %v982 = vpop.f32.mrb[0].mxu0
    %v983 = vadd.f32 0.0, %v982
    %v984 = vpop.f32.mrb[0].mxu0
    %v985 = vadd.f32 0.0, %v984
    %v986 = vpop.f32.mrb[0].mxu0
    %v987 = vadd.f32 0.0, %v986
    %988 = vmatprep.mubr.bf16.mxu0 %v453
    %989 = vmatmul.mubr.bf16.gmra.mrb[0].mxu0 %v452
    %v990 = vpop.f32.mrb[0].mxu0
    %v991 = vadd.f32 0.0, %v990
    %v992 = vpop.f32.mrb[0].mxu0
    %v993 = vadd.f32 0.0, %v992
    %v994 = vpop.f32.mrb[0].mxu0
    %v995 = vadd.f32 0.0, %v994
    %v996 = vpop.f32.mrb[0].mxu0
    %v997 = vadd.f32 0.0, %v996
    %998 = vmatprep.mubr.bf16.mxu0 %v455
    %999 = vmatmul.mubr.bf16.gmra.mrb[0].mxu0 %v454
    %v1000 = vpop.f32.mrb[0].mxu0
    %v1001 = vadd.f32 0.0, %v1000
    %v1002 = vpop.f32.mrb[0].mxu0
    %v1003 = vadd.f32 0.0, %v1002
    %v1004 = vpop.f32.mrb[0].mxu0
    %v1005 = vadd.f32 0.0, %v1004
    %v1006 = vpop.f32.mrb[0].mxu0
    %v1007 = vadd.f32 0.0, %v1006
    %1008 = vmatprep.mubr.bf16.mxu0 %v457
    %1009 = vmatmul.mubr.bf16.gmra.mrb[0].mxu0 %v456
    %v1010 = vpop.f32.mrb[0].mxu0
    %v1011 = vadd.f32 0.0, %v1010
    %v1012 = vpop.f32.mrb[0].mxu0
    %v1013 = vadd.f32 0.0, %v1012
    %v1014 = vpop.f32.mrb[0].mxu0
    %v1015 = vadd.f32 0.0, %v1014
    %v1016 = vpop.f32.mrb[0].mxu0
    %v1017 = vadd.f32 0.0, %v1016
    %1018 = vmatprep.mubr.bf16.mxu0 %v459
    %1019 = vmatmul.mubr.bf16.gmra.mrb[0].mxu0 %v458
    %v1020 = vpop.f32.mrb[0].mxu0
    %v1021 = vadd.f32 0.0, %v1020
    %v1022 = vpop.f32.mrb[0].mxu0
    %v1023 = vadd.f32 0.0, %v1022
    %v1024 = vpop.f32.mrb[0].mxu0
    %v1025 = vadd.f32 0.0, %v1024
    %v1026 = vpop.f32.mrb[0].mxu0
    %v1027 = vadd.f32 0.0, %v1026
    %1028 = vmatprep.mubr.bf16.mxu0 %v461
    %1029 = vmatmul.mubr.bf16.gmra.mrb[0].mxu0 %v460
    %v1030 = vpop.f32.mrb[0].mxu0
    %v1031 = vadd.f32 0.0, %v1030
    %v1032 = vpop.f32.mrb[0].mxu0
    %v1033 = vadd.f32 0.0, %v1032
    %v1034 = vpop.f32.mrb[0].mxu0
    %v1035 = vadd.f32 0.0, %v1034
    %v1036 = vpop.f32.mrb[0].mxu0
    %v1037 = vadd.f32 0.0, %v1036
    %1038 = vmatprep.mubr.bf16.mxu0 %v463
    %1039 = vmatmul.mubr.bf16.gmra.mrb[0].mxu0 %v462
    %v1040 = vpop.f32.mrb[0].mxu0
    %v1041 = vadd.f32 0.0, %v1040
    %v1042 = vpop.f32.mrb[0].mxu0
    %v1043 = vadd.f32 0.0, %v1042
    %v1044 = vpop.f32.mrb[0].mxu0
    %v1045 = vadd.f32 0.0, %v1044
    %v1046 = vpop.f32.mrb[0].mxu0
    %v1047 = vadd.f32 0.0, %v1046
    %1048 = vmatprep.mubr.bf16.mxu0 %v465
    %1049 = vmatmul.mubr.bf16.gmra.mrb[0].mxu0 %v464
    %v1050 = vpop.f32.mrb[0].mxu0
    %v1051 = vadd.f32 0.0, %v1050
    %v1052 = vpop.f32.mrb[0].mxu0
    %v1053 = vadd.f32 0.0, %v1052
    %v1054 = vpop.f32.mrb[0].mxu0
    %v1055 = vadd.f32 0.0, %v1054
    %v1056 = vpop.f32.mrb[0].mxu0
    %v1057 = vadd.f32 0.0, %v1056
    %1058 = vmatprep.mubr.bf16.mxu0 %v467
    %1059 = vmatmul.mubr.bf16.gmra.mrb[0].mxu0 %v466
    %v1060 = vpop.f32.mrb[0].mxu0
    %v1061 = vadd.f32 0.0, %v1060
    %v1062 = vpop.f32.mrb[0].mxu0
    %v1063 = vadd.f32 0.0, %v1062
    %v1064 = vpop.f32.mrb[0].mxu0
    %v1065 = vadd.f32 0.0, %v1064
    %v1066 = vpop.f32.mrb[0].mxu0
    %v1067 = vadd.f32 0.0, %v1066
    %1068 = vmatprep.mubr.bf16.mxu0 %v469
    %1069 = vmatmul.mubr.bf16.gmra.mrb[0].mxu0 %v468
    %v1070 = vpop.f32.mrb[0].mxu0
    %v1071 = vadd.f32 0.0, %v1070
    %v1072 = vpop.f32.mrb[0].mxu0
    %v1073 = vadd.f32 0.0, %v1072
    %v1074 = vpop.f32.mrb[0].mxu0
    %v1075 = vadd.f32 0.0, %v1074
    %v1076 = vpop.f32.mrb[0].mxu0
    %v1077 = vadd.f32 0.0, %v1076
    %1078 = vmatprep.mubr.bf16.mxu0 %v471
    %1079 = vmatmul.mubr.bf16.gmra.mrb[0].mxu0 %v470
    %v1080 = vpop.f32.mrb[0].mxu0
    %v1081 = vadd.f32 0.0, %v1080
    %v1082 = vpop.f32.mrb[0].mxu0
    %v1083 = vadd.f32 0.0, %v1082
    %v1084 = vpop.f32.mrb[0].mxu0
    %v1085 = vadd.f32 0.0, %v1084
    %v1086 = vpop.f32.mrb[0].mxu0
    %v1087 = vadd.f32 0.0, %v1086
    %1088 = vmatprep.mubr.bf16.mxu0 %v473
    %1089 = vmatmul.mubr.bf16.gmra.mrb[0].mxu0 %v472
    %v1090 = vpop.f32.mrb[0].mxu0
    %v1091 = vadd.f32 0.0, %v1090
    %v1092 = vpop.f32.mrb[0].mxu0
    %v1093 = vadd.f32 0.0, %v1092
    %v1094 = vpop.f32.mrb[0].mxu0
    %v1095 = vadd.f32 0.0, %v1094
    %v1096 = vpop.f32.mrb[0].mxu0
    %v1097 = vadd.f32 0.0, %v1096
    %1098 = vmatprep.mubr.bf16.mxu0 %v475
    %1099 = vmatmul.mubr.bf16.gmra.mrb[0].mxu0 %v474
    %v1100 = vpop.f32.mrb[0].mxu0
    %v1101 = vadd.f32 0.0, %v1100
    %v1102 = vpop.f32.mrb[0].mxu0
    %v1103 = vadd.f32 0.0, %v1102
    %v1104 = vpop.f32.mrb[0].mxu0
    %v1105 = vadd.f32 0.0, %v1104
    %v1106 = vpop.f32.mrb[0].mxu0
    %v1107 = vadd.f32 0.0, %v1106
    %1108 = vmatprep.mubr.bf16.mxu0 %v477
    %1109 = vmatmul.mubr.bf16.gmra.mrb[0].mxu0 %v476
    %v1110 = vpop.f32.mrb[0].mxu0
    %v1111 = vadd.f32 0.0, %v1110
    %v1112 = vpop.f32.mrb[0].mxu0
    %v1113 = vadd.f32 0.0, %v1112
    %v1114 = vpop.f32.mrb[0].mxu0
    %v1115 = vadd.f32 0.0, %v1114
    %v1116 = vpop.f32.mrb[0].mxu0
    %v1117 = vadd.f32 0.0, %v1116
    %1118 = vmatprep.mubr.bf16.mxu0 %v479
    %1119 = vmatmul.mubr.bf16.gmra.mrb[0].mxu0 %v478
    %v1120 = vpop.f32.mrb[0].mxu0
    %v1121 = vadd.f32 0.0, %v1120
    %v1122 = vpop.f32.mrb[0].mxu0
    %v1123 = vadd.f32 0.0, %v1122
    %v1124 = vpop.f32.mrb[0].mxu0
    %v1125 = vadd.f32 0.0, %v1124
    %v1126 = vpop.f32.mrb[0].mxu0
    %v1127 = vadd.f32 0.0, %v1126
    %1128 = vmatprep.mubr.bf16.mxu0 %v481
    %1129 = vmatmul.mubr.bf16.gmra.mrb[0].mxu0 %v480
    %v1130 = vpop.f32.mrb[0].mxu0
    %v1131 = vadd.f32 0.0, %v1130
    %v1132 = vpop.f32.mrb[0].mxu0
    %v1133 = vadd.f32 0.0, %v1132
    %v1134 = vpop.f32.mrb[0].mxu0
    %v1135 = vadd.f32 0.0, %v1134
    %v1136 = vpop.f32.mrb[0].mxu0
    %v1137 = vadd.f32 0.0, %v1136
    %1138 = vmatprep.mubr.bf16.mxu0 %v483
    %1139 = vmatmul.mubr.bf16.gmra.mrb[0].mxu0 %v482
    %v1140 = vpop.f32.mrb[0].mxu0
    %v1141 = vadd.f32 0.0, %v1140
    %v1142 = vpop.f32.mrb[0].mxu0
    %v1143 = vadd.f32 0.0, %v1142
    %v1144 = vpop.f32.mrb[0].mxu0
    %v1145 = vadd.f32 0.0, %v1144
    %v1146 = vpop.f32.mrb[0].mxu0
    %v1147 = vadd.f32 0.0, %v1146
    %1148 = vmatprep.mubr.bf16.mxu0 %v485
    %1149 = vmatmul.mubr.bf16.gmra.mrb[0].mxu0 %v484
    %v1150 = vpop.f32.mrb[0].mxu0
    %v1151 = vadd.f32 0.0, %v1150
    %v1152 = vpop.f32.mrb[0].mxu0
    %v1153 = vadd.f32 0.0, %v1152
    %v1154 = vpop.f32.mrb[0].mxu0
    %v1155 = vadd.f32 0.0, %v1154
    %v1156 = vpop.f32.mrb[0].mxu0
    %v1157 = vadd.f32 0.0, %v1156
    %1158 = vmatprep.mubr.bf16.mxu0 %v487
    %1159 = vmatmul.mubr.bf16.gmra.mrb[0].mxu0 %v486
    %v1160 = vpop.f32.mrb[0].mxu0
    %v1161 = vadd.f32 0.0, %v1160
    %v1162 = vpop.f32.mrb[0].mxu0
    %v1163 = vadd.f32 0.0, %v1162
    %v1164 = vpop.f32.mrb[0].mxu0
    %v1165 = vadd.f32 0.0, %v1164
    %v1166 = vpop.f32.mrb[0].mxu0
    %v1167 = vadd.f32 0.0, %v1166
    %1168 = vmatprep.mubr.bf16.mxu0 %v489
    %1169 = vmatmul.mubr.bf16.gmra.mrb[0].mxu0 %v488
    %v1170 = vpop.f32.mrb[0].mxu0
    %v1171 = vadd.f32 0.0, %v1170
    %v1172 = vpop.f32.mrb[0].mxu0
    %v1173 = vadd.f32 0.0, %v1172
    %v1174 = vpop.f32.mrb[0].mxu0
    %v1175 = vadd.f32 0.0, %v1174
    %v1176 = vpop.f32.mrb[0].mxu0
    %v1177 = vadd.f32 0.0, %v1176
    %1178 = vmatprep.mubr.bf16.mxu0 %v491
    %1179 = vmatmul.mubr.bf16.gmra.mrb[0].mxu0 %v490
    %v1180 = vpop.f32.mrb[0].mxu0
    %v1181 = vadd.f32 0.0, %v1180
    %v1182 = vpop.f32.mrb[0].mxu0
    %v1183 = vadd.f32 0.0, %v1182
    %v1184 = vpop.f32.mrb[0].mxu0
    %v1185 = vadd.f32 0.0, %v1184
    %v1186 = vpop.f32.mrb[0].mxu0
    %v1187 = vadd.f32 0.0, %v1186
    %1188 = vmatprep.mubr.bf16.mxu0 %v493
    %1189 = vmatmul.mubr.bf16.gmra.mrb[0].mxu0 %v492
    %v1190 = vpop.f32.mrb[0].mxu0
    %v1191 = vadd.f32 0.0, %v1190
    %v1192 = vpop.f32.mrb[0].mxu0
    %v1193 = vadd.f32 0.0, %v1192
    %v1194 = vpop.f32.mrb[0].mxu0
    %v1195 = vadd.f32 0.0, %v1194
    %v1196 = vpop.f32.mrb[0].mxu0
    %v1197 = vadd.f32 0.0, %v1196
    %1198 = vmatprep.mubr.bf16.mxu0 %v495
    %1199 = vmatmul.mubr.bf16.gmra.mrb[0].mxu0 %v494
    %v1200 = vpop.f32.mrb[0].mxu0
    %v1201 = vadd.f32 0.0, %v1200
    %v1202 = vpop.f32.mrb[0].mxu0
    %v1203 = vadd.f32 0.0, %v1202
    %v1204 = vpop.f32.mrb[0].mxu0
    %v1205 = vadd.f32 0.0, %v1204
    %v1206 = vpop.f32.mrb[0].mxu0
    %v1207 = vadd.f32 0.0, %v1206
    %1208 = vmatprep.mubr.bf16.mxu0 %v497
    %1209 = vmatmul.mubr.bf16.gmra.mrb[0].mxu0 %v496
    %v1210 = vpop.f32.mrb[0].mxu0
    %v1211 = vadd.f32 0.0, %v1210
    %v1212 = vpop.f32.mrb[0].mxu0
    %v1213 = vadd.f32 0.0, %v1212
    %v1214 = vpop.f32.mrb[0].mxu0
    %v1215 = vadd.f32 0.0, %v1214
    %v1216 = vpop.f32.mrb[0].mxu0
    %v1217 = vadd.f32 0.0, %v1216
    %1218 = vmatprep.mubr.bf16.mxu0 %v499
    %1219 = vmatmul.mubr.bf16.gmra.mrb[0].mxu0 %v498
    %v1220 = vpop.f32.mrb[0].mxu0
    %v1221 = vadd.f32 0.0, %v1220
    %v1222 = vpop.f32.mrb[0].mxu0
    %v1223 = vadd.f32 0.0, %v1222
    %v1224 = vpop.f32.mrb[0].mxu0
    %v1225 = vadd.f32 0.0, %v1224
    %v1226 = vpop.f32.mrb[0].mxu0
    %v1227 = vadd.f32 0.0, %v1226
    %1228 = vmatprep.mubr.bf16.mxu0 %v501
    %1229 = vmatmul.mubr.bf16.gmra.mrb[0].mxu0 %v500
    %v1230 = vpop.f32.mrb[0].mxu0
    %v1231 = vadd.f32 0.0, %v1230
    %v1232 = vpop.f32.mrb[0].mxu0
    %v1233 = vadd.f32 0.0, %v1232
    %v1234 = vpop.f32.mrb[0].mxu0
    %v1235 = vadd.f32 0.0, %v1234
    %v1236 = vpop.f32.mrb[0].mxu0
    %v1237 = vadd.f32 0.0, %v1236
    %1238 = vmatprep.mubr.bf16.mxu0 %v503
    %1239 = vmatmul.mubr.bf16.gmra.mrb[0].mxu0 %v502
    %v1240 = vpop.f32.mrb[0].mxu0
    %v1241 = vadd.f32 0.0, %v1240
    %v1242 = vpop.f32.mrb[0].mxu0
    %v1243 = vadd.f32 0.0, %v1242
    %v1244 = vpop.f32.mrb[0].mxu0
    %v1245 = vadd.f32 0.0, %v1244
    %v1246 = vpop.f32.mrb[0].mxu0
    %v1247 = vadd.f32 0.0, %v1246
    %1248 = vmatprep.mubr.bf16.mxu0 %v505
    %1249 = vmatmul.mubr.bf16.gmra.mrb[0].mxu0 %v504
    %v1250 = vpop.f32.mrb[0].mxu0
    %v1251 = vadd.f32 0.0, %v1250
    %v1252 = vpop.f32.mrb[0].mxu0
    %v1253 = vadd.f32 0.0, %v1252
    %v1254 = vpop.f32.mrb[0].mxu0
    %v1255 = vadd.f32 0.0, %v1254
    %v1256 = vpop.f32.mrb[0].mxu0
    %v1257 = vadd.f32 0.0, %v1256
    %1258 = vmatprep.mubr.bf16.mxu0 %v507
    %1259 = vmatmul.mubr.bf16.gmra.mrb[0].mxu0 %v506
    %v1260 = vpop.f32.mrb[0].mxu0
    %v1261 = vadd.f32 0.0, %v1260
    %v1262 = vpop.f32.mrb[0].mxu0
    %v1263 = vadd.f32 0.0, %v1262
    %v1264 = vpop.f32.mrb[0].mxu0
    %v1265 = vadd.f32 0.0, %v1264
    %v1266 = vpop.f32.mrb[0].mxu0
    %v1267 = vadd.f32 0.0, %v1266
    %1268 = vmatprep.mubr.bf16.mxu0 %v509
    %1269 = vmatmul.mubr.bf16.gmra.mrb[0].mxu0 %v508
    %v1270 = vpop.f32.mrb[0].mxu0
    %v1271 = vadd.f32 0.0, %v1270
    %v1272 = vpop.f32.mrb[0].mxu0
    %v1273 = vadd.f32 0.0, %v1272
    %v1274 = vpop.f32.mrb[0].mxu0
    %v1275 = vadd.f32 0.0, %v1274
    %v1276 = vpop.f32.mrb[0].mxu0
    %v1277 = vadd.f32 0.0, %v1276
    %1278 = vmatprep.mubr.bf16.mxu0 %v511
    %1279 = vmatmul.mubr.bf16.gmra.mrb[0].mxu0 %v510
    %v1280 = vpop.f32.mrb[0].mxu0
    %v1281 = vadd.f32 0.0, %v1280
    %v1282 = vpop.f32.mrb[0].mxu0
    %v1283 = vadd.f32 0.0, %v1282
    %v1284 = vpop.f32.mrb[0].mxu0
    %v1285 = vadd.f32 0.0, %v1284
    %v1286 = vpop.f32.mrb[0].mxu0
    %v1287 = vadd.f32 0.0, %v1286
    %1288 = vmatprep.mubr.bf16.mxu0 %v513
    %1289 = vmatmul.mubr.bf16.gmra.mrb[0].mxu0 %v512
    %v1290 = vpop.f32.mrb[0].mxu0
    %v1291 = vadd.f32 0.0, %v1290
    %v1292 = vpop.f32.mrb[0].mxu0
    %v1293 = vadd.f32 0.0, %v1292
    %v1294 = vpop.f32.mrb[0].mxu0
    %v1295 = vadd.f32 0.0, %v1294
    %v1296 = vpop.f32.mrb[0].mxu0
    %v1297 = vadd.f32 0.0, %v1296
    %1298 = vmatprep.mubr.bf16.mxu0 %v515
    %1299 = vmatmul.mubr.bf16.gmra.mrb[0].mxu0 %v514
    %v1300 = vpop.f32.mrb[0].mxu0
    %v1301 = vadd.f32 0.0, %v1300
    %v1302 = vpop.f32.mrb[0].mxu0
    %v1303 = vadd.f32 0.0, %v1302
    %v1304 = vpop.f32.mrb[0].mxu0
    %v1305 = vadd.f32 0.0, %v1304
    %v1306 = vpop.f32.mrb[0].mxu0
    %v1307 = vadd.f32 0.0, %v1306
    %1308 = vmatprep.mubr.bf16.mxu0 %v517
    %1309 = vmatmul.mubr.bf16.gmra.mrb[0].mxu0 %v516
    %v1310 = vpop.f32.mrb[0].mxu0
    %v1311 = vadd.f32 0.0, %v1310
    %v1312 = vpop.f32.mrb[0].mxu0
    %v1313 = vadd.f32 0.0, %v1312
    %v1314 = vpop.f32.mrb[0].mxu0
    %v1315 = vadd.f32 0.0, %v1314
    %v1316 = vpop.f32.mrb[0].mxu0
    %v1317 = vadd.f32 0.0, %v1316
    %1318 = vmatprep.mubr.bf16.mxu0 %v519
    %1319 = vmatmul.mubr.bf16.gmra.mrb[0].mxu0 %v518
    %v1320 = vpop.f32.mrb[0].mxu0
    %v1321 = vadd.f32 0.0, %v1320
    %v1322 = vpop.f32.mrb[0].mxu0
    %v1323 = vadd.f32 0.0, %v1322
    %v1324 = vpop.f32.mrb[0].mxu0
    %v1325 = vadd.f32 0.0, %v1324
    %v1326 = vpop.f32.mrb[0].mxu0
    %v1327 = vadd.f32 0.0, %v1326
    %1328 = vmatprep.mubr.bf16.mxu0 %v521
    %1329 = vmatmul.mubr.bf16.gmra.mrb[0].mxu0 %v520
    %v1330 = vpop.f32.mrb[0].mxu0
    %v1331 = vadd.f32 0.0, %v1330
    %v1332 = vpop.f32.mrb[0].mxu0
    %v1333 = vadd.f32 0.0, %v1332
    %v1334 = vpop.f32.mrb[0].mxu0
    %v1335 = vadd.f32 0.0, %v1334
    %v1336 = vpop.f32.mrb[0].mxu0
    %v1337 = vadd.f32 0.0, %v1336
    %1338 = vmatprep.mubr.bf16.mxu0 %v523
    %1339 = vmatmul.mubr.bf16.gmra.mrb[0].mxu0 %v522
    %v1340 = vpop.f32.mrb[0].mxu0
    %v1341 = vadd.f32 0.0, %v1340
    %v1342 = vpop.f32.mrb[0].mxu0
    %v1343 = vadd.f32 0.0, %v1342
    %v1344 = vpop.f32.mrb[0].mxu0
    %v1345 = vadd.f32 0.0, %v1344
    %v1346 = vpop.f32.mrb[0].mxu0
    %v1347 = vadd.f32 0.0, %v1346
    %1348 = vmatprep.mubr.bf16.mxu0 %v525
    %1349 = vmatmul.mubr.bf16.gmra.mrb[0].mxu0 %v524
    %v1350 = vpop.f32.mrb[0].mxu0
    %v1351 = vadd.f32 0.0, %v1350
    %v1352 = vpop.f32.mrb[0].mxu0
    %v1353 = vadd.f32 0.0, %v1352
    %v1354 = vpop.f32.mrb[0].mxu0
    %v1355 = vadd.f32 0.0, %v1354
    %v1356 = vpop.f32.mrb[0].mxu0
    %v1357 = vadd.f32 0.0, %v1356
    %1358 = vmatprep.mubr.bf16.mxu0 %v527
    %1359 = vmatmul.mubr.bf16.gmra.mrb[0].mxu0 %v526
    %v1360 = vpop.f32.mrb[0].mxu0
    %v1361 = vadd.f32 0.0, %v1360
    %v1362 = vpop.f32.mrb[0].mxu0
    %v1363 = vadd.f32 0.0, %v1362
    %v1364 = vpop.f32.mrb[0].mxu0
    %v1365 = vadd.f32 0.0, %v1364
    %v1366 = vpop.f32.mrb[0].mxu0
    %v1367 = vadd.f32 0.0, %v1366
    %1368 = vmatprep.mubr.bf16.mxu0 %v529
    %1369 = vmatmul.mubr.bf16.gmra.mrb[0].mxu0 %v528
    %v1370 = vpop.f32.mrb[0].mxu0
    %v1371 = vadd.f32 0.0, %v1370
    %v1372 = vpop.f32.mrb[0].mxu0
    %v1373 = vadd.f32 0.0, %v1372
    %v1374 = vpop.f32.mrb[0].mxu0
    %v1375 = vadd.f32 0.0, %v1374
    %v1376 = vpop.f32.mrb[0].mxu0
    %v1377 = vadd.f32 0.0, %v1376
    %1378 = vmatprep.mubr.bf16.mxu0 %v531
    %1379 = vmatmul.mubr.bf16.gmra.mrb[0].mxu0 %v530
    %v1380 = vpop.f32.mrb[0].mxu0
    %v1381 = vadd.f32 0.0, %v1380
    %v1382 = vpop.f32.mrb[0].mxu0
    %v1383 = vadd.f32 0.0, %v1382
    %v1384 = vpop.f32.mrb[0].mxu0
    %v1385 = vadd.f32 0.0, %v1384
    %v1386 = vpop.f32.mrb[0].mxu0
    %v1387 = vadd.f32 0.0, %v1386
    %1388 = vmatprep.mubr.bf16.mxu0 %v533
    %1389 = vmatmul.mubr.bf16.gmra.mrb[0].mxu0 %v532
    %v1390 = vpop.f32.mrb[0].mxu0
    %v1391 = vadd.f32 0.0, %v1390
    %v1392 = vpop.f32.mrb[0].mxu0
    %v1393 = vadd.f32 0.0, %v1392
    %v1394 = vpop.f32.mrb[0].mxu0
    %v1395 = vadd.f32 0.0, %v1394
    %v1396 = vpop.f32.mrb[0].mxu0
    %v1397 = vadd.f32 0.0, %v1396
    %1398 = vmatprep.mubr.bf16.mxu0 %v535
    %1399 = vmatmul.mubr.bf16.gmra.mrb[0].mxu0 %v534
    %v1400 = vpop.f32.mrb[0].mxu0
    %v1401 = vadd.f32 0.0, %v1400
    %v1402 = vpop.f32.mrb[0].mxu0
    %v1403 = vadd.f32 0.0, %v1402
    %v1404 = vpop.f32.mrb[0].mxu0
    %v1405 = vadd.f32 0.0, %v1404
    %v1406 = vpop.f32.mrb[0].mxu0
    %v1407 = vadd.f32 0.0, %v1406
    %1408 = vmatprep.mubr.bf16.mxu0 %v537
    %1409 = vmatmul.mubr.bf16.gmra.mrb[0].mxu0 %v536
    %v1410 = vpop.f32.mrb[0].mxu0
    %v1411 = vadd.f32 0.0, %v1410
    %v1412 = vpop.f32.mrb[0].mxu0
    %v1413 = vadd.f32 0.0, %v1412
    %v1414 = vpop.f32.mrb[0].mxu0
    %v1415 = vadd.f32 0.0, %v1414
    %v1416 = vpop.f32.mrb[0].mxu0
    %v1417 = vadd.f32 0.0, %v1416
    %1418 = vdwg.mxu0
    %1419 = vmatprep.subr.bf16.mxu0 %v821
    %1420 = vmatpush1.bf16.msra.mxu0 %v820
    %1421 = vmatprep.subr.bf16.mxu0 %v825
    %1422 = vmatpush1.bf16.msra.mxu0 %v824
    %1423 = vmatprep.subr.bf16.mxu0 %v829
    %1424 = vmatpush1.bf16.msra.mxu0 %v828
    %1425 = vmatprep.subr.bf16.mxu0 %v833
    %1426 = vmatpush1.bf16.msra.mxu0 %v832
    %1427 = vmatprep.subr.bf16.mxu0 %v837
    %1428 = vmatpush1.bf16.msra.mxu0 %v836
    %1429 = vmatprep.subr.bf16.mxu0 %v841
    %1430 = vmatpush1.bf16.msra.mxu0 %v840
    %1431 = vmatprep.subr.bf16.mxu0 %v845
    %1432 = vmatpush1.bf16.msra.mxu0 %v844
    %1433 = vmatprep.subr.bf16.mxu0 %v849
    %1434 = vmatpush1.bf16.msra.mxu0 %v848
    %1435 = vmatprep.subr.bf16.mxu0 %v853
    %1436 = vmatpush1.bf16.msra.mxu0 %v852
    %1437 = vmatprep.subr.bf16.mxu0 %v857
    %1438 = vmatpush1.bf16.msra.mxu0 %v856
    %1439 = vmatprep.subr.bf16.mxu0 %v861
    %1440 = vmatpush1.bf16.msra.mxu0 %v860
    %1441 = vmatprep.subr.bf16.mxu0 %v865
    %1442 = vmatpush1.bf16.msra.mxu0 %v864
    %1443 = vmatprep.subr.bf16.mxu0 %v869
    %1444 = vmatpush1.bf16.msra.mxu0 %v868
    %1445 = vmatprep.subr.bf16.mxu0 %v873
    %1446 = vmatpush1.bf16.msra.mxu0 %v872
    %1447 = vmatprep.subr.bf16.mxu0 %v877
    %1448 = vmatpush1.bf16.msra.mxu0 %v876
    %1449 = vmatprep.subr.bf16.mxu0 %v881
    %1450 = vmatpush1.bf16.msra.mxu0 %v880
    %1451 = vmatprep.mubr.bf16.mxu0 %v451
    %1452 = vmatmul.mubr.bf16.gmra.mrb[0].mxu0 %v450
    %v1453 = vpop.f32.mrb[0].mxu0
    %v1454 = vadd.f32 0.0, %v1453
    %v1455 = vpop.f32.mrb[0].mxu0
    %v1456 = vadd.f32 0.0, %v1455
    %v1457 = vpop.f32.mrb[0].mxu0
    %v1458 = vadd.f32 0.0, %v1457
    %v1459 = vpop.f32.mrb[0].mxu0
    %v1460 = vadd.f32 0.0, %v1459
    %1461 = vmatprep.mubr.bf16.mxu0 %v453
    %1462 = vmatmul.mubr.bf16.gmra.mrb[0].mxu0 %v452
    %v1463 = vpop.f32.mrb[0].mxu0
    %v1464 = vadd.f32 0.0, %v1463
    %v1465 = vpop.f32.mrb[0].mxu0
    %v1466 = vadd.f32 0.0, %v1465
    %v1467 = vpop.f32.mrb[0].mxu0
    %v1468 = vadd.f32 0.0, %v1467
    %v1469 = vpop.f32.mrb[0].mxu0
    %v1470 = vadd.f32 0.0, %v1469
    %1471 = vmatprep.mubr.bf16.mxu0 %v455
    %1472 = vmatmul.mubr.bf16.gmra.mrb[0].mxu0 %v454
    %v1473 = vpop.f32.mrb[0].mxu0
    %v1474 = vadd.f32 0.0, %v1473
    %v1475 = vpop.f32.mrb[0].mxu0
    %v1476 = vadd.f32 0.0, %v1475
    %v1477 = vpop.f32.mrb[0].mxu0
    %v1478 = vadd.f32 0.0, %v1477
    %v1479 = vpop.f32.mrb[0].mxu0
    %v1480 = vadd.f32 0.0, %v1479
    %1481 = vmatprep.mubr.bf16.mxu0 %v457
    %1482 = vmatmul.mubr.bf16.gmra.mrb[0].mxu0 %v456
    %v1483 = vpop.f32.mrb[0].mxu0
    %v1484 = vadd.f32 0.0, %v1483
    %v1485 = vpop.f32.mrb[0].mxu0
    %v1486 = vadd.f32 0.0, %v1485
    %v1487 = vpop.f32.mrb[0].mxu0
    %v1488 = vadd.f32 0.0, %v1487
    %v1489 = vpop.f32.mrb[0].mxu0
    %v1490 = vadd.f32 0.0, %v1489
    %1491 = vmatprep.mubr.bf16.mxu0 %v459
    %1492 = vmatmul.mubr.bf16.gmra.mrb[0].mxu0 %v458
    %v1493 = vpop.f32.mrb[0].mxu0
    %v1494 = vadd.f32 0.0, %v1493
    %v1495 = vpop.f32.mrb[0].mxu0
    %v1496 = vadd.f32 0.0, %v1495
    %v1497 = vpop.f32.mrb[0].mxu0
    %v1498 = vadd.f32 0.0, %v1497
    %v1499 = vpop.f32.mrb[0].mxu0
    %v1500 = vadd.f32 0.0, %v1499
    %1501 = vmatprep.mubr.bf16.mxu0 %v461
    %1502 = vmatmul.mubr.bf16.gmra.mrb[0].mxu0 %v460
    %v1503 = vpop.f32.mrb[0].mxu0
    %v1504 = vadd.f32 0.0, %v1503
    %v1505 = vpop.f32.mrb[0].mxu0
    %v1506 = vadd.f32 0.0, %v1505
    %v1507 = vpop.f32.mrb[0].mxu0
    %v1508 = vadd.f32 0.0, %v1507
    %v1509 = vpop.f32.mrb[0].mxu0
    %v1510 = vadd.f32 0.0, %v1509
    %1511 = vmatprep.mubr.bf16.mxu0 %v463
    %1512 = vmatmul.mubr.bf16.gmra.mrb[0].mxu0 %v462
    %v1513 = vpop.f32.mrb[0].mxu0
    %v1514 = vadd.f32 0.0, %v1513
    %v1515 = vpop.f32.mrb[0].mxu0
    %v1516 = vadd.f32 0.0, %v1515
    %v1517 = vpop.f32.mrb[0].mxu0
    %v1518 = vadd.f32 0.0, %v1517
    %v1519 = vpop.f32.mrb[0].mxu0
    %v1520 = vadd.f32 0.0, %v1519
    %1521 = vmatprep.mubr.bf16.mxu0 %v465
    %1522 = vmatmul.mubr.bf16.gmra.mrb[0].mxu0 %v464
    %v1523 = vpop.f32.mrb[0].mxu0
    %v1524 = vadd.f32 0.0, %v1523
    %v1525 = vpop.f32.mrb[0].mxu0
    %v1526 = vadd.f32 0.0, %v1525
    %v1527 = vpop.f32.mrb[0].mxu0
    %v1528 = vadd.f32 0.0, %v1527
    %v1529 = vpop.f32.mrb[0].mxu0
    %v1530 = vadd.f32 0.0, %v1529
    %1531 = vmatprep.mubr.bf16.mxu0 %v467
    %1532 = vmatmul.mubr.bf16.gmra.mrb[0].mxu0 %v466
    %v1533 = vpop.f32.mrb[0].mxu0
    %v1534 = vadd.f32 0.0, %v1533
    %v1535 = vpop.f32.mrb[0].mxu0
    %v1536 = vadd.f32 0.0, %v1535
    %v1537 = vpop.f32.mrb[0].mxu0
    %v1538 = vadd.f32 0.0, %v1537
    %v1539 = vpop.f32.mrb[0].mxu0
    %v1540 = vadd.f32 0.0, %v1539
    %1541 = vmatprep.mubr.bf16.mxu0 %v469
    %1542 = vmatmul.mubr.bf16.gmra.mrb[0].mxu0 %v468
    %v1543 = vpop.f32.mrb[0].mxu0
    %v1544 = vadd.f32 0.0, %v1543
    %v1545 = vpop.f32.mrb[0].mxu0
    %v1546 = vadd.f32 0.0, %v1545
    %v1547 = vpop.f32.mrb[0].mxu0
    %v1548 = vadd.f32 0.0, %v1547
    %v1549 = vpop.f32.mrb[0].mxu0
    %v1550 = vadd.f32 0.0, %v1549
    %1551 = vmatprep.mubr.bf16.mxu0 %v471
    %1552 = vmatmul.mubr.bf16.gmra.mrb[0].mxu0 %v470
    %v1553 = vpop.f32.mrb[0].mxu0
    %v1554 = vadd.f32 0.0, %v1553
    %v1555 = vpop.f32.mrb[0].mxu0
    %v1556 = vadd.f32 0.0, %v1555
    %v1557 = vpop.f32.mrb[0].mxu0
    %v1558 = vadd.f32 0.0, %v1557
    %v1559 = vpop.f32.mrb[0].mxu0
    %v1560 = vadd.f32 0.0, %v1559
    %1561 = vmatprep.mubr.bf16.mxu0 %v473
    %1562 = vmatmul.mubr.bf16.gmra.mrb[0].mxu0 %v472
    %v1563 = vpop.f32.mrb[0].mxu0
    %v1564 = vadd.f32 0.0, %v1563
    %v1565 = vpop.f32.mrb[0].mxu0
    %v1566 = vadd.f32 0.0, %v1565
    %v1567 = vpop.f32.mrb[0].mxu0
    %v1568 = vadd.f32 0.0, %v1567
    %v1569 = vpop.f32.mrb[0].mxu0
    %v1570 = vadd.f32 0.0, %v1569
    %1571 = vmatprep.mubr.bf16.mxu0 %v475
    %1572 = vmatmul.mubr.bf16.gmra.mrb[0].mxu0 %v474
    %v1573 = vpop.f32.mrb[0].mxu0
    %v1574 = vadd.f32 0.0, %v1573
    %v1575 = vpop.f32.mrb[0].mxu0
    %v1576 = vadd.f32 0.0, %v1575
    %v1577 = vpop.f32.mrb[0].mxu0
    %v1578 = vadd.f32 0.0, %v1577
    %v1579 = vpop.f32.mrb[0].mxu0
    %v1580 = vadd.f32 0.0, %v1579
    %1581 = vmatprep.mubr.bf16.mxu0 %v477
    %1582 = vmatmul.mubr.bf16.gmra.mrb[0].mxu0 %v476
    %v1583 = vpop.f32.mrb[0].mxu0
    %v1584 = vadd.f32 0.0, %v1583
    %v1585 = vpop.f32.mrb[0].mxu0
    %v1586 = vadd.f32 0.0, %v1585
    %v1587 = vpop.f32.mrb[0].mxu0
    %v1588 = vadd.f32 0.0, %v1587
    %v1589 = vpop.f32.mrb[0].mxu0
    %v1590 = vadd.f32 0.0, %v1589
    %1591 = vmatprep.mubr.bf16.mxu0 %v479
    %1592 = vmatmul.mubr.bf16.gmra.mrb[0].mxu0 %v478
    %v1593 = vpop.f32.mrb[0].mxu0
    %v1594 = vadd.f32 0.0, %v1593
    %v1595 = vpop.f32.mrb[0].mxu0
    %v1596 = vadd.f32 0.0, %v1595
    %v1597 = vpop.f32.mrb[0].mxu0
    %v1598 = vadd.f32 0.0, %v1597
    %v1599 = vpop.f32.mrb[0].mxu0
    %v1600 = vadd.f32 0.0, %v1599
    %1601 = vmatprep.mubr.bf16.mxu0 %v481
    %1602 = vmatmul.mubr.bf16.gmra.mrb[0].mxu0 %v480
    %v1603 = vpop.f32.mrb[0].mxu0
    %v1604 = vadd.f32 0.0, %v1603
    %v1605 = vpop.f32.mrb[0].mxu0
    %v1606 = vadd.f32 0.0, %v1605
    %v1607 = vpop.f32.mrb[0].mxu0
    %v1608 = vadd.f32 0.0, %v1607
    %v1609 = vpop.f32.mrb[0].mxu0
    %v1610 = vadd.f32 0.0, %v1609
    %1611 = vmatprep.mubr.bf16.mxu0 %v483
    %1612 = vmatmul.mubr.bf16.gmra.mrb[0].mxu0 %v482
    %v1613 = vpop.f32.mrb[0].mxu0
    %v1614 = vadd.f32 0.0, %v1613
    %v1615 = vpop.f32.mrb[0].mxu0
    %v1616 = vadd.f32 0.0, %v1615
    %v1617 = vpop.f32.mrb[0].mxu0
    %v1618 = vadd.f32 0.0, %v1617
    %v1619 = vpop.f32.mrb[0].mxu0
    %v1620 = vadd.f32 0.0, %v1619
    %1621 = vmatprep.mubr.bf16.mxu0 %v485
    %1622 = vmatmul.mubr.bf16.gmra.mrb[0].mxu0 %v484
    %v1623 = vpop.f32.mrb[0].mxu0
    %v1624 = vadd.f32 0.0, %v1623
    %v1625 = vpop.f32.mrb[0].mxu0
    %v1626 = vadd.f32 0.0, %v1625
    %v1627 = vpop.f32.mrb[0].mxu0
    %v1628 = vadd.f32 0.0, %v1627
    %v1629 = vpop.f32.mrb[0].mxu0
    %v1630 = vadd.f32 0.0, %v1629
    %1631 = vmatprep.mubr.bf16.mxu0 %v487
    %1632 = vmatmul.mubr.bf16.gmra.mrb[0].mxu0 %v486
    %v1633 = vpop.f32.mrb[0].mxu0
    %v1634 = vadd.f32 0.0, %v1633
    %v1635 = vpop.f32.mrb[0].mxu0
    %v1636 = vadd.f32 0.0, %v1635
    %v1637 = vpop.f32.mrb[0].mxu0
    %v1638 = vadd.f32 0.0, %v1637
    %v1639 = vpop.f32.mrb[0].mxu0
    %v1640 = vadd.f32 0.0, %v1639
    %1641 = vmatprep.mubr.bf16.mxu0 %v489
    %1642 = vmatmul.mubr.bf16.gmra.mrb[0].mxu0 %v488
    %v1643 = vpop.f32.mrb[0].mxu0
    %v1644 = vadd.f32 0.0, %v1643
    %v1645 = vpop.f32.mrb[0].mxu0
    %v1646 = vadd.f32 0.0, %v1645
    %v1647 = vpop.f32.mrb[0].mxu0
    %v1648 = vadd.f32 0.0, %v1647
    %v1649 = vpop.f32.mrb[0].mxu0
    %v1650 = vadd.f32 0.0, %v1649
    %1651 = vmatprep.mubr.bf16.mxu0 %v491
    %1652 = vmatmul.mubr.bf16.gmra.mrb[0].mxu0 %v490
    %v1653 = vpop.f32.mrb[0].mxu0
    %v1654 = vadd.f32 0.0, %v1653
    %v1655 = vpop.f32.mrb[0].mxu0
    %v1656 = vadd.f32 0.0, %v1655
    %v1657 = vpop.f32.mrb[0].mxu0
    %v1658 = vadd.f32 0.0, %v1657
    %v1659 = vpop.f32.mrb[0].mxu0
    %v1660 = vadd.f32 0.0, %v1659
    %1661 = vmatprep.mubr.bf16.mxu0 %v493
    %1662 = vmatmul.mubr.bf16.gmra.mrb[0].mxu0 %v492
    %v1663 = vpop.f32.mrb[0].mxu0
    %v1664 = vadd.f32 0.0, %v1663
    %v1665 = vpop.f32.mrb[0].mxu0
    %v1666 = vadd.f32 0.0, %v1665
    %v1667 = vpop.f32.mrb[0].mxu0
    %v1668 = vadd.f32 0.0, %v1667
    %v1669 = vpop.f32.mrb[0].mxu0
    %v1670 = vadd.f32 0.0, %v1669
    %1671 = vmatprep.mubr.bf16.mxu0 %v495
    %1672 = vmatmul.mubr.bf16.gmra.mrb[0].mxu0 %v494
    %v1673 = vpop.f32.mrb[0].mxu0
    %v1674 = vadd.f32 0.0, %v1673
    %v1675 = vpop.f32.mrb[0].mxu0
    %v1676 = vadd.f32 0.0, %v1675
    %v1677 = vpop.f32.mrb[0].mxu0
    %v1678 = vadd.f32 0.0, %v1677
    %v1679 = vpop.f32.mrb[0].mxu0
    %v1680 = vadd.f32 0.0, %v1679
    %1681 = vmatprep.mubr.bf16.mxu0 %v497
    %1682 = vmatmul.mubr.bf16.gmra.mrb[0].mxu0 %v496
    %v1683 = vpop.f32.mrb[0].mxu0
    %v1684 = vadd.f32 0.0, %v1683
    %v1685 = vpop.f32.mrb[0].mxu0
    %v1686 = vadd.f32 0.0, %v1685
    %v1687 = vpop.f32.mrb[0].mxu0
    %v1688 = vadd.f32 0.0, %v1687
    %v1689 = vpop.f32.mrb[0].mxu0
    %v1690 = vadd.f32 0.0, %v1689
    %1691 = vmatprep.mubr.bf16.mxu0 %v499
    %1692 = vmatmul.mubr.bf16.gmra.mrb[0].mxu0 %v498
    %v1693 = vpop.f32.mrb[0].mxu0
    %v1694 = vadd.f32 0.0, %v1693
    %v1695 = vpop.f32.mrb[0].mxu0
    %v1696 = vadd.f32 0.0, %v1695
    %v1697 = vpop.f32.mrb[0].mxu0
    %v1698 = vadd.f32 0.0, %v1697
    %v1699 = vpop.f32.mrb[0].mxu0
    %v1700 = vadd.f32 0.0, %v1699
    %1701 = vmatprep.mubr.bf16.mxu0 %v501
    %1702 = vmatmul.mubr.bf16.gmra.mrb[0].mxu0 %v500
    %v1703 = vpop.f32.mrb[0].mxu0
    %v1704 = vadd.f32 0.0, %v1703
    %v1705 = vpop.f32.mrb[0].mxu0
    %v1706 = vadd.f32 0.0, %v1705
    %v1707 = vpop.f32.mrb[0].mxu0
    %v1708 = vadd.f32 0.0, %v1707
    %v1709 = vpop.f32.mrb[0].mxu0
    %v1710 = vadd.f32 0.0, %v1709
    %1711 = vmatprep.mubr.bf16.mxu0 %v503
    %1712 = vmatmul.mubr.bf16.gmra.mrb[0].mxu0 %v502
    %v1713 = vpop.f32.mrb[0].mxu0
    %v1714 = vadd.f32 0.0, %v1713
    %v1715 = vpop.f32.mrb[0].mxu0
    %v1716 = vadd.f32 0.0, %v1715
    %v1717 = vpop.f32.mrb[0].mxu0
    %v1718 = vadd.f32 0.0, %v1717
    %v1719 = vpop.f32.mrb[0].mxu0
    %v1720 = vadd.f32 0.0, %v1719
    %1721 = vmatprep.mubr.bf16.mxu0 %v505
    %1722 = vmatmul.mubr.bf16.gmra.mrb[0].mxu0 %v504
    %v1723 = vpop.f32.mrb[0].mxu0
    %v1724 = vadd.f32 0.0, %v1723
    %v1725 = vpop.f32.mrb[0].mxu0
    %v1726 = vadd.f32 0.0, %v1725
    %v1727 = vpop.f32.mrb[0].mxu0
    %v1728 = vadd.f32 0.0, %v1727
    %v1729 = vpop.f32.mrb[0].mxu0
    %v1730 = vadd.f32 0.0, %v1729
    %1731 = vmatprep.mubr.bf16.mxu0 %v507
    %1732 = vmatmul.mubr.bf16.gmra.mrb[0].mxu0 %v506
    %v1733 = vpop.f32.mrb[0].mxu0
    %v1734 = vadd.f32 0.0, %v1733
    %v1735 = vpop.f32.mrb[0].mxu0
    %v1736 = vadd.f32 0.0, %v1735
    %v1737 = vpop.f32.mrb[0].mxu0
    %v1738 = vadd.f32 0.0, %v1737
    %v1739 = vpop.f32.mrb[0].mxu0
    %v1740 = vadd.f32 0.0, %v1739
    %1741 = vmatprep.mubr.bf16.mxu0 %v509
    %1742 = vmatmul.mubr.bf16.gmra.mrb[0].mxu0 %v508
    %v1743 = vpop.f32.mrb[0].mxu0
    %v1744 = vadd.f32 0.0, %v1743
    %v1745 = vpop.f32.mrb[0].mxu0
    %v1746 = vadd.f32 0.0, %v1745
    %v1747 = vpop.f32.mrb[0].mxu0
    %v1748 = vadd.f32 0.0, %v1747
    %v1749 = vpop.f32.mrb[0].mxu0
    %v1750 = vadd.f32 0.0, %v1749
    %1751 = vmatprep.mubr.bf16.mxu0 %v511
    %1752 = vmatmul.mubr.bf16.gmra.mrb[0].mxu0 %v510
    %v1753 = vpop.f32.mrb[0].mxu0
    %v1754 = vadd.f32 0.0, %v1753
    %v1755 = vpop.f32.mrb[0].mxu0
    %v1756 = vadd.f32 0.0, %v1755
    %v1757 = vpop.f32.mrb[0].mxu0
    %v1758 = vadd.f32 0.0, %v1757
    %v1759 = vpop.f32.mrb[0].mxu0
    %v1760 = vadd.f32 0.0, %v1759
    %1761 = vmatprep.mubr.bf16.mxu0 %v513
    %1762 = vmatmul.mubr.bf16.gmra.mrb[0].mxu0 %v512
    %v1763 = vpop.f32.mrb[0].mxu0
    %v1764 = vadd.f32 0.0, %v1763
    %v1765 = vpop.f32.mrb[0].mxu0
    %v1766 = vadd.f32 0.0, %v1765
    %v1767 = vpop.f32.mrb[0].mxu0
    %v1768 = vadd.f32 0.0, %v1767
    %v1769 = vpop.f32.mrb[0].mxu0
    %v1770 = vadd.f32 0.0, %v1769
    %1771 = vmatprep.mubr.bf16.mxu0 %v515
    %1772 = vmatmul.mubr.bf16.gmra.mrb[0].mxu0 %v514
    %v1773 = vpop.f32.mrb[0].mxu0
    %v1774 = vadd.f32 0.0, %v1773
    %v1775 = vpop.f32.mrb[0].mxu0
    %v1776 = vadd.f32 0.0, %v1775
    %v1777 = vpop.f32.mrb[0].mxu0
    %v1778 = vadd.f32 0.0, %v1777
    %v1779 = vpop.f32.mrb[0].mxu0
    %v1780 = vadd.f32 0.0, %v1779
    %1781 = vmatprep.mubr.bf16.mxu0 %v517
    %1782 = vmatmul.mubr.bf16.gmra.mrb[0].mxu0 %v516
    %v1783 = vpop.f32.mrb[0].mxu0
    %v1784 = vadd.f32 0.0, %v1783
    %v1785 = vpop.f32.mrb[0].mxu0
    %v1786 = vadd.f32 0.0, %v1785
    %v1787 = vpop.f32.mrb[0].mxu0
    %v1788 = vadd.f32 0.0, %v1787
    %v1789 = vpop.f32.mrb[0].mxu0
    %v1790 = vadd.f32 0.0, %v1789
    %1791 = vmatprep.mubr.bf16.mxu0 %v519
    %1792 = vmatmul.mubr.bf16.gmra.mrb[0].mxu0 %v518
    %v1793 = vpop.f32.mrb[0].mxu0
    %v1794 = vadd.f32 0.0, %v1793
    %v1795 = vpop.f32.mrb[0].mxu0
    %v1796 = vadd.f32 0.0, %v1795
    %v1797 = vpop.f32.mrb[0].mxu0
    %v1798 = vadd.f32 0.0, %v1797
    %v1799 = vpop.f32.mrb[0].mxu0
    %v1800 = vadd.f32 0.0, %v1799
    %1801 = vmatprep.mubr.bf16.mxu0 %v521
    %1802 = vmatmul.mubr.bf16.gmra.mrb[0].mxu0 %v520
    %v1803 = vpop.f32.mrb[0].mxu0
    %v1804 = vadd.f32 0.0, %v1803
    %v1805 = vpop.f32.mrb[0].mxu0
    %v1806 = vadd.f32 0.0, %v1805
    %v1807 = vpop.f32.mrb[0].mxu0
    %v1808 = vadd.f32 0.0, %v1807
    %v1809 = vpop.f32.mrb[0].mxu0
    %v1810 = vadd.f32 0.0, %v1809
    %1811 = vmatprep.mubr.bf16.mxu0 %v523
    %1812 = vmatmul.mubr.bf16.gmra.mrb[0].mxu0 %v522
    %v1813 = vpop.f32.mrb[0].mxu0
    %v1814 = vadd.f32 0.0, %v1813
    %v1815 = vpop.f32.mrb[0].mxu0
    %v1816 = vadd.f32 0.0, %v1815
    %v1817 = vpop.f32.mrb[0].mxu0
    %v1818 = vadd.f32 0.0, %v1817
    %v1819 = vpop.f32.mrb[0].mxu0
    %v1820 = vadd.f32 0.0, %v1819
    %1821 = vmatprep.mubr.bf16.mxu0 %v525
    %1822 = vmatmul.mubr.bf16.gmra.mrb[0].mxu0 %v524
    %v1823 = vpop.f32.mrb[0].mxu0
    %v1824 = vadd.f32 0.0, %v1823
    %v1825 = vpop.f32.mrb[0].mxu0
    %v1826 = vadd.f32 0.0, %v1825
    %v1827 = vpop.f32.mrb[0].mxu0
    %v1828 = vadd.f32 0.0, %v1827
    %v1829 = vpop.f32.mrb[0].mxu0
    %v1830 = vadd.f32 0.0, %v1829
    %1831 = vmatprep.mubr.bf16.mxu0 %v527
    %1832 = vmatmul.mubr.bf16.gmra.mrb[0].mxu0 %v526
    %v1833 = vpop.f32.mrb[0].mxu0
    %v1834 = vadd.f32 0.0, %v1833
    %v1835 = vpop.f32.mrb[0].mxu0
    %v1836 = vadd.f32 0.0, %v1835
    %v1837 = vpop.f32.mrb[0].mxu0
    %v1838 = vadd.f32 0.0, %v1837
    %v1839 = vpop.f32.mrb[0].mxu0
    %v1840 = vadd.f32 0.0, %v1839
    %1841 = vmatprep.mubr.bf16.mxu0 %v529
    %1842 = vmatmul.mubr.bf16.gmra.mrb[0].mxu0 %v528
    %v1843 = vpop.f32.mrb[0].mxu0
    %v1844 = vadd.f32 0.0, %v1843
    %v1845 = vpop.f32.mrb[0].mxu0
    %v1846 = vadd.f32 0.0, %v1845
    %v1847 = vpop.f32.mrb[0].mxu0
    %v1848 = vadd.f32 0.0, %v1847
    %v1849 = vpop.f32.mrb[0].mxu0
    %v1850 = vadd.f32 0.0, %v1849
    %1851 = vmatprep.mubr.bf16.mxu0 %v531
    %1852 = vmatmul.mubr.bf16.gmra.mrb[0].mxu0 %v530
    %v1853 = vpop.f32.mrb[0].mxu0
    %v1854 = vadd.f32 0.0, %v1853
    %v1855 = vpop.f32.mrb[0].mxu0
    %v1856 = vadd.f32 0.0, %v1855
    %v1857 = vpop.f32.mrb[0].mxu0
    %v1858 = vadd.f32 0.0, %v1857
    %v1859 = vpop.f32.mrb[0].mxu0
    %v1860 = vadd.f32 0.0, %v1859
    %1861 = vmatprep.mubr.bf16.mxu0 %v533
    %1862 = vmatmul.mubr.bf16.gmra.mrb[0].mxu0 %v532
    %v1863 = vpop.f32.mrb[0].mxu0
    %v1864 = vadd.f32 0.0, %v1863
    %v1865 = vpop.f32.mrb[0].mxu0
    %v1866 = vadd.f32 0.0, %v1865
    %v1867 = vpop.f32.mrb[0].mxu0
    %v1868 = vadd.f32 0.0, %v1867
    %v1869 = vpop.f32.mrb[0].mxu0
    %v1870 = vadd.f32 0.0, %v1869
    %1871 = vmatprep.mubr.bf16.mxu0 %v535
    %1872 = vmatmul.mubr.bf16.gmra.mrb[0].mxu0 %v534
    %v1873 = vpop.f32.mrb[0].mxu0
    %v1874 = vadd.f32 0.0, %v1873
    %v1875 = vpop.f32.mrb[0].mxu0
    %v1876 = vadd.f32 0.0, %v1875
    %v1877 = vpop.f32.mrb[0].mxu0
    %v1878 = vadd.f32 0.0, %v1877
    %v1879 = vpop.f32.mrb[0].mxu0
    %v1880 = vadd.f32 0.0, %v1879
    %1881 = vmatprep.mubr.bf16.mxu0 %v537
    %1882 = vmatmul.mubr.bf16.gmra.mrb[0].mxu0 %v536
    %v1883 = vpop.f32.mrb[0].mxu0
    %v1884 = vadd.f32 0.0, %v1883
    %v1885 = vpop.f32.mrb[0].mxu0
    %v1886 = vadd.f32 0.0, %v1885
    %v1887 = vpop.f32.mrb[0].mxu0
    %v1888 = vadd.f32 0.0, %v1887
    %v1889 = vpop.f32.mrb[0].mxu0
    %v1890 = vadd.f32 0.0, %v1889
    %1891 = vdwg.mxu0
    %1892 = vst [vmem:[#allocation2] sm:$0xff] %v981
    %1893 = vst [vmem:[#allocation2 + $0x8] sm:$0xff] %v983
    %1894 = vst [vmem:[#allocation2 + $0x10] sm:$0xff] %v1454
    %1895 = vst [vmem:[#allocation2 + $0x18] sm:$0xff] %v1456
    %1896 = vst [vmem:[#allocation2 + $0x20] sm:$0xff] %v985
    %1897 = vst [vmem:[#allocation2 + $0x28] sm:$0xff] %v987
    %1898 = vst [vmem:[#allocation2 + $0x30] sm:$0xff] %v1458
    %1899 = vst [vmem:[#allocation2 + $0x38] sm:$0xff] %v1460
    %1900 = vst [vmem:[#allocation2 + $0x40] sm:$0xff] %v991
    %1901 = vst [vmem:[#allocation2 + $0x48] sm:$0xff] %v993
    %1902 = vst [vmem:[#allocation2 + $0x50] sm:$0xff] %v1464
    %1903 = vst [vmem:[#allocation2 + $0x58] sm:$0xff] %v1466
    %1904 = vst [vmem:[#allocation2 + $0x60] sm:$0xff] %v995
    %1905 = vst [vmem:[#allocation2 + $0x68] sm:$0xff] %v997
    %1906 = vst [vmem:[#allocation2 + $0x70] sm:$0xff] %v1468
    %1907 = vst [vmem:[#allocation2 + $0x78] sm:$0xff] %v1470
    %1908 = vst [vmem:[#allocation2 + $0x80] sm:$0xff] %v1001
    %1909 = vst [vmem:[#allocation2 + $0x88] sm:$0xff] %v1003
    %1910 = vst [vmem:[#allocation2 + $0x90] sm:$0xff] %v1474
    %1911 = vst [vmem:[#allocation2 + $0x98] sm:$0xff] %v1476
    %1912 = vst [vmem:[#allocation2 + $0xa0] sm:$0xff] %v1005
    %1913 = vst [vmem:[#allocation2 + $0xa8] sm:$0xff] %v1007
    %1914 = vst [vmem:[#allocation2 + $0xb0] sm:$0xff] %v1478
    %1915 = vst [vmem:[#allocation2 + $0xb8] sm:$0xff] %v1480
    %1916 = vst [vmem:[#allocation2 + $0xc0] sm:$0xff] %v1011
    %1917 = vst [vmem:[#allocation2 + $0xc8] sm:$0xff] %v1013
    %1918 = vst [vmem:[#allocation2 + $0xd0] sm:$0xff] %v1484
    %1919 = vst [vmem:[#allocation2 + $0xd8] sm:$0xff] %v1486
    %1920 = vst [vmem:[#allocation2 + $0xe0] sm:$0xff] %v1015
    %1921 = vst [vmem:[#allocation2 + $0xe8] sm:$0xff] %v1017
    %1922 = vst [vmem:[#allocation2 + $0xf0] sm:$0xff] %v1488
    %1923 = vst [vmem:[#allocation2 + $0xf8] sm:$0xff] %v1490
    %1924 = vst [vmem:[#allocation2 + $0x100] sm:$0xff] %v1021
    %1925 = vst [vmem:[#allocation2 + $0x108] sm:$0xff] %v1023
    %1926 = vst [vmem:[#allocation2 + $0x110] sm:$0xff] %v1494
    %1927 = vst [vmem:[#allocation2 + $0x118] sm:$0xff] %v1496
    %1928 = vst [vmem:[#allocation2 + $0x120] sm:$0xff] %v1025
    %1929 = vst [vmem:[#allocation2 + $0x128] sm:$0xff] %v1027
    %1930 = vst [vmem:[#allocation2 + $0x130] sm:$0xff] %v1498
    %1931 = vst [vmem:[#allocation2 + $0x138] sm:$0xff] %v1500
    %1932 = vst [vmem:[#allocation2 + $0x140] sm:$0xff] %v1031
    %1933 = vst [vmem:[#allocation2 + $0x148] sm:$0xff] %v1033
    %1934 = vst [vmem:[#allocation2 + $0x150] sm:$0xff] %v1504
    %1935 = vst [vmem:[#allocation2 + $0x158] sm:$0xff] %v1506
    %1936 = vst [vmem:[#allocation2 + $0x160] sm:$0xff] %v1035
    %1937 = vst [vmem:[#allocation2 + $0x168] sm:$0xff] %v1037
    %1938 = vst [vmem:[#allocation2 + $0x170] sm:$0xff] %v1508
    %1939 = vst [vmem:[#allocation2 + $0x178] sm:$0xff] %v1510
    %1940 = vst [vmem:[#allocation2 + $0x180] sm:$0xff] %v1041
    %1941 = vst [vmem:[#allocation2 + $0x188] sm:$0xff] %v1043
    %1942 = vst [vmem:[#allocation2 + $0x190] sm:$0xff] %v1514
    %1943 = vst [vmem:[#allocation2 + $0x198] sm:$0xff] %v1516
    %1944 = vst [vmem:[#allocation2 + $0x1a0] sm:$0xff] %v1045
    %1945 = vst [vmem:[#allocation2 + $0x1a8] sm:$0xff] %v1047
    %1946 = vst [vmem:[#allocation2 + $0x1b0] sm:$0xff] %v1518
    %1947 = vst [vmem:[#allocation2 + $0x1b8] sm:$0xff] %v1520
    %1948 = vst [vmem:[#allocation2 + $0x1c0] sm:$0xff] %v1051
    %1949 = vst [vmem:[#allocation2 + $0x1c8] sm:$0xff] %v1053
    %1950 = vst [vmem:[#allocation2 + $0x1d0] sm:$0xff] %v1524
    %1951 = vst [vmem:[#allocation2 + $0x1d8] sm:$0xff] %v1526
    %1952 = vst [vmem:[#allocation2 + $0x1e0] sm:$0xff] %v1055
    %1953 = vst [vmem:[#allocation2 + $0x1e8] sm:$0xff] %v1057
    %1954 = vst [vmem:[#allocation2 + $0x1f0] sm:$0xff] %v1528
    %1955 = vst [vmem:[#allocation2 + $0x1f8] sm:$0xff] %v1530
    %1956 = vst [vmem:[#allocation2 + $0x200] sm:$0xff] %v1061
    %1957 = vst [vmem:[#allocation2 + $0x208] sm:$0xff] %v1063
    %1958 = vst [vmem:[#allocation2 + $0x210] sm:$0xff] %v1534
    %1959 = vst [vmem:[#allocation2 + $0x218] sm:$0xff] %v1536
    %1960 = vst [vmem:[#allocation2 + $0x220] sm:$0xff] %v1065
    %1961 = vst [vmem:[#allocation2 + $0x228] sm:$0xff] %v1067
    %1962 = vst [vmem:[#allocation2 + $0x230] sm:$0xff] %v1538
    %1963 = vst [vmem:[#allocation2 + $0x238] sm:$0xff] %v1540
    %1964 = vst [vmem:[#allocation2 + $0x240] sm:$0xff] %v1071
    %1965 = vst [vmem:[#allocation2 + $0x248] sm:$0xff] %v1073
    %1966 = vst [vmem:[#allocation2 + $0x250] sm:$0xff] %v1544
    %1967 = vst [vmem:[#allocation2 + $0x258] sm:$0xff] %v1546
    %1968 = vst [vmem:[#allocation2 + $0x260] sm:$0xff] %v1075
    %1969 = vst [vmem:[#allocation2 + $0x268] sm:$0xff] %v1077
    %1970 = vst [vmem:[#allocation2 + $0x270] sm:$0xff] %v1548
    %1971 = vst [vmem:[#allocation2 + $0x278] sm:$0xff] %v1550
    %1972 = vst [vmem:[#allocation2 + $0x280] sm:$0xff] %v1081
    %1973 = vst [vmem:[#allocation2 + $0x288] sm:$0xff] %v1083
    %1974 = vst [vmem:[#allocation2 + $0x290] sm:$0xff] %v1554
    %1975 = vst [vmem:[#allocation2 + $0x298] sm:$0xff] %v1556
    %1976 = vst [vmem:[#allocation2 + $0x2a0] sm:$0xff] %v1085
    %1977 = vst [vmem:[#allocation2 + $0x2a8] sm:$0xff] %v1087
    %1978 = vst [vmem:[#allocation2 + $0x2b0] sm:$0xff] %v1558
    %1979 = vst [vmem:[#allocation2 + $0x2b8] sm:$0xff] %v1560
    %1980 = vst [vmem:[#allocation2 + $0x2c0] sm:$0xff] %v1091
    %1981 = vst [vmem:[#allocation2 + $0x2c8] sm:$0xff] %v1093
    %1982 = vst [vmem:[#allocation2 + $0x2d0] sm:$0xff] %v1564
    %1983 = vst [vmem:[#allocation2 + $0x2d8] sm:$0xff] %v1566
    %1984 = vst [vmem:[#allocation2 + $0x2e0] sm:$0xff] %v1095
    %1985 = vst [vmem:[#allocation2 + $0x2e8] sm:$0xff] %v1097
    %1986 = vst [vmem:[#allocation2 + $0x2f0] sm:$0xff] %v1568
    %1987 = vst [vmem:[#allocation2 + $0x2f8] sm:$0xff] %v1570
    %1988 = vst [vmem:[#allocation2 + $0x300] sm:$0xff] %v1101
    %1989 = vst [vmem:[#allocation2 + $0x308] sm:$0xff] %v1103
    %1990 = vst [vmem:[#allocation2 + $0x310] sm:$0xff] %v1574
    %1991 = vst [vmem:[#allocation2 + $0x318] sm:$0xff] %v1576
    %1992 = vst [vmem:[#allocation2 + $0x320] sm:$0xff] %v1105
    %1993 = vst [vmem:[#allocation2 + $0x328] sm:$0xff] %v1107
    %1994 = vst [vmem:[#allocation2 + $0x330] sm:$0xff] %v1578
    %1995 = vst [vmem:[#allocation2 + $0x338] sm:$0xff] %v1580
    %1996 = vst [vmem:[#allocation2 + $0x340] sm:$0xff] %v1111
    %1997 = vst [vmem:[#allocation2 + $0x348] sm:$0xff] %v1113
    %1998 = vst [vmem:[#allocation2 + $0x350] sm:$0xff] %v1584
    %1999 = vst [vmem:[#allocation2 + $0x358] sm:$0xff] %v1586
    %2000 = vst [vmem:[#allocation2 + $0x360] sm:$0xff] %v1115
    %2001 = vst [vmem:[#allocation2 + $0x368] sm:$0xff] %v1117
    %2002 = vst [vmem:[#allocation2 + $0x370] sm:$0xff] %v1588
    %2003 = vst [vmem:[#allocation2 + $0x378] sm:$0xff] %v1590
    %2004 = vst [vmem:[#allocation2 + $0x380] sm:$0xff] %v1121
    %2005 = vst [vmem:[#allocation2 + $0x388] sm:$0xff] %v1123
    %2006 = vst [vmem:[#allocation2 + $0x390] sm:$0xff] %v1594
    %2007 = vst [vmem:[#allocation2 + $0x398] sm:$0xff] %v1596
    %2008 = vst [vmem:[#allocation2 + $0x3a0] sm:$0xff] %v1125
    %2009 = vst [vmem:[#allocation2 + $0x3a8] sm:$0xff] %v1127
    %2010 = vst [vmem:[#allocation2 + $0x3b0] sm:$0xff] %v1598
    %2011 = vst [vmem:[#allocation2 + $0x3b8] sm:$0xff] %v1600
    %2012 = vst [vmem:[#allocation2 + $0x3c0] sm:$0xff] %v1131
    %2013 = vst [vmem:[#allocation2 + $0x3c8] sm:$0xff] %v1133
    %2014 = vst [vmem:[#allocation2 + $0x3d0] sm:$0xff] %v1604
    %2015 = vst [vmem:[#allocation2 + $0x3d8] sm:$0xff] %v1606
    %2016 = vst [vmem:[#allocation2 + $0x3e0] sm:$0xff] %v1135
    %2017 = vst [vmem:[#allocation2 + $0x3e8] sm:$0xff] %v1137
    %2018 = vst [vmem:[#allocation2 + $0x3f0] sm:$0xff] %v1608
    %2019 = vst [vmem:[#allocation2 + $0x3f8] sm:$0xff] %v1610
    %2020 = vst [vmem:[#allocation2 + $0x400] sm:$0xff] %v1141
    %2021 = vst [vmem:[#allocation2 + $0x408] sm:$0xff] %v1143
    %2022 = vst [vmem:[#allocation2 + $0x410] sm:$0xff] %v1614
    %2023 = vst [vmem:[#allocation2 + $0x418] sm:$0xff] %v1616
    %2024 = vst [vmem:[#allocation2 + $0x420] sm:$0xff] %v1145
    %2025 = vst [vmem:[#allocation2 + $0x428] sm:$0xff] %v1147
    %2026 = vst [vmem:[#allocation2 + $0x430] sm:$0xff] %v1618
    %2027 = vst [vmem:[#allocation2 + $0x438] sm:$0xff] %v1620
    %2028 = vst [vmem:[#allocation2 + $0x440] sm:$0xff] %v1151
    %2029 = vst [vmem:[#allocation2 + $0x448] sm:$0xff] %v1153
    %2030 = vst [vmem:[#allocation2 + $0x450] sm:$0xff] %v1624
    %2031 = vst [vmem:[#allocation2 + $0x458] sm:$0xff] %v1626
    %2032 = vst [vmem:[#allocation2 + $0x460] sm:$0xff] %v1155
    %2033 = vst [vmem:[#allocation2 + $0x468] sm:$0xff] %v1157
    %2034 = vst [vmem:[#allocation2 + $0x470] sm:$0xff] %v1628
    %2035 = vst [vmem:[#allocation2 + $0x478] sm:$0xff] %v1630
    %2036 = vst [vmem:[#allocation2 + $0x480] sm:$0xff] %v1161
    %2037 = vst [vmem:[#allocation2 + $0x488] sm:$0xff] %v1163
    %2038 = vst [vmem:[#allocation2 + $0x490] sm:$0xff] %v1634
    %2039 = vst [vmem:[#allocation2 + $0x498] sm:$0xff] %v1636
    %2040 = vst [vmem:[#allocation2 + $0x4a0] sm:$0xff] %v1165
    %2041 = vst [vmem:[#allocation2 + $0x4a8] sm:$0xff] %v1167
    %2042 = vst [vmem:[#allocation2 + $0x4b0] sm:$0xff] %v1638
    %2043 = vst [vmem:[#allocation2 + $0x4b8] sm:$0xff] %v1640
    %2044 = vst [vmem:[#allocation2 + $0x4c0] sm:$0xff] %v1171
    %2045 = vst [vmem:[#allocation2 + $0x4c8] sm:$0xff] %v1173
    %2046 = vst [vmem:[#allocation2 + $0x4d0] sm:$0xff] %v1644
    %2047 = vst [vmem:[#allocation2 + $0x4d8] sm:$0xff] %v1646
    %2048 = vst [vmem:[#allocation2 + $0x4e0] sm:$0xff] %v1175
    %2049 = vst [vmem:[#allocation2 + $0x4e8] sm:$0xff] %v1177
    %2050 = vst [vmem:[#allocation2 + $0x4f0] sm:$0xff] %v1648
    %2051 = vst [vmem:[#allocation2 + $0x4f8] sm:$0xff] %v1650
    %2052 = vst [vmem:[#allocation2 + $0x500] sm:$0xff] %v1181
    %2053 = vst [vmem:[#allocation2 + $0x508] sm:$0xff] %v1183
    %2054 = vst [vmem:[#allocation2 + $0x510] sm:$0xff] %v1654
    %2055 = vst [vmem:[#allocation2 + $0x518] sm:$0xff] %v1656
    %2056 = vst [vmem:[#allocation2 + $0x520] sm:$0xff] %v1185
    %2057 = vst [vmem:[#allocation2 + $0x528] sm:$0xff] %v1187
    %2058 = vst [vmem:[#allocation2 + $0x530] sm:$0xff] %v1658
    %2059 = vst [vmem:[#allocation2 + $0x538] sm:$0xff] %v1660
    %2060 = vst [vmem:[#allocation2 + $0x540] sm:$0xff] %v1191
    %2061 = vst [vmem:[#allocation2 + $0x548] sm:$0xff] %v1193
    %2062 = vst [vmem:[#allocation2 + $0x550] sm:$0xff] %v1664
    %2063 = vst [vmem:[#allocation2 + $0x558] sm:$0xff] %v1666
    %2064 = vst [vmem:[#allocation2 + $0x560] sm:$0xff] %v1195
    %2065 = vst [vmem:[#allocation2 + $0x568] sm:$0xff] %v1197
    %2066 = vst [vmem:[#allocation2 + $0x570] sm:$0xff] %v1668
    %2067 = vst [vmem:[#allocation2 + $0x578] sm:$0xff] %v1670
    %2068 = vst [vmem:[#allocation2 + $0x580] sm:$0xff] %v1201
    %2069 = vst [vmem:[#allocation2 + $0x588] sm:$0xff] %v1203
    %2070 = vst [vmem:[#allocation2 + $0x590] sm:$0xff] %v1674
    %2071 = vst [vmem:[#allocation2 + $0x598] sm:$0xff] %v1676
    %2072 = vst [vmem:[#allocation2 + $0x5a0] sm:$0xff] %v1205
    %2073 = vst [vmem:[#allocation2 + $0x5a8] sm:$0xff] %v1207
    %2074 = vst [vmem:[#allocation2 + $0x5b0] sm:$0xff] %v1678
    %2075 = vst [vmem:[#allocation2 + $0x5b8] sm:$0xff] %v1680
    %2076 = vst [vmem:[#allocation2 + $0x5c0] sm:$0xff] %v1211
    %2077 = vst [vmem:[#allocation2 + $0x5c8] sm:$0xff] %v1213
    %2078 = vst [vmem:[#allocation2 + $0x5d0] sm:$0xff] %v1684
    %2079 = vst [vmem:[#allocation2 + $0x5d8] sm:$0xff] %v1686
    %2080 = vst [vmem:[#allocation2 + $0x5e0] sm:$0xff] %v1215
    %2081 = vst [vmem:[#allocation2 + $0x5e8] sm:$0xff] %v1217
    %2082 = vst [vmem:[#allocation2 + $0x5f0] sm:$0xff] %v1688
    %2083 = vst [vmem:[#allocation2 + $0x5f8] sm:$0xff] %v1690
    %2084 = vst [vmem:[#allocation2 + $0x600] sm:$0xff] %v1221
    %2085 = vst [vmem:[#allocation2 + $0x608] sm:$0xff] %v1223
    %2086 = vst [vmem:[#allocation2 + $0x610] sm:$0xff] %v1694
    %2087 = vst [vmem:[#allocation2 + $0x618] sm:$0xff] %v1696
    %2088 = vst [vmem:[#allocation2 + $0x620] sm:$0xff] %v1225
    %2089 = vst [vmem:[#allocation2 + $0x628] sm:$0xff] %v1227
    %2090 = vst [vmem:[#allocation2 + $0x630] sm:$0xff] %v1698
    %2091 = vst [vmem:[#allocation2 + $0x638] sm:$0xff] %v1700
    %2092 = vst [vmem:[#allocation2 + $0x640] sm:$0xff] %v1231
    %2093 = vst [vmem:[#allocation2 + $0x648] sm:$0xff] %v1233
    %2094 = vst [vmem:[#allocation2 + $0x650] sm:$0xff] %v1704
    %2095 = vst [vmem:[#allocation2 + $0x658] sm:$0xff] %v1706
    %2096 = vst [vmem:[#allocation2 + $0x660] sm:$0xff] %v1235
    %2097 = vst [vmem:[#allocation2 + $0x668] sm:$0xff] %v1237
    %2098 = vst [vmem:[#allocation2 + $0x670] sm:$0xff] %v1708
    %2099 = vst [vmem:[#allocation2 + $0x678] sm:$0xff] %v1710
    %2100 = vst [vmem:[#allocation2 + $0x680] sm:$0xff] %v1241
    %2101 = vst [vmem:[#allocation2 + $0x688] sm:$0xff] %v1243
    %2102 = vst [vmem:[#allocation2 + $0x690] sm:$0xff] %v1714
    %2103 = vst [vmem:[#allocation2 + $0x698] sm:$0xff] %v1716
    %2104 = vst [vmem:[#allocation2 + $0x6a0] sm:$0xff] %v1245
    %2105 = vst [vmem:[#allocation2 + $0x6a8] sm:$0xff] %v1247
    %2106 = vst [vmem:[#allocation2 + $0x6b0] sm:$0xff] %v1718
    %2107 = vst [vmem:[#allocation2 + $0x6b8] sm:$0xff] %v1720
    %2108 = vst [vmem:[#allocation2 + $0x6c0] sm:$0xff] %v1251
    %2109 = vst [vmem:[#allocation2 + $0x6c8] sm:$0xff] %v1253
    %2110 = vst [vmem:[#allocation2 + $0x6d0] sm:$0xff] %v1724
    %2111 = vst [vmem:[#allocation2 + $0x6d8] sm:$0xff] %v1726
    %2112 = vst [vmem:[#allocation2 + $0x6e0] sm:$0xff] %v1255
    %2113 = vst [vmem:[#allocation2 + $0x6e8] sm:$0xff] %v1257
    %2114 = vst [vmem:[#allocation2 + $0x6f0] sm:$0xff] %v1728
    %2115 = vst [vmem:[#allocation2 + $0x6f8] sm:$0xff] %v1730
    %2116 = vst [vmem:[#allocation2 + $0x700] sm:$0xff] %v1261
    %2117 = vst [vmem:[#allocation2 + $0x708] sm:$0xff] %v1263
    %2118 = vst [vmem:[#allocation2 + $0x710] sm:$0xff] %v1734
    %2119 = vst [vmem:[#allocation2 + $0x718] sm:$0xff] %v1736
    %2120 = vst [vmem:[#allocation2 + $0x720] sm:$0xff] %v1265
    %2121 = vst [vmem:[#allocation2 + $0x728] sm:$0xff] %v1267
    %2122 = vst [vmem:[#allocation2 + $0x730] sm:$0xff] %v1738
    %2123 = vst [vmem:[#allocation2 + $0x738] sm:$0xff] %v1740
    %2124 = vst [vmem:[#allocation2 + $0x740] sm:$0xff] %v1271
    %2125 = vst [vmem:[#allocation2 + $0x748] sm:$0xff] %v1273
    %2126 = vst [vmem:[#allocation2 + $0x750] sm:$0xff] %v1744
    %2127 = vst [vmem:[#allocation2 + $0x758] sm:$0xff] %v1746
    %2128 = vst [vmem:[#allocation2 + $0x760] sm:$0xff] %v1275
    %2129 = vst [vmem:[#allocation2 + $0x768] sm:$0xff] %v1277
    %2130 = vst [vmem:[#allocation2 + $0x770] sm:$0xff] %v1748
    %2131 = vst [vmem:[#allocation2 + $0x778] sm:$0xff] %v1750
    %2132 = vst [vmem:[#allocation2 + $0x780] sm:$0xff] %v1281
    %2133 = vst [vmem:[#allocation2 + $0x788] sm:$0xff] %v1283
    %2134 = vst [vmem:[#allocation2 + $0x790] sm:$0xff] %v1754
    %2135 = vst [vmem:[#allocation2 + $0x798] sm:$0xff] %v1756
    %2136 = vst [vmem:[#allocation2 + $0x7a0] sm:$0xff] %v1285
    %2137 = vst [vmem:[#allocation2 + $0x7a8] sm:$0xff] %v1287
    %2138 = vst [vmem:[#allocation2 + $0x7b0] sm:$0xff] %v1758
    %2139 = vst [vmem:[#allocation2 + $0x7b8] sm:$0xff] %v1760
    %2140 = vst [vmem:[#allocation2 + $0x7c0] sm:$0xff] %v1291
    %2141 = vst [vmem:[#allocation2 + $0x7c8] sm:$0xff] %v1293
    %2142 = vst [vmem:[#allocation2 + $0x7d0] sm:$0xff] %v1764
    %2143 = vst [vmem:[#allocation2 + $0x7d8] sm:$0xff] %v1766
    %2144 = vst [vmem:[#allocation2 + $0x7e0] sm:$0xff] %v1295
    %2145 = vst [vmem:[#allocation2 + $0x7e8] sm:$0xff] %v1297
    %2146 = vst [vmem:[#allocation2 + $0x7f0] sm:$0xff] %v1768
    %2147 = vst [vmem:[#allocation2 + $0x7f8] sm:$0xff] %v1770
    %2148 = vst [vmem:[#allocation2 + $0x800] sm:$0xff] %v1301
    %2149 = vst [vmem:[#allocation2 + $0x808] sm:$0xff] %v1303
    %2150 = vst [vmem:[#allocation2 + $0x810] sm:$0xff] %v1774
    %2151 = vst [vmem:[#allocation2 + $0x818] sm:$0xff] %v1776
    %2152 = vst [vmem:[#allocation2 + $0x820] sm:$0xff] %v1305
    %2153 = vst [vmem:[#allocation2 + $0x828] sm:$0xff] %v1307
    %2154 = vst [vmem:[#allocation2 + $0x830] sm:$0xff] %v1778
    %2155 = vst [vmem:[#allocation2 + $0x838] sm:$0xff] %v1780
    %2156 = vst [vmem:[#allocation2 + $0x840] sm:$0xff] %v1311
    %2157 = vst [vmem:[#allocation2 + $0x848] sm:$0xff] %v1313
    %2158 = vst [vmem:[#allocation2 + $0x850] sm:$0xff] %v1784
    %2159 = vst [vmem:[#allocation2 + $0x858] sm:$0xff] %v1786
    %2160 = vst [vmem:[#allocation2 + $0x860] sm:$0xff] %v1315
    %2161 = vst [vmem:[#allocation2 + $0x868] sm:$0xff] %v1317
    %2162 = vst [vmem:[#allocation2 + $0x870] sm:$0xff] %v1788
    %2163 = vst [vmem:[#allocation2 + $0x878] sm:$0xff] %v1790
    %2164 = vst [vmem:[#allocation2 + $0x880] sm:$0xff] %v1321
    %2165 = vst [vmem:[#allocation2 + $0x888] sm:$0xff] %v1323
    %2166 = vst [vmem:[#allocation2 + $0x890] sm:$0xff] %v1794
    %2167 = vst [vmem:[#allocation2 + $0x898] sm:$0xff] %v1796
    %2168 = vst [vmem:[#allocation2 + $0x8a0] sm:$0xff] %v1325
    %2169 = vst [vmem:[#allocation2 + $0x8a8] sm:$0xff] %v1327
    %2170 = vst [vmem:[#allocation2 + $0x8b0] sm:$0xff] %v1798
    %2171 = vst [vmem:[#allocation2 + $0x8b8] sm:$0xff] %v1800
    %2172 = vst [vmem:[#allocation2 + $0x8c0] sm:$0xff] %v1331
    %2173 = vst [vmem:[#allocation2 + $0x8c8] sm:$0xff] %v1333
    %2174 = vst [vmem:[#allocation2 + $0x8d0] sm:$0xff] %v1804
    %2175 = vst [vmem:[#allocation2 + $0x8d8] sm:$0xff] %v1806
    %2176 = vst [vmem:[#allocation2 + $0x8e0] sm:$0xff] %v1335
    %2177 = vst [vmem:[#allocation2 + $0x8e8] sm:$0xff] %v1337
    %2178 = vst [vmem:[#allocation2 + $0x8f0] sm:$0xff] %v1808
    %2179 = vst [vmem:[#allocation2 + $0x8f8] sm:$0xff] %v1810
    %2180 = vst [vmem:[#allocation2 + $0x900] sm:$0xff] %v1341
    %2181 = vst [vmem:[#allocation2 + $0x908] sm:$0xff] %v1343
    %2182 = vst [vmem:[#allocation2 + $0x910] sm:$0xff] %v1814
    %2183 = vst [vmem:[#allocation2 + $0x918] sm:$0xff] %v1816
    %2184 = vst [vmem:[#allocation2 + $0x920] sm:$0xff] %v1345
    %2185 = vst [vmem:[#allocation2 + $0x928] sm:$0xff] %v1347
    %2186 = vst [vmem:[#allocation2 + $0x930] sm:$0xff] %v1818
    %2187 = vst [vmem:[#allocation2 + $0x938] sm:$0xff] %v1820
    %2188 = vst [vmem:[#allocation2 + $0x940] sm:$0xff] %v1351
    %2189 = vst [vmem:[#allocation2 + $0x948] sm:$0xff] %v1353
    %2190 = vst [vmem:[#allocation2 + $0x950] sm:$0xff] %v1824
    %2191 = vst [vmem:[#allocation2 + $0x958] sm:$0xff] %v1826
    %2192 = vst [vmem:[#allocation2 + $0x960] sm:$0xff] %v1355
    %2193 = vst [vmem:[#allocation2 + $0x968] sm:$0xff] %v1357
    %2194 = vst [vmem:[#allocation2 + $0x970] sm:$0xff] %v1828
    %2195 = vst [vmem:[#allocation2 + $0x978] sm:$0xff] %v1830
    %2196 = vst [vmem:[#allocation2 + $0x980] sm:$0xff] %v1361
    %2197 = vst [vmem:[#allocation2 + $0x988] sm:$0xff] %v1363
    %2198 = vst [vmem:[#allocation2 + $0x990] sm:$0xff] %v1834
    %2199 = vst [vmem:[#allocation2 + $0x998] sm:$0xff] %v1836
    %2200 = vst [vmem:[#allocation2 + $0x9a0] sm:$0xff] %v1365
    %2201 = vst [vmem:[#allocation2 + $0x9a8] sm:$0xff] %v1367
    %2202 = vst [vmem:[#allocation2 + $0x9b0] sm:$0xff] %v1838
    %2203 = vst [vmem:[#allocation2 + $0x9b8] sm:$0xff] %v1840
    %2204 = vst [vmem:[#allocation2 + $0x9c0] sm:$0xff] %v1371
    %2205 = vst [vmem:[#allocation2 + $0x9c8] sm:$0xff] %v1373
    %2206 = vst [vmem:[#allocation2 + $0x9d0] sm:$0xff] %v1844
    %2207 = vst [vmem:[#allocation2 + $0x9d8] sm:$0xff] %v1846
    %2208 = vst [vmem:[#allocation2 + $0x9e0] sm:$0xff] %v1375
    %2209 = vst [vmem:[#allocation2 + $0x9e8] sm:$0xff] %v1377
    %2210 = vst [vmem:[#allocation2 + $0x9f0] sm:$0xff] %v1848
    %2211 = vst [vmem:[#allocation2 + $0x9f8] sm:$0xff] %v1850
    %2212 = vst [vmem:[#allocation2 + $0xa00] sm:$0xff] %v1381
    %2213 = vst [vmem:[#allocation2 + $0xa08] sm:$0xff] %v1383
    %2214 = vst [vmem:[#allocation2 + $0xa10] sm:$0xff] %v1854
    %2215 = vst [vmem:[#allocation2 + $0xa18] sm:$0xff] %v1856
    %2216 = vst [vmem:[#allocation2 + $0xa20] sm:$0xff] %v1385
    %2217 = vst [vmem:[#allocation2 + $0xa28] sm:$0xff] %v1387
    %2218 = vst [vmem:[#allocation2 + $0xa30] sm:$0xff] %v1858
    %2219 = vst [vmem:[#allocation2 + $0xa38] sm:$0xff] %v1860
    %2220 = vst [vmem:[#allocation2 + $0xa40] sm:$0xff] %v1391
    %2221 = vst [vmem:[#allocation2 + $0xa48] sm:$0xff] %v1393
    %2222 = vst [vmem:[#allocation2 + $0xa50] sm:$0xff] %v1864
    %2223 = vst [vmem:[#allocation2 + $0xa58] sm:$0xff] %v1866
    %2224 = vst [vmem:[#allocation2 + $0xa60] sm:$0xff] %v1395
    %2225 = vst [vmem:[#allocation2 + $0xa68] sm:$0xff] %v1397
    %2226 = vst [vmem:[#allocation2 + $0xa70] sm:$0xff] %v1868
    %2227 = vst [vmem:[#allocation2 + $0xa78] sm:$0xff] %v1870
    %2228 = vst [vmem:[#allocation2 + $0xa80] sm:$0xff] %v1401
    %2229 = vst [vmem:[#allocation2 + $0xa88] sm:$0xff] %v1403
    %2230 = vst [vmem:[#allocation2 + $0xa90] sm:$0xff] %v1874
    %2231 = vst [vmem:[#allocation2 + $0xa98] sm:$0xff] %v1876
    %2232 = vst [vmem:[#allocation2 + $0xaa0] sm:$0xff] %v1405
    %2233 = vst [vmem:[#allocation2 + $0xaa8] sm:$0xff] %v1407
    %2234 = vst [vmem:[#allocation2 + $0xab0] sm:$0xff] %v1878
    %2235 = vst [vmem:[#allocation2 + $0xab8] sm:$0xff] %v1880
    %2236 = vst [vmem:[#allocation2 + $0xac0] sm:$0xff] %v1411
    %2237 = vst [vmem:[#allocation2 + $0xac8] sm:$0xff] %v1413
    %2238 = vst [vmem:[#allocation2 + $0xad0] sm:$0xff] %v1884
    %2239 = vst [vmem:[#allocation2 + $0xad8] sm:$0xff] %v1886
    %2240 = vst [vmem:[#allocation2 + $0xae0] sm:$0xff] %v1415
    %2241 = vst [vmem:[#allocation2 + $0xae8] sm:$0xff] %v1417
    %2242 = vst [vmem:[#allocation2 + $0xaf0] sm:$0xff] %v1888
    %2243 = vst [vmem:[#allocation2 + $0xaf8] sm:$0xff] %v1890
    %v2244 = vld [vmem:[%s1] sm:$0xff]
    %v2245 = vld [vmem:[%s1 + $0x8] sm:$0xff]
    %v2246 = vld [vmem:[%s1 + $0x10] sm:$0xff]
    %v2247 = vld [vmem:[%s1 + $0x18] sm:$0xff]
    %v2248 = vld [vmem:[%s1 + $0x20] sm:$0xff]
    %v2249 = vld [vmem:[%s1 + $0x28] sm:$0xff]
    %v2250 = vld [vmem:[%s1 + $0x30] sm:$0xff]
    %v2251 = vld [vmem:[%s1 + $0x38] sm:$0xff]
    %v2252 = vld [vmem:[%s1 + $0x40] sm:$0xff]
    %v2253 = vld [vmem:[%s1 + $0x48] sm:$0xff]
    %v2254 = vld [vmem:[%s1 + $0x50] sm:$0xff]
    %v2255 = vld [vmem:[%s1 + $0x58] sm:$0xff]
    %v2256 = vld [vmem:[%s1 + $0x60] sm:$0xff]
    %v2257 = vld [vmem:[%s1 + $0x68] sm:$0xff]
    %v2258 = vld [vmem:[%s1 + $0x70] sm:$0xff]
    %v2259 = vld [vmem:[%s1 + $0x78] sm:$0xff]
    %v2260 = vld [vmem:[%s1 + $0x80] sm:$0xff]
    %v2261 = vld [vmem:[%s1 + $0x88] sm:$0xff]
    %v2262 = vld [vmem:[%s1 + $0x90] sm:$0xff]
    %v2263 = vld [vmem:[%s1 + $0x98] sm:$0xff]
    %v2264 = vld [vmem:[%s1 + $0xa0] sm:$0xff]
    %v2265 = vld [vmem:[%s1 + $0xa8] sm:$0xff]
    %v2266 = vld [vmem:[%s1 + $0xb0] sm:$0xff]
    %v2267 = vld [vmem:[%s1 + $0xb8] sm:$0xff]
    %v2268 = vld [vmem:[%s1 + $0xc0] sm:$0xff]
    %v2269 = vld [vmem:[%s1 + $0xc8] sm:$0xff]
    %v2270 = vld [vmem:[%s1 + $0xd0] sm:$0xff]
    %v2271 = vld [vmem:[%s1 + $0xd8] sm:$0xff]
    %v2272 = vld [vmem:[%s1 + $0xe0] sm:$0xff]
    %v2273 = vld [vmem:[%s1 + $0xe8] sm:$0xff]
    %v2274 = vld [vmem:[%s1 + $0xf0] sm:$0xff]
    %v2275 = vld [vmem:[%s1 + $0xf8] sm:$0xff]
    %v2276 = vld [vmem:[%s1 + $0x100] sm:$0xff]
    %v2277 = vld [vmem:[%s1 + $0x108] sm:$0xff]
    %v2278 = vld [vmem:[%s1 + $0x110] sm:$0xff]
    %v2279 = vld [vmem:[%s1 + $0x118] sm:$0xff]
    %v2280 = vld [vmem:[%s1 + $0x120] sm:$0xff]
    %v2281 = vld [vmem:[%s1 + $0x128] sm:$0xff]
    %v2282 = vld [vmem:[%s1 + $0x130] sm:$0xff]
    %v2283 = vld [vmem:[%s1 + $0x138] sm:$0xff]
    %v2284 = vld [vmem:[%s1 + $0x140] sm:$0xff]
    %v2285 = vld [vmem:[%s1 + $0x148] sm:$0xff]
    %v2286 = vld [vmem:[%s1 + $0x150] sm:$0xff]
    %v2287 = vld [vmem:[%s1 + $0x158] sm:$0xff]
    %v2288 = vld [vmem:[%s1 + $0x160] sm:$0xff]
    %v2289 = vld [vmem:[%s1 + $0x168] sm:$0xff]
    %v2290 = vld [vmem:[%s1 + $0x170] sm:$0xff]
    %v2291 = vld [vmem:[%s1 + $0x178] sm:$0xff]
    %v2292 = vld [vmem:[%s1 + $0x180] sm:$0xff]
    %v2293 = vld [vmem:[%s1 + $0x188] sm:$0xff]
    %v2294 = vld [vmem:[%s1 + $0x190] sm:$0xff]
    %v2295 = vld [vmem:[%s1 + $0x198] sm:$0xff]
    %v2296 = vld [vmem:[%s1 + $0x1a0] sm:$0xff]
    %v2297 = vld [vmem:[%s1 + $0x1a8] sm:$0xff]
    %v2298 = vld [vmem:[%s1 + $0x1b0] sm:$0xff]
    %v2299 = vld [vmem:[%s1 + $0x1b8] sm:$0xff]
    %v2300 = vld [vmem:[%s1 + $0x1c0] sm:$0xff]
    %v2301 = vld [vmem:[%s1 + $0x1c8] sm:$0xff]
    %v2302 = vld [vmem:[%s1 + $0x1d0] sm:$0xff]
    %v2303 = vld [vmem:[%s1 + $0x1d8] sm:$0xff]
    %v2304 = vld [vmem:[%s1 + $0x1e0] sm:$0xff]
    %v2305 = vld [vmem:[%s1 + $0x1e8] sm:$0xff]
    %v2306 = vld [vmem:[%s1 + $0x1f0] sm:$0xff]
    %v2307 = vld [vmem:[%s1 + $0x1f8] sm:$0xff]
    %v2308 = vld [vmem:[%s1 + $0x200] sm:$0xff]
    %v2309 = vld [vmem:[%s1 + $0x208] sm:$0xff]
    %v2310 = vld [vmem:[%s1 + $0x210] sm:$0xff]
    %v2311 = vld [vmem:[%s1 + $0x218] sm:$0xff]
    %v2312 = vld [vmem:[%s1 + $0x220] sm:$0xff]
    %v2313 = vld [vmem:[%s1 + $0x228] sm:$0xff]
    %v2314 = vld [vmem:[%s1 + $0x230] sm:$0xff]
    %v2315 = vld [vmem:[%s1 + $0x238] sm:$0xff]
    %v2316 = vld [vmem:[%s1 + $0x240] sm:$0xff]
    %v2317 = vld [vmem:[%s1 + $0x248] sm:$0xff]
    %v2318 = vld [vmem:[%s1 + $0x250] sm:$0xff]
    %v2319 = vld [vmem:[%s1 + $0x258] sm:$0xff]
    %v2320 = vld [vmem:[%s1 + $0x260] sm:$0xff]
    %v2321 = vld [vmem:[%s1 + $0x268] sm:$0xff]
    %v2322 = vld [vmem:[%s1 + $0x270] sm:$0xff]
    %v2323 = vld [vmem:[%s1 + $0x278] sm:$0xff]
    %v2324 = vld [vmem:[%s1 + $0x280] sm:$0xff]
    %v2325 = vld [vmem:[%s1 + $0x288] sm:$0xff]
    %v2326 = vld [vmem:[%s1 + $0x290] sm:$0xff]
    %v2327 = vld [vmem:[%s1 + $0x298] sm:$0xff]
    %v2328 = vld [vmem:[%s1 + $0x2a0] sm:$0xff]
    %v2329 = vld [vmem:[%s1 + $0x2a8] sm:$0xff]
    %v2330 = vld [vmem:[%s1 + $0x2b0] sm:$0xff]
    %v2331 = vld [vmem:[%s1 + $0x2b8] sm:$0xff]
    %v2332 = vld [vmem:[%s1 + $0x2c0] sm:$0xff]
    %v2333 = vld [vmem:[%s1 + $0x2c8] sm:$0xff]
    %v2334 = vld [vmem:[%s3] sm:$0xff]
    %v2335 = vld [vmem:[%s3 + $0x8] sm:$0xff]
    %v2336 = vld [vmem:[%s3 + $0x10] sm:$0xff]
    %v2337 = vld [vmem:[%s3 + $0x18] sm:$0xff]
    %v2338 = vld [vmem:[%s3 + $0x20] sm:$0xff]
    %v2339 = vld [vmem:[%s3 + $0x28] sm:$0xff]
    %v2340 = vld [vmem:[%s3 + $0x30] sm:$0xff]
    %v2341 = vld [vmem:[%s3 + $0x38] sm:$0xff]
    %v2342 = vld [vmem:[%s3 + $0x40] sm:$0xff]
    %v2343 = vld [vmem:[%s3 + $0x48] sm:$0xff]
    %v2344 = vld [vmem:[%s3 + $0x50] sm:$0xff]
    %v2345 = vld [vmem:[%s3 + $0x58] sm:$0xff]
    %v2346 = vld [vmem:[%s3 + $0x60] sm:$0xff]
    %v2347 = vld [vmem:[%s3 + $0x68] sm:$0xff]
    %v2348 = vld [vmem:[%s3 + $0x70] sm:$0xff]
    %v2349 = vld [vmem:[%s3 + $0x78] sm:$0xff]
    %v2350 = vld [vmem:[%s3 + $0x80] sm:$0xff]
    %v2351 = vld [vmem:[%s3 + $0x88] sm:$0xff]
    %v2352 = vld [vmem:[%s3 + $0x90] sm:$0xff]
    %v2353 = vld [vmem:[%s3 + $0x98] sm:$0xff]
    %v2354 = vld [vmem:[%s3 + $0xa0] sm:$0xff]
    %v2355 = vld [vmem:[%s3 + $0xa8] sm:$0xff]
    %v2356 = vld [vmem:[%s3 + $0xb0] sm:$0xff]
    %v2357 = vld [vmem:[%s3 + $0xb8] sm:$0xff]
    %v2358 = vld [vmem:[%s3 + $0xc0] sm:$0xff]
    %v2359 = vld [vmem:[%s3 + $0xc8] sm:$0xff]
    %v2360 = vld [vmem:[%s3 + $0xd0] sm:$0xff]
    %v2361 = vld [vmem:[%s3 + $0xd8] sm:$0xff]
    %v2362 = vld [vmem:[%s3 + $0xe0] sm:$0xff]
    %v2363 = vld [vmem:[%s3 + $0xe8] sm:$0xff]
    %v2364 = vld [vmem:[%s3 + $0xf0] sm:$0xff]
    %v2365 = vld [vmem:[%s3 + $0xf8] sm:$0xff]
    %v2456 = vunpack.c.l.b16 %v2244
    %v2457 = vunpack.c.h.b16 %v2244
    %v2458 = vunpack.c.l.b16 %v2245
    %v2459 = vunpack.c.h.b16 %v2245
    %v2460 = vunpack.c.l.b16 %v2246
    %v2461 = vunpack.c.h.b16 %v2246
    %v2462 = vunpack.c.l.b16 %v2247
    %v2463 = vunpack.c.h.b16 %v2247
    %v2464 = vunpack.c.l.b16 %v2248
    %v2465 = vunpack.c.h.b16 %v2248
    %v2466 = vunpack.c.l.b16 %v2249
    %v2467 = vunpack.c.h.b16 %v2249
    %v2468 = vunpack.c.l.b16 %v2250
    %v2469 = vunpack.c.h.b16 %v2250
    %v2470 = vunpack.c.l.b16 %v2251
    %v2471 = vunpack.c.h.b16 %v2251
    %v2472 = vunpack.c.l.b16 %v2252
    %v2473 = vunpack.c.h.b16 %v2252
    %v2474 = vunpack.c.l.b16 %v2253
    %v2475 = vunpack.c.h.b16 %v2253
    %v2476 = vunpack.c.l.b16 %v2254
    %v2477 = vunpack.c.h.b16 %v2254
    %v2478 = vunpack.c.l.b16 %v2255
    %v2479 = vunpack.c.h.b16 %v2255
    %v2480 = vunpack.c.l.b16 %v2256
    %v2481 = vunpack.c.h.b16 %v2256
    %v2482 = vunpack.c.l.b16 %v2257
    %v2483 = vunpack.c.h.b16 %v2257
    %v2484 = vunpack.c.l.b16 %v2258
    %v2485 = vunpack.c.h.b16 %v2258
    %v2486 = vunpack.c.l.b16 %v2259
    %v2487 = vunpack.c.h.b16 %v2259
    %v2488 = vunpack.c.l.b16 %v2260
    %v2489 = vunpack.c.h.b16 %v2260
    %v2490 = vunpack.c.l.b16 %v2261
    %v2491 = vunpack.c.h.b16 %v2261
    %v2492 = vunpack.c.l.b16 %v2262
    %v2493 = vunpack.c.h.b16 %v2262
    %v2494 = vunpack.c.l.b16 %v2263
    %v2495 = vunpack.c.h.b16 %v2263
    %v2496 = vunpack.c.l.b16 %v2264
    %v2497 = vunpack.c.h.b16 %v2264
    %v2498 = vunpack.c.l.b16 %v2265
    %v2499 = vunpack.c.h.b16 %v2265
    %v2500 = vunpack.c.l.b16 %v2266
    %v2501 = vunpack.c.h.b16 %v2266
    %v2502 = vunpack.c.l.b16 %v2267
    %v2503 = vunpack.c.h.b16 %v2267
    %v2504 = vunpack.c.l.b16 %v2268
    %v2505 = vunpack.c.h.b16 %v2268
    %v2506 = vunpack.c.l.b16 %v2269
    %v2507 = vunpack.c.h.b16 %v2269
    %v2508 = vunpack.c.l.b16 %v2270
    %v2509 = vunpack.c.h.b16 %v2270
    %v2510 = vunpack.c.l.b16 %v2271
    %v2511 = vunpack.c.h.b16 %v2271
    %v2512 = vunpack.c.l.b16 %v2272
    %v2513 = vunpack.c.h.b16 %v2272
    %v2514 = vunpack.c.l.b16 %v2273
    %v2515 = vunpack.c.h.b16 %v2273
    %v2516 = vunpack.c.l.b16 %v2274
    %v2517 = vunpack.c.h.b16 %v2274
    %v2518 = vunpack.c.l.b16 %v2275
    %v2519 = vunpack.c.h.b16 %v2275
    %v2520 = vunpack.c.l.b16 %v2276
    %v2521 = vunpack.c.h.b16 %v2276
    %v2522 = vunpack.c.l.b16 %v2277
    %v2523 = vunpack.c.h.b16 %v2277
    %v2524 = vunpack.c.l.b16 %v2278
    %v2525 = vunpack.c.h.b16 %v2278
    %v2526 = vunpack.c.l.b16 %v2279
    %v2527 = vunpack.c.h.b16 %v2279
    %v2528 = vunpack.c.l.b16 %v2280
    %v2529 = vunpack.c.h.b16 %v2280
    %v2530 = vunpack.c.l.b16 %v2281
    %v2531 = vunpack.c.h.b16 %v2281
    %v2532 = vunpack.c.l.b16 %v2282
    %v2533 = vunpack.c.h.b16 %v2282
    %v2534 = vunpack.c.l.b16 %v2283
    %v2535 = vunpack.c.h.b16 %v2283
    %v2536 = vunpack.c.l.b16 %v2284
    %v2537 = vunpack.c.h.b16 %v2284
    %v2538 = vunpack.c.l.b16 %v2285
    %v2539 = vunpack.c.h.b16 %v2285
    %v2540 = vunpack.c.l.b16 %v2286
    %v2541 = vunpack.c.h.b16 %v2286
    %v2542 = vunpack.c.l.b16 %v2287
    %v2543 = vunpack.c.h.b16 %v2287
    %v2544 = vunpack.c.l.b16 %v2288
    %v2545 = vunpack.c.h.b16 %v2288
    %v2546 = vunpack.c.l.b16 %v2289
    %v2547 = vunpack.c.h.b16 %v2289
    %v2548 = vunpack.c.l.b16 %v2290
    %v2549 = vunpack.c.h.b16 %v2290
    %v2550 = vunpack.c.l.b16 %v2291
    %v2551 = vunpack.c.h.b16 %v2291
    %v2552 = vunpack.c.l.b16 %v2292
    %v2553 = vunpack.c.h.b16 %v2292
    %v2554 = vunpack.c.l.b16 %v2293
    %v2555 = vunpack.c.h.b16 %v2293
    %v2556 = vunpack.c.l.b16 %v2294
    %v2557 = vunpack.c.h.b16 %v2294
    %v2558 = vunpack.c.l.b16 %v2295
    %v2559 = vunpack.c.h.b16 %v2295
    %v2560 = vunpack.c.l.b16 %v2296
    %v2561 = vunpack.c.h.b16 %v2296
    %v2562 = vunpack.c.l.b16 %v2297
    %v2563 = vunpack.c.h.b16 %v2297
    %v2564 = vunpack.c.l.b16 %v2298
    %v2565 = vunpack.c.h.b16 %v2298
    %v2566 = vunpack.c.l.b16 %v2299
    %v2567 = vunpack.c.h.b16 %v2299
    %v2568 = vunpack.c.l.b16 %v2300
    %v2569 = vunpack.c.h.b16 %v2300
    %v2570 = vunpack.c.l.b16 %v2301
    %v2571 = vunpack.c.h.b16 %v2301
    %v2572 = vunpack.c.l.b16 %v2302
    %v2573 = vunpack.c.h.b16 %v2302
    %v2574 = vunpack.c.l.b16 %v2303
    %v2575 = vunpack.c.h.b16 %v2303
    %v2576 = vunpack.c.l.b16 %v2304
    %v2577 = vunpack.c.h.b16 %v2304
    %v2578 = vunpack.c.l.b16 %v2305
    %v2579 = vunpack.c.h.b16 %v2305
    %v2580 = vunpack.c.l.b16 %v2306
    %v2581 = vunpack.c.h.b16 %v2306
    %v2582 = vunpack.c.l.b16 %v2307
    %v2583 = vunpack.c.h.b16 %v2307
    %v2584 = vunpack.c.l.b16 %v2308
    %v2585 = vunpack.c.h.b16 %v2308
    %v2586 = vunpack.c.l.b16 %v2309
    %v2587 = vunpack.c.h.b16 %v2309
    %v2588 = vunpack.c.l.b16 %v2310
    %v2589 = vunpack.c.h.b16 %v2310
    %v2590 = vunpack.c.l.b16 %v2311
    %v2591 = vunpack.c.h.b16 %v2311
    %v2592 = vunpack.c.l.b16 %v2312
    %v2593 = vunpack.c.h.b16 %v2312
    %v2594 = vunpack.c.l.b16 %v2313
    %v2595 = vunpack.c.h.b16 %v2313
    %v2596 = vunpack.c.l.b16 %v2314
    %v2597 = vunpack.c.h.b16 %v2314
    %v2598 = vunpack.c.l.b16 %v2315
    %v2599 = vunpack.c.h.b16 %v2315
    %v2600 = vunpack.c.l.b16 %v2316
    %v2601 = vunpack.c.h.b16 %v2316
    %v2602 = vunpack.c.l.b16 %v2317
    %v2603 = vunpack.c.h.b16 %v2317
    %v2604 = vunpack.c.l.b16 %v2318
    %v2605 = vunpack.c.h.b16 %v2318
    %v2606 = vunpack.c.l.b16 %v2319
    %v2607 = vunpack.c.h.b16 %v2319
    %v2608 = vunpack.c.l.b16 %v2320
    %v2609 = vunpack.c.h.b16 %v2320
    %v2610 = vunpack.c.l.b16 %v2321
    %v2611 = vunpack.c.h.b16 %v2321
    %v2612 = vunpack.c.l.b16 %v2322
    %v2613 = vunpack.c.h.b16 %v2322
    %v2614 = vunpack.c.l.b16 %v2323
    %v2615 = vunpack.c.h.b16 %v2323
    %v2616 = vunpack.c.l.b16 %v2324
    %v2617 = vunpack.c.h.b16 %v2324
    %v2618 = vunpack.c.l.b16 %v2325
    %v2619 = vunpack.c.h.b16 %v2325
    %v2620 = vunpack.c.l.b16 %v2326
    %v2621 = vunpack.c.h.b16 %v2326
    %v2622 = vunpack.c.l.b16 %v2327
    %v2623 = vunpack.c.h.b16 %v2327
    %v2624 = vunpack.c.l.b16 %v2328
    %v2625 = vunpack.c.h.b16 %v2328
    %v2626 = vunpack.c.l.b16 %v2329
    %v2627 = vunpack.c.h.b16 %v2329
    %v2628 = vunpack.c.l.b16 %v2330
    %v2629 = vunpack.c.h.b16 %v2330
    %v2630 = vunpack.c.l.b16 %v2331
    %v2631 = vunpack.c.h.b16 %v2331
    %v2632 = vunpack.c.l.b16 %v2332
    %v2633 = vunpack.c.h.b16 %v2332
    %v2634 = vunpack.c.l.b16 %v2333
    %v2635 = vunpack.c.h.b16 %v2333
    %v2636 = vpack.c.b16 %v2458, %v2456
    %v2637 = vpack.c.b16 %v2459, %v2457
    %v2638 = vpack.c.b16 %v2462, %v2460
    %v2639 = vpack.c.b16 %v2463, %v2461
    %v2640 = vpack.c.b16 %v2466, %v2464
    %v2641 = vpack.c.b16 %v2467, %v2465
    %v2642 = vpack.c.b16 %v2470, %v2468
    %v2643 = vpack.c.b16 %v2471, %v2469
    %v2644 = vpack.c.b16 %v2474, %v2472
    %v2645 = vpack.c.b16 %v2475, %v2473
    %v2646 = vpack.c.b16 %v2478, %v2476
    %v2647 = vpack.c.b16 %v2479, %v2477
    %v2648 = vpack.c.b16 %v2482, %v2480
    %v2649 = vpack.c.b16 %v2483, %v2481
    %v2650 = vpack.c.b16 %v2486, %v2484
    %v2651 = vpack.c.b16 %v2487, %v2485
    %v2652 = vpack.c.b16 %v2490, %v2488
    %v2653 = vpack.c.b16 %v2491, %v2489
    %v2654 = vpack.c.b16 %v2494, %v2492
    %v2655 = vpack.c.b16 %v2495, %v2493
    %v2656 = vpack.c.b16 %v2498, %v2496
    %v2657 = vpack.c.b16 %v2499, %v2497
    %v2658 = vpack.c.b16 %v2502, %v2500
    %v2659 = vpack.c.b16 %v2503, %v2501
    %v2660 = vpack.c.b16 %v2506, %v2504
    %v2661 = vpack.c.b16 %v2507, %v2505
    %v2662 = vpack.c.b16 %v2510, %v2508
    %v2663 = vpack.c.b16 %v2511, %v2509
    %v2664 = vpack.c.b16 %v2514, %v2512
    %v2665 = vpack.c.b16 %v2515, %v2513
    %v2666 = vpack.c.b16 %v2518, %v2516
    %v2667 = vpack.c.b16 %v2519, %v2517
    %v2668 = vpack.c.b16 %v2522, %v2520
    %v2669 = vpack.c.b16 %v2523, %v2521
    %v2670 = vpack.c.b16 %v2526, %v2524
    %v2671 = vpack.c.b16 %v2527, %v2525
    %v2672 = vpack.c.b16 %v2530, %v2528
    %v2673 = vpack.c.b16 %v2531, %v2529
    %v2674 = vpack.c.b16 %v2534, %v2532
    %v2675 = vpack.c.b16 %v2535, %v2533
    %v2676 = vpack.c.b16 %v2538, %v2536
    %v2677 = vpack.c.b16 %v2539, %v2537
    %v2678 = vpack.c.b16 %v2542, %v2540
    %v2679 = vpack.c.b16 %v2543, %v2541
    %v2680 = vpack.c.b16 %v2546, %v2544
    %v2681 = vpack.c.b16 %v2547, %v2545
    %v2682 = vpack.c.b16 %v2550, %v2548
    %v2683 = vpack.c.b16 %v2551, %v2549
    %v2684 = vpack.c.b16 %v2554, %v2552
    %v2685 = vpack.c.b16 %v2555, %v2553
    %v2686 = vpack.c.b16 %v2558, %v2556
    %v2687 = vpack.c.b16 %v2559, %v2557
    %v2688 = vpack.c.b16 %v2562, %v2560
    %v2689 = vpack.c.b16 %v2563, %v2561
    %v2690 = vpack.c.b16 %v2566, %v2564
    %v2691 = vpack.c.b16 %v2567, %v2565
    %v2692 = vpack.c.b16 %v2570, %v2568
    %v2693 = vpack.c.b16 %v2571, %v2569
    %v2694 = vpack.c.b16 %v2574, %v2572
    %v2695 = vpack.c.b16 %v2575, %v2573
    %v2696 = vpack.c.b16 %v2578, %v2576
    %v2697 = vpack.c.b16 %v2579, %v2577
    %v2698 = vpack.c.b16 %v2582, %v2580
    %v2699 = vpack.c.b16 %v2583, %v2581
    %v2700 = vpack.c.b16 %v2586, %v2584
    %v2701 = vpack.c.b16 %v2587, %v2585
    %v2702 = vpack.c.b16 %v2590, %v2588
    %v2703 = vpack.c.b16 %v2591, %v2589
    %v2704 = vpack.c.b16 %v2594, %v2592
    %v2705 = vpack.c.b16 %v2595, %v2593
    %v2706 = vpack.c.b16 %v2598, %v2596
    %v2707 = vpack.c.b16 %v2599, %v2597
    %v2708 = vpack.c.b16 %v2602, %v2600
    %v2709 = vpack.c.b16 %v2603, %v2601
    %v2710 = vpack.c.b16 %v2606, %v2604
    %v2711 = vpack.c.b16 %v2607, %v2605
    %v2712 = vpack.c.b16 %v2610, %v2608
    %v2713 = vpack.c.b16 %v2611, %v2609
    %v2714 = vpack.c.b16 %v2614, %v2612
    %v2715 = vpack.c.b16 %v2615, %v2613
    %v2716 = vpack.c.b16 %v2618, %v2616
    %v2717 = vpack.c.b16 %v2619, %v2617
    %v2718 = vpack.c.b16 %v2622, %v2620
    %v2719 = vpack.c.b16 %v2623, %v2621
    %v2720 = vpack.c.b16 %v2626, %v2624
    %v2721 = vpack.c.b16 %v2627, %v2625
    %v2722 = vpack.c.b16 %v2630, %v2628
    %v2723 = vpack.c.b16 %v2631, %v2629
    %v2724 = vpack.c.b16 %v2634, %v2632
    %v2725 = vpack.c.b16 %v2635, %v2633
    %v2848 = vunpack.c.l.b16 %v2334
    %v2849 = vunpack.c.h.b16 %v2334
    %v2850 = vunpack.c.l.b16 %v2335
    %v2851 = vunpack.c.h.b16 %v2335
    %v2852 = vunpack.c.l.b16 %v2336
    %v2853 = vunpack.c.h.b16 %v2336
    %v2854 = vunpack.c.l.b16 %v2337
    %v2855 = vunpack.c.h.b16 %v2337
    %v2856 = vunpack.c.l.b16 %v2338
    %v2857 = vunpack.c.h.b16 %v2338
    %v2858 = vunpack.c.l.b16 %v2339
    %v2859 = vunpack.c.h.b16 %v2339
    %v2860 = vunpack.c.l.b16 %v2340
    %v2861 = vunpack.c.h.b16 %v2340
    %v2862 = vunpack.c.l.b16 %v2341
    %v2863 = vunpack.c.h.b16 %v2341
    %v2864 = vunpack.c.l.b16 %v2342
    %v2865 = vunpack.c.h.b16 %v2342
    %v2866 = vunpack.c.l.b16 %v2343
    %v2867 = vunpack.c.h.b16 %v2343
    %v2868 = vunpack.c.l.b16 %v2344
    %v2869 = vunpack.c.h.b16 %v2344
    %v2870 = vunpack.c.l.b16 %v2345
    %v2871 = vunpack.c.h.b16 %v2345
    %v2872 = vunpack.c.l.b16 %v2346
    %v2873 = vunpack.c.h.b16 %v2346
    %v2874 = vunpack.c.l.b16 %v2347
    %v2875 = vunpack.c.h.b16 %v2347
    %v2876 = vunpack.c.l.b16 %v2348
    %v2877 = vunpack.c.h.b16 %v2348
    %v2878 = vunpack.c.l.b16 %v2349
    %v2879 = vunpack.c.h.b16 %v2349
    %v2880 = vunpack.c.l.b16 %v2350
    %v2881 = vunpack.c.h.b16 %v2350
    %v2882 = vunpack.c.l.b16 %v2351
    %v2883 = vunpack.c.h.b16 %v2351
    %v2884 = vunpack.c.l.b16 %v2352
    %v2885 = vunpack.c.h.b16 %v2352
    %v2886 = vunpack.c.l.b16 %v2353
    %v2887 = vunpack.c.h.b16 %v2353
    %v2888 = vunpack.c.l.b16 %v2354
    %v2889 = vunpack.c.h.b16 %v2354
    %v2890 = vunpack.c.l.b16 %v2355
    %v2891 = vunpack.c.h.b16 %v2355
    %v2892 = vunpack.c.l.b16 %v2356
    %v2893 = vunpack.c.h.b16 %v2356
    %v2894 = vunpack.c.l.b16 %v2357
    %v2895 = vunpack.c.h.b16 %v2357
    %v2896 = vunpack.c.l.b16 %v2358
    %v2897 = vunpack.c.h.b16 %v2358
    %v2898 = vunpack.c.l.b16 %v2359
    %v2899 = vunpack.c.h.b16 %v2359
    %v2900 = vunpack.c.l.b16 %v2360
    %v2901 = vunpack.c.h.b16 %v2360
    %v2902 = vunpack.c.l.b16 %v2361
    %v2903 = vunpack.c.h.b16 %v2361
    %v2904 = vunpack.c.l.b16 %v2362
    %v2905 = vunpack.c.h.b16 %v2362
    %v2906 = vunpack.c.l.b16 %v2363
    %v2907 = vunpack.c.h.b16 %v2363
    %v2908 = vunpack.c.l.b16 %v2364
    %v2909 = vunpack.c.h.b16 %v2364
    %v2910 = vunpack.c.l.b16 %v2365
    %v2911 = vunpack.c.h.b16 %v2365
    %v2912 = vpack.c.b16 %v2850, %v2848
    %v2913 = vpack.c.b16 %v2851, %v2849
    %v2914 = vpack.c.b16 %v2854, %v2852
    %v2915 = vpack.c.b16 %v2855, %v2853
    %v2916 = vpack.c.b16 %v2858, %v2856
    %v2917 = vpack.c.b16 %v2859, %v2857
    %v2918 = vpack.c.b16 %v2862, %v2860
    %v2919 = vpack.c.b16 %v2863, %v2861
    %v2920 = vpack.c.b16 %v2866, %v2864
    %v2921 = vpack.c.b16 %v2867, %v2865
    %v2922 = vpack.c.b16 %v2870, %v2868
    %v2923 = vpack.c.b16 %v2871, %v2869
    %v2924 = vpack.c.b16 %v2874, %v2872
    %v2925 = vpack.c.b16 %v2875, %v2873
    %v2926 = vpack.c.b16 %v2878, %v2876
    %v2927 = vpack.c.b16 %v2879, %v2877
    %v2928 = vpack.c.b16 %v2882, %v2880
    %v2929 = vpack.c.b16 %v2883, %v2881
    %v2930 = vpack.c.b16 %v2886, %v2884
    %v2931 = vpack.c.b16 %v2887, %v2885
    %v2932 = vpack.c.b16 %v2890, %v2888
    %v2933 = vpack.c.b16 %v2891, %v2889
    %v2934 = vpack.c.b16 %v2894, %v2892
    %v2935 = vpack.c.b16 %v2895, %v2893
    %v2936 = vpack.c.b16 %v2898, %v2896
    %v2937 = vpack.c.b16 %v2899, %v2897
    %v2938 = vpack.c.b16 %v2902, %v2900
    %v2939 = vpack.c.b16 %v2903, %v2901
    %v2940 = vpack.c.b16 %v2906, %v2904
    %v2941 = vpack.c.b16 %v2907, %v2905
    %v2942 = vpack.c.b16 %v2910, %v2908
    %v2943 = vpack.c.b16 %v2911, %v2909
    %2976 = vmatprep.subr.bf16.mxu0 %v2913
    %2977 = vmatpush1.bf16.msra.mxu0 %v2912
    %2978 = vmatprep.subr.bf16.mxu0 %v2915
    %2979 = vmatpush1.bf16.msra.mxu0 %v2914
    %2980 = vmatprep.subr.bf16.mxu0 %v2917
    %2981 = vmatpush1.bf16.msra.mxu0 %v2916
    %2982 = vmatprep.subr.bf16.mxu0 %v2919
    %2983 = vmatpush1.bf16.msra.mxu0 %v2918
    %2984 = vmatprep.subr.bf16.mxu0 %v2921
    %2985 = vmatpush1.bf16.msra.mxu0 %v2920
    %2986 = vmatprep.subr.bf16.mxu0 %v2923
    %2987 = vmatpush1.bf16.msra.mxu0 %v2922
    %2988 = vmatprep.subr.bf16.mxu0 %v2925
    %2989 = vmatpush1.bf16.msra.mxu0 %v2924
    %2990 = vmatprep.subr.bf16.mxu0 %v2927
    %2991 = vmatpush1.bf16.msra.mxu0 %v2926
    %2992 = vmatprep.subr.bf16.mxu0 %v2929
    %2993 = vmatpush1.bf16.msra.mxu0 %v2928
    %2994 = vmatprep.subr.bf16.mxu0 %v2931
    %2995 = vmatpush1.bf16.msra.mxu0 %v2930
    %2996 = vmatprep.subr.bf16.mxu0 %v2933
    %2997 = vmatpush1.bf16.msra.mxu0 %v2932
    %2998 = vmatprep.subr.bf16.mxu0 %v2935
    %2999 = vmatpush1.bf16.msra.mxu0 %v2934
    %3000 = vmatprep.subr.bf16.mxu0 %v2937
    %3001 = vmatpush1.bf16.msra.mxu0 %v2936
    %3002 = vmatprep.subr.bf16.mxu0 %v2939
    %3003 = vmatpush1.bf16.msra.mxu0 %v2938
    %3004 = vmatprep.subr.bf16.mxu0 %v2941
    %3005 = vmatpush1.bf16.msra.mxu0 %v2940
    %3006 = vmatprep.subr.bf16.mxu0 %v2943
    %3007 = vmatpush1.bf16.msra.mxu0 %v2942
    %3008 = vmatprep.mubr.bf16.mxu0 %v2637
    %3009 = vmatmul.mubr.bf16.gmra.mrb[0].mxu0 %v2636
    %v3010 = vpop.f32.mrb[0].mxu0
    %v3011 = vadd.f32 0.0, %v3010
    %v3012 = vpop.f32.mrb[0].mxu0
    %v3013 = vadd.f32 0.0, %v3012
    %v3014 = vpop.f32.mrb[0].mxu0
    %v3015 = vadd.f32 0.0, %v3014
    %v3016 = vpop.f32.mrb[0].mxu0
    %v3017 = vadd.f32 0.0, %v3016
    %3018 = vmatprep.mubr.bf16.mxu0 %v2639
    %3019 = vmatmul.mubr.bf16.gmra.mrb[0].mxu0 %v2638
    %v3020 = vpop.f32.mrb[0].mxu0
    %v3021 = vadd.f32 0.0, %v3020
    %v3022 = vpop.f32.mrb[0].mxu0
    %v3023 = vadd.f32 0.0, %v3022
    %v3024 = vpop.f32.mrb[0].mxu0
    %v3025 = vadd.f32 0.0, %v3024
    %v3026 = vpop.f32.mrb[0].mxu0
    %v3027 = vadd.f32 0.0, %v3026
    %3028 = vmatprep.mubr.bf16.mxu0 %v2641
    %3029 = vmatmul.mubr.bf16.gmra.mrb[0].mxu0 %v2640
    %v3030 = vpop.f32.mrb[0].mxu0
    %v3031 = vadd.f32 0.0, %v3030
    %v3032 = vpop.f32.mrb[0].mxu0
    %v3033 = vadd.f32 0.0, %v3032
    %v3034 = vpop.f32.mrb[0].mxu0
    %v3035 = vadd.f32 0.0, %v3034
    %v3036 = vpop.f32.mrb[0].mxu0
    %v3037 = vadd.f32 0.0, %v3036
    %3038 = vmatprep.mubr.bf16.mxu0 %v2643
    %3039 = vmatmul.mubr.bf16.gmra.mrb[0].mxu0 %v2642
    %v3040 = vpop.f32.mrb[0].mxu0
    %v3041 = vadd.f32 0.0, %v3040
    %v3042 = vpop.f32.mrb[0].mxu0
    %v3043 = vadd.f32 0.0, %v3042
    %v3044 = vpop.f32.mrb[0].mxu0
    %v3045 = vadd.f32 0.0, %v3044
    %v3046 = vpop.f32.mrb[0].mxu0
    %v3047 = vadd.f32 0.0, %v3046
    %3048 = vmatprep.mubr.bf16.mxu0 %v2645
    %3049 = vmatmul.mubr.bf16.gmra.mrb[0].mxu0 %v2644
    %v3050 = vpop.f32.mrb[0].mxu0
    %v3051 = vadd.f32 0.0, %v3050
    %v3052 = vpop.f32.mrb[0].mxu0
    %v3053 = vadd.f32 0.0, %v3052
    %v3054 = vpop.f32.mrb[0].mxu0
    %v3055 = vadd.f32 0.0, %v3054
    %v3056 = vpop.f32.mrb[0].mxu0
    %v3057 = vadd.f32 0.0, %v3056
    %3058 = vmatprep.mubr.bf16.mxu0 %v2647
    %3059 = vmatmul.mubr.bf16.gmra.mrb[0].mxu0 %v2646
    %v3060 = vpop.f32.mrb[0].mxu0
    %v3061 = vadd.f32 0.0, %v3060
    %v3062 = vpop.f32.mrb[0].mxu0
    %v3063 = vadd.f32 0.0, %v3062
    %v3064 = vpop.f32.mrb[0].mxu0
    %v3065 = vadd.f32 0.0, %v3064
    %v3066 = vpop.f32.mrb[0].mxu0
    %v3067 = vadd.f32 0.0, %v3066
    %3068 = vmatprep.mubr.bf16.mxu0 %v2649
    %3069 = vmatmul.mubr.bf16.gmra.mrb[0].mxu0 %v2648
    %v3070 = vpop.f32.mrb[0].mxu0
    %v3071 = vadd.f32 0.0, %v3070
    %v3072 = vpop.f32.mrb[0].mxu0
    %v3073 = vadd.f32 0.0, %v3072
    %v3074 = vpop.f32.mrb[0].mxu0
    %v3075 = vadd.f32 0.0, %v3074
    %v3076 = vpop.f32.mrb[0].mxu0
    %v3077 = vadd.f32 0.0, %v3076
    %3078 = vmatprep.mubr.bf16.mxu0 %v2651
    %3079 = vmatmul.mubr.bf16.gmra.mrb[0].mxu0 %v2650
    %v3080 = vpop.f32.mrb[0].mxu0
    %v3081 = vadd.f32 0.0, %v3080
    %v3082 = vpop.f32.mrb[0].mxu0
    %v3083 = vadd.f32 0.0, %v3082
    %v3084 = vpop.f32.mrb[0].mxu0
    %v3085 = vadd.f32 0.0, %v3084
    %v3086 = vpop.f32.mrb[0].mxu0
    %v3087 = vadd.f32 0.0, %v3086
    %3088 = vmatprep.mubr.bf16.mxu0 %v2653
    %3089 = vmatmul.mubr.bf16.gmra.mrb[0].mxu0 %v2652
    %v3090 = vpop.f32.mrb[0].mxu0
    %v3091 = vadd.f32 0.0, %v3090
    %v3092 = vpop.f32.mrb[0].mxu0
    %v3093 = vadd.f32 0.0, %v3092
    %v3094 = vpop.f32.mrb[0].mxu0
    %v3095 = vadd.f32 0.0, %v3094
    %v3096 = vpop.f32.mrb[0].mxu0
    %v3097 = vadd.f32 0.0, %v3096
    %3098 = vmatprep.mubr.bf16.mxu0 %v2655
    %3099 = vmatmul.mubr.bf16.gmra.mrb[0].mxu0 %v2654
    %v3100 = vpop.f32.mrb[0].mxu0
    %v3101 = vadd.f32 0.0, %v3100
    %v3102 = vpop.f32.mrb[0].mxu0
    %v3103 = vadd.f32 0.0, %v3102
    %v3104 = vpop.f32.mrb[0].mxu0
    %v3105 = vadd.f32 0.0, %v3104
    %v3106 = vpop.f32.mrb[0].mxu0
    %v3107 = vadd.f32 0.0, %v3106
    %3108 = vmatprep.mubr.bf16.mxu0 %v2657
    %3109 = vmatmul.mubr.bf16.gmra.mrb[0].mxu0 %v2656
    %v3110 = vpop.f32.mrb[0].mxu0
    %v3111 = vadd.f32 0.0, %v3110
    %v3112 = vpop.f32.mrb[0].mxu0
    %v3113 = vadd.f32 0.0, %v3112
    %v3114 = vpop.f32.mrb[0].mxu0
    %v3115 = vadd.f32 0.0, %v3114
    %v3116 = vpop.f32.mrb[0].mxu0
    %v3117 = vadd.f32 0.0, %v3116
    %3118 = vmatprep.mubr.bf16.mxu0 %v2659
    %3119 = vmatmul.mubr.bf16.gmra.mrb[0].mxu0 %v2658
    %v3120 = vpop.f32.mrb[0].mxu0
    %v3121 = vadd.f32 0.0, %v3120
    %v3122 = vpop.f32.mrb[0].mxu0
    %v3123 = vadd.f32 0.0, %v3122
    %v3124 = vpop.f32.mrb[0].mxu0
    %v3125 = vadd.f32 0.0, %v3124
    %v3126 = vpop.f32.mrb[0].mxu0
    %v3127 = vadd.f32 0.0, %v3126
    %3128 = vmatprep.mubr.bf16.mxu0 %v2661
    %3129 = vmatmul.mubr.bf16.gmra.mrb[0].mxu0 %v2660
    %v3130 = vpop.f32.mrb[0].mxu0
    %v3131 = vadd.f32 0.0, %v3130
    %v3132 = vpop.f32.mrb[0].mxu0
    %v3133 = vadd.f32 0.0, %v3132
    %v3134 = vpop.f32.mrb[0].mxu0
    %v3135 = vadd.f32 0.0, %v3134
    %v3136 = vpop.f32.mrb[0].mxu0
    %v3137 = vadd.f32 0.0, %v3136
    %3138 = vmatprep.mubr.bf16.mxu0 %v2663
    %3139 = vmatmul.mubr.bf16.gmra.mrb[0].mxu0 %v2662
    %v3140 = vpop.f32.mrb[0].mxu0
    %v3141 = vadd.f32 0.0, %v3140
    %v3142 = vpop.f32.mrb[0].mxu0
    %v3143 = vadd.f32 0.0, %v3142
    %v3144 = vpop.f32.mrb[0].mxu0
    %v3145 = vadd.f32 0.0, %v3144
    %v3146 = vpop.f32.mrb[0].mxu0
    %v3147 = vadd.f32 0.0, %v3146
    %3148 = vmatprep.mubr.bf16.mxu0 %v2665
    %3149 = vmatmul.mubr.bf16.gmra.mrb[0].mxu0 %v2664
    %v3150 = vpop.f32.mrb[0].mxu0
    %v3151 = vadd.f32 0.0, %v3150
    %v3152 = vpop.f32.mrb[0].mxu0
    %v3153 = vadd.f32 0.0, %v3152
    %v3154 = vpop.f32.mrb[0].mxu0
    %v3155 = vadd.f32 0.0, %v3154
    %v3156 = vpop.f32.mrb[0].mxu0
    %v3157 = vadd.f32 0.0, %v3156
    %3158 = vmatprep.mubr.bf16.mxu0 %v2667
    %3159 = vmatmul.mubr.bf16.gmra.mrb[0].mxu0 %v2666
    %v3160 = vpop.f32.mrb[0].mxu0
    %v3161 = vadd.f32 0.0, %v3160
    %v3162 = vpop.f32.mrb[0].mxu0
    %v3163 = vadd.f32 0.0, %v3162
    %v3164 = vpop.f32.mrb[0].mxu0
    %v3165 = vadd.f32 0.0, %v3164
    %v3166 = vpop.f32.mrb[0].mxu0
    %v3167 = vadd.f32 0.0, %v3166
    %3168 = vmatprep.mubr.bf16.mxu0 %v2669
    %3169 = vmatmul.mubr.bf16.gmra.mrb[0].mxu0 %v2668
    %v3170 = vpop.f32.mrb[0].mxu0
    %v3171 = vadd.f32 0.0, %v3170
    %v3172 = vpop.f32.mrb[0].mxu0
    %v3173 = vadd.f32 0.0, %v3172
    %v3174 = vpop.f32.mrb[0].mxu0
    %v3175 = vadd.f32 0.0, %v3174
    %v3176 = vpop.f32.mrb[0].mxu0
    %v3177 = vadd.f32 0.0, %v3176
    %3178 = vmatprep.mubr.bf16.mxu0 %v2671
    %3179 = vmatmul.mubr.bf16.gmra.mrb[0].mxu0 %v2670
    %v3180 = vpop.f32.mrb[0].mxu0
    %v3181 = vadd.f32 0.0, %v3180
    %v3182 = vpop.f32.mrb[0].mxu0
    %v3183 = vadd.f32 0.0, %v3182
    %v3184 = vpop.f32.mrb[0].mxu0
    %v3185 = vadd.f32 0.0, %v3184
    %v3186 = vpop.f32.mrb[0].mxu0
    %v3187 = vadd.f32 0.0, %v3186
    %3188 = vmatprep.mubr.bf16.mxu0 %v2673
    %3189 = vmatmul.mubr.bf16.gmra.mrb[0].mxu0 %v2672
    %v3190 = vpop.f32.mrb[0].mxu0
    %v3191 = vadd.f32 0.0, %v3190
    %v3192 = vpop.f32.mrb[0].mxu0
    %v3193 = vadd.f32 0.0, %v3192
    %v3194 = vpop.f32.mrb[0].mxu0
    %v3195 = vadd.f32 0.0, %v3194
    %v3196 = vpop.f32.mrb[0].mxu0
    %v3197 = vadd.f32 0.0, %v3196
    %3198 = vmatprep.mubr.bf16.mxu0 %v2675
    %3199 = vmatmul.mubr.bf16.gmra.mrb[0].mxu0 %v2674
    %v3200 = vpop.f32.mrb[0].mxu0
    %v3201 = vadd.f32 0.0, %v3200
    %v3202 = vpop.f32.mrb[0].mxu0
    %v3203 = vadd.f32 0.0, %v3202
    %v3204 = vpop.f32.mrb[0].mxu0
    %v3205 = vadd.f32 0.0, %v3204
    %v3206 = vpop.f32.mrb[0].mxu0
    %v3207 = vadd.f32 0.0, %v3206
    %3208 = vmatprep.mubr.bf16.mxu0 %v2677
    %3209 = vmatmul.mubr.bf16.gmra.mrb[0].mxu0 %v2676
    %v3210 = vpop.f32.mrb[0].mxu0
    %v3211 = vadd.f32 0.0, %v3210
    %v3212 = vpop.f32.mrb[0].mxu0
    %v3213 = vadd.f32 0.0, %v3212
    %v3214 = vpop.f32.mrb[0].mxu0
    %v3215 = vadd.f32 0.0, %v3214
    %v3216 = vpop.f32.mrb[0].mxu0
    %v3217 = vadd.f32 0.0, %v3216
    %3218 = vmatprep.mubr.bf16.mxu0 %v2679
    %3219 = vmatmul.mubr.bf16.gmra.mrb[0].mxu0 %v2678
    %v3220 = vpop.f32.mrb[0].mxu0
    %v3221 = vadd.f32 0.0, %v3220
    %v3222 = vpop.f32.mrb[0].mxu0
    %v3223 = vadd.f32 0.0, %v3222
    %v3224 = vpop.f32.mrb[0].mxu0
    %v3225 = vadd.f32 0.0, %v3224
    %v3226 = vpop.f32.mrb[0].mxu0
    %v3227 = vadd.f32 0.0, %v3226
    %3228 = vmatprep.mubr.bf16.mxu0 %v2681
    %3229 = vmatmul.mubr.bf16.gmra.mrb[0].mxu0 %v2680
    %v3230 = vpop.f32.mrb[0].mxu0
    %v3231 = vadd.f32 0.0, %v3230
    %v3232 = vpop.f32.mrb[0].mxu0
    %v3233 = vadd.f32 0.0, %v3232
    %v3234 = vpop.f32.mrb[0].mxu0
    %v3235 = vadd.f32 0.0, %v3234
    %v3236 = vpop.f32.mrb[0].mxu0
    %v3237 = vadd.f32 0.0, %v3236
    %3238 = vmatprep.mubr.bf16.mxu0 %v2683
    %3239 = vmatmul.mubr.bf16.gmra.mrb[0].mxu0 %v2682
    %v3240 = vpop.f32.mrb[0].mxu0
    %v3241 = vadd.f32 0.0, %v3240
    %v3242 = vpop.f32.mrb[0].mxu0
    %v3243 = vadd.f32 0.0, %v3242
    %v3244 = vpop.f32.mrb[0].mxu0
    %v3245 = vadd.f32 0.0, %v3244
    %v3246 = vpop.f32.mrb[0].mxu0
    %v3247 = vadd.f32 0.0, %v3246
    %3248 = vmatprep.mubr.bf16.mxu0 %v2685
    %3249 = vmatmul.mubr.bf16.gmra.mrb[0].mxu0 %v2684
    %v3250 = vpop.f32.mrb[0].mxu0
    %v3251 = vadd.f32 0.0, %v3250
    %v3252 = vpop.f32.mrb[0].mxu0
    %v3253 = vadd.f32 0.0, %v3252
    %v3254 = vpop.f32.mrb[0].mxu0
    %v3255 = vadd.f32 0.0, %v3254
    %v3256 = vpop.f32.mrb[0].mxu0
    %v3257 = vadd.f32 0.0, %v3256
    %3258 = vmatprep.mubr.bf16.mxu0 %v2687
    %3259 = vmatmul.mubr.bf16.gmra.mrb[0].mxu0 %v2686
    %v3260 = vpop.f32.mrb[0].mxu0
    %v3261 = vadd.f32 0.0, %v3260
    %v3262 = vpop.f32.mrb[0].mxu0
    %v3263 = vadd.f32 0.0, %v3262
    %v3264 = vpop.f32.mrb[0].mxu0
    %v3265 = vadd.f32 0.0, %v3264
    %v3266 = vpop.f32.mrb[0].mxu0
    %v3267 = vadd.f32 0.0, %v3266
    %3268 = vmatprep.mubr.bf16.mxu0 %v2689
    %3269 = vmatmul.mubr.bf16.gmra.mrb[0].mxu0 %v2688
    %v3270 = vpop.f32.mrb[0].mxu0
    %v3271 = vadd.f32 0.0, %v3270
    %v3272 = vpop.f32.mrb[0].mxu0
    %v3273 = vadd.f32 0.0, %v3272
    %v3274 = vpop.f32.mrb[0].mxu0
    %v3275 = vadd.f32 0.0, %v3274
    %v3276 = vpop.f32.mrb[0].mxu0
    %v3277 = vadd.f32 0.0, %v3276
    %3278 = vmatprep.mubr.bf16.mxu0 %v2691
    %3279 = vmatmul.mubr.bf16.gmra.mrb[0].mxu0 %v2690
    %v3280 = vpop.f32.mrb[0].mxu0
    %v3281 = vadd.f32 0.0, %v3280
    %v3282 = vpop.f32.mrb[0].mxu0
    %v3283 = vadd.f32 0.0, %v3282
    %v3284 = vpop.f32.mrb[0].mxu0
    %v3285 = vadd.f32 0.0, %v3284
    %v3286 = vpop.f32.mrb[0].mxu0
    %v3287 = vadd.f32 0.0, %v3286
    %3288 = vmatprep.mubr.bf16.mxu0 %v2693
    %3289 = vmatmul.mubr.bf16.gmra.mrb[0].mxu0 %v2692
    %v3290 = vpop.f32.mrb[0].mxu0
    %v3291 = vadd.f32 0.0, %v3290
    %v3292 = vpop.f32.mrb[0].mxu0
    %v3293 = vadd.f32 0.0, %v3292
    %v3294 = vpop.f32.mrb[0].mxu0
    %v3295 = vadd.f32 0.0, %v3294
    %v3296 = vpop.f32.mrb[0].mxu0
    %v3297 = vadd.f32 0.0, %v3296
    %3298 = vmatprep.mubr.bf16.mxu0 %v2695
    %3299 = vmatmul.mubr.bf16.gmra.mrb[0].mxu0 %v2694
    %v3300 = vpop.f32.mrb[0].mxu0
    %v3301 = vadd.f32 0.0, %v3300
    %v3302 = vpop.f32.mrb[0].mxu0
    %v3303 = vadd.f32 0.0, %v3302
    %v3304 = vpop.f32.mrb[0].mxu0
    %v3305 = vadd.f32 0.0, %v3304
    %v3306 = vpop.f32.mrb[0].mxu0
    %v3307 = vadd.f32 0.0, %v3306
    %3308 = vmatprep.mubr.bf16.mxu0 %v2697
    %3309 = vmatmul.mubr.bf16.gmra.mrb[0].mxu0 %v2696
    %v3310 = vpop.f32.mrb[0].mxu0
    %v3311 = vadd.f32 0.0, %v3310
    %v3312 = vpop.f32.mrb[0].mxu0
    %v3313 = vadd.f32 0.0, %v3312
    %v3314 = vpop.f32.mrb[0].mxu0
    %v3315 = vadd.f32 0.0, %v3314
    %v3316 = vpop.f32.mrb[0].mxu0
    %v3317 = vadd.f32 0.0, %v3316
    %3318 = vmatprep.mubr.bf16.mxu0 %v2699
    %3319 = vmatmul.mubr.bf16.gmra.mrb[0].mxu0 %v2698
    %v3320 = vpop.f32.mrb[0].mxu0
    %v3321 = vadd.f32 0.0, %v3320
    %v3322 = vpop.f32.mrb[0].mxu0
    %v3323 = vadd.f32 0.0, %v3322
    %v3324 = vpop.f32.mrb[0].mxu0
    %v3325 = vadd.f32 0.0, %v3324
    %v3326 = vpop.f32.mrb[0].mxu0
    %v3327 = vadd.f32 0.0, %v3326
    %3328 = vmatprep.mubr.bf16.mxu0 %v2701
    %3329 = vmatmul.mubr.bf16.gmra.mrb[0].mxu0 %v2700
    %v3330 = vpop.f32.mrb[0].mxu0
    %v3331 = vadd.f32 0.0, %v3330
    %v3332 = vpop.f32.mrb[0].mxu0
    %v3333 = vadd.f32 0.0, %v3332
    %v3334 = vpop.f32.mrb[0].mxu0
    %v3335 = vadd.f32 0.0, %v3334
    %v3336 = vpop.f32.mrb[0].mxu0
    %v3337 = vadd.f32 0.0, %v3336
    %3338 = vmatprep.mubr.bf16.mxu0 %v2703
    %3339 = vmatmul.mubr.bf16.gmra.mrb[0].mxu0 %v2702
    %v3340 = vpop.f32.mrb[0].mxu0
    %v3341 = vadd.f32 0.0, %v3340
    %v3342 = vpop.f32.mrb[0].mxu0
    %v3343 = vadd.f32 0.0, %v3342
    %v3344 = vpop.f32.mrb[0].mxu0
    %v3345 = vadd.f32 0.0, %v3344
    %v3346 = vpop.f32.mrb[0].mxu0
    %v3347 = vadd.f32 0.0, %v3346
    %3348 = vmatprep.mubr.bf16.mxu0 %v2705
    %3349 = vmatmul.mubr.bf16.gmra.mrb[0].mxu0 %v2704
    %v3350 = vpop.f32.mrb[0].mxu0
    %v3351 = vadd.f32 0.0, %v3350
    %v3352 = vpop.f32.mrb[0].mxu0
    %v3353 = vadd.f32 0.0, %v3352
    %v3354 = vpop.f32.mrb[0].mxu0
    %v3355 = vadd.f32 0.0, %v3354
    %v3356 = vpop.f32.mrb[0].mxu0
    %v3357 = vadd.f32 0.0, %v3356
    %3358 = vmatprep.mubr.bf16.mxu0 %v2707
    %3359 = vmatmul.mubr.bf16.gmra.mrb[0].mxu0 %v2706
    %v3360 = vpop.f32.mrb[0].mxu0
    %v3361 = vadd.f32 0.0, %v3360
    %v3362 = vpop.f32.mrb[0].mxu0
    %v3363 = vadd.f32 0.0, %v3362
    %v3364 = vpop.f32.mrb[0].mxu0
    %v3365 = vadd.f32 0.0, %v3364
    %v3366 = vpop.f32.mrb[0].mxu0
    %v3367 = vadd.f32 0.0, %v3366
    %3368 = vmatprep.mubr.bf16.mxu0 %v2709
    %3369 = vmatmul.mubr.bf16.gmra.mrb[0].mxu0 %v2708
    %v3370 = vpop.f32.mrb[0].mxu0
    %v3371 = vadd.f32 0.0, %v3370
    %v3372 = vpop.f32.mrb[0].mxu0
    %v3373 = vadd.f32 0.0, %v3372
    %v3374 = vpop.f32.mrb[0].mxu0
    %v3375 = vadd.f32 0.0, %v3374
    %v3376 = vpop.f32.mrb[0].mxu0
    %v3377 = vadd.f32 0.0, %v3376
    %3378 = vmatprep.mubr.bf16.mxu0 %v2711
    %3379 = vmatmul.mubr.bf16.gmra.mrb[0].mxu0 %v2710
    %v3380 = vpop.f32.mrb[0].mxu0
    %v3381 = vadd.f32 0.0, %v3380
    %v3382 = vpop.f32.mrb[0].mxu0
    %v3383 = vadd.f32 0.0, %v3382
    %v3384 = vpop.f32.mrb[0].mxu0
    %v3385 = vadd.f32 0.0, %v3384
    %v3386 = vpop.f32.mrb[0].mxu0
    %v3387 = vadd.f32 0.0, %v3386
    %3388 = vmatprep.mubr.bf16.mxu0 %v2713
    %3389 = vmatmul.mubr.bf16.gmra.mrb[0].mxu0 %v2712
    %v3390 = vpop.f32.mrb[0].mxu0
    %v3391 = vadd.f32 0.0, %v3390
    %v3392 = vpop.f32.mrb[0].mxu0
    %v3393 = vadd.f32 0.0, %v3392
    %v3394 = vpop.f32.mrb[0].mxu0
    %v3395 = vadd.f32 0.0, %v3394
    %v3396 = vpop.f32.mrb[0].mxu0
    %v3397 = vadd.f32 0.0, %v3396
    %3398 = vmatprep.mubr.bf16.mxu0 %v2715
    %3399 = vmatmul.mubr.bf16.gmra.mrb[0].mxu0 %v2714
    %v3400 = vpop.f32.mrb[0].mxu0
    %v3401 = vadd.f32 0.0, %v3400
    %v3402 = vpop.f32.mrb[0].mxu0
    %v3403 = vadd.f32 0.0, %v3402
    %v3404 = vpop.f32.mrb[0].mxu0
    %v3405 = vadd.f32 0.0, %v3404
    %v3406 = vpop.f32.mrb[0].mxu0
    %v3407 = vadd.f32 0.0, %v3406
    %3408 = vmatprep.mubr.bf16.mxu0 %v2717
    %3409 = vmatmul.mubr.bf16.gmra.mrb[0].mxu0 %v2716
    %v3410 = vpop.f32.mrb[0].mxu0
    %v3411 = vadd.f32 0.0, %v3410
    %v3412 = vpop.f32.mrb[0].mxu0
    %v3413 = vadd.f32 0.0, %v3412
    %v3414 = vpop.f32.mrb[0].mxu0
    %v3415 = vadd.f32 0.0, %v3414
    %v3416 = vpop.f32.mrb[0].mxu0
    %v3417 = vadd.f32 0.0, %v3416
    %3418 = vmatprep.mubr.bf16.mxu0 %v2719
    %3419 = vmatmul.mubr.bf16.gmra.mrb[0].mxu0 %v2718
    %v3420 = vpop.f32.mrb[0].mxu0
    %v3421 = vadd.f32 0.0, %v3420
    %v3422 = vpop.f32.mrb[0].mxu0
    %v3423 = vadd.f32 0.0, %v3422
    %v3424 = vpop.f32.mrb[0].mxu0
    %v3425 = vadd.f32 0.0, %v3424
    %v3426 = vpop.f32.mrb[0].mxu0
    %v3427 = vadd.f32 0.0, %v3426
    %3428 = vmatprep.mubr.bf16.mxu0 %v2721
    %3429 = vmatmul.mubr.bf16.gmra.mrb[0].mxu0 %v2720
    %v3430 = vpop.f32.mrb[0].mxu0
    %v3431 = vadd.f32 0.0, %v3430
    %v3432 = vpop.f32.mrb[0].mxu0
    %v3433 = vadd.f32 0.0, %v3432
    %v3434 = vpop.f32.mrb[0].mxu0
    %v3435 = vadd.f32 0.0, %v3434
    %v3436 = vpop.f32.mrb[0].mxu0
    %v3437 = vadd.f32 0.0, %v3436
    %3438 = vmatprep.mubr.bf16.mxu0 %v2723
    %3439 = vmatmul.mubr.bf16.gmra.mrb[0].mxu0 %v2722
    %v3440 = vpop.f32.mrb[0].mxu0
    %v3441 = vadd.f32 0.0, %v3440
    %v3442 = vpop.f32.mrb[0].mxu0
    %v3443 = vadd.f32 0.0, %v3442
    %v3444 = vpop.f32.mrb[0].mxu0
    %v3445 = vadd.f32 0.0, %v3444
    %v3446 = vpop.f32.mrb[0].mxu0
    %v3447 = vadd.f32 0.0, %v3446
    %3448 = vmatprep.mubr.bf16.mxu0 %v2725
    %3449 = vmatmul.mubr.bf16.gmra.mrb[0].mxu0 %v2724
    %v3450 = vpop.f32.mrb[0].mxu0
    %v3451 = vadd.f32 0.0, %v3450
    %v3452 = vpop.f32.mrb[0].mxu0
    %v3453 = vadd.f32 0.0, %v3452
    %v3454 = vpop.f32.mrb[0].mxu0
    %v3455 = vadd.f32 0.0, %v3454
    %v3456 = vpop.f32.mrb[0].mxu0
    %v3457 = vadd.f32 0.0, %v3456
    %3458 = vdwg.mxu0
    %3459 = vst [vmem:[#allocation3] sm:$0xff] %v3011
    %3460 = vst [vmem:[#allocation3 + $0x8] sm:$0xff] %v3013
    %3461 = vst [vmem:[#allocation3 + $0x10] sm:$0xff] %v3015
    %3462 = vst [vmem:[#allocation3 + $0x18] sm:$0xff] %v3017
    %3463 = vst [vmem:[#allocation3 + $0x20] sm:$0xff] %v3021
    %3464 = vst [vmem:[#allocation3 + $0x28] sm:$0xff] %v3023
    %3465 = vst [vmem:[#allocation3 + $0x30] sm:$0xff] %v3025
    %3466 = vst [vmem:[#allocation3 + $0x38] sm:$0xff] %v3027
    %3467 = vst [vmem:[#allocation3 + $0x40] sm:$0xff] %v3031
    %3468 = vst [vmem:[#allocation3 + $0x48] sm:$0xff] %v3033
    %3469 = vst [vmem:[#allocation3 + $0x50] sm:$0xff] %v3035
    %3470 = vst [vmem:[#allocation3 + $0x58] sm:$0xff] %v3037
    %3471 = vst [vmem:[#allocation3 + $0x60] sm:$0xff] %v3041
    %3472 = vst [vmem:[#allocation3 + $0x68] sm:$0xff] %v3043
    %3473 = vst [vmem:[#allocation3 + $0x70] sm:$0xff] %v3045
    %3474 = vst [vmem:[#allocation3 + $0x78] sm:$0xff] %v3047
    %3475 = vst [vmem:[#allocation3 + $0x80] sm:$0xff] %v3051
    %3476 = vst [vmem:[#allocation3 + $0x88] sm:$0xff] %v3053
    %3477 = vst [vmem:[#allocation3 + $0x90] sm:$0xff] %v3055
    %3478 = vst [vmem:[#allocation3 + $0x98] sm:$0xff] %v3057
    %3479 = vst [vmem:[#allocation3 + $0xa0] sm:$0xff] %v3061
    %3480 = vst [vmem:[#allocation3 + $0xa8] sm:$0xff] %v3063
    %3481 = vst [vmem:[#allocation3 + $0xb0] sm:$0xff] %v3065
    %3482 = vst [vmem:[#allocation3 + $0xb8] sm:$0xff] %v3067
    %3483 = vst [vmem:[#allocation3 + $0xc0] sm:$0xff] %v3071
    %3484 = vst [vmem:[#allocation3 + $0xc8] sm:$0xff] %v3073
    %3485 = vst [vmem:[#allocation3 + $0xd0] sm:$0xff] %v3075
    %3486 = vst [vmem:[#allocation3 + $0xd8] sm:$0xff] %v3077
    %3487 = vst [vmem:[#allocation3 + $0xe0] sm:$0xff] %v3081
    %3488 = vst [vmem:[#allocation3 + $0xe8] sm:$0xff] %v3083
    %3489 = vst [vmem:[#allocation3 + $0xf0] sm:$0xff] %v3085
    %3490 = vst [vmem:[#allocation3 + $0xf8] sm:$0xff] %v3087
    %3491 = vst [vmem:[#allocation3 + $0x100] sm:$0xff] %v3091
    %3492 = vst [vmem:[#allocation3 + $0x108] sm:$0xff] %v3093
    %3493 = vst [vmem:[#allocation3 + $0x110] sm:$0xff] %v3095
    %3494 = vst [vmem:[#allocation3 + $0x118] sm:$0xff] %v3097
    %3495 = vst [vmem:[#allocation3 + $0x120] sm:$0xff] %v3101
    %3496 = vst [vmem:[#allocation3 + $0x128] sm:$0xff] %v3103
    %3497 = vst [vmem:[#allocation3 + $0x130] sm:$0xff] %v3105
    %3498 = vst [vmem:[#allocation3 + $0x138] sm:$0xff] %v3107
    %3499 = vst [vmem:[#allocation3 + $0x140] sm:$0xff] %v3111
    %3500 = vst [vmem:[#allocation3 + $0x148] sm:$0xff] %v3113
    %3501 = vst [vmem:[#allocation3 + $0x150] sm:$0xff] %v3115
    %3502 = vst [vmem:[#allocation3 + $0x158] sm:$0xff] %v3117
    %3503 = vst [vmem:[#allocation3 + $0x160] sm:$0xff] %v3121
    %3504 = vst [vmem:[#allocation3 + $0x168] sm:$0xff] %v3123
    %3505 = vst [vmem:[#allocation3 + $0x170] sm:$0xff] %v3125
    %3506 = vst [vmem:[#allocation3 + $0x178] sm:$0xff] %v3127
    %3507 = vst [vmem:[#allocation3 + $0x180] sm:$0xff] %v3131
    %3508 = vst [vmem:[#allocation3 + $0x188] sm:$0xff] %v3133
    %3509 = vst [vmem:[#allocation3 + $0x190] sm:$0xff] %v3135
    %3510 = vst [vmem:[#allocation3 + $0x198] sm:$0xff] %v3137
    %3511 = vst [vmem:[#allocation3 + $0x1a0] sm:$0xff] %v3141
    %3512 = vst [vmem:[#allocation3 + $0x1a8] sm:$0xff] %v3143
    %3513 = vst [vmem:[#allocation3 + $0x1b0] sm:$0xff] %v3145
    %3514 = vst [vmem:[#allocation3 + $0x1b8] sm:$0xff] %v3147
    %3515 = vst [vmem:[#allocation3 + $0x1c0] sm:$0xff] %v3151
    %3516 = vst [vmem:[#allocation3 + $0x1c8] sm:$0xff] %v3153
    %3517 = vst [vmem:[#allocation3 + $0x1d0] sm:$0xff] %v3155
    %3518 = vst [vmem:[#allocation3 + $0x1d8] sm:$0xff] %v3157
    %3519 = vst [vmem:[#allocation3 + $0x1e0] sm:$0xff] %v3161
    %3520 = vst [vmem:[#allocation3 + $0x1e8] sm:$0xff] %v3163
    %3521 = vst [vmem:[#allocation3 + $0x1f0] sm:$0xff] %v3165
    %3522 = vst [vmem:[#allocation3 + $0x1f8] sm:$0xff] %v3167
    %3523 = vst [vmem:[#allocation3 + $0x200] sm:$0xff] %v3171
    %3524 = vst [vmem:[#allocation3 + $0x208] sm:$0xff] %v3173
    %3525 = vst [vmem:[#allocation3 + $0x210] sm:$0xff] %v3175
    %3526 = vst [vmem:[#allocation3 + $0x218] sm:$0xff] %v3177
    %3527 = vst [vmem:[#allocation3 + $0x220] sm:$0xff] %v3181
    %3528 = vst [vmem:[#allocation3 + $0x228] sm:$0xff] %v3183
    %3529 = vst [vmem:[#allocation3 + $0x230] sm:$0xff] %v3185
    %3530 = vst [vmem:[#allocation3 + $0x238] sm:$0xff] %v3187
    %3531 = vst [vmem:[#allocation3 + $0x240] sm:$0xff] %v3191
    %3532 = vst [vmem:[#allocation3 + $0x248] sm:$0xff] %v3193
    %3533 = vst [vmem:[#allocation3 + $0x250] sm:$0xff] %v3195
    %3534 = vst [vmem:[#allocation3 + $0x258] sm:$0xff] %v3197
    %3535 = vst [vmem:[#allocation3 + $0x260] sm:$0xff] %v3201
    %3536 = vst [vmem:[#allocation3 + $0x268] sm:$0xff] %v3203
    %3537 = vst [vmem:[#allocation3 + $0x270] sm:$0xff] %v3205
    %3538 = vst [vmem:[#allocation3 + $0x278] sm:$0xff] %v3207
    %3539 = vst [vmem:[#allocation3 + $0x280] sm:$0xff] %v3211
    %3540 = vst [vmem:[#allocation3 + $0x288] sm:$0xff] %v3213
    %3541 = vst [vmem:[#allocation3 + $0x290] sm:$0xff] %v3215
    %3542 = vst [vmem:[#allocation3 + $0x298] sm:$0xff] %v3217
    %3543 = vst [vmem:[#allocation3 + $0x2a0] sm:$0xff] %v3221
    %3544 = vst [vmem:[#allocation3 + $0x2a8] sm:$0xff] %v3223
    %3545 = vst [vmem:[#allocation3 + $0x2b0] sm:$0xff] %v3225
    %3546 = vst [vmem:[#allocation3 + $0x2b8] sm:$0xff] %v3227
    %3547 = vst [vmem:[#allocation3 + $0x2c0] sm:$0xff] %v3231
    %3548 = vst [vmem:[#allocation3 + $0x2c8] sm:$0xff] %v3233
    %3549 = vst [vmem:[#allocation3 + $0x2d0] sm:$0xff] %v3235
    %3550 = vst [vmem:[#allocation3 + $0x2d8] sm:$0xff] %v3237
    %3551 = vst [vmem:[#allocation3 + $0x2e0] sm:$0xff] %v3241
    %3552 = vst [vmem:[#allocation3 + $0x2e8] sm:$0xff] %v3243
    %3553 = vst [vmem:[#allocation3 + $0x2f0] sm:$0xff] %v3245
    %3554 = vst [vmem:[#allocation3 + $0x2f8] sm:$0xff] %v3247
    %3555 = vst [vmem:[#allocation3 + $0x300] sm:$0xff] %v3251
    %3556 = vst [vmem:[#allocation3 + $0x308] sm:$0xff] %v3253
    %3557 = vst [vmem:[#allocation3 + $0x310] sm:$0xff] %v3255
    %3558 = vst [vmem:[#allocation3 + $0x318] sm:$0xff] %v3257
    %3559 = vst [vmem:[#allocation3 + $0x320] sm:$0xff] %v3261
    %3560 = vst [vmem:[#allocation3 + $0x328] sm:$0xff] %v3263
    %3561 = vst [vmem:[#allocation3 + $0x330] sm:$0xff] %v3265
    %3562 = vst [vmem:[#allocation3 + $0x338] sm:$0xff] %v3267
    %3563 = vst [vmem:[#allocation3 + $0x340] sm:$0xff] %v3271
    %3564 = vst [vmem:[#allocation3 + $0x348] sm:$0xff] %v3273
    %3565 = vst [vmem:[#allocation3 + $0x350] sm:$0xff] %v3275
    %3566 = vst [vmem:[#allocation3 + $0x358] sm:$0xff] %v3277
    %3567 = vst [vmem:[#allocation3 + $0x360] sm:$0xff] %v3281
    %3568 = vst [vmem:[#allocation3 + $0x368] sm:$0xff] %v3283
    %3569 = vst [vmem:[#allocation3 + $0x370] sm:$0xff] %v3285
    %3570 = vst [vmem:[#allocation3 + $0x378] sm:$0xff] %v3287
    %3571 = vst [vmem:[#allocation3 + $0x380] sm:$0xff] %v3291
    %3572 = vst [vmem:[#allocation3 + $0x388] sm:$0xff] %v3293
    %3573 = vst [vmem:[#allocation3 + $0x390] sm:$0xff] %v3295
    %3574 = vst [vmem:[#allocation3 + $0x398] sm:$0xff] %v3297
    %3575 = vst [vmem:[#allocation3 + $0x3a0] sm:$0xff] %v3301
    %3576 = vst [vmem:[#allocation3 + $0x3a8] sm:$0xff] %v3303
    %3577 = vst [vmem:[#allocation3 + $0x3b0] sm:$0xff] %v3305
    %3578 = vst [vmem:[#allocation3 + $0x3b8] sm:$0xff] %v3307
    %3579 = vst [vmem:[#allocation3 + $0x3c0] sm:$0xff] %v3311
    %3580 = vst [vmem:[#allocation3 + $0x3c8] sm:$0xff] %v3313
    %3581 = vst [vmem:[#allocation3 + $0x3d0] sm:$0xff] %v3315
    %3582 = vst [vmem:[#allocation3 + $0x3d8] sm:$0xff] %v3317
    %3583 = vst [vmem:[#allocation3 + $0x3e0] sm:$0xff] %v3321
    %3584 = vst [vmem:[#allocation3 + $0x3e8] sm:$0xff] %v3323
    %3585 = vst [vmem:[#allocation3 + $0x3f0] sm:$0xff] %v3325
    %3586 = vst [vmem:[#allocation3 + $0x3f8] sm:$0xff] %v3327
    %3587 = vst [vmem:[#allocation3 + $0x400] sm:$0xff] %v3331
    %3588 = vst [vmem:[#allocation3 + $0x408] sm:$0xff] %v3333
    %3589 = vst [vmem:[#allocation3 + $0x410] sm:$0xff] %v3335
    %3590 = vst [vmem:[#allocation3 + $0x418] sm:$0xff] %v3337
    %3591 = vst [vmem:[#allocation3 + $0x420] sm:$0xff] %v3341
    %3592 = vst [vmem:[#allocation3 + $0x428] sm:$0xff] %v3343
    %3593 = vst [vmem:[#allocation3 + $0x430] sm:$0xff] %v3345
    %3594 = vst [vmem:[#allocation3 + $0x438] sm:$0xff] %v3347
    %3595 = vst [vmem:[#allocation3 + $0x440] sm:$0xff] %v3351
    %3596 = vst [vmem:[#allocation3 + $0x448] sm:$0xff] %v3353
    %3597 = vst [vmem:[#allocation3 + $0x450] sm:$0xff] %v3355
    %3598 = vst [vmem:[#allocation3 + $0x458] sm:$0xff] %v3357
    %3599 = vst [vmem:[#allocation3 + $0x460] sm:$0xff] %v3361
    %3600 = vst [vmem:[#allocation3 + $0x468] sm:$0xff] %v3363
    %3601 = vst [vmem:[#allocation3 + $0x470] sm:$0xff] %v3365
    %3602 = vst [vmem:[#allocation3 + $0x478] sm:$0xff] %v3367
    %3603 = vst [vmem:[#allocation3 + $0x480] sm:$0xff] %v3371
    %3604 = vst [vmem:[#allocation3 + $0x488] sm:$0xff] %v3373
    %3605 = vst [vmem:[#allocation3 + $0x490] sm:$0xff] %v3375
    %3606 = vst [vmem:[#allocation3 + $0x498] sm:$0xff] %v3377
    %3607 = vst [vmem:[#allocation3 + $0x4a0] sm:$0xff] %v3381
    %3608 = vst [vmem:[#allocation3 + $0x4a8] sm:$0xff] %v3383
    %3609 = vst [vmem:[#allocation3 + $0x4b0] sm:$0xff] %v3385
    %3610 = vst [vmem:[#allocation3 + $0x4b8] sm:$0xff] %v3387
    %3611 = vst [vmem:[#allocation3 + $0x4c0] sm:$0xff] %v3391
    %3612 = vst [vmem:[#allocation3 + $0x4c8] sm:$0xff] %v3393
    %3613 = vst [vmem:[#allocation3 + $0x4d0] sm:$0xff] %v3395
    %3614 = vst [vmem:[#allocation3 + $0x4d8] sm:$0xff] %v3397
    %3615 = vst [vmem:[#allocation3 + $0x4e0] sm:$0xff] %v3401
    %3616 = vst [vmem:[#allocation3 + $0x4e8] sm:$0xff] %v3403
    %3617 = vst [vmem:[#allocation3 + $0x4f0] sm:$0xff] %v3405
    %3618 = vst [vmem:[#allocation3 + $0x4f8] sm:$0xff] %v3407
    %3619 = vst [vmem:[#allocation3 + $0x500] sm:$0xff] %v3411
    %3620 = vst [vmem:[#allocation3 + $0x508] sm:$0xff] %v3413
    %3621 = vst [vmem:[#allocation3 + $0x510] sm:$0xff] %v3415
    %3622 = vst [vmem:[#allocation3 + $0x518] sm:$0xff] %v3417
    %3623 = vst [vmem:[#allocation3 + $0x520] sm:$0xff] %v3421
    %3624 = vst [vmem:[#allocation3 + $0x528] sm:$0xff] %v3423
    %3625 = vst [vmem:[#allocation3 + $0x530] sm:$0xff] %v3425
    %3626 = vst [vmem:[#allocation3 + $0x538] sm:$0xff] %v3427
    %3627 = vst [vmem:[#allocation3 + $0x540] sm:$0xff] %v3431
    %3628 = vst [vmem:[#allocation3 + $0x548] sm:$0xff] %v3433
    %3629 = vst [vmem:[#allocation3 + $0x550] sm:$0xff] %v3435
    %3630 = vst [vmem:[#allocation3 + $0x558] sm:$0xff] %v3437
    %3631 = vst [vmem:[#allocation3 + $0x560] sm:$0xff] %v3441
    %3632 = vst [vmem:[#allocation3 + $0x568] sm:$0xff] %v3443
    %3633 = vst [vmem:[#allocation3 + $0x570] sm:$0xff] %v3445
    %3634 = vst [vmem:[#allocation3 + $0x578] sm:$0xff] %v3447
    %3635 = vst [vmem:[#allocation3 + $0x580] sm:$0xff] %v3451
    %3636 = vst [vmem:[#allocation3 + $0x588] sm:$0xff] %v3453
    %3637 = vst [vmem:[#allocation3 + $0x590] sm:$0xff] %v3455
    %3638 = vst [vmem:[#allocation3 + $0x598] sm:$0xff] %v3457
    %v3639 = vld [vmem:[#allocation2] sm:$0xff]
    %v3640 = vld [vmem:[#allocation2 + $0x8] sm:$0xff]
    %v3641 = vld [vmem:[#allocation2 + $0x20] sm:$0xff]
    %v3642 = vld [vmem:[#allocation2 + $0x28] sm:$0xff]
    %v3643 = vld [vmem:[#allocation2 + $0x40] sm:$0xff]
    %v3644 = vld [vmem:[#allocation2 + $0x48] sm:$0xff]
    %v3645 = vld [vmem:[#allocation2 + $0x60] sm:$0xff]
    %v3646 = vld [vmem:[#allocation2 + $0x68] sm:$0xff]
    %v3647 = vld [vmem:[#allocation2 + $0x80] sm:$0xff]
    %v3648 = vld [vmem:[#allocation2 + $0x88] sm:$0xff]
    %v3649 = vld [vmem:[#allocation2 + $0xa0] sm:$0xff]
    %v3650 = vld [vmem:[#allocation2 + $0xa8] sm:$0xff]
    %v3651 = vld [vmem:[#allocation2 + $0xc0] sm:$0xff]
    %v3652 = vld [vmem:[#allocation2 + $0xc8] sm:$0xff]
    %v3653 = vld [vmem:[#allocation2 + $0xe0] sm:$0xff]
    %v3654 = vld [vmem:[#allocation2 + $0xe8] sm:$0xff]
    %v3655 = vld [vmem:[#allocation2 + $0x100] sm:$0xff]
    %v3656 = vld [vmem:[#allocation2 + $0x108] sm:$0xff]
    %v3657 = vld [vmem:[#allocation2 + $0x120] sm:$0xff]
    %v3658 = vld [vmem:[#allocation2 + $0x128] sm:$0xff]
    %v3659 = vld [vmem:[#allocation2 + $0x140] sm:$0xff]
    %v3660 = vld [vmem:[#allocation2 + $0x148] sm:$0xff]
    %v3661 = vld [vmem:[#allocation2 + $0x160] sm:$0xff]
    %v3662 = vld [vmem:[#allocation2 + $0x168] sm:$0xff]
    %v3663 = vld [vmem:[#allocation2 + $0x180] sm:$0xff]
    %v3664 = vld [vmem:[#allocation2 + $0x188] sm:$0xff]
    %v3665 = vld [vmem:[#allocation2 + $0x1a0] sm:$0xff]
    %v3666 = vld [vmem:[#allocation2 + $0x1a8] sm:$0xff]
    %v3667 = vld [vmem:[#allocation2 + $0x1c0] sm:$0xff]
    %v3668 = vld [vmem:[#allocation2 + $0x1c8] sm:$0xff]
    %v3669 = vld [vmem:[#allocation2 + $0x1e0] sm:$0xff]
    %v3670 = vld [vmem:[#allocation2 + $0x1e8] sm:$0xff]
    %v3671 = vld [vmem:[#allocation2 + $0x200] sm:$0xff]
    %v3672 = vld [vmem:[#allocation2 + $0x208] sm:$0xff]
    %v3673 = vld [vmem:[#allocation2 + $0x220] sm:$0xff]
    %v3674 = vld [vmem:[#allocation2 + $0x228] sm:$0xff]
    %v3675 = vld [vmem:[#allocation2 + $0x240] sm:$0xff]
    %v3676 = vld [vmem:[#allocation2 + $0x248] sm:$0xff]
    %v3677 = vld [vmem:[#allocation2 + $0x260] sm:$0xff]
    %v3678 = vld [vmem:[#allocation2 + $0x268] sm:$0xff]
    %v3679 = vld [vmem:[#allocation2 + $0x280] sm:$0xff]
    %v3680 = vld [vmem:[#allocation2 + $0x288] sm:$0xff]
    %v3681 = vld [vmem:[#allocation2 + $0x2a0] sm:$0xff]
    %v3682 = vld [vmem:[#allocation2 + $0x2a8] sm:$0xff]
    %v3683 = vld [vmem:[#allocation2 + $0x2c0] sm:$0xff]
    %v3684 = vld [vmem:[#allocation2 + $0x2c8] sm:$0xff]
    %v3685 = vld [vmem:[#allocation2 + $0x2e0] sm:$0xff]
    %v3686 = vld [vmem:[#allocation2 + $0x2e8] sm:$0xff]
    %v3687 = vld [vmem:[#allocation2 + $0x300] sm:$0xff]
    %v3688 = vld [vmem:[#allocation2 + $0x308] sm:$0xff]
    %v3689 = vld [vmem:[#allocation2 + $0x320] sm:$0xff]
    %v3690 = vld [vmem:[#allocation2 + $0x328] sm:$0xff]
    %v3691 = vld [vmem:[#allocation2 + $0x340] sm:$0xff]
    %v3692 = vld [vmem:[#allocation2 + $0x348] sm:$0xff]
    %v3693 = vld [vmem:[#allocation2 + $0x360] sm:$0xff]
    %v3694 = vld [vmem:[#allocation2 + $0x368] sm:$0xff]
    %v3695 = vld [vmem:[#allocation2 + $0x380] sm:$0xff]
    %v3696 = vld [vmem:[#allocation2 + $0x388] sm:$0xff]
    %v3697 = vld [vmem:[#allocation2 + $0x3a0] sm:$0xff]
    %v3698 = vld [vmem:[#allocation2 + $0x3a8] sm:$0xff]
    %v3699 = vld [vmem:[#allocation2 + $0x3c0] sm:$0xff]
    %v3700 = vld [vmem:[#allocation2 + $0x3c8] sm:$0xff]
    %v3701 = vld [vmem:[#allocation2 + $0x3e0] sm:$0xff]
    %v3702 = vld [vmem:[#allocation2 + $0x3e8] sm:$0xff]
    %v3703 = vld [vmem:[#allocation2 + $0x400] sm:$0xff]
    %v3704 = vld [vmem:[#allocation2 + $0x408] sm:$0xff]
    %v3705 = vld [vmem:[#allocation2 + $0x420] sm:$0xff]
    %v3706 = vld [vmem:[#allocation2 + $0x428] sm:$0xff]
    %v3707 = vld [vmem:[#allocation2 + $0x440] sm:$0xff]
    %v3708 = vld [vmem:[#allocation2 + $0x448] sm:$0xff]
    %v3709 = vld [vmem:[#allocation2 + $0x460] sm:$0xff]
    %v3710 = vld [vmem:[#allocation2 + $0x468] sm:$0xff]
    %v3711 = vld [vmem:[#allocation2 + $0x480] sm:$0xff]
    %v3712 = vld [vmem:[#allocation2 + $0x488] sm:$0xff]
    %v3713 = vld [vmem:[#allocation2 + $0x4a0] sm:$0xff]
    %v3714 = vld [vmem:[#allocation2 + $0x4a8] sm:$0xff]
    %v3715 = vld [vmem:[#allocation2 + $0x4c0] sm:$0xff]
    %v3716 = vld [vmem:[#allocation2 + $0x4c8] sm:$0xff]
    %v3717 = vld [vmem:[#allocation2 + $0x4e0] sm:$0xff]
    %v3718 = vld [vmem:[#allocation2 + $0x4e8] sm:$0xff]
    %v3719 = vld [vmem:[#allocation2 + $0x500] sm:$0xff]
    %v3720 = vld [vmem:[#allocation2 + $0x508] sm:$0xff]
    %v3721 = vld [vmem:[#allocation2 + $0x520] sm:$0xff]
    %v3722 = vld [vmem:[#allocation2 + $0x528] sm:$0xff]
    %v3723 = vld [vmem:[#allocation2 + $0x540] sm:$0xff]
    %v3724 = vld [vmem:[#allocation2 + $0x548] sm:$0xff]
    %v3725 = vld [vmem:[#allocation2 + $0x560] sm:$0xff]
    %v3726 = vld [vmem:[#allocation2 + $0x568] sm:$0xff]
    %v3727 = vmax.f32 %v3639, %v3643
    %v3728 = vmax.f32 %v3641, %v3645
    %v3729 = vmax.f32 %v3727, %v3647
    %v3730 = vmax.f32 %v3728, %v3649
    %v3731 = vmax.f32 %v3729, %v3651
    %v3732 = vmax.f32 %v3730, %v3653
    %v3733 = vmax.f32 %v3731, %v3655
    %v3734 = vmax.f32 %v3732, %v3657
    %v3735 = vmax.f32 %v3733, %v3659
    %v3736 = vmax.f32 %v3734, %v3661
    %v3737 = vmax.f32 %v3735, %v3663
    %v3738 = vmax.f32 %v3736, %v3665
    %v3739 = vmax.f32 %v3737, %v3667
    %v3740 = vmax.f32 %v3738, %v3669
    %v3741 = vmax.f32 %v3739, %v3671
    %v3742 = vmax.f32 %v3740, %v3673
    %v3743 = vmax.f32 %v3741, %v3675
    %v3744 = vmax.f32 %v3742, %v3677
    %v3745 = vmax.f32 %v3743, %v3679
    %v3746 = vmax.f32 %v3744, %v3681
    %v3747 = vmax.f32 %v3745, %v3683
    %v3748 = vmax.f32 %v3746, %v3685
    %v3749 = vmax.f32 %v3747, %v3687
    %v3750 = vmax.f32 %v3748, %v3689
    %v3751 = vmax.f32 %v3749, %v3691
    %v3752 = vmax.f32 %v3750, %v3693
    %v3753 = vmax.f32 %v3751, %v3695
    %v3754 = vmax.f32 %v3752, %v3697
    %v3755 = vmax.f32 %v3753, %v3699
    %v3756 = vmax.f32 %v3754, %v3701
    %v3757 = vmax.f32 %v3755, %v3703
    %v3758 = vmax.f32 %v3756, %v3705
    %v3759 = vmax.f32 %v3757, %v3707
    %v3760 = vmax.f32 %v3758, %v3709
    %v3761 = vmax.f32 %v3759, %v3711
    %v3762 = vmax.f32 %v3760, %v3713
    %v3763 = vmax.f32 %v3761, %v3715
    %v3764 = vmax.f32 %v3762, %v3717
    %v3765 = vmax.f32 %v3763, %v3719
    %v3766 = vmax.f32 %v3764, %v3721
    %v3767 = vmax.f32 %v3765, %v3723
    %v3768 = vmax.f32 %v3766, %v3725
    %v3769 = vmax.f32 %v3767, %v3768
    %v3770 = vrot.slane %v3769, 4
    %v3771 = vmax.f32 %v3769, %v3770
    %v3772 = vrot.slane %v3771, 2
    %v3773 = vmax.f32 %v3771, %v3772
    %v3774 = vrot.slane %v3773, 1
    %v3775 = vmax.f32 %v3773, %v3774
    %v3776 = vmax.f32 %v3640, %v3644
    %v3777 = vmax.f32 %v3642, %v3646
    %v3778 = vmax.f32 %v3776, %v3648
    %v3779 = vmax.f32 %v3777, %v3650
    %v3780 = vmax.f32 %v3778, %v3652
    %v3781 = vmax.f32 %v3779, %v3654
    %v3782 = vmax.f32 %v3780, %v3656
    %v3783 = vmax.f32 %v3781, %v3658
    %v3784 = vmax.f32 %v3782, %v3660
    %v3785 = vmax.f32 %v3783, %v3662
    %v3786 = vmax.f32 %v3784, %v3664
    %v3787 = vmax.f32 %v3785, %v3666
    %v3788 = vmax.f32 %v3786, %v3668
    %v3789 = vmax.f32 %v3787, %v3670
    %v3790 = vmax.f32 %v3788, %v3672
    %v3791 = vmax.f32 %v3789, %v3674
    %v3792 = vmax.f32 %v3790, %v3676
    %v3793 = vmax.f32 %v3791, %v3678
    %v3794 = vmax.f32 %v3792, %v3680
    %v3795 = vmax.f32 %v3793, %v3682
    %v3796 = vmax.f32 %v3794, %v3684
    %v3797 = vmax.f32 %v3795, %v3686
    %v3798 = vmax.f32 %v3796, %v3688
    %v3799 = vmax.f32 %v3797, %v3690
    %v3800 = vmax.f32 %v3798, %v3692
    %v3801 = vmax.f32 %v3799, %v3694
    %v3802 = vmax.f32 %v3800, %v3696
    %v3803 = vmax.f32 %v3801, %v3698
    %v3804 = vmax.f32 %v3802, %v3700
    %v3805 = vmax.f32 %v3803, %v3702
    %v3806 = vmax.f32 %v3804, %v3704
    %v3807 = vmax.f32 %v3805, %v3706
    %v3808 = vmax.f32 %v3806, %v3708
    %v3809 = vmax.f32 %v3807, %v3710
    %v3810 = vmax.f32 %v3808, %v3712
    %v3811 = vmax.f32 %v3809, %v3714
    %v3812 = vmax.f32 %v3810, %v3716
    %v3813 = vmax.f32 %v3811, %v3718
    %v3814 = vmax.f32 %v3812, %v3720
    %v3815 = vmax.f32 %v3813, %v3722
    %v3816 = vmax.f32 %v3814, %v3724
    %v3817 = vmax.f32 %v3815, %v3726
    %v3818 = vmax.f32 %v3816, %v3817
    %v3819 = vrot.slane %v3818, 4
    %v3820 = vmax.f32 %v3818, %v3819
    %v3821 = vrot.slane %v3820, 2
    %v3822 = vmax.f32 %v3820, %v3821
    %v3823 = vrot.slane %v3822, 1
    %v3824 = vmax.f32 %v3822, %v3823
    %v3825 = vld [vmem:[#allocation2 + $0x580] sm:$0xff]
    %v3826 = vld [vmem:[#allocation2 + $0x588] sm:$0xff]
    %v3827 = vld [vmem:[#allocation2 + $0x5a0] sm:$0xff]
    %v3828 = vld [vmem:[#allocation2 + $0x5a8] sm:$0xff]
    %v3829 = vld [vmem:[#allocation2 + $0x5c0] sm:$0xff]
    %v3830 = vld [vmem:[#allocation2 + $0x5c8] sm:$0xff]
    %v3831 = vld [vmem:[#allocation2 + $0x5e0] sm:$0xff]
    %v3832 = vld [vmem:[#allocation2 + $0x5e8] sm:$0xff]
    %v3833 = vld [vmem:[#allocation2 + $0x600] sm:$0xff]
    %v3834 = vld [vmem:[#allocation2 + $0x608] sm:$0xff]
    %v3835 = vld [vmem:[#allocation2 + $0x620] sm:$0xff]
    %v3836 = vld [vmem:[#allocation2 + $0x628] sm:$0xff]
    %v3837 = vld [vmem:[#allocation2 + $0x640] sm:$0xff]
    %v3838 = vld [vmem:[#allocation2 + $0x648] sm:$0xff]
    %v3839 = vld [vmem:[#allocation2 + $0x660] sm:$0xff]
    %v3840 = vld [vmem:[#allocation2 + $0x668] sm:$0xff]
    %v3841 = vld [vmem:[#allocation2 + $0x680] sm:$0xff]
    %v3842 = vld [vmem:[#allocation2 + $0x688] sm:$0xff]
    %v3843 = vld [vmem:[#allocation2 + $0x6a0] sm:$0xff]
    %v3844 = vld [vmem:[#allocation2 + $0x6a8] sm:$0xff]
    %v3845 = vld [vmem:[#allocation2 + $0x6c0] sm:$0xff]
    %v3846 = vld [vmem:[#allocation2 + $0x6c8] sm:$0xff]
    %v3847 = vld [vmem:[#allocation2 + $0x6e0] sm:$0xff]
    %v3848 = vld [vmem:[#allocation2 + $0x6e8] sm:$0xff]
    %v3849 = vld [vmem:[#allocation2 + $0x700] sm:$0xff]
    %v3850 = vld [vmem:[#allocation2 + $0x708] sm:$0xff]
    %v3851 = vld [vmem:[#allocation2 + $0x720] sm:$0xff]
    %v3852 = vld [vmem:[#allocation2 + $0x728] sm:$0xff]
    %v3853 = vld [vmem:[#allocation2 + $0x740] sm:$0xff]
    %v3854 = vld [vmem:[#allocation2 + $0x748] sm:$0xff]
    %v3855 = vld [vmem:[#allocation2 + $0x760] sm:$0xff]
    %v3856 = vld [vmem:[#allocation2 + $0x768] sm:$0xff]
    %v3857 = vld [vmem:[#allocation2 + $0x780] sm:$0xff]
    %v3858 = vld [vmem:[#allocation2 + $0x788] sm:$0xff]
    %v3859 = vld [vmem:[#allocation2 + $0x7a0] sm:$0xff]
    %v3860 = vld [vmem:[#allocation2 + $0x7a8] sm:$0xff]
    %v3861 = vld [vmem:[#allocation2 + $0x7c0] sm:$0xff]
    %v3862 = vld [vmem:[#allocation2 + $0x7c8] sm:$0xff]
    %v3863 = vld [vmem:[#allocation2 + $0x7e0] sm:$0xff]
    %v3864 = vld [vmem:[#allocation2 + $0x7e8] sm:$0xff]
    %v3865 = vld [vmem:[#allocation2 + $0x800] sm:$0xff]
    %v3866 = vld [vmem:[#allocation2 + $0x808] sm:$0xff]
    %v3867 = vld [vmem:[#allocation2 + $0x820] sm:$0xff]
    %v3868 = vld [vmem:[#allocation2 + $0x828] sm:$0xff]
    %v3869 = vld [vmem:[#allocation2 + $0x840] sm:$0xff]
    %v3870 = vld [vmem:[#allocation2 + $0x848] sm:$0xff]
    %v3871 = vld [vmem:[#allocation2 + $0x860] sm:$0xff]
    %v3872 = vld [vmem:[#allocation2 + $0x868] sm:$0xff]
    %v3873 = vld [vmem:[#allocation2 + $0x880] sm:$0xff]
    %v3874 = vld [vmem:[#allocation2 + $0x888] sm:$0xff]
    %v3875 = vld [vmem:[#allocation2 + $0x8a0] sm:$0xff]
    %v3876 = vld [vmem:[#allocation2 + $0x8a8] sm:$0xff]
    %v3877 = vld [vmem:[#allocation2 + $0x8c0] sm:$0xff]
    %v3878 = vld [vmem:[#allocation2 + $0x8c8] sm:$0xff]
    %v3879 = vld [vmem:[#allocation2 + $0x8e0] sm:$0xff]
    %v3880 = vld [vmem:[#allocation2 + $0x8e8] sm:$0xff]
    %v3881 = vld [vmem:[#allocation2 + $0x900] sm:$0xff]
    %v3882 = vld [vmem:[#allocation2 + $0x908] sm:$0xff]
    %v3883 = vld [vmem:[#allocation2 + $0x920] sm:$0xff]
    %v3884 = vld [vmem:[#allocation2 + $0x928] sm:$0xff]
    %v3885 = vld [vmem:[#allocation2 + $0x940] sm:$0xff]
    %v3886 = vld [vmem:[#allocation2 + $0x948] sm:$0xff]
    %v3887 = vld [vmem:[#allocation2 + $0x960] sm:$0xff]
    %v3888 = vld [vmem:[#allocation2 + $0x968] sm:$0xff]
    %v3889 = vld [vmem:[#allocation2 + $0x980] sm:$0xff]
    %v3890 = vld [vmem:[#allocation2 + $0x988] sm:$0xff]
    %v3891 = vld [vmem:[#allocation2 + $0x9a0] sm:$0xff]
    %v3892 = vld [vmem:[#allocation2 + $0x9a8] sm:$0xff]
    %v3893 = vld [vmem:[#allocation2 + $0x9c0] sm:$0xff]
    %v3894 = vld [vmem:[#allocation2 + $0x9c8] sm:$0xff]
    %v3895 = vld [vmem:[#allocation2 + $0x9e0] sm:$0xff]
    %v3896 = vld [vmem:[#allocation2 + $0x9e8] sm:$0xff]
    %v3897 = vld [vmem:[#allocation2 + $0xa00] sm:$0xff]
    %v3898 = vld [vmem:[#allocation2 + $0xa08] sm:$0xff]
    %v3899 = vld [vmem:[#allocation2 + $0xa20] sm:$0xff]
    %v3900 = vld [vmem:[#allocation2 + $0xa28] sm:$0xff]
    %v3901 = vld [vmem:[#allocation2 + $0xa40] sm:$0xff]
    %v3902 = vld [vmem:[#allocation2 + $0xa48] sm:$0xff]
    %v3903 = vld [vmem:[#allocation2 + $0xa60] sm:$0xff]
    %v3904 = vld [vmem:[#allocation2 + $0xa68] sm:$0xff]
    %v3905 = vld [vmem:[#allocation2 + $0xa80] sm:$0xff]
    %v3906 = vld [vmem:[#allocation2 + $0xa88] sm:$0xff]
    %v3907 = vld [vmem:[#allocation2 + $0xaa0] sm:$0xff]
    %v3908 = vld [vmem:[#allocation2 + $0xaa8] sm:$0xff]
    %v3909 = vld [vmem:[#allocation2 + $0xac0] sm:$0xff]
    %v3910 = vld [vmem:[#allocation2 + $0xac8] sm:$0xff]
    %v3911 = vld [vmem:[#allocation2 + $0xae0] sm:$0xff]
    %v3912 = vld [vmem:[#allocation2 + $0xae8] sm:$0xff]
    %v3913 = vmax.f32 %v3825, %v3829
    %v3914 = vmax.f32 %v3827, %v3831
    %v3915 = vmax.f32 %v3913, %v3833
    %v3916 = vmax.f32 %v3914, %v3835
    %v3917 = vmax.f32 %v3915, %v3837
    %v3918 = vmax.f32 %v3916, %v3839
    %v3919 = vmax.f32 %v3917, %v3841
    %v3920 = vmax.f32 %v3918, %v3843
    %v3921 = vmax.f32 %v3919, %v3845
    %v3922 = vmax.f32 %v3920, %v3847
    %v3923 = vmax.f32 %v3921, %v3849
    %v3924 = vmax.f32 %v3922, %v3851
    %v3925 = vmax.f32 %v3923, %v3853
    %v3926 = vmax.f32 %v3924, %v3855
    %v3927 = vmax.f32 %v3925, %v3857
    %v3928 = vmax.f32 %v3926, %v3859
    %v3929 = vmax.f32 %v3927, %v3861
    %v3930 = vmax.f32 %v3928, %v3863
    %v3931 = vmax.f32 %v3929, %v3865
    %v3932 = vmax.f32 %v3930, %v3867
    %v3933 = vmax.f32 %v3931, %v3869
    %v3934 = vmax.f32 %v3932, %v3871
    %v3935 = vmax.f32 %v3933, %v3873
    %v3936 = vmax.f32 %v3934, %v3875
    %v3937 = vmax.f32 %v3935, %v3877
    %v3938 = vmax.f32 %v3936, %v3879
    %v3939 = vmax.f32 %v3937, %v3881
    %v3940 = vmax.f32 %v3938, %v3883
    %v3941 = vmax.f32 %v3939, %v3885
    %v3942 = vmax.f32 %v3940, %v3887
    %v3943 = vmax.f32 %v3941, %v3889
    %v3944 = vmax.f32 %v3942, %v3891
    %v3945 = vmax.f32 %v3943, %v3893
    %v3946 = vmax.f32 %v3944, %v3895
    %v3947 = vmax.f32 %v3945, %v3897
    %v3948 = vmax.f32 %v3946, %v3899
    %v3949 = vmax.f32 %v3947, %v3901
    %v3950 = vmax.f32 %v3948, %v3903
    %v3951 = vmax.f32 %v3949, %v3905
    %v3952 = vmax.f32 %v3950, %v3907
    %v3953 = vmax.f32 %v3951, %v3909
    %v3954 = vmax.f32 %v3952, %v3911
    %v3955 = vmax.f32 %v3953, %v3954
    %v3956 = vrot.slane %v3955, 4
    %v3957 = vmax.f32 %v3955, %v3956
    %v3958 = vrot.slane %v3957, 2
    %v3959 = vmax.f32 %v3957, %v3958
    %v3960 = vrot.slane %v3959, 1
    %v3961 = vmax.f32 %v3959, %v3960
    %v3962 = vmax.f32 %v3826, %v3830
    %v3963 = vmax.f32 %v3828, %v3832
    %v3964 = vmax.f32 %v3962, %v3834
    %v3965 = vmax.f32 %v3963, %v3836
    %v3966 = vmax.f32 %v3964, %v3838
    %v3967 = vmax.f32 %v3965, %v3840
    %v3968 = vmax.f32 %v3966, %v3842
    %v3969 = vmax.f32 %v3967, %v3844
    %v3970 = vmax.f32 %v3968, %v3846
    %v3971 = vmax.f32 %v3969, %v3848
    %v3972 = vmax.f32 %v3970, %v3850
    %v3973 = vmax.f32 %v3971, %v3852
    %v3974 = vmax.f32 %v3972, %v3854
    %v3975 = vmax.f32 %v3973, %v3856
    %v3976 = vmax.f32 %v3974, %v3858
    %v3977 = vmax.f32 %v3975, %v3860
    %v3978 = vmax.f32 %v3976, %v3862
    %v3979 = vmax.f32 %v3977, %v3864
    %v3980 = vmax.f32 %v3978, %v3866
    %v3981 = vmax.f32 %v3979, %v3868
    %v3982 = vmax.f32 %v3980, %v3870
    %v3983 = vmax.f32 %v3981, %v3872
    %v3984 = vmax.f32 %v3982, %v3874
    %v3985 = vmax.f32 %v3983, %v3876
    %v3986 = vmax.f32 %v3984, %v3878
    %v3987 = vmax.f32 %v3985, %v3880
    %v3988 = vmax.f32 %v3986, %v3882
    %v3989 = vmax.f32 %v3987, %v3884
    %v3990 = vmax.f32 %v3988, %v3886
    %v3991 = vmax.f32 %v3989, %v3888
    %v3992 = vmax.f32 %v3990, %v3890
    %v3993 = vmax.f32 %v3991, %v3892
    %v3994 = vmax.f32 %v3992, %v3894
    %v3995 = vmax.f32 %v3993, %v3896
    %v3996 = vmax.f32 %v3994, %v3898
    %v3997 = vmax.f32 %v3995, %v3900
    %v3998 = vmax.f32 %v3996, %v3902
    %v3999 = vmax.f32 %v3997, %v3904
    %v4000 = vmax.f32 %v3998, %v3906
    %v4001 = vmax.f32 %v3999, %v3908
    %v4002 = vmax.f32 %v4000, %v3910
    %v4003 = vmax.f32 %v4001, %v3912
    %v4004 = vmax.f32 %v4002, %v4003
    %v4005 = vrot.slane %v4004, 4
    %v4006 = vmax.f32 %v4004, %v4005
    %v4007 = vrot.slane %v4006, 2
    %v4008 = vmax.f32 %v4006, %v4007
    %v4009 = vrot.slane %v4008, 1
    %v4010 = vmax.f32 %v4008, %v4009
    %vm4011 = vcmask 1040384
    %v4012 = vsel %vm4011, %v3775, %v3961
    %v4013 = vsel %vm4011, %v3824, %v4010
    %v4014 = vpack.c.bf16 %v4012, %v4012
    %v4015 = vpack.c.bf16 %v4013, %v4013
    %v4016 = vld [vmem:[%s4] sm:$0xf]
    %v4017 = vld [vmem:[%s4 + $0x4] sm:$0xf]
    %v4018 = vld [vmem:[%s4 + $0x8] sm:$0xf]
    %v4019 = vld [vmem:[%s4 + $0xc] sm:$0xf]
    %v4020 = vld [vmem:[%s4 + $0x10] sm:$0xf]
    %v4021 = vld [vmem:[%s4 + $0x14] sm:$0xf]
    %v4022 = vld [vmem:[%s4 + $0x18] sm:$0xf]
    %v4023 = vld [vmem:[%s4 + $0x1c] sm:$0xf]
    %v4024 = vld [vmem:[%s4 + $0x20] sm:$0xf]
    %v4025 = vld [vmem:[%s4 + $0x24] sm:$0xf]
    %v4026 = vld [vmem:[%s4 + $0x28] sm:$0xf]
    %v4027 = vld [vmem:[%s4 + $0x2c] sm:$0xf]
    %v4028 = vld [vmem:[%s4 + $0x30] sm:$0xf]
    %v4029 = vld [vmem:[%s4 + $0x34] sm:$0xf]
    %v4030 = vld [vmem:[%s4 + $0x38] sm:$0xf]
    %v4031 = vld [vmem:[%s4 + $0x3c] sm:$0xf]
    %v4032 = vld [vmem:[%s4 + $0x40] sm:$0xf]
    %v4033 = vld [vmem:[%s4 + $0x44] sm:$0xf]
    %v4034 = vld [vmem:[%s4 + $0x48] sm:$0xf]
    %v4035 = vld [vmem:[%s4 + $0x4c] sm:$0xf]
    %v4036 = vld [vmem:[%s4 + $0x50] sm:$0xf]
    %v4037 = vld [vmem:[%s4 + $0x54] sm:$0xf]
    %v4038 = vld [vmem:[%s4 + $0x58] sm:$0xf]
    %v4039 = vld [vmem:[%s4 + $0x5c] sm:$0xf]
    %v4040 = vld [vmem:[%s4 + $0x60] sm:$0xf]
    %v4041 = vld [vmem:[%s4 + $0x64] sm:$0xf]
    %v4042 = vld [vmem:[%s4 + $0x68] sm:$0xf]
    %v4043 = vld [vmem:[%s4 + $0x6c] sm:$0xf]
    %v4044 = vld [vmem:[%s4 + $0x70] sm:$0xf]
    %v4045 = vld [vmem:[%s4 + $0x74] sm:$0xf]
    %v4046 = vld [vmem:[%s4 + $0x78] sm:$0xf]
    %v4047 = vld [vmem:[%s4 + $0x7c] sm:$0xf]
    %v4080 = vunpack.c.l.b16 %v4016
    %v4081 = vunpack.c.l.b16 %v4017
    %v4082 = vunpack.c.l.b16 %v4018
    %v4083 = vunpack.c.l.b16 %v4019
    %v4084 = vunpack.c.l.b16 %v4020
    %v4085 = vunpack.c.l.b16 %v4021
    %v4086 = vunpack.c.l.b16 %v4022
    %v4087 = vunpack.c.l.b16 %v4023
    %v4088 = vunpack.c.l.b16 %v4024
    %v4089 = vunpack.c.l.b16 %v4025
    %v4090 = vunpack.c.l.b16 %v4026
    %v4091 = vunpack.c.l.b16 %v4027
    %v4092 = vunpack.c.l.b16 %v4028
    %v4093 = vunpack.c.l.b16 %v4029
    %v4094 = vunpack.c.l.b16 %v4030
    %v4095 = vunpack.c.l.b16 %v4031
    %v4096 = vunpack.c.l.b16 %v4032
    %v4097 = vunpack.c.l.b16 %v4033
    %v4098 = vunpack.c.l.b16 %v4034
    %v4099 = vunpack.c.l.b16 %v4035
    %v4100 = vunpack.c.l.b16 %v4036
    %v4101 = vunpack.c.l.b16 %v4037
    %v4102 = vunpack.c.l.b16 %v4038
    %v4103 = vunpack.c.l.b16 %v4039
    %v4104 = vunpack.c.l.b16 %v4040
    %v4105 = vunpack.c.l.b16 %v4041
    %v4106 = vunpack.c.l.b16 %v4042
    %v4107 = vunpack.c.l.b16 %v4043
    %v4108 = vunpack.c.l.b16 %v4044
    %v4109 = vunpack.c.l.b16 %v4045
    %v4110 = vunpack.c.l.b16 %v4046
    %v4111 = vunpack.c.l.b16 %v4047
    %v4112 = vpack.c.b16 %v4081, %v4080
    %v4113 = vpack.c.b16 %v4083, %v4082
    %v4114 = vpack.c.b16 %v4085, %v4084
    %v4115 = vpack.c.b16 %v4087, %v4086
    %v4116 = vpack.c.b16 %v4089, %v4088
    %v4117 = vpack.c.b16 %v4091, %v4090
    %v4118 = vpack.c.b16 %v4093, %v4092
    %v4119 = vpack.c.b16 %v4095, %v4094
    %v4120 = vpack.c.b16 %v4097, %v4096
    %v4121 = vpack.c.b16 %v4099, %v4098
    %v4122 = vpack.c.b16 %v4101, %v4100
    %v4123 = vpack.c.b16 %v4103, %v4102
    %v4124 = vpack.c.b16 %v4105, %v4104
    %v4125 = vpack.c.b16 %v4107, %v4106
    %v4126 = vpack.c.b16 %v4109, %v4108
    %v4127 = vpack.c.b16 %v4111, %v4110
    %4144 = vmatprep.subr.bf16.mxu0 0
    %4145 = vmatpush1.bf16.msra.mxu0 %v4112
    %4146 = vmatprep.subr.bf16.mxu0 0
    %4147 = vmatpush1.bf16.msra.mxu0 %v4113
    %4148 = vmatprep.subr.bf16.mxu0 0
    %4149 = vmatpush1.bf16.msra.mxu0 %v4114
    %4150 = vmatprep.subr.bf16.mxu0 0
    %4151 = vmatpush1.bf16.msra.mxu0 %v4115
    %4152 = vmatprep.subr.bf16.mxu0 0
    %4153 = vmatpush1.bf16.msra.mxu0 %v4116
    %4154 = vmatprep.subr.bf16.mxu0 0
    %4155 = vmatpush1.bf16.msra.mxu0 %v4117
    %4156 = vmatprep.subr.bf16.mxu0 0
    %4157 = vmatpush1.bf16.msra.mxu0 %v4118
    %4158 = vmatprep.subr.bf16.mxu0 0
    %4159 = vmatpush1.bf16.msra.mxu0 %v4119
    %4160 = vmatprep.subr.bf16.mxu0 0
    %4161 = vmatpush1.bf16.msra.mxu0 %v4120
    %4162 = vmatprep.subr.bf16.mxu0 0
    %4163 = vmatpush1.bf16.msra.mxu0 %v4121
    %4164 = vmatprep.subr.bf16.mxu0 0
    %4165 = vmatpush1.bf16.msra.mxu0 %v4122
    %4166 = vmatprep.subr.bf16.mxu0 0
    %4167 = vmatpush1.bf16.msra.mxu0 %v4123
    %4168 = vmatprep.subr.bf16.mxu0 0
    %4169 = vmatpush1.bf16.msra.mxu0 %v4124
    %4170 = vmatprep.subr.bf16.mxu0 0
    %4171 = vmatpush1.bf16.msra.mxu0 %v4125
    %4172 = vmatprep.subr.bf16.mxu0 0
    %4173 = vmatpush1.bf16.msra.mxu0 %v4126
    %4174 = vmatprep.subr.bf16.mxu0 0
    %4175 = vmatpush1.bf16.msra.mxu0 %v4127
    %4176 = vmatprep.mubr.bf16.mxu0 %v4015
    %4177 = vmatmul.mubr.bf16.gmra.mrb[0].mxu0 %v4014
    %v4178 = vpop.f32.mrb[0].mxu0
    %v4179 = vadd.f32 0.0, %v4178
    %v4180 = vpop.f32.mrb[0].mxu0
    %v4181 = vpop.f32.mrb[0].mxu0
    %v4182 = vpop.f32.mrb[0].mxu0
    %4183 = vdwg.mxu0
    %4184 = vst [vmem:[%s8] sm:$0x3] %v4179
    %v4185 = vld [vmem:[#allocation2 + $0x10] sm:$0xff]
    %v4186 = vld [vmem:[#allocation2 + $0x18] sm:$0xff]
    %v4187 = vld [vmem:[#allocation2 + $0x30] sm:$0xff]
    %v4188 = vld [vmem:[#allocation2 + $0x38] sm:$0xff]
    %v4189 = vld [vmem:[#allocation2 + $0x50] sm:$0xff]
    %v4190 = vld [vmem:[#allocation2 + $0x58] sm:$0xff]
    %v4191 = vld [vmem:[#allocation2 + $0x70] sm:$0xff]
    %v4192 = vld [vmem:[#allocation2 + $0x78] sm:$0xff]
    %v4193 = vld [vmem:[#allocation2 + $0x90] sm:$0xff]
    %v4194 = vld [vmem:[#allocation2 + $0x98] sm:$0xff]
    %v4195 = vld [vmem:[#allocation2 + $0xb0] sm:$0xff]
    %v4196 = vld [vmem:[#allocation2 + $0xb8] sm:$0xff]
    %v4197 = vld [vmem:[#allocation2 + $0xd0] sm:$0xff]
    %v4198 = vld [vmem:[#allocation2 + $0xd8] sm:$0xff]
    %v4199 = vld [vmem:[#allocation2 + $0xf0] sm:$0xff]
    %v4200 = vld [vmem:[#allocation2 + $0xf8] sm:$0xff]
    %v4201 = vld [vmem:[#allocation2 + $0x110] sm:$0xff]
    %v4202 = vld [vmem:[#allocation2 + $0x118] sm:$0xff]
    %v4203 = vld [vmem:[#allocation2 + $0x130] sm:$0xff]
    %v4204 = vld [vmem:[#allocation2 + $0x138] sm:$0xff]
    %v4205 = vld [vmem:[#allocation2 + $0x150] sm:$0xff]
    %v4206 = vld [vmem:[#allocation2 + $0x158] sm:$0xff]
    %v4207 = vmax.f32 %v4185, %v4189
    %v4208 = vmax.f32 %v4187, %v4191
    %v4209 = vmax.f32 %v4207, %v4193
    %v4210 = vmax.f32 %v4208, %v4195
    %v4211 = vmax.f32 %v4209, %v4197
    %v4212 = vmax.f32 %v4210, %v4199
    %v4213 = vmax.f32 %v4211, %v4201
    %v4214 = vmax.f32 %v4212, %v4203
    %v4215 = vmax.f32 %v4213, %v4205
    %v4216 = vmax.f32 %v4215, %v4214
    %v4217 = vrot.slane %v4216, 4
    %v4218 = vmax.f32 %v4216, %v4217
    %v4219 = vrot.slane %v4218, 2
    %v4220 = vmax.f32 %v4218, %v4219
    %v4221 = vrot.slane %v4220, 1
    %v4222 = vmax.f32 %v4220, %v4221
    %v4223 = vmax.f32 %v4186, %v4190
    %v4224 = vmax.f32 %v4188, %v4192
    %v4225 = vmax.f32 %v4223, %v4194
    %v4226 = vmax.f32 %v4224, %v4196
    %v4227 = vmax.f32 %v4225, %v4198
    %v4228 = vmax.f32 %v4226, %v4200
    %v4229 = vmax.f32 %v4227, %v4202
    %v4230 = vmax.f32 %v4228, %v4204
    %v4231 = vmax.f32 %v4229, %v4206
    %v4232 = vmax.f32 %v4231, %v4230
    %v4233 = vrot.slane %v4232, 4
    %v4234 = vmax.f32 %v4232, %v4233
    %v4235 = vrot.slane %v4234, 2
    %v4236 = vmax.f32 %v4234, %v4235
    %v4237 = vrot.slane %v4236, 1
    %v4238 = vmax.f32 %v4236, %v4237
    %v4239 = vld [vmem:[#allocation2 + $0x590] sm:$0xff]
    %v4240 = vld [vmem:[#allocation2 + $0x598] sm:$0xff]
    %v4241 = vld [vmem:[#allocation2 + $0x5b0] sm:$0xff]
    %v4242 = vld [vmem:[#allocation2 + $0x5b8] sm:$0xff]
    %v4243 = vld [vmem:[#allocation2 + $0x5d0] sm:$0xff]
    %v4244 = vld [vmem:[#allocation2 + $0x5d8] sm:$0xff]
    %v4245 = vld [vmem:[#allocation2 + $0x5f0] sm:$0xff]
    %v4246 = vld [vmem:[#allocation2 + $0x5f8] sm:$0xff]
    %v4247 = vld [vmem:[#allocation2 + $0x610] sm:$0xff]
    %v4248 = vld [vmem:[#allocation2 + $0x618] sm:$0xff]
    %v4249 = vld [vmem:[#allocation2 + $0x630] sm:$0xff]
    %v4250 = vld [vmem:[#allocation2 + $0x638] sm:$0xff]
    %v4251 = vld [vmem:[#allocation2 + $0x650] sm:$0xff]
    %v4252 = vld [vmem:[#allocation2 + $0x658] sm:$0xff]
    %v4253 = vld [vmem:[#allocation2 + $0x670] sm:$0xff]
    %v4254 = vld [vmem:[#allocation2 + $0x678] sm:$0xff]
    %v4255 = vld [vmem:[#allocation2 + $0x690] sm:$0xff]
    %v4256 = vld [vmem:[#allocation2 + $0x698] sm:$0xff]
    %v4257 = vld [vmem:[#allocation2 + $0x6b0] sm:$0xff]
    %v4258 = vld [vmem:[#allocation2 + $0x6b8] sm:$0xff]
    %v4259 = vld [vmem:[#allocation2 + $0x6d0] sm:$0xff]
    %v4260 = vld [vmem:[#allocation2 + $0x6d8] sm:$0xff]
    %v4261 = vmax.f32 %v4239, %v4243
    %v4262 = vmax.f32 %v4241, %v4245
    %v4263 = vmax.f32 %v4261, %v4247
    %v4264 = vmax.f32 %v4262, %v4249
    %v4265 = vmax.f32 %v4263, %v4251
    %v4266 = vmax.f32 %v4264, %v4253
    %v4267 = vmax.f32 %v4265, %v4255
    %v4268 = vmax.f32 %v4266, %v4257
    %v4269 = vmax.f32 %v4267, %v4259
    %v4270 = vmax.f32 %v4269, %v4268
    %v4271 = vrot.slane %v4270, 4
    %v4272 = vmax.f32 %v4270, %v4271
    %v4273 = vrot.slane %v4272, 2
    %v4274 = vmax.f32 %v4272, %v4273
    %v4275 = vrot.slane %v4274, 1
    %v4276 = vmax.f32 %v4274, %v4275
    %v4277 = vmax.f32 %v4240, %v4244
    %v4278 = vmax.f32 %v4242, %v4246
    %v4279 = vmax.f32 %v4277, %v4248
    %v4280 = vmax.f32 %v4278, %v4250
    %v4281 = vmax.f32 %v4279, %v4252
    %v4282 = vmax.f32 %v4280, %v4254
    %v4283 = vmax.f32 %v4281, %v4256
    %v4284 = vmax.f32 %v4282, %v4258
    %v4285 = vmax.f32 %v4283, %v4260
    %v4286 = vmax.f32 %v4285, %v4284
    %v4287 = vrot.slane %v4286, 4
    %v4288 = vmax.f32 %v4286, %v4287
    %v4289 = vrot.slane %v4288, 2
    %v4290 = vmax.f32 %v4288, %v4289
    %v4291 = vrot.slane %v4290, 1
    %v4292 = vmax.f32 %v4290, %v4291
    %v4293 = vsel %vm4011, %v4222, %v4276
    %v4294 = vsel %vm4011, %v4238, %v4292
    %v4295 = vpack.c.bf16 %v4293, %v4293
    %v4296 = vpack.c.bf16 %v4294, %v4294
    %s4297 = scalar_lea.vmem %s4, 128
    %v4298 = vld [vmem:[%s4297] sm:$0xf]
    %v4299 = vld [vmem:[%s4297 + $0x4] sm:$0xf]
    %v4300 = vld [vmem:[%s4297 + $0x8] sm:$0xf]
    %v4301 = vld [vmem:[%s4297 + $0xc] sm:$0xf]
    %v4302 = vld [vmem:[%s4297 + $0x10] sm:$0xf]
    %v4303 = vld [vmem:[%s4297 + $0x14] sm:$0xf]
    %v4304 = vld [vmem:[%s4297 + $0x18] sm:$0xf]
    %v4305 = vld [vmem:[%s4297 + $0x1c] sm:$0xf]
    %v4306 = vld [vmem:[%s4297 + $0x20] sm:$0xf]
    %v4307 = vld [vmem:[%s4297 + $0x24] sm:$0xf]
    %v4308 = vld [vmem:[%s4297 + $0x28] sm:$0xf]
    %v4309 = vld [vmem:[%s4297 + $0x2c] sm:$0xf]
    %v4310 = vld [vmem:[%s4297 + $0x30] sm:$0xf]
    %v4311 = vld [vmem:[%s4297 + $0x34] sm:$0xf]
    %v4312 = vld [vmem:[%s4297 + $0x38] sm:$0xf]
    %v4313 = vld [vmem:[%s4297 + $0x3c] sm:$0xf]
    %v4314 = vld [vmem:[%s4297 + $0x40] sm:$0xf]
    %v4315 = vld [vmem:[%s4297 + $0x44] sm:$0xf]
    %v4316 = vld [vmem:[%s4297 + $0x48] sm:$0xf]
    %v4317 = vld [vmem:[%s4297 + $0x4c] sm:$0xf]
    %v4318 = vld [vmem:[%s4297 + $0x50] sm:$0xf]
    %v4319 = vld [vmem:[%s4297 + $0x54] sm:$0xf]
    %v4320 = vld [vmem:[%s4297 + $0x58] sm:$0xf]
    %v4321 = vld [vmem:[%s4297 + $0x5c] sm:$0xf]
    %v4322 = vld [vmem:[%s4297 + $0x60] sm:$0xf]
    %v4323 = vld [vmem:[%s4297 + $0x64] sm:$0xf]
    %v4324 = vld [vmem:[%s4297 + $0x68] sm:$0xf]
    %v4325 = vld [vmem:[%s4297 + $0x6c] sm:$0xf]
    %v4326 = vld [vmem:[%s4297 + $0x70] sm:$0xf]
    %v4327 = vld [vmem:[%s4297 + $0x74] sm:$0xf]
    %v4328 = vld [vmem:[%s4297 + $0x78] sm:$0xf]
    %v4329 = vld [vmem:[%s4297 + $0x7c] sm:$0xf]
    %v4362 = vunpack.c.l.b16 %v4298
    %v4363 = vunpack.c.l.b16 %v4299
    %v4364 = vunpack.c.l.b16 %v4300
    %v4365 = vunpack.c.l.b16 %v4301
    %v4366 = vunpack.c.l.b16 %v4302
    %v4367 = vunpack.c.l.b16 %v4303
    %v4368 = vunpack.c.l.b16 %v4304
    %v4369 = vunpack.c.l.b16 %v4305
    %v4370 = vunpack.c.l.b16 %v4306
    %v4371 = vunpack.c.l.b16 %v4307
    %v4372 = vunpack.c.l.b16 %v4308
    %v4373 = vunpack.c.l.b16 %v4309
    %v4374 = vunpack.c.l.b16 %v4310
    %v4375 = vunpack.c.l.b16 %v4311
    %v4376 = vunpack.c.l.b16 %v4312
    %v4377 = vunpack.c.l.b16 %v4313
    %v4378 = vunpack.c.l.b16 %v4314
    %v4379 = vunpack.c.l.b16 %v4315
    %v4380 = vunpack.c.l.b16 %v4316
    %v4381 = vunpack.c.l.b16 %v4317
    %v4382 = vunpack.c.l.b16 %v4318
    %v4383 = vunpack.c.l.b16 %v4319
    %v4384 = vunpack.c.l.b16 %v4320
    %v4385 = vunpack.c.l.b16 %v4321
    %v4386 = vunpack.c.l.b16 %v4322
    %v4387 = vunpack.c.l.b16 %v4323
    %v4388 = vunpack.c.l.b16 %v4324
    %v4389 = vunpack.c.l.b16 %v4325
    %v4390 = vunpack.c.l.b16 %v4326
    %v4391 = vunpack.c.l.b16 %v4327
    %v4392 = vunpack.c.l.b16 %v4328
    %v4393 = vunpack.c.l.b16 %v4329
    %v4394 = vpack.c.b16 %v4363, %v4362
    %v4395 = vpack.c.b16 %v4365, %v4364
    %v4396 = vpack.c.b16 %v4367, %v4366
    %v4397 = vpack.c.b16 %v4369, %v4368
    %v4398 = vpack.c.b16 %v4371, %v4370
    %v4399 = vpack.c.b16 %v4373, %v4372
    %v4400 = vpack.c.b16 %v4375, %v4374
    %v4401 = vpack.c.b16 %v4377, %v4376
    %v4402 = vpack.c.b16 %v4379, %v4378
    %v4403 = vpack.c.b16 %v4381, %v4380
    %v4404 = vpack.c.b16 %v4383, %v4382
    %v4405 = vpack.c.b16 %v4385, %v4384
    %v4406 = vpack.c.b16 %v4387, %v4386
    %v4407 = vpack.c.b16 %v4389, %v4388
    %v4408 = vpack.c.b16 %v4391, %v4390
    %v4409 = vpack.c.b16 %v4393, %v4392
    %4426 = vmatprep.subr.bf16.mxu0 0
    %4427 = vmatpush1.bf16.msra.mxu0 %v4394
    %4428 = vmatprep.subr.bf16.mxu0 0
    %4429 = vmatpush1.bf16.msra.mxu0 %v4395
    %4430 = vmatprep.subr.bf16.mxu0 0
    %4431 = vmatpush1.bf16.msra.mxu0 %v4396
    %4432 = vmatprep.subr.bf16.mxu0 0
    %4433 = vmatpush1.bf16.msra.mxu0 %v4397
    %4434 = vmatprep.subr.bf16.mxu0 0
    %4435 = vmatpush1.bf16.msra.mxu0 %v4398
    %4436 = vmatprep.subr.bf16.mxu0 0
    %4437 = vmatpush1.bf16.msra.mxu0 %v4399
    %4438 = vmatprep.subr.bf16.mxu0 0
    %4439 = vmatpush1.bf16.msra.mxu0 %v4400
    %4440 = vmatprep.subr.bf16.mxu0 0
    %4441 = vmatpush1.bf16.msra.mxu0 %v4401
    %4442 = vmatprep.subr.bf16.mxu0 0
    %4443 = vmatpush1.bf16.msra.mxu0 %v4402
    %4444 = vmatprep.subr.bf16.mxu0 0
    %4445 = vmatpush1.bf16.msra.mxu0 %v4403
    %4446 = vmatprep.subr.bf16.mxu0 0
    %4447 = vmatpush1.bf16.msra.mxu0 %v4404
    %4448 = vmatprep.subr.bf16.mxu0 0
    %4449 = vmatpush1.bf16.msra.mxu0 %v4405
    %4450 = vmatprep.subr.bf16.mxu0 0
    %4451 = vmatpush1.bf16.msra.mxu0 %v4406
    %4452 = vmatprep.subr.bf16.mxu0 0
    %4453 = vmatpush1.bf16.msra.mxu0 %v4407
    %4454 = vmatprep.subr.bf16.mxu0 0
    %4455 = vmatpush1.bf16.msra.mxu0 %v4408
    %4456 = vmatprep.subr.bf16.mxu0 0
    %4457 = vmatpush1.bf16.msra.mxu0 %v4409
    %4458 = vmatprep.mubr.bf16.mxu0 %v4296
    %4459 = vmatmul.mubr.bf16.gmra.mrb[0].mxu0 %v4295
    %v4460 = vpop.f32.mrb[0].mxu0
    %v4461 = vadd.f32 0.0, %v4460
    %v4462 = vpop.f32.mrb[0].mxu0
    %v4463 = vpop.f32.mrb[0].mxu0
    %v4464 = vpop.f32.mrb[0].mxu0
    %4465 = vdwg.mxu0
    %4466 = vst [vmem:[%s8 + $0x2] sm:$0x3] %v4461
    %v4467 = vld [vmem:[#allocation2 + $0x170] sm:$0xff]
    %v4468 = vld [vmem:[#allocation2 + $0x178] sm:$0xff]
    %v4469 = vld [vmem:[#allocation2 + $0x190] sm:$0xff]
    %v4470 = vld [vmem:[#allocation2 + $0x198] sm:$0xff]
    %v4471 = vld [vmem:[#allocation2 + $0x1b0] sm:$0xff]
    %v4472 = vld [vmem:[#allocation2 + $0x1b8] sm:$0xff]
    %v4473 = vld [vmem:[#allocation2 + $0x1d0] sm:$0xff]
    %v4474 = vld [vmem:[#allocation2 + $0x1d8] sm:$0xff]
    %v4475 = vld [vmem:[#allocation2 + $0x1f0] sm:$0xff]
    %v4476 = vld [vmem:[#allocation2 + $0x1f8] sm:$0xff]
    %v4477 = vld [vmem:[#allocation2 + $0x210] sm:$0xff]
    %v4478 = vld [vmem:[#allocation2 + $0x218] sm:$0xff]
    %v4479 = vld [vmem:[#allocation2 + $0x230] sm:$0xff]
    %v4480 = vld [vmem:[#allocation2 + $0x238] sm:$0xff]
    %v4481 = vld [vmem:[#allocation2 + $0x250] sm:$0xff]
    %v4482 = vld [vmem:[#allocation2 + $0x258] sm:$0xff]
    %v4483 = vld [vmem:[#allocation2 + $0x270] sm:$0xff]
    %v4484 = vld [vmem:[#allocation2 + $0x278] sm:$0xff]
    %v4485 = vld [vmem:[#allocation2 + $0x290] sm:$0xff]
    %v4486 = vld [vmem:[#allocation2 + $0x298] sm:$0xff]
    %v4487 = vld [vmem:[#allocation2 + $0x2b0] sm:$0xff]
    %v4488 = vld [vmem:[#allocation2 + $0x2b8] sm:$0xff]
    %v4489 = vmax.f32 %v4467, %v4471
    %v4490 = vmax.f32 %v4469, %v4473
    %v4491 = vmax.f32 %v4489, %v4475
    %v4492 = vmax.f32 %v4490, %v4477
    %v4493 = vmax.f32 %v4491, %v4479
    %v4494 = vmax.f32 %v4492, %v4481
    %v4495 = vmax.f32 %v4493, %v4483
    %v4496 = vmax.f32 %v4494, %v4485
    %v4497 = vmax.f32 %v4495, %v4487
    %v4498 = vmax.f32 %v4497, %v4496
    %v4499 = vrot.slane %v4498, 4
    %v4500 = vmax.f32 %v4498, %v4499
    %v4501 = vrot.slane %v4500, 2
    %v4502 = vmax.f32 %v4500, %v4501
    %v4503 = vrot.slane %v4502, 1
    %v4504 = vmax.f32 %v4502, %v4503
    %v4505 = vmax.f32 %v4468, %v4472
    %v4506 = vmax.f32 %v4470, %v4474
    %v4507 = vmax.f32 %v4505, %v4476
    %v4508 = vmax.f32 %v4506, %v4478
    %v4509 = vmax.f32 %v4507, %v4480
    %v4510 = vmax.f32 %v4508, %v4482
    %v4511 = vmax.f32 %v4509, %v4484
    %v4512 = vmax.f32 %v4510, %v4486
    %v4513 = vmax.f32 %v4511, %v4488
    %v4514 = vmax.f32 %v4513, %v4512
    %v4515 = vrot.slane %v4514, 4
    %v4516 = vmax.f32 %v4514, %v4515
    %v4517 = vrot.slane %v4516, 2
    %v4518 = vmax.f32 %v4516, %v4517
    %v4519 = vrot.slane %v4518, 1
    %v4520 = vmax.f32 %v4518, %v4519
    %v4521 = vld [vmem:[#allocation2 + $0x6f0] sm:$0xff]
    %v4522 = vld [vmem:[#allocation2 + $0x6f8] sm:$0xff]
    %v4523 = vld [vmem:[#allocation2 + $0x710] sm:$0xff]
    %v4524 = vld [vmem:[#allocation2 + $0x718] sm:$0xff]
    %v4525 = vld [vmem:[#allocation2 + $0x730] sm:$0xff]
    %v4526 = vld [vmem:[#allocation2 + $0x738] sm:$0xff]
    %v4527 = vld [vmem:[#allocation2 + $0x750] sm:$0xff]
    %v4528 = vld [vmem:[#allocation2 + $0x758] sm:$0xff]
    %v4529 = vld [vmem:[#allocation2 + $0x770] sm:$0xff]
    %v4530 = vld [vmem:[#allocation2 + $0x778] sm:$0xff]
    %v4531 = vld [vmem:[#allocation2 + $0x790] sm:$0xff]
    %v4532 = vld [vmem:[#allocation2 + $0x798] sm:$0xff]
    %v4533 = vld [vmem:[#allocation2 + $0x7b0] sm:$0xff]
    %v4534 = vld [vmem:[#allocation2 + $0x7b8] sm:$0xff]
    %v4535 = vld [vmem:[#allocation2 + $0x7d0] sm:$0xff]
    %v4536 = vld [vmem:[#allocation2 + $0x7d8] sm:$0xff]
    %v4537 = vld [vmem:[#allocation2 + $0x7f0] sm:$0xff]
    %v4538 = vld [vmem:[#allocation2 + $0x7f8] sm:$0xff]
    %v4539 = vld [vmem:[#allocation2 + $0x810] sm:$0xff]
    %v4540 = vld [vmem:[#allocation2 + $0x818] sm:$0xff]
    %v4541 = vld [vmem:[#allocation2 + $0x830] sm:$0xff]
    %v4542 = vld [vmem:[#allocation2 + $0x838] sm:$0xff]
    %v4543 = vmax.f32 %v4521, %v4525
    %v4544 = vmax.f32 %v4523, %v4527
    %v4545 = vmax.f32 %v4543, %v4529
    %v4546 = vmax.f32 %v4544, %v4531
    %v4547 = vmax.f32 %v4545, %v4533
    %v4548 = vmax.f32 %v4546, %v4535
    %v4549 = vmax.f32 %v4547, %v4537
    %v4550 = vmax.f32 %v4548, %v4539
    %v4551 = vmax.f32 %v4549, %v4541
    %v4552 = vmax.f32 %v4551, %v4550
    %v4553 = vrot.slane %v4552, 4
    %v4554 = vmax.f32 %v4552, %v4553
    %v4555 = vrot.slane %v4554, 2
    %v4556 = vmax.f32 %v4554, %v4555
    %v4557 = vrot.slane %v4556, 1
    %v4558 = vmax.f32 %v4556, %v4557
    %v4559 = vmax.f32 %v4522, %v4526
    %v4560 = vmax.f32 %v4524, %v4528
    %v4561 = vmax.f32 %v4559, %v4530
    %v4562 = vmax.f32 %v4560, %v4532
    %v4563 = vmax.f32 %v4561, %v4534
    %v4564 = vmax.f32 %v4562, %v4536
    %v4565 = vmax.f32 %v4563, %v4538
    %v4566 = vmax.f32 %v4564, %v4540
    %v4567 = vmax.f32 %v4565, %v4542
    %v4568 = vmax.f32 %v4567, %v4566
    %v4569 = vrot.slane %v4568, 4
    %v4570 = vmax.f32 %v4568, %v4569
    %v4571 = vrot.slane %v4570, 2
    %v4572 = vmax.f32 %v4570, %v4571
    %v4573 = vrot.slane %v4572, 1
    %v4574 = vmax.f32 %v4572, %v4573
    %v4575 = vsel %vm4011, %v4504, %v4558
    %v4576 = vsel %vm4011, %v4520, %v4574
    %v4577 = vpack.c.bf16 %v4575, %v4575
    %v4578 = vpack.c.bf16 %v4576, %v4576
    %s4579 = scalar_lea.vmem %s4, 256
    %v4580 = vld [vmem:[%s4579] sm:$0xf]
    %v4581 = vld [vmem:[%s4579 + $0x4] sm:$0xf]
    %v4582 = vld [vmem:[%s4579 + $0x8] sm:$0xf]
    %v4583 = vld [vmem:[%s4579 + $0xc] sm:$0xf]
    %v4584 = vld [vmem:[%s4579 + $0x10] sm:$0xf]
    %v4585 = vld [vmem:[%s4579 + $0x14] sm:$0xf]
    %v4586 = vld [vmem:[%s4579 + $0x18] sm:$0xf]
    %v4587 = vld [vmem:[%s4579 + $0x1c] sm:$0xf]
    %v4588 = vld [vmem:[%s4579 + $0x20] sm:$0xf]
    %v4589 = vld [vmem:[%s4579 + $0x24] sm:$0xf]
    %v4590 = vld [vmem:[%s4579 + $0x28] sm:$0xf]
    %v4591 = vld [vmem:[%s4579 + $0x2c] sm:$0xf]
    %v4592 = vld [vmem:[%s4579 + $0x30] sm:$0xf]
    %v4593 = vld [vmem:[%s4579 + $0x34] sm:$0xf]
    %v4594 = vld [vmem:[%s4579 + $0x38] sm:$0xf]
    %v4595 = vld [vmem:[%s4579 + $0x3c] sm:$0xf]
    %v4596 = vld [vmem:[%s4579 + $0x40] sm:$0xf]
    %v4597 = vld [vmem:[%s4579 + $0x44] sm:$0xf]
    %v4598 = vld [vmem:[%s4579 + $0x48] sm:$0xf]
    %v4599 = vld [vmem:[%s4579 + $0x4c] sm:$0xf]
    %v4600 = vld [vmem:[%s4579 + $0x50] sm:$0xf]
    %v4601 = vld [vmem:[%s4579 + $0x54] sm:$0xf]
    %v4602 = vld [vmem:[%s4579 + $0x58] sm:$0xf]
    %v4603 = vld [vmem:[%s4579 + $0x5c] sm:$0xf]
    %v4604 = vld [vmem:[%s4579 + $0x60] sm:$0xf]
    %v4605 = vld [vmem:[%s4579 + $0x64] sm:$0xf]
    %v4606 = vld [vmem:[%s4579 + $0x68] sm:$0xf]
    %v4607 = vld [vmem:[%s4579 + $0x6c] sm:$0xf]
    %v4608 = vld [vmem:[%s4579 + $0x70] sm:$0xf]
    %v4609 = vld [vmem:[%s4579 + $0x74] sm:$0xf]
    %v4610 = vld [vmem:[%s4579 + $0x78] sm:$0xf]
    %v4611 = vld [vmem:[%s4579 + $0x7c] sm:$0xf]
    %v4644 = vunpack.c.l.b16 %v4580
    %v4645 = vunpack.c.l.b16 %v4581
    %v4646 = vunpack.c.l.b16 %v4582
    %v4647 = vunpack.c.l.b16 %v4583
    %v4648 = vunpack.c.l.b16 %v4584
    %v4649 = vunpack.c.l.b16 %v4585
    %v4650 = vunpack.c.l.b16 %v4586
    %v4651 = vunpack.c.l.b16 %v4587
    %v4652 = vunpack.c.l.b16 %v4588
    %v4653 = vunpack.c.l.b16 %v4589
    %v4654 = vunpack.c.l.b16 %v4590
    %v4655 = vunpack.c.l.b16 %v4591
    %v4656 = vunpack.c.l.b16 %v4592
    %v4657 = vunpack.c.l.b16 %v4593
    %v4658 = vunpack.c.l.b16 %v4594
    %v4659 = vunpack.c.l.b16 %v4595
    %v4660 = vunpack.c.l.b16 %v4596
    %v4661 = vunpack.c.l.b16 %v4597
    %v4662 = vunpack.c.l.b16 %v4598
    %v4663 = vunpack.c.l.b16 %v4599
    %v4664 = vunpack.c.l.b16 %v4600
    %v4665 = vunpack.c.l.b16 %v4601
    %v4666 = vunpack.c.l.b16 %v4602
    %v4667 = vunpack.c.l.b16 %v4603
    %v4668 = vunpack.c.l.b16 %v4604
    %v4669 = vunpack.c.l.b16 %v4605
    %v4670 = vunpack.c.l.b16 %v4606
    %v4671 = vunpack.c.l.b16 %v4607
    %v4672 = vunpack.c.l.b16 %v4608
    %v4673 = vunpack.c.l.b16 %v4609
    %v4674 = vunpack.c.l.b16 %v4610
    %v4675 = vunpack.c.l.b16 %v4611
    %v4676 = vpack.c.b16 %v4645, %v4644
    %v4677 = vpack.c.b16 %v4647, %v4646
    %v4678 = vpack.c.b16 %v4649, %v4648
    %v4679 = vpack.c.b16 %v4651, %v4650
    %v4680 = vpack.c.b16 %v4653, %v4652
    %v4681 = vpack.c.b16 %v4655, %v4654
    %v4682 = vpack.c.b16 %v4657, %v4656
    %v4683 = vpack.c.b16 %v4659, %v4658
    %v4684 = vpack.c.b16 %v4661, %v4660
    %v4685 = vpack.c.b16 %v4663, %v4662
    %v4686 = vpack.c.b16 %v4665, %v4664
    %v4687 = vpack.c.b16 %v4667, %v4666
    %v4688 = vpack.c.b16 %v4669, %v4668
    %v4689 = vpack.c.b16 %v4671, %v4670
    %v4690 = vpack.c.b16 %v4673, %v4672
    %v4691 = vpack.c.b16 %v4675, %v4674
    %4708 = vmatprep.subr.bf16.mxu0 0
    %4709 = vmatpush1.bf16.msra.mxu0 %v4676
    %4710 = vmatprep.subr.bf16.mxu0 0
    %4711 = vmatpush1.bf16.msra.mxu0 %v4677
    %4712 = vmatprep.subr.bf16.mxu0 0
    %4713 = vmatpush1.bf16.msra.mxu0 %v4678
    %4714 = vmatprep.subr.bf16.mxu0 0
    %4715 = vmatpush1.bf16.msra.mxu0 %v4679
    %4716 = vmatprep.subr.bf16.mxu0 0
    %4717 = vmatpush1.bf16.msra.mxu0 %v4680
    %4718 = vmatprep.subr.bf16.mxu0 0
    %4719 = vmatpush1.bf16.msra.mxu0 %v4681
    %4720 = vmatprep.subr.bf16.mxu0 0
    %4721 = vmatpush1.bf16.msra.mxu0 %v4682
    %4722 = vmatprep.subr.bf16.mxu0 0
    %4723 = vmatpush1.bf16.msra.mxu0 %v4683
    %4724 = vmatprep.subr.bf16.mxu0 0
    %4725 = vmatpush1.bf16.msra.mxu0 %v4684
    %4726 = vmatprep.subr.bf16.mxu0 0
    %4727 = vmatpush1.bf16.msra.mxu0 %v4685
    %4728 = vmatprep.subr.bf16.mxu0 0
    %4729 = vmatpush1.bf16.msra.mxu0 %v4686
    %4730 = vmatprep.subr.bf16.mxu0 0
    %4731 = vmatpush1.bf16.msra.mxu0 %v4687
    %4732 = vmatprep.subr.bf16.mxu0 0
    %4733 = vmatpush1.bf16.msra.mxu0 %v4688
    %4734 = vmatprep.subr.bf16.mxu0 0
    %4735 = vmatpush1.bf16.msra.mxu0 %v4689
    %4736 = vmatprep.subr.bf16.mxu0 0
    %4737 = vmatpush1.bf16.msra.mxu0 %v4690
    %4738 = vmatprep.subr.bf16.mxu0 0
    %4739 = vmatpush1.bf16.msra.mxu0 %v4691
    %4740 = vmatprep.mubr.bf16.mxu0 %v4578
    %4741 = vmatmul.mubr.bf16.gmra.mrb[0].mxu0 %v4577
    %v4742 = vpop.f32.mrb[0].mxu0
    %v4743 = vadd.f32 0.0, %v4742
    %v4744 = vpop.f32.mrb[0].mxu0
    %v4745 = vpop.f32.mrb[0].mxu0
    %v4746 = vpop.f32.mrb[0].mxu0
    %4747 = vdwg.mxu0
    %4748 = vst [vmem:[%s8 + $0x4] sm:$0x3] %v4743
    %v4749 = vld [vmem:[#allocation2 + $0x2d0] sm:$0xff]
    %v4750 = vld [vmem:[#allocation2 + $0x2d8] sm:$0xff]
    %v4751 = vld [vmem:[#allocation2 + $0x2f0] sm:$0xff]
    %v4752 = vld [vmem:[#allocation2 + $0x2f8] sm:$0xff]
    %v4753 = vld [vmem:[#allocation2 + $0x310] sm:$0xff]
    %v4754 = vld [vmem:[#allocation2 + $0x318] sm:$0xff]
    %v4755 = vld [vmem:[#allocation2 + $0x330] sm:$0xff]
    %v4756 = vld [vmem:[#allocation2 + $0x338] sm:$0xff]
    %v4757 = vld [vmem:[#allocation2 + $0x350] sm:$0xff]
    %v4758 = vld [vmem:[#allocation2 + $0x358] sm:$0xff]
    %v4759 = vld [vmem:[#allocation2 + $0x370] sm:$0xff]
    %v4760 = vld [vmem:[#allocation2 + $0x378] sm:$0xff]
    %v4761 = vld [vmem:[#allocation2 + $0x390] sm:$0xff]
    %v4762 = vld [vmem:[#allocation2 + $0x398] sm:$0xff]
    %v4763 = vld [vmem:[#allocation2 + $0x3b0] sm:$0xff]
    %v4764 = vld [vmem:[#allocation2 + $0x3b8] sm:$0xff]
    %v4765 = vld [vmem:[#allocation2 + $0x3d0] sm:$0xff]
    %v4766 = vld [vmem:[#allocation2 + $0x3d8] sm:$0xff]
    %v4767 = vld [vmem:[#allocation2 + $0x3f0] sm:$0xff]
    %v4768 = vld [vmem:[#allocation2 + $0x3f8] sm:$0xff]
    %v4769 = vld [vmem:[#allocation2 + $0x410] sm:$0xff]
    %v4770 = vld [vmem:[#allocation2 + $0x418] sm:$0xff]
    %v4771 = vmax.f32 %v4749, %v4753
    %v4772 = vmax.f32 %v4751, %v4755
    %v4773 = vmax.f32 %v4771, %v4757
    %v4774 = vmax.f32 %v4772, %v4759
    %v4775 = vmax.f32 %v4773, %v4761
    %v4776 = vmax.f32 %v4774, %v4763
    %v4777 = vmax.f32 %v4775, %v4765
    %v4778 = vmax.f32 %v4776, %v4767
    %v4779 = vmax.f32 %v4777, %v4769
    %v4780 = vmax.f32 %v4779, %v4778
    %v4781 = vrot.slane %v4780, 4
    %v4782 = vmax.f32 %v4780, %v4781
    %v4783 = vrot.slane %v4782, 2
    %v4784 = vmax.f32 %v4782, %v4783
    %v4785 = vrot.slane %v4784, 1
    %v4786 = vmax.f32 %v4784, %v4785
    %v4787 = vmax.f32 %v4750, %v4754
    %v4788 = vmax.f32 %v4752, %v4756
    %v4789 = vmax.f32 %v4787, %v4758
    %v4790 = vmax.f32 %v4788, %v4760
    %v4791 = vmax.f32 %v4789, %v4762
    %v4792 = vmax.f32 %v4790, %v4764
    %v4793 = vmax.f32 %v4791, %v4766
    %v4794 = vmax.f32 %v4792, %v4768
    %v4795 = vmax.f32 %v4793, %v4770
    %v4796 = vmax.f32 %v4795, %v4794
    %v4797 = vrot.slane %v4796, 4
    %v4798 = vmax.f32 %v4796, %v4797
    %v4799 = vrot.slane %v4798, 2
    %v4800 = vmax.f32 %v4798, %v4799
    %v4801 = vrot.slane %v4800, 1
    %v4802 = vmax.f32 %v4800, %v4801
    %v4803 = vld [vmem:[#allocation2 + $0x850] sm:$0xff]
    %v4804 = vld [vmem:[#allocation2 + $0x858] sm:$0xff]
    %v4805 = vld [vmem:[#allocation2 + $0x870] sm:$0xff]
    %v4806 = vld [vmem:[#allocation2 + $0x878] sm:$0xff]
    %v4807 = vld [vmem:[#allocation2 + $0x890] sm:$0xff]
    %v4808 = vld [vmem:[#allocation2 + $0x898] sm:$0xff]
    %v4809 = vld [vmem:[#allocation2 + $0x8b0] sm:$0xff]
    %v4810 = vld [vmem:[#allocation2 + $0x8b8] sm:$0xff]
    %v4811 = vld [vmem:[#allocation2 + $0x8d0] sm:$0xff]
    %v4812 = vld [vmem:[#allocation2 + $0x8d8] sm:$0xff]
    %v4813 = vld [vmem:[#allocation2 + $0x8f0] sm:$0xff]
    %v4814 = vld [vmem:[#allocation2 + $0x8f8] sm:$0xff]
    %v4815 = vld [vmem:[#allocation2 + $0x910] sm:$0xff]
    %v4816 = vld [vmem:[#allocation2 + $0x918] sm:$0xff]
    %v4817 = vld [vmem:[#allocation2 + $0x930] sm:$0xff]
    %v4818 = vld [vmem:[#allocation2 + $0x938] sm:$0xff]
    %v4819 = vld [vmem:[#allocation2 + $0x950] sm:$0xff]
    %v4820 = vld [vmem:[#allocation2 + $0x958] sm:$0xff]
    %v4821 = vld [vmem:[#allocation2 + $0x970] sm:$0xff]
    %v4822 = vld [vmem:[#allocation2 + $0x978] sm:$0xff]
    %v4823 = vld [vmem:[#allocation2 + $0x990] sm:$0xff]
    %v4824 = vld [vmem:[#allocation2 + $0x998] sm:$0xff]
    %v4825 = vmax.f32 %v4803, %v4807
    %v4826 = vmax.f32 %v4805, %v4809
    %v4827 = vmax.f32 %v4825, %v4811
    %v4828 = vmax.f32 %v4826, %v4813
    %v4829 = vmax.f32 %v4827, %v4815
    %v4830 = vmax.f32 %v4828, %v4817
    %v4831 = vmax.f32 %v4829, %v4819
    %v4832 = vmax.f32 %v4830, %v4821
    %v4833 = vmax.f32 %v4831, %v4823
    %v4834 = vmax.f32 %v4833, %v4832
    %v4835 = vrot.slane %v4834, 4
    %v4836 = vmax.f32 %v4834, %v4835
    %v4837 = vrot.slane %v4836, 2
    %v4838 = vmax.f32 %v4836, %v4837
    %v4839 = vrot.slane %v4838, 1
    %v4840 = vmax.f32 %v4838, %v4839
    %v4841 = vmax.f32 %v4804, %v4808
    %v4842 = vmax.f32 %v4806, %v4810
    %v4843 = vmax.f32 %v4841, %v4812
    %v4844 = vmax.f32 %v4842, %v4814
    %v4845 = vmax.f32 %v4843, %v4816
    %v4846 = vmax.f32 %v4844, %v4818
    %v4847 = vmax.f32 %v4845, %v4820
    %v4848 = vmax.f32 %v4846, %v4822
    %v4849 = vmax.f32 %v4847, %v4824
    %v4850 = vmax.f32 %v4849, %v4848
    %v4851 = vrot.slane %v4850, 4
    %v4852 = vmax.f32 %v4850, %v4851
    %v4853 = vrot.slane %v4852, 2
    %v4854 = vmax.f32 %v4852, %v4853
    %v4855 = vrot.slane %v4854, 1
    %v4856 = vmax.f32 %v4854, %v4855
    %v4857 = vsel %vm4011, %v4786, %v4840
    %v4858 = vsel %vm4011, %v4802, %v4856
    %v4859 = vpack.c.bf16 %v4857, %v4857
    %v4860 = vpack.c.bf16 %v4858, %v4858
    %s4861 = scalar_lea.vmem %s4, 384
    %v4862 = vld [vmem:[%s4861] sm:$0xf]
    %v4863 = vld [vmem:[%s4861 + $0x4] sm:$0xf]
    %v4864 = vld [vmem:[%s4861 + $0x8] sm:$0xf]
    %v4865 = vld [vmem:[%s4861 + $0xc] sm:$0xf]
    %v4866 = vld [vmem:[%s4861 + $0x10] sm:$0xf]
    %v4867 = vld [vmem:[%s4861 + $0x14] sm:$0xf]
    %v4868 = vld [vmem:[%s4861 + $0x18] sm:$0xf]
    %v4869 = vld [vmem:[%s4861 + $0x1c] sm:$0xf]
    %v4870 = vld [vmem:[%s4861 + $0x20] sm:$0xf]
    %v4871 = vld [vmem:[%s4861 + $0x24] sm:$0xf]
    %v4872 = vld [vmem:[%s4861 + $0x28] sm:$0xf]
    %v4873 = vld [vmem:[%s4861 + $0x2c] sm:$0xf]
    %v4874 = vld [vmem:[%s4861 + $0x30] sm:$0xf]
    %v4875 = vld [vmem:[%s4861 + $0x34] sm:$0xf]
    %v4876 = vld [vmem:[%s4861 + $0x38] sm:$0xf]
    %v4877 = vld [vmem:[%s4861 + $0x3c] sm:$0xf]
    %v4878 = vld [vmem:[%s4861 + $0x40] sm:$0xf]
    %v4879 = vld [vmem:[%s4861 + $0x44] sm:$0xf]
    %v4880 = vld [vmem:[%s4861 + $0x48] sm:$0xf]
    %v4881 = vld [vmem:[%s4861 + $0x4c] sm:$0xf]
    %v4882 = vld [vmem:[%s4861 + $0x50] sm:$0xf]
    %v4883 = vld [vmem:[%s4861 + $0x54] sm:$0xf]
    %v4884 = vld [vmem:[%s4861 + $0x58] sm:$0xf]
    %v4885 = vld [vmem:[%s4861 + $0x5c] sm:$0xf]
    %v4886 = vld [vmem:[%s4861 + $0x60] sm:$0xf]
    %v4887 = vld [vmem:[%s4861 + $0x64] sm:$0xf]
    %v4888 = vld [vmem:[%s4861 + $0x68] sm:$0xf]
    %v4889 = vld [vmem:[%s4861 + $0x6c] sm:$0xf]
    %v4890 = vld [vmem:[%s4861 + $0x70] sm:$0xf]
    %v4891 = vld [vmem:[%s4861 + $0x74] sm:$0xf]
    %v4892 = vld [vmem:[%s4861 + $0x78] sm:$0xf]
    %v4893 = vld [vmem:[%s4861 + $0x7c] sm:$0xf]
    %v4926 = vunpack.c.l.b16 %v4862
    %v4927 = vunpack.c.l.b16 %v4863
    %v4928 = vunpack.c.l.b16 %v4864
    %v4929 = vunpack.c.l.b16 %v4865
    %v4930 = vunpack.c.l.b16 %v4866
    %v4931 = vunpack.c.l.b16 %v4867
    %v4932 = vunpack.c.l.b16 %v4868
    %v4933 = vunpack.c.l.b16 %v4869
    %v4934 = vunpack.c.l.b16 %v4870
    %v4935 = vunpack.c.l.b16 %v4871
    %v4936 = vunpack.c.l.b16 %v4872
    %v4937 = vunpack.c.l.b16 %v4873
    %v4938 = vunpack.c.l.b16 %v4874
    %v4939 = vunpack.c.l.b16 %v4875
    %v4940 = vunpack.c.l.b16 %v4876
    %v4941 = vunpack.c.l.b16 %v4877
    %v4942 = vunpack.c.l.b16 %v4878
    %v4943 = vunpack.c.l.b16 %v4879
    %v4944 = vunpack.c.l.b16 %v4880
    %v4945 = vunpack.c.l.b16 %v4881
    %v4946 = vunpack.c.l.b16 %v4882
    %v4947 = vunpack.c.l.b16 %v4883
    %v4948 = vunpack.c.l.b16 %v4884
    %v4949 = vunpack.c.l.b16 %v4885
    %v4950 = vunpack.c.l.b16 %v4886
    %v4951 = vunpack.c.l.b16 %v4887
    %v4952 = vunpack.c.l.b16 %v4888
    %v4953 = vunpack.c.l.b16 %v4889
    %v4954 = vunpack.c.l.b16 %v4890
    %v4955 = vunpack.c.l.b16 %v4891
    %v4956 = vunpack.c.l.b16 %v4892
    %v4957 = vunpack.c.l.b16 %v4893
    %v4958 = vpack.c.b16 %v4927, %v4926
    %v4959 = vpack.c.b16 %v4929, %v4928
    %v4960 = vpack.c.b16 %v4931, %v4930
    %v4961 = vpack.c.b16 %v4933, %v4932
    %v4962 = vpack.c.b16 %v4935, %v4934
    %v4963 = vpack.c.b16 %v4937, %v4936
    %v4964 = vpack.c.b16 %v4939, %v4938
    %v4965 = vpack.c.b16 %v4941, %v4940
    %v4966 = vpack.c.b16 %v4943, %v4942
    %v4967 = vpack.c.b16 %v4945, %v4944
    %v4968 = vpack.c.b16 %v4947, %v4946
    %v4969 = vpack.c.b16 %v4949, %v4948
    %v4970 = vpack.c.b16 %v4951, %v4950
    %v4971 = vpack.c.b16 %v4953, %v4952
    %v4972 = vpack.c.b16 %v4955, %v4954
    %v4973 = vpack.c.b16 %v4957, %v4956
    %4990 = vmatprep.subr.bf16.mxu0 0
    %4991 = vmatpush1.bf16.msra.mxu0 %v4958
    %4992 = vmatprep.subr.bf16.mxu0 0
    %4993 = vmatpush1.bf16.msra.mxu0 %v4959
    %4994 = vmatprep.subr.bf16.mxu0 0
    %4995 = vmatpush1.bf16.msra.mxu0 %v4960
    %4996 = vmatprep.subr.bf16.mxu0 0
    %4997 = vmatpush1.bf16.msra.mxu0 %v4961
    %4998 = vmatprep.subr.bf16.mxu0 0
    %4999 = vmatpush1.bf16.msra.mxu0 %v4962
    %5000 = vmatprep.subr.bf16.mxu0 0
    %5001 = vmatpush1.bf16.msra.mxu0 %v4963
    %5002 = vmatprep.subr.bf16.mxu0 0
    %5003 = vmatpush1.bf16.msra.mxu0 %v4964
    %5004 = vmatprep.subr.bf16.mxu0 0
    %5005 = vmatpush1.bf16.msra.mxu0 %v4965
    %5006 = vmatprep.subr.bf16.mxu0 0
    %5007 = vmatpush1.bf16.msra.mxu0 %v4966
    %5008 = vmatprep.subr.bf16.mxu0 0
    %5009 = vmatpush1.bf16.msra.mxu0 %v4967
    %5010 = vmatprep.subr.bf16.mxu0 0
    %5011 = vmatpush1.bf16.msra.mxu0 %v4968
    %5012 = vmatprep.subr.bf16.mxu0 0
    %5013 = vmatpush1.bf16.msra.mxu0 %v4969
    %5014 = vmatprep.subr.bf16.mxu0 0
    %5015 = vmatpush1.bf16.msra.mxu0 %v4970
    %5016 = vmatprep.subr.bf16.mxu0 0
    %5017 = vmatpush1.bf16.msra.mxu0 %v4971
    %5018 = vmatprep.subr.bf16.mxu0 0
    %5019 = vmatpush1.bf16.msra.mxu0 %v4972
    %5020 = vmatprep.subr.bf16.mxu0 0
    %5021 = vmatpush1.bf16.msra.mxu0 %v4973
    %5022 = vmatprep.mubr.bf16.mxu0 %v4860
    %5023 = vmatmul.mubr.bf16.gmra.mrb[0].mxu0 %v4859
    %v5024 = vpop.f32.mrb[0].mxu0
    %v5025 = vadd.f32 0.0, %v5024
    %v5026 = vpop.f32.mrb[0].mxu0
    %v5027 = vpop.f32.mrb[0].mxu0
    %v5028 = vpop.f32.mrb[0].mxu0
    %5029 = vdwg.mxu0
    %5030 = vst [vmem:[%s8 + $0x6] sm:$0x3] %v5025
    %v5031 = vld [vmem:[#allocation2 + $0x430] sm:$0xff]
    %v5032 = vld [vmem:[#allocation2 + $0x438] sm:$0xff]
    %v5033 = vld [vmem:[#allocation2 + $0x450] sm:$0xff]
    %v5034 = vld [vmem:[#allocation2 + $0x458] sm:$0xff]
    %v5035 = vld [vmem:[#allocation2 + $0x470] sm:$0xff]
    %v5036 = vld [vmem:[#allocation2 + $0x478] sm:$0xff]
    %v5037 = vld [vmem:[#allocation2 + $0x490] sm:$0xff]
    %v5038 = vld [vmem:[#allocation2 + $0x498] sm:$0xff]
    %v5039 = vld [vmem:[#allocation2 + $0x4b0] sm:$0xff]
    %v5040 = vld [vmem:[#allocation2 + $0x4b8] sm:$0xff]
    %v5041 = vld [vmem:[#allocation2 + $0x4d0] sm:$0xff]
    %v5042 = vld [vmem:[#allocation2 + $0x4d8] sm:$0xff]
    %v5043 = vld [vmem:[#allocation2 + $0x4f0] sm:$0xff]
    %v5044 = vld [vmem:[#allocation2 + $0x4f8] sm:$0xff]
    %v5045 = vld [vmem:[#allocation2 + $0x510] sm:$0xff]
    %v5046 = vld [vmem:[#allocation2 + $0x518] sm:$0xff]
    %v5047 = vld [vmem:[#allocation2 + $0x530] sm:$0xff]
    %v5048 = vld [vmem:[#allocation2 + $0x538] sm:$0xff]
    %v5049 = vld [vmem:[#allocation2 + $0x550] sm:$0xff]
    %v5050 = vld [vmem:[#allocation2 + $0x558] sm:$0xff]
    %v5051 = vld [vmem:[#allocation2 + $0x570] sm:$0xff]
    %v5052 = vld [vmem:[#allocation2 + $0x578] sm:$0xff]
    %v5053 = vmax.f32 %v5031, %v5035
    %v5054 = vmax.f32 %v5033, %v5037
    %v5055 = vmax.f32 %v5053, %v5039
    %v5056 = vmax.f32 %v5054, %v5041
    %v5057 = vmax.f32 %v5055, %v5043
    %v5058 = vmax.f32 %v5056, %v5045
    %v5059 = vmax.f32 %v5057, %v5047
    %v5060 = vmax.f32 %v5058, %v5049
    %v5061 = vmax.f32 %v5059, %v5051
    %v5062 = vmax.f32 %v5061, %v5060
    %v5063 = vrot.slane %v5062, 4
    %v5064 = vmax.f32 %v5062, %v5063
    %v5065 = vrot.slane %v5064, 2
    %v5066 = vmax.f32 %v5064, %v5065
    %v5067 = vrot.slane %v5066, 1
    %v5068 = vmax.f32 %v5066, %v5067
    %v5069 = vmax.f32 %v5032, %v5036
    %v5070 = vmax.f32 %v5034, %v5038
    %v5071 = vmax.f32 %v5069, %v5040
    %v5072 = vmax.f32 %v5070, %v5042
    %v5073 = vmax.f32 %v5071, %v5044
    %v5074 = vmax.f32 %v5072, %v5046
    %v5075 = vmax.f32 %v5073, %v5048
    %v5076 = vmax.f32 %v5074, %v5050
    %v5077 = vmax.f32 %v5075, %v5052
    %v5078 = vmax.f32 %v5077, %v5076
    %v5079 = vrot.slane %v5078, 4
    %v5080 = vmax.f32 %v5078, %v5079
    %v5081 = vrot.slane %v5080, 2
    %v5082 = vmax.f32 %v5080, %v5081
    %v5083 = vrot.slane %v5082, 1
    %v5084 = vmax.f32 %v5082, %v5083
    %v5085 = vld [vmem:[#allocation2 + $0x9b0] sm:$0xff]
    %v5086 = vld [vmem:[#allocation2 + $0x9b8] sm:$0xff]
    %v5087 = vld [vmem:[#allocation2 + $0x9d0] sm:$0xff]
    %v5088 = vld [vmem:[#allocation2 + $0x9d8] sm:$0xff]
    %v5089 = vld [vmem:[#allocation2 + $0x9f0] sm:$0xff]
    %v5090 = vld [vmem:[#allocation2 + $0x9f8] sm:$0xff]
    %v5091 = vld [vmem:[#allocation2 + $0xa10] sm:$0xff]
    %v5092 = vld [vmem:[#allocation2 + $0xa18] sm:$0xff]
    %v5093 = vld [vmem:[#allocation2 + $0xa30] sm:$0xff]
    %v5094 = vld [vmem:[#allocation2 + $0xa38] sm:$0xff]
    %v5095 = vld [vmem:[#allocation2 + $0xa50] sm:$0xff]
    %v5096 = vld [vmem:[#allocation2 + $0xa58] sm:$0xff]
    %v5097 = vld [vmem:[#allocation2 + $0xa70] sm:$0xff]
    %v5098 = vld [vmem:[#allocation2 + $0xa78] sm:$0xff]
    %v5099 = vld [vmem:[#allocation2 + $0xa90] sm:$0xff]
    %v5100 = vld [vmem:[#allocation2 + $0xa98] sm:$0xff]
    %v5101 = vld [vmem:[#allocation2 + $0xab0] sm:$0xff]
    %v5102 = vld [vmem:[#allocation2 + $0xab8] sm:$0xff]
    %v5103 = vld [vmem:[#allocation2 + $0xad0] sm:$0xff]
    %v5104 = vld [vmem:[#allocation2 + $0xad8] sm:$0xff]
    %v5105 = vld [vmem:[#allocation2 + $0xaf0] sm:$0xff]
    %v5106 = vld [vmem:[#allocation2 + $0xaf8] sm:$0xff]
    %v5107 = vmax.f32 %v5085, %v5089
    %v5108 = vmax.f32 %v5087, %v5091
    %v5109 = vmax.f32 %v5107, %v5093
    %v5110 = vmax.f32 %v5108, %v5095
    %v5111 = vmax.f32 %v5109, %v5097
    %v5112 = vmax.f32 %v5110, %v5099
    %v5113 = vmax.f32 %v5111, %v5101
    %v5114 = vmax.f32 %v5112, %v5103
    %v5115 = vmax.f32 %v5113, %v5105
    %v5116 = vmax.f32 %v5115, %v5114
    %v5117 = vrot.slane %v5116, 4
    %v5118 = vmax.f32 %v5116, %v5117
    %v5119 = vrot.slane %v5118, 2
    %v5120 = vmax.f32 %v5118, %v5119
    %v5121 = vrot.slane %v5120, 1
    %v5122 = vmax.f32 %v5120, %v5121
    %v5123 = vmax.f32 %v5086, %v5090
    %v5124 = vmax.f32 %v5088, %v5092
    %v5125 = vmax.f32 %v5123, %v5094
    %v5126 = vmax.f32 %v5124, %v5096
    %v5127 = vmax.f32 %v5125, %v5098
    %v5128 = vmax.f32 %v5126, %v5100
    %v5129 = vmax.f32 %v5127, %v5102
    %v5130 = vmax.f32 %v5128, %v5104
    %v5131 = vmax.f32 %v5129, %v5106
    %v5132 = vmax.f32 %v5131, %v5130
    %v5133 = vrot.slane %v5132, 4
    %v5134 = vmax.f32 %v5132, %v5133
    %v5135 = vrot.slane %v5134, 2
    %v5136 = vmax.f32 %v5134, %v5135
    %v5137 = vrot.slane %v5136, 1
    %v5138 = vmax.f32 %v5136, %v5137
    %v5139 = vsel %vm4011, %v5068, %v5122
    %v5140 = vsel %vm4011, %v5084, %v5138
    %v5141 = vpack.c.bf16 %v5139, %v5139
    %v5142 = vpack.c.bf16 %v5140, %v5140
    %s5143 = scalar_lea.vmem %s4, 512
    %v5144 = vld [vmem:[%s5143] sm:$0xf]
    %v5145 = vld [vmem:[%s5143 + $0x4] sm:$0xf]
    %v5146 = vld [vmem:[%s5143 + $0x8] sm:$0xf]
    %v5147 = vld [vmem:[%s5143 + $0xc] sm:$0xf]
    %v5148 = vld [vmem:[%s5143 + $0x10] sm:$0xf]
    %v5149 = vld [vmem:[%s5143 + $0x14] sm:$0xf]
    %v5150 = vld [vmem:[%s5143 + $0x18] sm:$0xf]
    %v5151 = vld [vmem:[%s5143 + $0x1c] sm:$0xf]
    %v5152 = vld [vmem:[%s5143 + $0x20] sm:$0xf]
    %v5153 = vld [vmem:[%s5143 + $0x24] sm:$0xf]
    %v5154 = vld [vmem:[%s5143 + $0x28] sm:$0xf]
    %v5155 = vld [vmem:[%s5143 + $0x2c] sm:$0xf]
    %v5156 = vld [vmem:[%s5143 + $0x30] sm:$0xf]
    %v5157 = vld [vmem:[%s5143 + $0x34] sm:$0xf]
    %v5158 = vld [vmem:[%s5143 + $0x38] sm:$0xf]
    %v5159 = vld [vmem:[%s5143 + $0x3c] sm:$0xf]
    %v5160 = vld [vmem:[%s5143 + $0x40] sm:$0xf]
    %v5161 = vld [vmem:[%s5143 + $0x44] sm:$0xf]
    %v5162 = vld [vmem:[%s5143 + $0x48] sm:$0xf]
    %v5163 = vld [vmem:[%s5143 + $0x4c] sm:$0xf]
    %v5164 = vld [vmem:[%s5143 + $0x50] sm:$0xf]
    %v5165 = vld [vmem:[%s5143 + $0x54] sm:$0xf]
    %v5166 = vld [vmem:[%s5143 + $0x58] sm:$0xf]
    %v5167 = vld [vmem:[%s5143 + $0x5c] sm:$0xf]
    %v5168 = vld [vmem:[%s5143 + $0x60] sm:$0xf]
    %v5169 = vld [vmem:[%s5143 + $0x64] sm:$0xf]
    %v5170 = vld [vmem:[%s5143 + $0x68] sm:$0xf]
    %v5171 = vld [vmem:[%s5143 + $0x6c] sm:$0xf]
    %v5172 = vld [vmem:[%s5143 + $0x70] sm:$0xf]
    %v5173 = vld [vmem:[%s5143 + $0x74] sm:$0xf]
    %v5174 = vld [vmem:[%s5143 + $0x78] sm:$0xf]
    %v5175 = vld [vmem:[%s5143 + $0x7c] sm:$0xf]
    %v5208 = vunpack.c.l.b16 %v5144
    %v5209 = vunpack.c.l.b16 %v5145
    %v5210 = vunpack.c.l.b16 %v5146
    %v5211 = vunpack.c.l.b16 %v5147
    %v5212 = vunpack.c.l.b16 %v5148
    %v5213 = vunpack.c.l.b16 %v5149
    %v5214 = vunpack.c.l.b16 %v5150
    %v5215 = vunpack.c.l.b16 %v5151
    %v5216 = vunpack.c.l.b16 %v5152
    %v5217 = vunpack.c.l.b16 %v5153
    %v5218 = vunpack.c.l.b16 %v5154
    %v5219 = vunpack.c.l.b16 %v5155
    %v5220 = vunpack.c.l.b16 %v5156
    %v5221 = vunpack.c.l.b16 %v5157
    %v5222 = vunpack.c.l.b16 %v5158
    %v5223 = vunpack.c.l.b16 %v5159
    %v5224 = vunpack.c.l.b16 %v5160
    %v5225 = vunpack.c.l.b16 %v5161
    %v5226 = vunpack.c.l.b16 %v5162
    %v5227 = vunpack.c.l.b16 %v5163
    %v5228 = vunpack.c.l.b16 %v5164
    %v5229 = vunpack.c.l.b16 %v5165
    %v5230 = vunpack.c.l.b16 %v5166
    %v5231 = vunpack.c.l.b16 %v5167
    %v5232 = vunpack.c.l.b16 %v5168
    %v5233 = vunpack.c.l.b16 %v5169
    %v5234 = vunpack.c.l.b16 %v5170
    %v5235 = vunpack.c.l.b16 %v5171
    %v5236 = vunpack.c.l.b16 %v5172
    %v5237 = vunpack.c.l.b16 %v5173
    %v5238 = vunpack.c.l.b16 %v5174
    %v5239 = vunpack.c.l.b16 %v5175
    %v5240 = vpack.c.b16 %v5209, %v5208
    %v5241 = vpack.c.b16 %v5211, %v5210
    %v5242 = vpack.c.b16 %v5213, %v5212
    %v5243 = vpack.c.b16 %v5215, %v5214
    %v5244 = vpack.c.b16 %v5217, %v5216
    %v5245 = vpack.c.b16 %v5219, %v5218
    %v5246 = vpack.c.b16 %v5221, %v5220
    %v5247 = vpack.c.b16 %v5223, %v5222
    %v5248 = vpack.c.b16 %v5225, %v5224
    %v5249 = vpack.c.b16 %v5227, %v5226
    %v5250 = vpack.c.b16 %v5229, %v5228
    %v5251 = vpack.c.b16 %v5231, %v5230
    %v5252 = vpack.c.b16 %v5233, %v5232
    %v5253 = vpack.c.b16 %v5235, %v5234
    %v5254 = vpack.c.b16 %v5237, %v5236
    %v5255 = vpack.c.b16 %v5239, %v5238
    %5272 = vmatprep.subr.bf16.mxu0 0
    %5273 = vmatpush1.bf16.msra.mxu0 %v5240
    %5274 = vmatprep.subr.bf16.mxu0 0
    %5275 = vmatpush1.bf16.msra.mxu0 %v5241
    %5276 = vmatprep.subr.bf16.mxu0 0
    %5277 = vmatpush1.bf16.msra.mxu0 %v5242
    %5278 = vmatprep.subr.bf16.mxu0 0
    %5279 = vmatpush1.bf16.msra.mxu0 %v5243
    %5280 = vmatprep.subr.bf16.mxu0 0
    %5281 = vmatpush1.bf16.msra.mxu0 %v5244
    %5282 = vmatprep.subr.bf16.mxu0 0
    %5283 = vmatpush1.bf16.msra.mxu0 %v5245
    %5284 = vmatprep.subr.bf16.mxu0 0
    %5285 = vmatpush1.bf16.msra.mxu0 %v5246
    %5286 = vmatprep.subr.bf16.mxu0 0
    %5287 = vmatpush1.bf16.msra.mxu0 %v5247
    %5288 = vmatprep.subr.bf16.mxu0 0
    %5289 = vmatpush1.bf16.msra.mxu0 %v5248
    %5290 = vmatprep.subr.bf16.mxu0 0
    %5291 = vmatpush1.bf16.msra.mxu0 %v5249
    %5292 = vmatprep.subr.bf16.mxu0 0
    %5293 = vmatpush1.bf16.msra.mxu0 %v5250
    %5294 = vmatprep.subr.bf16.mxu0 0
    %5295 = vmatpush1.bf16.msra.mxu0 %v5251
    %5296 = vmatprep.subr.bf16.mxu0 0
    %5297 = vmatpush1.bf16.msra.mxu0 %v5252
    %5298 = vmatprep.subr.bf16.mxu0 0
    %5299 = vmatpush1.bf16.msra.mxu0 %v5253
    %5300 = vmatprep.subr.bf16.mxu0 0
    %5301 = vmatpush1.bf16.msra.mxu0 %v5254
    %5302 = vmatprep.subr.bf16.mxu0 0
    %5303 = vmatpush1.bf16.msra.mxu0 %v5255
    %5304 = vmatprep.mubr.bf16.mxu0 %v5142
    %5305 = vmatmul.mubr.bf16.gmra.mrb[0].mxu0 %v5141
    %v5306 = vpop.f32.mrb[0].mxu0
    %v5307 = vadd.f32 0.0, %v5306
    %v5308 = vpop.f32.mrb[0].mxu0
    %v5309 = vpop.f32.mrb[0].mxu0
    %v5310 = vpop.f32.mrb[0].mxu0
    %5311 = vdwg.mxu0
    %5312 = vst [vmem:[%s8 + $0x8] sm:$0x3] %v5307
    %v5313 = vld [vmem:[#allocation3] sm:$0xff]
    %v5314 = vld [vmem:[#allocation3 + $0x8] sm:$0xff]
    %v5315 = vld [vmem:[#allocation3 + $0x10] sm:$0xff]
    %v5316 = vld [vmem:[#allocation3 + $0x18] sm:$0xff]
    %v5317 = vld [vmem:[#allocation3 + $0x20] sm:$0xff]
    %v5318 = vld [vmem:[#allocation3 + $0x28] sm:$0xff]
    %v5319 = vld [vmem:[#allocation3 + $0x30] sm:$0xff]
    %v5320 = vld [vmem:[#allocation3 + $0x38] sm:$0xff]
    %v5321 = vld [vmem:[#allocation3 + $0x40] sm:$0xff]
    %v5322 = vld [vmem:[#allocation3 + $0x48] sm:$0xff]
    %v5323 = vmax.f32 %v5313, %v5317
    %v5324 = vmax.f32 %v5315, %v5319
    %v5325 = vmax.f32 %v5323, %v5321
    %v5326 = vmax.f32 %v5325, %v5324
    %v5327 = vrot.slane %v5326, 4
    %v5328 = vmax.f32 %v5326, %v5327
    %v5329 = vrot.slane %v5328, 2
    %v5330 = vmax.f32 %v5328, %v5329
    %v5331 = vrot.slane %v5330, 1
    %v5332 = vmax.f32 %v5330, %v5331
    %v5333 = vmax.f32 %v5314, %v5318
    %v5334 = vmax.f32 %v5316, %v5320
    %v5335 = vmax.f32 %v5333, %v5322
    %v5336 = vmax.f32 %v5335, %v5334
    %v5337 = vrot.slane %v5336, 4
    %v5338 = vmax.f32 %v5336, %v5337
    %v5339 = vrot.slane %v5338, 2
    %v5340 = vmax.f32 %v5338, %v5339
    %v5341 = vrot.slane %v5340, 1
    %v5342 = vmax.f32 %v5340, %v5341
    %v5343 = vld [vmem:[#allocation3 + $0x2d0] sm:$0xff]
    %v5344 = vld [vmem:[#allocation3 + $0x2d8] sm:$0xff]
    %v5345 = vld [vmem:[#allocation3 + $0x2e0] sm:$0xff]
    %v5346 = vld [vmem:[#allocation3 + $0x2e8] sm:$0xff]
    %v5347 = vld [vmem:[#allocation3 + $0x2f0] sm:$0xff]
    %v5348 = vld [vmem:[#allocation3 + $0x2f8] sm:$0xff]
    %v5349 = vld [vmem:[#allocation3 + $0x300] sm:$0xff]
    %v5350 = vld [vmem:[#allocation3 + $0x308] sm:$0xff]
    %v5351 = vld [vmem:[#allocation3 + $0x310] sm:$0xff]
    %v5352 = vld [vmem:[#allocation3 + $0x318] sm:$0xff]
    %v5353 = vmax.f32 %v5343, %v5347
    %v5354 = vmax.f32 %v5345, %v5349
    %v5355 = vmax.f32 %v5353, %v5351
    %v5356 = vmax.f32 %v5355, %v5354
    %v5357 = vrot.slane %v5356, 4
    %v5358 = vmax.f32 %v5356, %v5357
    %v5359 = vrot.slane %v5358, 2
    %v5360 = vmax.f32 %v5358, %v5359
    %v5361 = vrot.slane %v5360, 1
    %v5362 = vmax.f32 %v5360, %v5361
    %v5363 = vmax.f32 %v5344, %v5348
    %v5364 = vmax.f32 %v5346, %v5350
    %v5365 = vmax.f32 %v5363, %v5352
    %v5366 = vmax.f32 %v5365, %v5364
    %v5367 = vrot.slane %v5366, 4
    %v5368 = vmax.f32 %v5366, %v5367
    %v5369 = vrot.slane %v5368, 2
    %v5370 = vmax.f32 %v5368, %v5369
    %v5371 = vrot.slane %v5370, 1
    %v5372 = vmax.f32 %v5370, %v5371
    %v5373 = vsel %vm4011, %v5332, %v5362
    %v5374 = vsel %vm4011, %v5342, %v5372
    %v5375 = vpack.c.bf16 %v5373, %v5373
    %v5376 = vpack.c.bf16 %v5374, %v5374
    %s5377 = scalar_lea.vmem %s4, 640
    %v5378 = vld [vmem:[%s5377] sm:$0xf]
    %v5379 = vld [vmem:[%s5377 + $0x4] sm:$0xf]
    %v5380 = vld [vmem:[%s5377 + $0x8] sm:$0xf]
    %v5381 = vld [vmem:[%s5377 + $0xc] sm:$0xf]
    %v5382 = vld [vmem:[%s5377 + $0x10] sm:$0xf]
    %v5383 = vld [vmem:[%s5377 + $0x14] sm:$0xf]
    %v5384 = vld [vmem:[%s5377 + $0x18] sm:$0xf]
    %v5385 = vld [vmem:[%s5377 + $0x1c] sm:$0xf]
    %v5386 = vld [vmem:[%s5377 + $0x20] sm:$0xf]
    %v5387 = vld [vmem:[%s5377 + $0x24] sm:$0xf]
    %v5388 = vld [vmem:[%s5377 + $0x28] sm:$0xf]
    %v5389 = vld [vmem:[%s5377 + $0x2c] sm:$0xf]
    %v5390 = vld [vmem:[%s5377 + $0x30] sm:$0xf]
    %v5391 = vld [vmem:[%s5377 + $0x34] sm:$0xf]
    %v5392 = vld [vmem:[%s5377 + $0x38] sm:$0xf]
    %v5393 = vld [vmem:[%s5377 + $0x3c] sm:$0xf]
    %v5394 = vld [vmem:[%s5377 + $0x40] sm:$0xf]
    %v5395 = vld [vmem:[%s5377 + $0x44] sm:$0xf]
    %v5396 = vld [vmem:[%s5377 + $0x48] sm:$0xf]
    %v5397 = vld [vmem:[%s5377 + $0x4c] sm:$0xf]
    %v5398 = vld [vmem:[%s5377 + $0x50] sm:$0xf]
    %v5399 = vld [vmem:[%s5377 + $0x54] sm:$0xf]
    %v5400 = vld [vmem:[%s5377 + $0x58] sm:$0xf]
    %v5401 = vld [vmem:[%s5377 + $0x5c] sm:$0xf]
    %v5402 = vld [vmem:[%s5377 + $0x60] sm:$0xf]
    %v5403 = vld [vmem:[%s5377 + $0x64] sm:$0xf]
    %v5404 = vld [vmem:[%s5377 + $0x68] sm:$0xf]
    %v5405 = vld [vmem:[%s5377 + $0x6c] sm:$0xf]
    %v5406 = vld [vmem:[%s5377 + $0x70] sm:$0xf]
    %v5407 = vld [vmem:[%s5377 + $0x74] sm:$0xf]
    %v5408 = vld [vmem:[%s5377 + $0x78] sm:$0xf]
    %v5409 = vld [vmem:[%s5377 + $0x7c] sm:$0xf]
    %v5442 = vunpack.c.l.b16 %v5378
    %v5443 = vunpack.c.l.b16 %v5379
    %v5444 = vunpack.c.l.b16 %v5380
    %v5445 = vunpack.c.l.b16 %v5381
    %v5446 = vunpack.c.l.b16 %v5382
    %v5447 = vunpack.c.l.b16 %v5383
    %v5448 = vunpack.c.l.b16 %v5384
    %v5449 = vunpack.c.l.b16 %v5385
    %v5450 = vunpack.c.l.b16 %v5386
    %v5451 = vunpack.c.l.b16 %v5387
    %v5452 = vunpack.c.l.b16 %v5388
    %v5453 = vunpack.c.l.b16 %v5389
    %v5454 = vunpack.c.l.b16 %v5390
    %v5455 = vunpack.c.l.b16 %v5391
    %v5456 = vunpack.c.l.b16 %v5392
    %v5457 = vunpack.c.l.b16 %v5393
    %v5458 = vunpack.c.l.b16 %v5394
    %v5459 = vunpack.c.l.b16 %v5395
    %v5460 = vunpack.c.l.b16 %v5396
    %v5461 = vunpack.c.l.b16 %v5397
    %v5462 = vunpack.c.l.b16 %v5398
    %v5463 = vunpack.c.l.b16 %v5399
    %v5464 = vunpack.c.l.b16 %v5400
    %v5465 = vunpack.c.l.b16 %v5401
    %v5466 = vunpack.c.l.b16 %v5402
    %v5467 = vunpack.c.l.b16 %v5403
    %v5468 = vunpack.c.l.b16 %v5404
    %v5469 = vunpack.c.l.b16 %v5405
    %v5470 = vunpack.c.l.b16 %v5406
    %v5471 = vunpack.c.l.b16 %v5407
    %v5472 = vunpack.c.l.b16 %v5408
    %v5473 = vunpack.c.l.b16 %v5409
    %v5474 = vpack.c.b16 %v5443, %v5442
    %v5475 = vpack.c.b16 %v5445, %v5444
    %v5476 = vpack.c.b16 %v5447, %v5446
    %v5477 = vpack.c.b16 %v5449, %v5448
    %v5478 = vpack.c.b16 %v5451, %v5450
    %v5479 = vpack.c.b16 %v5453, %v5452
    %v5480 = vpack.c.b16 %v5455, %v5454
    %v5481 = vpack.c.b16 %v5457, %v5456
    %v5482 = vpack.c.b16 %v5459, %v5458
    %v5483 = vpack.c.b16 %v5461, %v5460
    %v5484 = vpack.c.b16 %v5463, %v5462
    %v5485 = vpack.c.b16 %v5465, %v5464
    %v5486 = vpack.c.b16 %v5467, %v5466
    %v5487 = vpack.c.b16 %v5469, %v5468
    %v5488 = vpack.c.b16 %v5471, %v5470
    %v5489 = vpack.c.b16 %v5473, %v5472
    %5506 = vmatprep.subr.bf16.mxu0 0
    %5507 = vmatpush1.bf16.msra.mxu0 %v5474
    %5508 = vmatprep.subr.bf16.mxu0 0
    %5509 = vmatpush1.bf16.msra.mxu0 %v5475
    %5510 = vmatprep.subr.bf16.mxu0 0
    %5511 = vmatpush1.bf16.msra.mxu0 %v5476
    %5512 = vmatprep.subr.bf16.mxu0 0
    %5513 = vmatpush1.bf16.msra.mxu0 %v5477
    %5514 = vmatprep.subr.bf16.mxu0 0
    %5515 = vmatpush1.bf16.msra.mxu0 %v5478
    %5516 = vmatprep.subr.bf16.mxu0 0
    %5517 = vmatpush1.bf16.msra.mxu0 %v5479
    %5518 = vmatprep.subr.bf16.mxu0 0
    %5519 = vmatpush1.bf16.msra.mxu0 %v5480
    %5520 = vmatprep.subr.bf16.mxu0 0
    %5521 = vmatpush1.bf16.msra.mxu0 %v5481
    %5522 = vmatprep.subr.bf16.mxu0 0
    %5523 = vmatpush1.bf16.msra.mxu0 %v5482
    %5524 = vmatprep.subr.bf16.mxu0 0
    %5525 = vmatpush1.bf16.msra.mxu0 %v5483
    %5526 = vmatprep.subr.bf16.mxu0 0
    %5527 = vmatpush1.bf16.msra.mxu0 %v5484
    %5528 = vmatprep.subr.bf16.mxu0 0
    %5529 = vmatpush1.bf16.msra.mxu0 %v5485
    %5530 = vmatprep.subr.bf16.mxu0 0
    %5531 = vmatpush1.bf16.msra.mxu0 %v5486
    %5532 = vmatprep.subr.bf16.mxu0 0
    %5533 = vmatpush1.bf16.msra.mxu0 %v5487
    %5534 = vmatprep.subr.bf16.mxu0 0
    %5535 = vmatpush1.bf16.msra.mxu0 %v5488
    %5536 = vmatprep.subr.bf16.mxu0 0
    %5537 = vmatpush1.bf16.msra.mxu0 %v5489
    %5538 = vmatprep.mubr.bf16.mxu0 %v5376
    %5539 = vmatmul.mubr.bf16.gmra.mrb[0].mxu0 %v5375
    %v5540 = vpop.f32.mrb[0].mxu0
    %v5541 = vadd.f32 0.0, %v5540
    %v5542 = vpop.f32.mrb[0].mxu0
    %v5543 = vpop.f32.mrb[0].mxu0
    %v5544 = vpop.f32.mrb[0].mxu0
    %5545 = vdwg.mxu0
    %5546 = vst [vmem:[%s8 + $0xa] sm:$0x3] %v5541
    %v5547 = vld [vmem:[#allocation3 + $0x50] sm:$0xff]
    %v5548 = vld [vmem:[#allocation3 + $0x58] sm:$0xff]
    %v5549 = vld [vmem:[#allocation3 + $0x60] sm:$0xff]
    %v5550 = vld [vmem:[#allocation3 + $0x68] sm:$0xff]
    %v5551 = vld [vmem:[#allocation3 + $0x70] sm:$0xff]
    %v5552 = vld [vmem:[#allocation3 + $0x78] sm:$0xff]
    %v5553 = vld [vmem:[#allocation3 + $0x80] sm:$0xff]
    %v5554 = vld [vmem:[#allocation3 + $0x88] sm:$0xff]
    %v5555 = vld [vmem:[#allocation3 + $0x90] sm:$0xff]
    %v5556 = vld [vmem:[#allocation3 + $0x98] sm:$0xff]
    %v5557 = vmax.f32 %v5547, %v5551
    %v5558 = vmax.f32 %v5549, %v5553
    %v5559 = vmax.f32 %v5557, %v5555
    %v5560 = vmax.f32 %v5559, %v5558
    %v5561 = vrot.slane %v5560, 4
    %v5562 = vmax.f32 %v5560, %v5561
    %v5563 = vrot.slane %v5562, 2
    %v5564 = vmax.f32 %v5562, %v5563
    %v5565 = vrot.slane %v5564, 1
    %v5566 = vmax.f32 %v5564, %v5565
    %v5567 = vmax.f32 %v5548, %v5552
    %v5568 = vmax.f32 %v5550, %v5554
    %v5569 = vmax.f32 %v5567, %v5556
    %v5570 = vmax.f32 %v5569, %v5568
    %v5571 = vrot.slane %v5570, 4
    %v5572 = vmax.f32 %v5570, %v5571
    %v5573 = vrot.slane %v5572, 2
    %v5574 = vmax.f32 %v5572, %v5573
    %v5575 = vrot.slane %v5574, 1
    %v5576 = vmax.f32 %v5574, %v5575
    %v5577 = vld [vmem:[#allocation3 + $0x320] sm:$0xff]
    %v5578 = vld [vmem:[#allocation3 + $0x328] sm:$0xff]
    %v5579 = vld [vmem:[#allocation3 + $0x330] sm:$0xff]
    %v5580 = vld [vmem:[#allocation3 + $0x338] sm:$0xff]
    %v5581 = vld [vmem:[#allocation3 + $0x340] sm:$0xff]
    %v5582 = vld [vmem:[#allocation3 + $0x348] sm:$0xff]
    %v5583 = vld [vmem:[#allocation3 + $0x350] sm:$0xff]
    %v5584 = vld [vmem:[#allocation3 + $0x358] sm:$0xff]
    %v5585 = vld [vmem:[#allocation3 + $0x360] sm:$0xff]
    %v5586 = vld [vmem:[#allocation3 + $0x368] sm:$0xff]
    %v5587 = vmax.f32 %v5577, %v5581
    %v5588 = vmax.f32 %v5579, %v5583
    %v5589 = vmax.f32 %v5587, %v5585
    %v5590 = vmax.f32 %v5589, %v5588
    %v5591 = vrot.slane %v5590, 4
    %v5592 = vmax.f32 %v5590, %v5591
    %v5593 = vrot.slane %v5592, 2
    %v5594 = vmax.f32 %v5592, %v5593
    %v5595 = vrot.slane %v5594, 1
    %v5596 = vmax.f32 %v5594, %v5595
    %v5597 = vmax.f32 %v5578, %v5582
    %v5598 = vmax.f32 %v5580, %v5584
    %v5599 = vmax.f32 %v5597, %v5586
    %v5600 = vmax.f32 %v5599, %v5598
    %v5601 = vrot.slane %v5600, 4
    %v5602 = vmax.f32 %v5600, %v5601
    %v5603 = vrot.slane %v5602, 2
    %v5604 = vmax.f32 %v5602, %v5603
    %v5605 = vrot.slane %v5604, 1
    %v5606 = vmax.f32 %v5604, %v5605
    %v5607 = vsel %vm4011, %v5566, %v5596
    %v5608 = vsel %vm4011, %v5576, %v5606
    %v5609 = vpack.c.bf16 %v5607, %v5607
    %v5610 = vpack.c.bf16 %v5608, %v5608
    %s5611 = scalar_lea.vmem %s4, 768
    %v5612 = vld [vmem:[%s5611] sm:$0xf]
    %v5613 = vld [vmem:[%s5611 + $0x4] sm:$0xf]
    %v5614 = vld [vmem:[%s5611 + $0x8] sm:$0xf]
    %v5615 = vld [vmem:[%s5611 + $0xc] sm:$0xf]
    %v5616 = vld [vmem:[%s5611 + $0x10] sm:$0xf]
    %v5617 = vld [vmem:[%s5611 + $0x14] sm:$0xf]
    %v5618 = vld [vmem:[%s5611 + $0x18] sm:$0xf]
    %v5619 = vld [vmem:[%s5611 + $0x1c] sm:$0xf]
    %v5620 = vld [vmem:[%s5611 + $0x20] sm:$0xf]
    %v5621 = vld [vmem:[%s5611 + $0x24] sm:$0xf]
    %v5622 = vld [vmem:[%s5611 + $0x28] sm:$0xf]
    %v5623 = vld [vmem:[%s5611 + $0x2c] sm:$0xf]
    %v5624 = vld [vmem:[%s5611 + $0x30] sm:$0xf]
    %v5625 = vld [vmem:[%s5611 + $0x34] sm:$0xf]
    %v5626 = vld [vmem:[%s5611 + $0x38] sm:$0xf]
    %v5627 = vld [vmem:[%s5611 + $0x3c] sm:$0xf]
    %v5628 = vld [vmem:[%s5611 + $0x40] sm:$0xf]
    %v5629 = vld [vmem:[%s5611 + $0x44] sm:$0xf]
    %v5630 = vld [vmem:[%s5611 + $0x48] sm:$0xf]
    %v5631 = vld [vmem:[%s5611 + $0x4c] sm:$0xf]
    %v5632 = vld [vmem:[%s5611 + $0x50] sm:$0xf]
    %v5633 = vld [vmem:[%s5611 + $0x54] sm:$0xf]
    %v5634 = vld [vmem:[%s5611 + $0x58] sm:$0xf]
    %v5635 = vld [vmem:[%s5611 + $0x5c] sm:$0xf]
    %v5636 = vld [vmem:[%s5611 + $0x60] sm:$0xf]
    %v5637 = vld [vmem:[%s5611 + $0x64] sm:$0xf]
    %v5638 = vld [vmem:[%s5611 + $0x68] sm:$0xf]
    %v5639 = vld [vmem:[%s5611 + $0x6c] sm:$0xf]
    %v5640 = vld [vmem:[%s5611 + $0x70] sm:$0xf]
    %v5641 = vld [vmem:[%s5611 + $0x74] sm:$0xf]
    %v5642 = vld [vmem:[%s5611 + $0x78] sm:$0xf]
    %v5643 = vld [vmem:[%s5611 + $0x7c] sm:$0xf]
    %v5676 = vunpack.c.l.b16 %v5612
    %v5677 = vunpack.c.l.b16 %v5613
    %v5678 = vunpack.c.l.b16 %v5614
    %v5679 = vunpack.c.l.b16 %v5615
    %v5680 = vunpack.c.l.b16 %v5616
    %v5681 = vunpack.c.l.b16 %v5617
    %v5682 = vunpack.c.l.b16 %v5618
    %v5683 = vunpack.c.l.b16 %v5619
    %v5684 = vunpack.c.l.b16 %v5620
    %v5685 = vunpack.c.l.b16 %v5621
    %v5686 = vunpack.c.l.b16 %v5622
    %v5687 = vunpack.c.l.b16 %v5623
    %v5688 = vunpack.c.l.b16 %v5624
    %v5689 = vunpack.c.l.b16 %v5625
    %v5690 = vunpack.c.l.b16 %v5626
    %v5691 = vunpack.c.l.b16 %v5627
    %v5692 = vunpack.c.l.b16 %v5628
    %v5693 = vunpack.c.l.b16 %v5629
    %v5694 = vunpack.c.l.b16 %v5630
    %v5695 = vunpack.c.l.b16 %v5631
    %v5696 = vunpack.c.l.b16 %v5632
    %v5697 = vunpack.c.l.b16 %v5633
    %v5698 = vunpack.c.l.b16 %v5634
    %v5699 = vunpack.c.l.b16 %v5635
    %v5700 = vunpack.c.l.b16 %v5636
    %v5701 = vunpack.c.l.b16 %v5637
    %v5702 = vunpack.c.l.b16 %v5638
    %v5703 = vunpack.c.l.b16 %v5639
    %v5704 = vunpack.c.l.b16 %v5640
    %v5705 = vunpack.c.l.b16 %v5641
    %v5706 = vunpack.c.l.b16 %v5642
    %v5707 = vunpack.c.l.b16 %v5643
    %v5708 = vpack.c.b16 %v5677, %v5676
    %v5709 = vpack.c.b16 %v5679, %v5678
    %v5710 = vpack.c.b16 %v5681, %v5680
    %v5711 = vpack.c.b16 %v5683, %v5682
    %v5712 = vpack.c.b16 %v5685, %v5684
    %v5713 = vpack.c.b16 %v5687, %v5686
    %v5714 = vpack.c.b16 %v5689, %v5688
    %v5715 = vpack.c.b16 %v5691, %v5690
    %v5716 = vpack.c.b16 %v5693, %v5692
    %v5717 = vpack.c.b16 %v5695, %v5694
    %v5718 = vpack.c.b16 %v5697, %v5696
    %v5719 = vpack.c.b16 %v5699, %v5698
    %v5720 = vpack.c.b16 %v5701, %v5700
    %v5721 = vpack.c.b16 %v5703, %v5702
    %v5722 = vpack.c.b16 %v5705, %v5704
    %v5723 = vpack.c.b16 %v5707, %v5706
    %5740 = vmatprep.subr.bf16.mxu0 0
    %5741 = vmatpush1.bf16.msra.mxu0 %v5708
    %5742 = vmatprep.subr.bf16.mxu0 0
    %5743 = vmatpush1.bf16.msra.mxu0 %v5709
    %5744 = vmatprep.subr.bf16.mxu0 0
    %5745 = vmatpush1.bf16.msra.mxu0 %v5710
    %5746 = vmatprep.subr.bf16.mxu0 0
    %5747 = vmatpush1.bf16.msra.mxu0 %v5711
    %5748 = vmatprep.subr.bf16.mxu0 0
    %5749 = vmatpush1.bf16.msra.mxu0 %v5712
    %5750 = vmatprep.subr.bf16.mxu0 0
    %5751 = vmatpush1.bf16.msra.mxu0 %v5713
    %5752 = vmatprep.subr.bf16.mxu0 0
    %5753 = vmatpush1.bf16.msra.mxu0 %v5714
    %5754 = vmatprep.subr.bf16.mxu0 0
    %5755 = vmatpush1.bf16.msra.mxu0 %v5715
    %5756 = vmatprep.subr.bf16.mxu0 0
    %5757 = vmatpush1.bf16.msra.mxu0 %v5716
    %5758 = vmatprep.subr.bf16.mxu0 0
    %5759 = vmatpush1.bf16.msra.mxu0 %v5717
    %5760 = vmatprep.subr.bf16.mxu0 0
    %5761 = vmatpush1.bf16.msra.mxu0 %v5718
    %5762 = vmatprep.subr.bf16.mxu0 0
    %5763 = vmatpush1.bf16.msra.mxu0 %v5719
    %5764 = vmatprep.subr.bf16.mxu0 0
    %5765 = vmatpush1.bf16.msra.mxu0 %v5720
    %5766 = vmatprep.subr.bf16.mxu0 0
    %5767 = vmatpush1.bf16.msra.mxu0 %v5721
    %5768 = vmatprep.subr.bf16.mxu0 0
    %5769 = vmatpush1.bf16.msra.mxu0 %v5722
    %5770 = vmatprep.subr.bf16.mxu0 0
    %5771 = vmatpush1.bf16.msra.mxu0 %v5723
    %5772 = vmatprep.mubr.bf16.mxu0 %v5610
    %5773 = vmatmul.mubr.bf16.gmra.mrb[0].mxu0 %v5609
    %v5774 = vpop.f32.mrb[0].mxu0
    %v5775 = vadd.f32 0.0, %v5774
    %v5776 = vpop.f32.mrb[0].mxu0
    %v5777 = vpop.f32.mrb[0].mxu0
    %v5778 = vpop.f32.mrb[0].mxu0
    %5779 = vdwg.mxu0
    %5780 = vst [vmem:[%s8 + $0xc] sm:$0x3] %v5775
    %v5781 = vld [vmem:[#allocation3 + $0xa0] sm:$0xff]
    %v5782 = vld [vmem:[#allocation3 + $0xa8] sm:$0xff]
    %v5783 = vld [vmem:[#allocation3 + $0xb0] sm:$0xff]
    %v5784 = vld [vmem:[#allocation3 + $0xb8] sm:$0xff]
    %v5785 = vld [vmem:[#allocation3 + $0xc0] sm:$0xff]
    %v5786 = vld [vmem:[#allocation3 + $0xc8] sm:$0xff]
    %v5787 = vld [vmem:[#allocation3 + $0xd0] sm:$0xff]
    %v5788 = vld [vmem:[#allocation3 + $0xd8] sm:$0xff]
    %v5789 = vld [vmem:[#allocation3 + $0xe0] sm:$0xff]
    %v5790 = vld [vmem:[#allocation3 + $0xe8] sm:$0xff]
    %v5791 = vmax.f32 %v5781, %v5785
    %v5792 = vmax.f32 %v5783, %v5787
    %v5793 = vmax.f32 %v5791, %v5789
    %v5794 = vmax.f32 %v5793, %v5792
    %v5795 = vrot.slane %v5794, 4
    %v5796 = vmax.f32 %v5794, %v5795
    %v5797 = vrot.slane %v5796, 2
    %v5798 = vmax.f32 %v5796, %v5797
    %v5799 = vrot.slane %v5798, 1
    %v5800 = vmax.f32 %v5798, %v5799
    %v5801 = vmax.f32 %v5782, %v5786
    %v5802 = vmax.f32 %v5784, %v5788
    %v5803 = vmax.f32 %v5801, %v5790
    %v5804 = vmax.f32 %v5803, %v5802
    %v5805 = vrot.slane %v5804, 4
    %v5806 = vmax.f32 %v5804, %v5805
    %v5807 = vrot.slane %v5806, 2
    %v5808 = vmax.f32 %v5806, %v5807
    %v5809 = vrot.slane %v5808, 1
    %v5810 = vmax.f32 %v5808, %v5809
    %v5811 = vld [vmem:[#allocation3 + $0x370] sm:$0xff]
    %v5812 = vld [vmem:[#allocation3 + $0x378] sm:$0xff]
    %v5813 = vld [vmem:[#allocation3 + $0x380] sm:$0xff]
    %v5814 = vld [vmem:[#allocation3 + $0x388] sm:$0xff]
    %v5815 = vld [vmem:[#allocation3 + $0x390] sm:$0xff]
    %v5816 = vld [vmem:[#allocation3 + $0x398] sm:$0xff]
    %v5817 = vld [vmem:[#allocation3 + $0x3a0] sm:$0xff]
    %v5818 = vld [vmem:[#allocation3 + $0x3a8] sm:$0xff]
    %v5819 = vld [vmem:[#allocation3 + $0x3b0] sm:$0xff]
    %v5820 = vld [vmem:[#allocation3 + $0x3b8] sm:$0xff]
    %v5821 = vmax.f32 %v5811, %v5815
    %v5822 = vmax.f32 %v5813, %v5817
    %v5823 = vmax.f32 %v5821, %v5819
    %v5824 = vmax.f32 %v5823, %v5822
    %v5825 = vrot.slane %v5824, 4
    %v5826 = vmax.f32 %v5824, %v5825
    %v5827 = vrot.slane %v5826, 2
    %v5828 = vmax.f32 %v5826, %v5827
    %v5829 = vrot.slane %v5828, 1
    %v5830 = vmax.f32 %v5828, %v5829
    %v5831 = vmax.f32 %v5812, %v5816
    %v5832 = vmax.f32 %v5814, %v5818
    %v5833 = vmax.f32 %v5831, %v5820
    %v5834 = vmax.f32 %v5833, %v5832
    %v5835 = vrot.slane %v5834, 4
    %v5836 = vmax.f32 %v5834, %v5835
    %v5837 = vrot.slane %v5836, 2
    %v5838 = vmax.f32 %v5836, %v5837
    %v5839 = vrot.slane %v5838, 1
    %v5840 = vmax.f32 %v5838, %v5839
    %v5841 = vsel %vm4011, %v5800, %v5830
    %v5842 = vsel %vm4011, %v5810, %v5840
    %v5843 = vpack.c.bf16 %v5841, %v5841
    %v5844 = vpack.c.bf16 %v5842, %v5842
    %s5845 = scalar_lea.vmem %s4, 896
    %v5846 = vld [vmem:[%s5845] sm:$0xf]
    %v5847 = vld [vmem:[%s5845 + $0x4] sm:$0xf]
    %v5848 = vld [vmem:[%s5845 + $0x8] sm:$0xf]
    %v5849 = vld [vmem:[%s5845 + $0xc] sm:$0xf]
    %v5850 = vld [vmem:[%s5845 + $0x10] sm:$0xf]
    %v5851 = vld [vmem:[%s5845 + $0x14] sm:$0xf]
    %v5852 = vld [vmem:[%s5845 + $0x18] sm:$0xf]
    %v5853 = vld [vmem:[%s5845 + $0x1c] sm:$0xf]
    %v5854 = vld [vmem:[%s5845 + $0x20] sm:$0xf]
    %v5855 = vld [vmem:[%s5845 + $0x24] sm:$0xf]
    %v5856 = vld [vmem:[%s5845 + $0x28] sm:$0xf]
    %v5857 = vld [vmem:[%s5845 + $0x2c] sm:$0xf]
    %v5858 = vld [vmem:[%s5845 + $0x30] sm:$0xf]
    %v5859 = vld [vmem:[%s5845 + $0x34] sm:$0xf]
    %v5860 = vld [vmem:[%s5845 + $0x38] sm:$0xf]
    %v5861 = vld [vmem:[%s5845 + $0x3c] sm:$0xf]
    %v5862 = vld [vmem:[%s5845 + $0x40] sm:$0xf]
    %v5863 = vld [vmem:[%s5845 + $0x44] sm:$0xf]
    %v5864 = vld [vmem:[%s5845 + $0x48] sm:$0xf]
    %v5865 = vld [vmem:[%s5845 + $0x4c] sm:$0xf]
    %v5866 = vld [vmem:[%s5845 + $0x50] sm:$0xf]
    %v5867 = vld [vmem:[%s5845 + $0x54] sm:$0xf]
    %v5868 = vld [vmem:[%s5845 + $0x58] sm:$0xf]
    %v5869 = vld [vmem:[%s5845 + $0x5c] sm:$0xf]
    %v5870 = vld [vmem:[%s5845 + $0x60] sm:$0xf]
    %v5871 = vld [vmem:[%s5845 + $0x64] sm:$0xf]
    %v5872 = vld [vmem:[%s5845 + $0x68] sm:$0xf]
    %v5873 = vld [vmem:[%s5845 + $0x6c] sm:$0xf]
    %v5874 = vld [vmem:[%s5845 + $0x70] sm:$0xf]
    %v5875 = vld [vmem:[%s5845 + $0x74] sm:$0xf]
    %v5876 = vld [vmem:[%s5845 + $0x78] sm:$0xf]
    %v5877 = vld [vmem:[%s5845 + $0x7c] sm:$0xf]
    %v5910 = vunpack.c.l.b16 %v5846
    %v5911 = vunpack.c.l.b16 %v5847
    %v5912 = vunpack.c.l.b16 %v5848
    %v5913 = vunpack.c.l.b16 %v5849
    %v5914 = vunpack.c.l.b16 %v5850
    %v5915 = vunpack.c.l.b16 %v5851
    %v5916 = vunpack.c.l.b16 %v5852
    %v5917 = vunpack.c.l.b16 %v5853
    %v5918 = vunpack.c.l.b16 %v5854
    %v5919 = vunpack.c.l.b16 %v5855
    %v5920 = vunpack.c.l.b16 %v5856
    %v5921 = vunpack.c.l.b16 %v5857
    %v5922 = vunpack.c.l.b16 %v5858
    %v5923 = vunpack.c.l.b16 %v5859
    %v5924 = vunpack.c.l.b16 %v5860
    %v5925 = vunpack.c.l.b16 %v5861
    %v5926 = vunpack.c.l.b16 %v5862
    %v5927 = vunpack.c.l.b16 %v5863
    %v5928 = vunpack.c.l.b16 %v5864
    %v5929 = vunpack.c.l.b16 %v5865
    %v5930 = vunpack.c.l.b16 %v5866
    %v5931 = vunpack.c.l.b16 %v5867
    %v5932 = vunpack.c.l.b16 %v5868
    %v5933 = vunpack.c.l.b16 %v5869
    %v5934 = vunpack.c.l.b16 %v5870
    %v5935 = vunpack.c.l.b16 %v5871
    %v5936 = vunpack.c.l.b16 %v5872
    %v5937 = vunpack.c.l.b16 %v5873
    %v5938 = vunpack.c.l.b16 %v5874
    %v5939 = vunpack.c.l.b16 %v5875
    %v5940 = vunpack.c.l.b16 %v5876
    %v5941 = vunpack.c.l.b16 %v5877
    %v5942 = vpack.c.b16 %v5911, %v5910
    %v5943 = vpack.c.b16 %v5913, %v5912
    %v5944 = vpack.c.b16 %v5915, %v5914
    %v5945 = vpack.c.b16 %v5917, %v5916
    %v5946 = vpack.c.b16 %v5919, %v5918
    %v5947 = vpack.c.b16 %v5921, %v5920
    %v5948 = vpack.c.b16 %v5923, %v5922
    %v5949 = vpack.c.b16 %v5925, %v5924
    %v5950 = vpack.c.b16 %v5927, %v5926
    %v5951 = vpack.c.b16 %v5929, %v5928
    %v5952 = vpack.c.b16 %v5931, %v5930
    %v5953 = vpack.c.b16 %v5933, %v5932
    %v5954 = vpack.c.b16 %v5935, %v5934
    %v5955 = vpack.c.b16 %v5937, %v5936
    %v5956 = vpack.c.b16 %v5939, %v5938
    %v5957 = vpack.c.b16 %v5941, %v5940
    %5974 = vmatprep.subr.bf16.mxu0 0
    %5975 = vmatpush1.bf16.msra.mxu0 %v5942
    %5976 = vmatprep.subr.bf16.mxu0 0
    %5977 = vmatpush1.bf16.msra.mxu0 %v5943
    %5978 = vmatprep.subr.bf16.mxu0 0
    %5979 = vmatpush1.bf16.msra.mxu0 %v5944
    %5980 = vmatprep.subr.bf16.mxu0 0
    %5981 = vmatpush1.bf16.msra.mxu0 %v5945
    %5982 = vmatprep.subr.bf16.mxu0 0
    %5983 = vmatpush1.bf16.msra.mxu0 %v5946
    %5984 = vmatprep.subr.bf16.mxu0 0
    %5985 = vmatpush1.bf16.msra.mxu0 %v5947
    %5986 = vmatprep.subr.bf16.mxu0 0
    %5987 = vmatpush1.bf16.msra.mxu0 %v5948
    %5988 = vmatprep.subr.bf16.mxu0 0
    %5989 = vmatpush1.bf16.msra.mxu0 %v5949
    %5990 = vmatprep.subr.bf16.mxu0 0
    %5991 = vmatpush1.bf16.msra.mxu0 %v5950
    %5992 = vmatprep.subr.bf16.mxu0 0
    %5993 = vmatpush1.bf16.msra.mxu0 %v5951
    %5994 = vmatprep.subr.bf16.mxu0 0
    %5995 = vmatpush1.bf16.msra.mxu0 %v5952
    %5996 = vmatprep.subr.bf16.mxu0 0
    %5997 = vmatpush1.bf16.msra.mxu0 %v5953
    %5998 = vmatprep.subr.bf16.mxu0 0
    %5999 = vmatpush1.bf16.msra.mxu0 %v5954
    %6000 = vmatprep.subr.bf16.mxu0 0
    %6001 = vmatpush1.bf16.msra.mxu0 %v5955
    %6002 = vmatprep.subr.bf16.mxu0 0
    %6003 = vmatpush1.bf16.msra.mxu0 %v5956
    %6004 = vmatprep.subr.bf16.mxu0 0
    %6005 = vmatpush1.bf16.msra.mxu0 %v5957
    %6006 = vmatprep.mubr.bf16.mxu0 %v5844
    %6007 = vmatmul.mubr.bf16.gmra.mrb[0].mxu0 %v5843
    %v6008 = vpop.f32.mrb[0].mxu0
    %v6009 = vadd.f32 0.0, %v6008
    %v6010 = vpop.f32.mrb[0].mxu0
    %v6011 = vpop.f32.mrb[0].mxu0
    %v6012 = vpop.f32.mrb[0].mxu0
    %6013 = vdwg.mxu0
    %6014 = vst [vmem:[%s8 + $0xe] sm:$0x3] %v6009
    %v6015 = vld [vmem:[#allocation3 + $0xf0] sm:$0xff]
    %v6016 = vld [vmem:[#allocation3 + $0xf8] sm:$0xff]
    %v6017 = vld [vmem:[#allocation3 + $0x100] sm:$0xff]
    %v6018 = vld [vmem:[#allocation3 + $0x108] sm:$0xff]
    %v6019 = vld [vmem:[#allocation3 + $0x110] sm:$0xff]
    %v6020 = vld [vmem:[#allocation3 + $0x118] sm:$0xff]
    %v6021 = vld [vmem:[#allocation3 + $0x120] sm:$0xff]
    %v6022 = vld [vmem:[#allocation3 + $0x128] sm:$0xff]
    %v6023 = vld [vmem:[#allocation3 + $0x130] sm:$0xff]
    %v6024 = vld [vmem:[#allocation3 + $0x138] sm:$0xff]
    %v6025 = vmax.f32 %v6015, %v6019
    %v6026 = vmax.f32 %v6017, %v6021
    %v6027 = vmax.f32 %v6025, %v6023
    %v6028 = vmax.f32 %v6027, %v6026
    %v6029 = vrot.slane %v6028, 4
    %v6030 = vmax.f32 %v6028, %v6029
    %v6031 = vrot.slane %v6030, 2
    %v6032 = vmax.f32 %v6030, %v6031
    %v6033 = vrot.slane %v6032, 1
    %v6034 = vmax.f32 %v6032, %v6033
    %v6035 = vmax.f32 %v6016, %v6020
    %v6036 = vmax.f32 %v6018, %v6022
    %v6037 = vmax.f32 %v6035, %v6024
    %v6038 = vmax.f32 %v6037, %v6036
    %v6039 = vrot.slane %v6038, 4
    %v6040 = vmax.f32 %v6038, %v6039
    %v6041 = vrot.slane %v6040, 2
    %v6042 = vmax.f32 %v6040, %v6041
    %v6043 = vrot.slane %v6042, 1
    %v6044 = vmax.f32 %v6042, %v6043
    %v6045 = vld [vmem:[#allocation3 + $0x3c0] sm:$0xff]
    %v6046 = vld [vmem:[#allocation3 + $0x3c8] sm:$0xff]
    %v6047 = vld [vmem:[#allocation3 + $0x3d0] sm:$0xff]
    %v6048 = vld [vmem:[#allocation3 + $0x3d8] sm:$0xff]
    %v6049 = vld [vmem:[#allocation3 + $0x3e0] sm:$0xff]
    %v6050 = vld [vmem:[#allocation3 + $0x3e8] sm:$0xff]
    %v6051 = vld [vmem:[#allocation3 + $0x3f0] sm:$0xff]
    %v6052 = vld [vmem:[#allocation3 + $0x3f8] sm:$0xff]
    %v6053 = vld [vmem:[#allocation3 + $0x400] sm:$0xff]
    %v6054 = vld [vmem:[#allocation3 + $0x408] sm:$0xff]
    %v6055 = vmax.f32 %v6045, %v6049
    %v6056 = vmax.f32 %v6047, %v6051
    %v6057 = vmax.f32 %v6055, %v6053
    %v6058 = vmax.f32 %v6057, %v6056
    %v6059 = vrot.slane %v6058, 4
    %v6060 = vmax.f32 %v6058, %v6059
    %v6061 = vrot.slane %v6060, 2
    %v6062 = vmax.f32 %v6060, %v6061
    %v6063 = vrot.slane %v6062, 1
    %v6064 = vmax.f32 %v6062, %v6063
    %v6065 = vmax.f32 %v6046, %v6050
    %v6066 = vmax.f32 %v6048, %v6052
    %v6067 = vmax.f32 %v6065, %v6054
    %v6068 = vmax.f32 %v6067, %v6066
    %v6069 = vrot.slane %v6068, 4
    %v6070 = vmax.f32 %v6068, %v6069
    %v6071 = vrot.slane %v6070, 2
    %v6072 = vmax.f32 %v6070, %v6071
    %v6073 = vrot.slane %v6072, 1
    %v6074 = vmax.f32 %v6072, %v6073
    %v6075 = vsel %vm4011, %v6034, %v6064
    %v6076 = vsel %vm4011, %v6044, %v6074
    %v6077 = vpack.c.bf16 %v6075, %v6075
    %v6078 = vpack.c.bf16 %v6076, %v6076
    %s6079 = scalar_lea.vmem %s4, 1024
    %v6080 = vld [vmem:[%s6079] sm:$0xf]
    %v6081 = vld [vmem:[%s6079 + $0x4] sm:$0xf]
    %v6082 = vld [vmem:[%s6079 + $0x8] sm:$0xf]
    %v6083 = vld [vmem:[%s6079 + $0xc] sm:$0xf]
    %v6084 = vld [vmem:[%s6079 + $0x10] sm:$0xf]
    %v6085 = vld [vmem:[%s6079 + $0x14] sm:$0xf]
    %v6086 = vld [vmem:[%s6079 + $0x18] sm:$0xf]
    %v6087 = vld [vmem:[%s6079 + $0x1c] sm:$0xf]
    %v6088 = vld [vmem:[%s6079 + $0x20] sm:$0xf]
    %v6089 = vld [vmem:[%s6079 + $0x24] sm:$0xf]
    %v6090 = vld [vmem:[%s6079 + $0x28] sm:$0xf]
    %v6091 = vld [vmem:[%s6079 + $0x2c] sm:$0xf]
    %v6092 = vld [vmem:[%s6079 + $0x30] sm:$0xf]
    %v6093 = vld [vmem:[%s6079 + $0x34] sm:$0xf]
    %v6094 = vld [vmem:[%s6079 + $0x38] sm:$0xf]
    %v6095 = vld [vmem:[%s6079 + $0x3c] sm:$0xf]
    %v6096 = vld [vmem:[%s6079 + $0x40] sm:$0xf]
    %v6097 = vld [vmem:[%s6079 + $0x44] sm:$0xf]
    %v6098 = vld [vmem:[%s6079 + $0x48] sm:$0xf]
    %v6099 = vld [vmem:[%s6079 + $0x4c] sm:$0xf]
    %v6100 = vld [vmem:[%s6079 + $0x50] sm:$0xf]
    %v6101 = vld [vmem:[%s6079 + $0x54] sm:$0xf]
    %v6102 = vld [vmem:[%s6079 + $0x58] sm:$0xf]
    %v6103 = vld [vmem:[%s6079 + $0x5c] sm:$0xf]
    %v6104 = vld [vmem:[%s6079 + $0x60] sm:$0xf]
    %v6105 = vld [vmem:[%s6079 + $0x64] sm:$0xf]
    %v6106 = vld [vmem:[%s6079 + $0x68] sm:$0xf]
    %v6107 = vld [vmem:[%s6079 + $0x6c] sm:$0xf]
    %v6108 = vld [vmem:[%s6079 + $0x70] sm:$0xf]
    %v6109 = vld [vmem:[%s6079 + $0x74] sm:$0xf]
    %v6110 = vld [vmem:[%s6079 + $0x78] sm:$0xf]
    %v6111 = vld [vmem:[%s6079 + $0x7c] sm:$0xf]
    %v6144 = vunpack.c.l.b16 %v6080
    %v6145 = vunpack.c.l.b16 %v6081
    %v6146 = vunpack.c.l.b16 %v6082
    %v6147 = vunpack.c.l.b16 %v6083
    %v6148 = vunpack.c.l.b16 %v6084
    %v6149 = vunpack.c.l.b16 %v6085
    %v6150 = vunpack.c.l.b16 %v6086
    %v6151 = vunpack.c.l.b16 %v6087
    %v6152 = vunpack.c.l.b16 %v6088
    %v6153 = vunpack.c.l.b16 %v6089
    %v6154 = vunpack.c.l.b16 %v6090
    %v6155 = vunpack.c.l.b16 %v6091
    %v6156 = vunpack.c.l.b16 %v6092
    %v6157 = vunpack.c.l.b16 %v6093
    %v6158 = vunpack.c.l.b16 %v6094
    %v6159 = vunpack.c.l.b16 %v6095
    %v6160 = vunpack.c.l.b16 %v6096
    %v6161 = vunpack.c.l.b16 %v6097
    %v6162 = vunpack.c.l.b16 %v6098
    %v6163 = vunpack.c.l.b16 %v6099
    %v6164 = vunpack.c.l.b16 %v6100
    %v6165 = vunpack.c.l.b16 %v6101
    %v6166 = vunpack.c.l.b16 %v6102
    %v6167 = vunpack.c.l.b16 %v6103
    %v6168 = vunpack.c.l.b16 %v6104
    %v6169 = vunpack.c.l.b16 %v6105
    %v6170 = vunpack.c.l.b16 %v6106
    %v6171 = vunpack.c.l.b16 %v6107
    %v6172 = vunpack.c.l.b16 %v6108
    %v6173 = vunpack.c.l.b16 %v6109
    %v6174 = vunpack.c.l.b16 %v6110
    %v6175 = vunpack.c.l.b16 %v6111
    %v6176 = vpack.c.b16 %v6145, %v6144
    %v6177 = vpack.c.b16 %v6147, %v6146
    %v6178 = vpack.c.b16 %v6149, %v6148
    %v6179 = vpack.c.b16 %v6151, %v6150
    %v6180 = vpack.c.b16 %v6153, %v6152
    %v6181 = vpack.c.b16 %v6155, %v6154
    %v6182 = vpack.c.b16 %v6157, %v6156
    %v6183 = vpack.c.b16 %v6159, %v6158
    %v6184 = vpack.c.b16 %v6161, %v6160
    %v6185 = vpack.c.b16 %v6163, %v6162
    %v6186 = vpack.c.b16 %v6165, %v6164
    %v6187 = vpack.c.b16 %v6167, %v6166
    %v6188 = vpack.c.b16 %v6169, %v6168
    %v6189 = vpack.c.b16 %v6171, %v6170
    %v6190 = vpack.c.b16 %v6173, %v6172
    %v6191 = vpack.c.b16 %v6175, %v6174
    %6208 = vmatprep.subr.bf16.mxu0 0
    %6209 = vmatpush1.bf16.msra.mxu0 %v6176
    %6210 = vmatprep.subr.bf16.mxu0 0
    %6211 = vmatpush1.bf16.msra.mxu0 %v6177
    %6212 = vmatprep.subr.bf16.mxu0 0
    %6213 = vmatpush1.bf16.msra.mxu0 %v6178
    %6214 = vmatprep.subr.bf16.mxu0 0
    %6215 = vmatpush1.bf16.msra.mxu0 %v6179
    %6216 = vmatprep.subr.bf16.mxu0 0
    %6217 = vmatpush1.bf16.msra.mxu0 %v6180
    %6218 = vmatprep.subr.bf16.mxu0 0
    %6219 = vmatpush1.bf16.msra.mxu0 %v6181
    %6220 = vmatprep.subr.bf16.mxu0 0
    %6221 = vmatpush1.bf16.msra.mxu0 %v6182
    %6222 = vmatprep.subr.bf16.mxu0 0
    %6223 = vmatpush1.bf16.msra.mxu0 %v6183
    %6224 = vmatprep.subr.bf16.mxu0 0
    %6225 = vmatpush1.bf16.msra.mxu0 %v6184
    %6226 = vmatprep.subr.bf16.mxu0 0
    %6227 = vmatpush1.bf16.msra.mxu0 %v6185
    %6228 = vmatprep.subr.bf16.mxu0 0
    %6229 = vmatpush1.bf16.msra.mxu0 %v6186
    %6230 = vmatprep.subr.bf16.mxu0 0
    %6231 = vmatpush1.bf16.msra.mxu0 %v6187
    %6232 = vmatprep.subr.bf16.mxu0 0
    %6233 = vmatpush1.bf16.msra.mxu0 %v6188
    %6234 = vmatprep.subr.bf16.mxu0 0
    %6235 = vmatpush1.bf16.msra.mxu0 %v6189
    %6236 = vmatprep.subr.bf16.mxu0 0
    %6237 = vmatpush1.bf16.msra.mxu0 %v6190
    %6238 = vmatprep.subr.bf16.mxu0 0
    %6239 = vmatpush1.bf16.msra.mxu0 %v6191
    %6240 = vmatprep.mubr.bf16.mxu0 %v6078
    %6241 = vmatmul.mubr.bf16.gmra.mrb[0].mxu0 %v6077
    %v6242 = vpop.f32.mrb[0].mxu0
    %v6243 = vadd.f32 0.0, %v6242
    %v6244 = vpop.f32.mrb[0].mxu0
    %v6245 = vpop.f32.mrb[0].mxu0
    %v6246 = vpop.f32.mrb[0].mxu0
    %6247 = vdwg.mxu0
    %6248 = vst [vmem:[%s8 + $0x10] sm:$0x3] %v6243
    %v6249 = vld [vmem:[#allocation3 + $0x140] sm:$0xff]
    %v6250 = vld [vmem:[#allocation3 + $0x148] sm:$0xff]
    %v6251 = vld [vmem:[#allocation3 + $0x150] sm:$0xff]
    %v6252 = vld [vmem:[#allocation3 + $0x158] sm:$0xff]
    %v6253 = vld [vmem:[#allocation3 + $0x160] sm:$0xff]
    %v6254 = vld [vmem:[#allocation3 + $0x168] sm:$0xff]
    %v6255 = vld [vmem:[#allocation3 + $0x170] sm:$0xff]
    %v6256 = vld [vmem:[#allocation3 + $0x178] sm:$0xff]
    %v6257 = vld [vmem:[#allocation3 + $0x180] sm:$0xff]
    %v6258 = vld [vmem:[#allocation3 + $0x188] sm:$0xff]
    %v6259 = vmax.f32 %v6249, %v6253
    %v6260 = vmax.f32 %v6251, %v6255
    %v6261 = vmax.f32 %v6259, %v6257
    %v6262 = vmax.f32 %v6261, %v6260
    %v6263 = vrot.slane %v6262, 4
    %v6264 = vmax.f32 %v6262, %v6263
    %v6265 = vrot.slane %v6264, 2
    %v6266 = vmax.f32 %v6264, %v6265
    %v6267 = vrot.slane %v6266, 1
    %v6268 = vmax.f32 %v6266, %v6267
    %v6269 = vmax.f32 %v6250, %v6254
    %v6270 = vmax.f32 %v6252, %v6256
    %v6271 = vmax.f32 %v6269, %v6258
    %v6272 = vmax.f32 %v6271, %v6270
    %v6273 = vrot.slane %v6272, 4
    %v6274 = vmax.f32 %v6272, %v6273
    %v6275 = vrot.slane %v6274, 2
    %v6276 = vmax.f32 %v6274, %v6275
    %v6277 = vrot.slane %v6276, 1
    %v6278 = vmax.f32 %v6276, %v6277
    %v6279 = vld [vmem:[#allocation3 + $0x410] sm:$0xff]
    %v6280 = vld [vmem:[#allocation3 + $0x418] sm:$0xff]
    %v6281 = vld [vmem:[#allocation3 + $0x420] sm:$0xff]
    %v6282 = vld [vmem:[#allocation3 + $0x428] sm:$0xff]
    %v6283 = vld [vmem:[#allocation3 + $0x430] sm:$0xff]
    %v6284 = vld [vmem:[#allocation3 + $0x438] sm:$0xff]
    %v6285 = vld [vmem:[#allocation3 + $0x440] sm:$0xff]
    %v6286 = vld [vmem:[#allocation3 + $0x448] sm:$0xff]
    %v6287 = vld [vmem:[#allocation3 + $0x450] sm:$0xff]
    %v6288 = vld [vmem:[#allocation3 + $0x458] sm:$0xff]
    %v6289 = vmax.f32 %v6279, %v6283
    %v6290 = vmax.f32 %v6281, %v6285
    %v6291 = vmax.f32 %v6289, %v6287
    %v6292 = vmax.f32 %v6291, %v6290
    %v6293 = vrot.slane %v6292, 4
    %v6294 = vmax.f32 %v6292, %v6293
    %v6295 = vrot.slane %v6294, 2
    %v6296 = vmax.f32 %v6294, %v6295
    %v6297 = vrot.slane %v6296, 1
    %v6298 = vmax.f32 %v6296, %v6297
    %v6299 = vmax.f32 %v6280, %v6284
    %v6300 = vmax.f32 %v6282, %v6286
    %v6301 = vmax.f32 %v6299, %v6288
    %v6302 = vmax.f32 %v6301, %v6300
    %v6303 = vrot.slane %v6302, 4
    %v6304 = vmax.f32 %v6302, %v6303
    %v6305 = vrot.slane %v6304, 2
    %v6306 = vmax.f32 %v6304, %v6305
    %v6307 = vrot.slane %v6306, 1
    %v6308 = vmax.f32 %v6306, %v6307
    %v6309 = vsel %vm4011, %v6268, %v6298
    %v6310 = vsel %vm4011, %v6278, %v6308
    %v6311 = vpack.c.bf16 %v6309, %v6309
    %v6312 = vpack.c.bf16 %v6310, %v6310
    %s6313 = scalar_lea.vmem %s4, 1152
    %v6314 = vld [vmem:[%s6313] sm:$0xf]
    %v6315 = vld [vmem:[%s6313 + $0x4] sm:$0xf]
    %v6316 = vld [vmem:[%s6313 + $0x8] sm:$0xf]
    %v6317 = vld [vmem:[%s6313 + $0xc] sm:$0xf]
    %v6318 = vld [vmem:[%s6313 + $0x10] sm:$0xf]
    %v6319 = vld [vmem:[%s6313 + $0x14] sm:$0xf]
    %v6320 = vld [vmem:[%s6313 + $0x18] sm:$0xf]
    %v6321 = vld [vmem:[%s6313 + $0x1c] sm:$0xf]
    %v6322 = vld [vmem:[%s6313 + $0x20] sm:$0xf]
    %v6323 = vld [vmem:[%s6313 + $0x24] sm:$0xf]
    %v6324 = vld [vmem:[%s6313 + $0x28] sm:$0xf]
    %v6325 = vld [vmem:[%s6313 + $0x2c] sm:$0xf]
    %v6326 = vld [vmem:[%s6313 + $0x30] sm:$0xf]
    %v6327 = vld [vmem:[%s6313 + $0x34] sm:$0xf]
    %v6328 = vld [vmem:[%s6313 + $0x38] sm:$0xf]
    %v6329 = vld [vmem:[%s6313 + $0x3c] sm:$0xf]
    %v6330 = vld [vmem:[%s6313 + $0x40] sm:$0xf]
    %v6331 = vld [vmem:[%s6313 + $0x44] sm:$0xf]
    %v6332 = vld [vmem:[%s6313 + $0x48] sm:$0xf]
    %v6333 = vld [vmem:[%s6313 + $0x4c] sm:$0xf]
    %v6334 = vld [vmem:[%s6313 + $0x50] sm:$0xf]
    %v6335 = vld [vmem:[%s6313 + $0x54] sm:$0xf]
    %v6336 = vld [vmem:[%s6313 + $0x58] sm:$0xf]
    %v6337 = vld [vmem:[%s6313 + $0x5c] sm:$0xf]
    %v6338 = vld [vmem:[%s6313 + $0x60] sm:$0xf]
    %v6339 = vld [vmem:[%s6313 + $0x64] sm:$0xf]
    %v6340 = vld [vmem:[%s6313 + $0x68] sm:$0xf]
    %v6341 = vld [vmem:[%s6313 + $0x6c] sm:$0xf]
    %v6342 = vld [vmem:[%s6313 + $0x70] sm:$0xf]
    %v6343 = vld [vmem:[%s6313 + $0x74] sm:$0xf]
    %v6344 = vld [vmem:[%s6313 + $0x78] sm:$0xf]
    %v6345 = vld [vmem:[%s6313 + $0x7c] sm:$0xf]
    %v6378 = vunpack.c.l.b16 %v6314
    %v6379 = vunpack.c.l.b16 %v6315
    %v6380 = vunpack.c.l.b16 %v6316
    %v6381 = vunpack.c.l.b16 %v6317
    %v6382 = vunpack.c.l.b16 %v6318
    %v6383 = vunpack.c.l.b16 %v6319
    %v6384 = vunpack.c.l.b16 %v6320
    %v6385 = vunpack.c.l.b16 %v6321
    %v6386 = vunpack.c.l.b16 %v6322
    %v6387 = vunpack.c.l.b16 %v6323
    %v6388 = vunpack.c.l.b16 %v6324
    %v6389 = vunpack.c.l.b16 %v6325
    %v6390 = vunpack.c.l.b16 %v6326
    %v6391 = vunpack.c.l.b16 %v6327
    %v6392 = vunpack.c.l.b16 %v6328
    %v6393 = vunpack.c.l.b16 %v6329
    %v6394 = vunpack.c.l.b16 %v6330
    %v6395 = vunpack.c.l.b16 %v6331
    %v6396 = vunpack.c.l.b16 %v6332
    %v6397 = vunpack.c.l.b16 %v6333
    %v6398 = vunpack.c.l.b16 %v6334
    %v6399 = vunpack.c.l.b16 %v6335
    %v6400 = vunpack.c.l.b16 %v6336
    %v6401 = vunpack.c.l.b16 %v6337
    %v6402 = vunpack.c.l.b16 %v6338
    %v6403 = vunpack.c.l.b16 %v6339
    %v6404 = vunpack.c.l.b16 %v6340
    %v6405 = vunpack.c.l.b16 %v6341
    %v6406 = vunpack.c.l.b16 %v6342
    %v6407 = vunpack.c.l.b16 %v6343
    %v6408 = vunpack.c.l.b16 %v6344
    %v6409 = vunpack.c.l.b16 %v6345
    %v6410 = vpack.c.b16 %v6379, %v6378
    %v6411 = vpack.c.b16 %v6381, %v6380
    %v6412 = vpack.c.b16 %v6383, %v6382
    %v6413 = vpack.c.b16 %v6385, %v6384
    %v6414 = vpack.c.b16 %v6387, %v6386
    %v6415 = vpack.c.b16 %v6389, %v6388
    %v6416 = vpack.c.b16 %v6391, %v6390
    %v6417 = vpack.c.b16 %v6393, %v6392
    %v6418 = vpack.c.b16 %v6395, %v6394
    %v6419 = vpack.c.b16 %v6397, %v6396
    %v6420 = vpack.c.b16 %v6399, %v6398
    %v6421 = vpack.c.b16 %v6401, %v6400
    %v6422 = vpack.c.b16 %v6403, %v6402
    %v6423 = vpack.c.b16 %v6405, %v6404
    %v6424 = vpack.c.b16 %v6407, %v6406
    %v6425 = vpack.c.b16 %v6409, %v6408
    %6442 = vmatprep.subr.bf16.mxu0 0
    %6443 = vmatpush1.bf16.msra.mxu0 %v6410
    %6444 = vmatprep.subr.bf16.mxu0 0
    %6445 = vmatpush1.bf16.msra.mxu0 %v6411
    %6446 = vmatprep.subr.bf16.mxu0 0
    %6447 = vmatpush1.bf16.msra.mxu0 %v6412
    %6448 = vmatprep.subr.bf16.mxu0 0
    %6449 = vmatpush1.bf16.msra.mxu0 %v6413
    %6450 = vmatprep.subr.bf16.mxu0 0
    %6451 = vmatpush1.bf16.msra.mxu0 %v6414
    %6452 = vmatprep.subr.bf16.mxu0 0
    %6453 = vmatpush1.bf16.msra.mxu0 %v6415
    %6454 = vmatprep.subr.bf16.mxu0 0
    %6455 = vmatpush1.bf16.msra.mxu0 %v6416
    %6456 = vmatprep.subr.bf16.mxu0 0
    %6457 = vmatpush1.bf16.msra.mxu0 %v6417
    %6458 = vmatprep.subr.bf16.mxu0 0
    %6459 = vmatpush1.bf16.msra.mxu0 %v6418
    %6460 = vmatprep.subr.bf16.mxu0 0
    %6461 = vmatpush1.bf16.msra.mxu0 %v6419
    %6462 = vmatprep.subr.bf16.mxu0 0
    %6463 = vmatpush1.bf16.msra.mxu0 %v6420
    %6464 = vmatprep.subr.bf16.mxu0 0
    %6465 = vmatpush1.bf16.msra.mxu0 %v6421
    %6466 = vmatprep.subr.bf16.mxu0 0
    %6467 = vmatpush1.bf16.msra.mxu0 %v6422
    %6468 = vmatprep.subr.bf16.mxu0 0
    %6469 = vmatpush1.bf16.msra.mxu0 %v6423
    %6470 = vmatprep.subr.bf16.mxu0 0
    %6471 = vmatpush1.bf16.msra.mxu0 %v6424
    %6472 = vmatprep.subr.bf16.mxu0 0
    %6473 = vmatpush1.bf16.msra.mxu0 %v6425
    %6474 = vmatprep.mubr.bf16.mxu0 %v6312
    %6475 = vmatmul.mubr.bf16.gmra.mrb[0].mxu0 %v6311
    %v6476 = vpop.f32.mrb[0].mxu0
    %v6477 = vadd.f32 0.0, %v6476
    %v6478 = vpop.f32.mrb[0].mxu0
    %v6479 = vpop.f32.mrb[0].mxu0
    %v6480 = vpop.f32.mrb[0].mxu0
    %6481 = vdwg.mxu0
    %6482 = vst [vmem:[%s8 + $0x12] sm:$0x3] %v6477
    %v6483 = vld [vmem:[#allocation3 + $0x190] sm:$0xff]
    %v6484 = vld [vmem:[#allocation3 + $0x198] sm:$0xff]
    %v6485 = vld [vmem:[#allocation3 + $0x1a0] sm:$0xff]
    %v6486 = vld [vmem:[#allocation3 + $0x1a8] sm:$0xff]
    %v6487 = vld [vmem:[#allocation3 + $0x1b0] sm:$0xff]
    %v6488 = vld [vmem:[#allocation3 + $0x1b8] sm:$0xff]
    %v6489 = vld [vmem:[#allocation3 + $0x1c0] sm:$0xff]
    %v6490 = vld [vmem:[#allocation3 + $0x1c8] sm:$0xff]
    %v6491 = vld [vmem:[#allocation3 + $0x1d0] sm:$0xff]
    %v6492 = vld [vmem:[#allocation3 + $0x1d8] sm:$0xff]
    %v6493 = vmax.f32 %v6483, %v6487
    %v6494 = vmax.f32 %v6485, %v6489
    %v6495 = vmax.f32 %v6493, %v6491
    %v6496 = vmax.f32 %v6495, %v6494
    %v6497 = vrot.slane %v6496, 4
    %v6498 = vmax.f32 %v6496, %v6497
    %v6499 = vrot.slane %v6498, 2
    %v6500 = vmax.f32 %v6498, %v6499
    %v6501 = vrot.slane %v6500, 1
    %v6502 = vmax.f32 %v6500, %v6501
    %v6503 = vmax.f32 %v6484, %v6488
    %v6504 = vmax.f32 %v6486, %v6490
    %v6505 = vmax.f32 %v6503, %v6492
    %v6506 = vmax.f32 %v6505, %v6504
    %v6507 = vrot.slane %v6506, 4
    %v6508 = vmax.f32 %v6506, %v6507
    %v6509 = vrot.slane %v6508, 2
    %v6510 = vmax.f32 %v6508, %v6509
    %v6511 = vrot.slane %v6510, 1
    %v6512 = vmax.f32 %v6510, %v6511
    %v6513 = vld [vmem:[#allocation3 + $0x460] sm:$0xff]
    %v6514 = vld [vmem:[#allocation3 + $0x468] sm:$0xff]
    %v6515 = vld [vmem:[#allocation3 + $0x470] sm:$0xff]
    %v6516 = vld [vmem:[#allocation3 + $0x478] sm:$0xff]
    %v6517 = vld [vmem:[#allocation3 + $0x480] sm:$0xff]
    %v6518 = vld [vmem:[#allocation3 + $0x488] sm:$0xff]
    %v6519 = vld [vmem:[#allocation3 + $0x490] sm:$0xff]
    %v6520 = vld [vmem:[#allocation3 + $0x498] sm:$0xff]
    %v6521 = vld [vmem:[#allocation3 + $0x4a0] sm:$0xff]
    %v6522 = vld [vmem:[#allocation3 + $0x4a8] sm:$0xff]
    %v6523 = vmax.f32 %v6513, %v6517
    %v6524 = vmax.f32 %v6515, %v6519
    %v6525 = vmax.f32 %v6523, %v6521
    %v6526 = vmax.f32 %v6525, %v6524
    %v6527 = vrot.slane %v6526, 4
    %v6528 = vmax.f32 %v6526, %v6527
    %v6529 = vrot.slane %v6528, 2
    %v6530 = vmax.f32 %v6528, %v6529
    %v6531 = vrot.slane %v6530, 1
    %v6532 = vmax.f32 %v6530, %v6531
    %v6533 = vmax.f32 %v6514, %v6518
    %v6534 = vmax.f32 %v6516, %v6520
    %v6535 = vmax.f32 %v6533, %v6522
    %v6536 = vmax.f32 %v6535, %v6534
    %v6537 = vrot.slane %v6536, 4
    %v6538 = vmax.f32 %v6536, %v6537
    %v6539 = vrot.slane %v6538, 2
    %v6540 = vmax.f32 %v6538, %v6539
    %v6541 = vrot.slane %v6540, 1
    %v6542 = vmax.f32 %v6540, %v6541
    %v6543 = vsel %vm4011, %v6502, %v6532
    %v6544 = vsel %vm4011, %v6512, %v6542
    %v6545 = vpack.c.bf16 %v6543, %v6543
    %v6546 = vpack.c.bf16 %v6544, %v6544
    %s6547 = scalar_lea.vmem %s4, 1280
    %v6548 = vld [vmem:[%s6547] sm:$0xf]
    %v6549 = vld [vmem:[%s6547 + $0x4] sm:$0xf]
    %v6550 = vld [vmem:[%s6547 + $0x8] sm:$0xf]
    %v6551 = vld [vmem:[%s6547 + $0xc] sm:$0xf]
    %v6552 = vld [vmem:[%s6547 + $0x10] sm:$0xf]
    %v6553 = vld [vmem:[%s6547 + $0x14] sm:$0xf]
    %v6554 = vld [vmem:[%s6547 + $0x18] sm:$0xf]
    %v6555 = vld [vmem:[%s6547 + $0x1c] sm:$0xf]
    %v6556 = vld [vmem:[%s6547 + $0x20] sm:$0xf]
    %v6557 = vld [vmem:[%s6547 + $0x24] sm:$0xf]
    %v6558 = vld [vmem:[%s6547 + $0x28] sm:$0xf]
    %v6559 = vld [vmem:[%s6547 + $0x2c] sm:$0xf]
    %v6560 = vld [vmem:[%s6547 + $0x30] sm:$0xf]
    %v6561 = vld [vmem:[%s6547 + $0x34] sm:$0xf]
    %v6562 = vld [vmem:[%s6547 + $0x38] sm:$0xf]
    %v6563 = vld [vmem:[%s6547 + $0x3c] sm:$0xf]
    %v6564 = vld [vmem:[%s6547 + $0x40] sm:$0xf]
    %v6565 = vld [vmem:[%s6547 + $0x44] sm:$0xf]
    %v6566 = vld [vmem:[%s6547 + $0x48] sm:$0xf]
    %v6567 = vld [vmem:[%s6547 + $0x4c] sm:$0xf]
    %v6568 = vld [vmem:[%s6547 + $0x50] sm:$0xf]
    %v6569 = vld [vmem:[%s6547 + $0x54] sm:$0xf]
    %v6570 = vld [vmem:[%s6547 + $0x58] sm:$0xf]
    %v6571 = vld [vmem:[%s6547 + $0x5c] sm:$0xf]
    %v6572 = vld [vmem:[%s6547 + $0x60] sm:$0xf]
    %v6573 = vld [vmem:[%s6547 + $0x64] sm:$0xf]
    %v6574 = vld [vmem:[%s6547 + $0x68] sm:$0xf]
    %v6575 = vld [vmem:[%s6547 + $0x6c] sm:$0xf]
    %v6576 = vld [vmem:[%s6547 + $0x70] sm:$0xf]
    %v6577 = vld [vmem:[%s6547 + $0x74] sm:$0xf]
    %v6578 = vld [vmem:[%s6547 + $0x78] sm:$0xf]
    %v6579 = vld [vmem:[%s6547 + $0x7c] sm:$0xf]
    %v6612 = vunpack.c.l.b16 %v6548
    %v6613 = vunpack.c.l.b16 %v6549
    %v6614 = vunpack.c.l.b16 %v6550
    %v6615 = vunpack.c.l.b16 %v6551
    %v6616 = vunpack.c.l.b16 %v6552
    %v6617 = vunpack.c.l.b16 %v6553
    %v6618 = vunpack.c.l.b16 %v6554
    %v6619 = vunpack.c.l.b16 %v6555
    %v6620 = vunpack.c.l.b16 %v6556
    %v6621 = vunpack.c.l.b16 %v6557
    %v6622 = vunpack.c.l.b16 %v6558
    %v6623 = vunpack.c.l.b16 %v6559
    %v6624 = vunpack.c.l.b16 %v6560
    %v6625 = vunpack.c.l.b16 %v6561
    %v6626 = vunpack.c.l.b16 %v6562
    %v6627 = vunpack.c.l.b16 %v6563
    %v6628 = vunpack.c.l.b16 %v6564
    %v6629 = vunpack.c.l.b16 %v6565
    %v6630 = vunpack.c.l.b16 %v6566
    %v6631 = vunpack.c.l.b16 %v6567
    %v6632 = vunpack.c.l.b16 %v6568
    %v6633 = vunpack.c.l.b16 %v6569
    %v6634 = vunpack.c.l.b16 %v6570
    %v6635 = vunpack.c.l.b16 %v6571
    %v6636 = vunpack.c.l.b16 %v6572
    %v6637 = vunpack.c.l.b16 %v6573
    %v6638 = vunpack.c.l.b16 %v6574
    %v6639 = vunpack.c.l.b16 %v6575
    %v6640 = vunpack.c.l.b16 %v6576
    %v6641 = vunpack.c.l.b16 %v6577
    %v6642 = vunpack.c.l.b16 %v6578
    %v6643 = vunpack.c.l.b16 %v6579
    %v6644 = vpack.c.b16 %v6613, %v6612
    %v6645 = vpack.c.b16 %v6615, %v6614
    %v6646 = vpack.c.b16 %v6617, %v6616
    %v6647 = vpack.c.b16 %v6619, %v6618
    %v6648 = vpack.c.b16 %v6621, %v6620
    %v6649 = vpack.c.b16 %v6623, %v6622
    %v6650 = vpack.c.b16 %v6625, %v6624
    %v6651 = vpack.c.b16 %v6627, %v6626
    %v6652 = vpack.c.b16 %v6629, %v6628
    %v6653 = vpack.c.b16 %v6631, %v6630
    %v6654 = vpack.c.b16 %v6633, %v6632
    %v6655 = vpack.c.b16 %v6635, %v6634
    %v6656 = vpack.c.b16 %v6637, %v6636
    %v6657 = vpack.c.b16 %v6639, %v6638
    %v6658 = vpack.c.b16 %v6641, %v6640
    %v6659 = vpack.c.b16 %v6643, %v6642
    %6676 = vmatprep.subr.bf16.mxu0 0
    %6677 = vmatpush1.bf16.msra.mxu0 %v6644
    %6678 = vmatprep.subr.bf16.mxu0 0
    %6679 = vmatpush1.bf16.msra.mxu0 %v6645
    %6680 = vmatprep.subr.bf16.mxu0 0
    %6681 = vmatpush1.bf16.msra.mxu0 %v6646
    %6682 = vmatprep.subr.bf16.mxu0 0
    %6683 = vmatpush1.bf16.msra.mxu0 %v6647
    %6684 = vmatprep.subr.bf16.mxu0 0
    %6685 = vmatpush1.bf16.msra.mxu0 %v6648
    %6686 = vmatprep.subr.bf16.mxu0 0
    %6687 = vmatpush1.bf16.msra.mxu0 %v6649
    %6688 = vmatprep.subr.bf16.mxu0 0
    %6689 = vmatpush1.bf16.msra.mxu0 %v6650
    %6690 = vmatprep.subr.bf16.mxu0 0
    %6691 = vmatpush1.bf16.msra.mxu0 %v6651
    %6692 = vmatprep.subr.bf16.mxu0 0
    %6693 = vmatpush1.bf16.msra.mxu0 %v6652
    %6694 = vmatprep.subr.bf16.mxu0 0
    %6695 = vmatpush1.bf16.msra.mxu0 %v6653
    %6696 = vmatprep.subr.bf16.mxu0 0
    %6697 = vmatpush1.bf16.msra.mxu0 %v6654
    %6698 = vmatprep.subr.bf16.mxu0 0
    %6699 = vmatpush1.bf16.msra.mxu0 %v6655
    %6700 = vmatprep.subr.bf16.mxu0 0
    %6701 = vmatpush1.bf16.msra.mxu0 %v6656
    %6702 = vmatprep.subr.bf16.mxu0 0
    %6703 = vmatpush1.bf16.msra.mxu0 %v6657
    %6704 = vmatprep.subr.bf16.mxu0 0
    %6705 = vmatpush1.bf16.msra.mxu0 %v6658
    %6706 = vmatprep.subr.bf16.mxu0 0
    %6707 = vmatpush1.bf16.msra.mxu0 %v6659
    %6708 = vmatprep.mubr.bf16.mxu0 %v6546
    %6709 = vmatmul.mubr.bf16.gmra.mrb[0].mxu0 %v6545
    %v6710 = vpop.f32.mrb[0].mxu0
    %v6711 = vadd.f32 0.0, %v6710
    %v6712 = vpop.f32.mrb[0].mxu0
    %v6713 = vpop.f32.mrb[0].mxu0
    %v6714 = vpop.f32.mrb[0].mxu0
    %6715 = vdwg.mxu0
    %6716 = vst [vmem:[%s8 + $0x14] sm:$0x3] %v6711
    %v6717 = vld [vmem:[#allocation3 + $0x1e0] sm:$0xff]
    %v6718 = vld [vmem:[#allocation3 + $0x1e8] sm:$0xff]
    %v6719 = vld [vmem:[#allocation3 + $0x1f0] sm:$0xff]
    %v6720 = vld [vmem:[#allocation3 + $0x1f8] sm:$0xff]
    %v6721 = vld [vmem:[#allocation3 + $0x200] sm:$0xff]
    %v6722 = vld [vmem:[#allocation3 + $0x208] sm:$0xff]
    %v6723 = vld [vmem:[#allocation3 + $0x210] sm:$0xff]
    %v6724 = vld [vmem:[#allocation3 + $0x218] sm:$0xff]
    %v6725 = vld [vmem:[#allocation3 + $0x220] sm:$0xff]
    %v6726 = vld [vmem:[#allocation3 + $0x228] sm:$0xff]
    %v6727 = vmax.f32 %v6717, %v6721
    %v6728 = vmax.f32 %v6719, %v6723
    %v6729 = vmax.f32 %v6727, %v6725
    %v6730 = vmax.f32 %v6729, %v6728
    %v6731 = vrot.slane %v6730, 4
    %v6732 = vmax.f32 %v6730, %v6731
    %v6733 = vrot.slane %v6732, 2
    %v6734 = vmax.f32 %v6732, %v6733
    %v6735 = vrot.slane %v6734, 1
    %v6736 = vmax.f32 %v6734, %v6735
    %v6737 = vmax.f32 %v6718, %v6722
    %v6738 = vmax.f32 %v6720, %v6724
    %v6739 = vmax.f32 %v6737, %v6726
    %v6740 = vmax.f32 %v6739, %v6738
    %v6741 = vrot.slane %v6740, 4
    %v6742 = vmax.f32 %v6740, %v6741
    %v6743 = vrot.slane %v6742, 2
    %v6744 = vmax.f32 %v6742, %v6743
    %v6745 = vrot.slane %v6744, 1
    %v6746 = vmax.f32 %v6744, %v6745
    %v6747 = vld [vmem:[#allocation3 + $0x4b0] sm:$0xff]
    %v6748 = vld [vmem:[#allocation3 + $0x4b8] sm:$0xff]
    %v6749 = vld [vmem:[#allocation3 + $0x4c0] sm:$0xff]
    %v6750 = vld [vmem:[#allocation3 + $0x4c8] sm:$0xff]
    %v6751 = vld [vmem:[#allocation3 + $0x4d0] sm:$0xff]
    %v6752 = vld [vmem:[#allocation3 + $0x4d8] sm:$0xff]
    %v6753 = vld [vmem:[#allocation3 + $0x4e0] sm:$0xff]
    %v6754 = vld [vmem:[#allocation3 + $0x4e8] sm:$0xff]
    %v6755 = vld [vmem:[#allocation3 + $0x4f0] sm:$0xff]
    %v6756 = vld [vmem:[#allocation3 + $0x4f8] sm:$0xff]
    %v6757 = vmax.f32 %v6747, %v6751
    %v6758 = vmax.f32 %v6749, %v6753
    %v6759 = vmax.f32 %v6757, %v6755
    %v6760 = vmax.f32 %v6759, %v6758
    %v6761 = vrot.slane %v6760, 4
    %v6762 = vmax.f32 %v6760, %v6761
    %v6763 = vrot.slane %v6762, 2
    %v6764 = vmax.f32 %v6762, %v6763
    %v6765 = vrot.slane %v6764, 1
    %v6766 = vmax.f32 %v6764, %v6765
    %v6767 = vmax.f32 %v6748, %v6752
    %v6768 = vmax.f32 %v6750, %v6754
    %v6769 = vmax.f32 %v6767, %v6756
    %v6770 = vmax.f32 %v6769, %v6768
    %v6771 = vrot.slane %v6770, 4
    %v6772 = vmax.f32 %v6770, %v6771
    %v6773 = vrot.slane %v6772, 2
    %v6774 = vmax.f32 %v6772, %v6773
    %v6775 = vrot.slane %v6774, 1
    %v6776 = vmax.f32 %v6774, %v6775
    %v6777 = vsel %vm4011, %v6736, %v6766
    %v6778 = vsel %vm4011, %v6746, %v6776
    %v6779 = vpack.c.bf16 %v6777, %v6777
    %v6780 = vpack.c.bf16 %v6778, %v6778
    %s6781 = scalar_lea.vmem %s4, 1408
    %v6782 = vld [vmem:[%s6781] sm:$0xf]
    %v6783 = vld [vmem:[%s6781 + $0x4] sm:$0xf]
    %v6784 = vld [vmem:[%s6781 + $0x8] sm:$0xf]
    %v6785 = vld [vmem:[%s6781 + $0xc] sm:$0xf]
    %v6786 = vld [vmem:[%s6781 + $0x10] sm:$0xf]
    %v6787 = vld [vmem:[%s6781 + $0x14] sm:$0xf]
    %v6788 = vld [vmem:[%s6781 + $0x18] sm:$0xf]
    %v6789 = vld [vmem:[%s6781 + $0x1c] sm:$0xf]
    %v6790 = vld [vmem:[%s6781 + $0x20] sm:$0xf]
    %v6791 = vld [vmem:[%s6781 + $0x24] sm:$0xf]
    %v6792 = vld [vmem:[%s6781 + $0x28] sm:$0xf]
    %v6793 = vld [vmem:[%s6781 + $0x2c] sm:$0xf]
    %v6794 = vld [vmem:[%s6781 + $0x30] sm:$0xf]
    %v6795 = vld [vmem:[%s6781 + $0x34] sm:$0xf]
    %v6796 = vld [vmem:[%s6781 + $0x38] sm:$0xf]
    %v6797 = vld [vmem:[%s6781 + $0x3c] sm:$0xf]
    %v6798 = vld [vmem:[%s6781 + $0x40] sm:$0xf]
    %v6799 = vld [vmem:[%s6781 + $0x44] sm:$0xf]
    %v6800 = vld [vmem:[%s6781 + $0x48] sm:$0xf]
    %v6801 = vld [vmem:[%s6781 + $0x4c] sm:$0xf]
    %v6802 = vld [vmem:[%s6781 + $0x50] sm:$0xf]
    %v6803 = vld [vmem:[%s6781 + $0x54] sm:$0xf]
    %v6804 = vld [vmem:[%s6781 + $0x58] sm:$0xf]
    %v6805 = vld [vmem:[%s6781 + $0x5c] sm:$0xf]
    %v6806 = vld [vmem:[%s6781 + $0x60] sm:$0xf]
    %v6807 = vld [vmem:[%s6781 + $0x64] sm:$0xf]
    %v6808 = vld [vmem:[%s6781 + $0x68] sm:$0xf]
    %v6809 = vld [vmem:[%s6781 + $0x6c] sm:$0xf]
    %v6810 = vld [vmem:[%s6781 + $0x70] sm:$0xf]
    %v6811 = vld [vmem:[%s6781 + $0x74] sm:$0xf]
    %v6812 = vld [vmem:[%s6781 + $0x78] sm:$0xf]
    %v6813 = vld [vmem:[%s6781 + $0x7c] sm:$0xf]
    %v6846 = vunpack.c.l.b16 %v6782
    %v6847 = vunpack.c.l.b16 %v6783
    %v6848 = vunpack.c.l.b16 %v6784
    %v6849 = vunpack.c.l.b16 %v6785
    %v6850 = vunpack.c.l.b16 %v6786
    %v6851 = vunpack.c.l.b16 %v6787
    %v6852 = vunpack.c.l.b16 %v6788
    %v6853 = vunpack.c.l.b16 %v6789
    %v6854 = vunpack.c.l.b16 %v6790
    %v6855 = vunpack.c.l.b16 %v6791
    %v6856 = vunpack.c.l.b16 %v6792
    %v6857 = vunpack.c.l.b16 %v6793
    %v6858 = vunpack.c.l.b16 %v6794
    %v6859 = vunpack.c.l.b16 %v6795
    %v6860 = vunpack.c.l.b16 %v6796
    %v6861 = vunpack.c.l.b16 %v6797
    %v6862 = vunpack.c.l.b16 %v6798
    %v6863 = vunpack.c.l.b16 %v6799
    %v6864 = vunpack.c.l.b16 %v6800
    %v6865 = vunpack.c.l.b16 %v6801
    %v6866 = vunpack.c.l.b16 %v6802
    %v6867 = vunpack.c.l.b16 %v6803
    %v6868 = vunpack.c.l.b16 %v6804
    %v6869 = vunpack.c.l.b16 %v6805
    %v6870 = vunpack.c.l.b16 %v6806
    %v6871 = vunpack.c.l.b16 %v6807
    %v6872 = vunpack.c.l.b16 %v6808
    %v6873 = vunpack.c.l.b16 %v6809
    %v6874 = vunpack.c.l.b16 %v6810
    %v6875 = vunpack.c.l.b16 %v6811
    %v6876 = vunpack.c.l.b16 %v6812
    %v6877 = vunpack.c.l.b16 %v6813
    %v6878 = vpack.c.b16 %v6847, %v6846
    %v6879 = vpack.c.b16 %v6849, %v6848
    %v6880 = vpack.c.b16 %v6851, %v6850
    %v6881 = vpack.c.b16 %v6853, %v6852
    %v6882 = vpack.c.b16 %v6855, %v6854
    %v6883 = vpack.c.b16 %v6857, %v6856
    %v6884 = vpack.c.b16 %v6859, %v6858
    %v6885 = vpack.c.b16 %v6861, %v6860
    %v6886 = vpack.c.b16 %v6863, %v6862
    %v6887 = vpack.c.b16 %v6865, %v6864
    %v6888 = vpack.c.b16 %v6867, %v6866
    %v6889 = vpack.c.b16 %v6869, %v6868
    %v6890 = vpack.c.b16 %v6871, %v6870
    %v6891 = vpack.c.b16 %v6873, %v6872
    %v6892 = vpack.c.b16 %v6875, %v6874
    %v6893 = vpack.c.b16 %v6877, %v6876
    %6910 = vmatprep.subr.bf16.mxu0 0
    %6911 = vmatpush1.bf16.msra.mxu0 %v6878
    %6912 = vmatprep.subr.bf16.mxu0 0
    %6913 = vmatpush1.bf16.msra.mxu0 %v6879
    %6914 = vmatprep.subr.bf16.mxu0 0
    %6915 = vmatpush1.bf16.msra.mxu0 %v6880
    %6916 = vmatprep.subr.bf16.mxu0 0
    %6917 = vmatpush1.bf16.msra.mxu0 %v6881
    %6918 = vmatprep.subr.bf16.mxu0 0
    %6919 = vmatpush1.bf16.msra.mxu0 %v6882
    %6920 = vmatprep.subr.bf16.mxu0 0
    %6921 = vmatpush1.bf16.msra.mxu0 %v6883
    %6922 = vmatprep.subr.bf16.mxu0 0
    %6923 = vmatpush1.bf16.msra.mxu0 %v6884
    %6924 = vmatprep.subr.bf16.mxu0 0
    %6925 = vmatpush1.bf16.msra.mxu0 %v6885
    %6926 = vmatprep.subr.bf16.mxu0 0
    %6927 = vmatpush1.bf16.msra.mxu0 %v6886
    %6928 = vmatprep.subr.bf16.mxu0 0
    %6929 = vmatpush1.bf16.msra.mxu0 %v6887
    %6930 = vmatprep.subr.bf16.mxu0 0
    %6931 = vmatpush1.bf16.msra.mxu0 %v6888
    %6932 = vmatprep.subr.bf16.mxu0 0
    %6933 = vmatpush1.bf16.msra.mxu0 %v6889
    %6934 = vmatprep.subr.bf16.mxu0 0
    %6935 = vmatpush1.bf16.msra.mxu0 %v6890
    %6936 = vmatprep.subr.bf16.mxu0 0
    %6937 = vmatpush1.bf16.msra.mxu0 %v6891
    %6938 = vmatprep.subr.bf16.mxu0 0
    %6939 = vmatpush1.bf16.msra.mxu0 %v6892
    %6940 = vmatprep.subr.bf16.mxu0 0
    %6941 = vmatpush1.bf16.msra.mxu0 %v6893
    %6942 = vmatprep.mubr.bf16.mxu0 %v6780
    %6943 = vmatmul.mubr.bf16.gmra.mrb[0].mxu0 %v6779
    %v6944 = vpop.f32.mrb[0].mxu0
    %v6945 = vadd.f32 0.0, %v6944
    %v6946 = vpop.f32.mrb[0].mxu0
    %v6947 = vpop.f32.mrb[0].mxu0
    %v6948 = vpop.f32.mrb[0].mxu0
    %6949 = vdwg.mxu0
    %6950 = vst [vmem:[%s8 + $0x16] sm:$0x3] %v6945
    %v6951 = vld [vmem:[#allocation3 + $0x230] sm:$0xff]
    %v6952 = vld [vmem:[#allocation3 + $0x238] sm:$0xff]
    %v6953 = vld [vmem:[#allocation3 + $0x240] sm:$0xff]
    %v6954 = vld [vmem:[#allocation3 + $0x248] sm:$0xff]
    %v6955 = vld [vmem:[#allocation3 + $0x250] sm:$0xff]
    %v6956 = vld [vmem:[#allocation3 + $0x258] sm:$0xff]
    %v6957 = vld [vmem:[#allocation3 + $0x260] sm:$0xff]
    %v6958 = vld [vmem:[#allocation3 + $0x268] sm:$0xff]
    %v6959 = vld [vmem:[#allocation3 + $0x270] sm:$0xff]
    %v6960 = vld [vmem:[#allocation3 + $0x278] sm:$0xff]
    %v6961 = vmax.f32 %v6951, %v6955
    %v6962 = vmax.f32 %v6953, %v6957
    %v6963 = vmax.f32 %v6961, %v6959
    %v6964 = vmax.f32 %v6963, %v6962
    %v6965 = vrot.slane %v6964, 4
    %v6966 = vmax.f32 %v6964, %v6965
    %v6967 = vrot.slane %v6966, 2
    %v6968 = vmax.f32 %v6966, %v6967
    %v6969 = vrot.slane %v6968, 1
    %v6970 = vmax.f32 %v6968, %v6969
    %v6971 = vmax.f32 %v6952, %v6956
    %v6972 = vmax.f32 %v6954, %v6958
    %v6973 = vmax.f32 %v6971, %v6960
    %v6974 = vmax.f32 %v6973, %v6972
    %v6975 = vrot.slane %v6974, 4
    %v6976 = vmax.f32 %v6974, %v6975
    %v6977 = vrot.slane %v6976, 2
    %v6978 = vmax.f32 %v6976, %v6977
    %v6979 = vrot.slane %v6978, 1
    %v6980 = vmax.f32 %v6978, %v6979
    %v6981 = vld [vmem:[#allocation3 + $0x500] sm:$0xff]
    %v6982 = vld [vmem:[#allocation3 + $0x508] sm:$0xff]
    %v6983 = vld [vmem:[#allocation3 + $0x510] sm:$0xff]
    %v6984 = vld [vmem:[#allocation3 + $0x518] sm:$0xff]
    %v6985 = vld [vmem:[#allocation3 + $0x520] sm:$0xff]
    %v6986 = vld [vmem:[#allocation3 + $0x528] sm:$0xff]
    %v6987 = vld [vmem:[#allocation3 + $0x530] sm:$0xff]
    %v6988 = vld [vmem:[#allocation3 + $0x538] sm:$0xff]
    %v6989 = vld [vmem:[#allocation3 + $0x540] sm:$0xff]
    %v6990 = vld [vmem:[#allocation3 + $0x548] sm:$0xff]
    %v6991 = vmax.f32 %v6981, %v6985
    %v6992 = vmax.f32 %v6983, %v6987
    %v6993 = vmax.f32 %v6991, %v6989
    %v6994 = vmax.f32 %v6993, %v6992
    %v6995 = vrot.slane %v6994, 4
    %v6996 = vmax.f32 %v6994, %v6995
    %v6997 = vrot.slane %v6996, 2
    %v6998 = vmax.f32 %v6996, %v6997
    %v6999 = vrot.slane %v6998, 1
    %v7000 = vmax.f32 %v6998, %v6999
    %v7001 = vmax.f32 %v6982, %v6986
    %v7002 = vmax.f32 %v6984, %v6988
    %v7003 = vmax.f32 %v7001, %v6990
    %v7004 = vmax.f32 %v7003, %v7002
    %v7005 = vrot.slane %v7004, 4
    %v7006 = vmax.f32 %v7004, %v7005
    %v7007 = vrot.slane %v7006, 2
    %v7008 = vmax.f32 %v7006, %v7007
    %v7009 = vrot.slane %v7008, 1
    %v7010 = vmax.f32 %v7008, %v7009
    %v7011 = vsel %vm4011, %v6970, %v7000
    %v7012 = vsel %vm4011, %v6980, %v7010
    %v7013 = vpack.c.bf16 %v7011, %v7011
    %v7014 = vpack.c.bf16 %v7012, %v7012
    %s7015 = scalar_lea.vmem %s4, 1536
    %v7016 = vld [vmem:[%s7015] sm:$0xf]
    %v7017 = vld [vmem:[%s7015 + $0x4] sm:$0xf]
    %v7018 = vld [vmem:[%s7015 + $0x8] sm:$0xf]
    %v7019 = vld [vmem:[%s7015 + $0xc] sm:$0xf]
    %v7020 = vld [vmem:[%s7015 + $0x10] sm:$0xf]
    %v7021 = vld [vmem:[%s7015 + $0x14] sm:$0xf]
    %v7022 = vld [vmem:[%s7015 + $0x18] sm:$0xf]
    %v7023 = vld [vmem:[%s7015 + $0x1c] sm:$0xf]
    %v7024 = vld [vmem:[%s7015 + $0x20] sm:$0xf]
    %v7025 = vld [vmem:[%s7015 + $0x24] sm:$0xf]
    %v7026 = vld [vmem:[%s7015 + $0x28] sm:$0xf]
    %v7027 = vld [vmem:[%s7015 + $0x2c] sm:$0xf]
    %v7028 = vld [vmem:[%s7015 + $0x30] sm:$0xf]
    %v7029 = vld [vmem:[%s7015 + $0x34] sm:$0xf]
    %v7030 = vld [vmem:[%s7015 + $0x38] sm:$0xf]
    %v7031 = vld [vmem:[%s7015 + $0x3c] sm:$0xf]
    %v7032 = vld [vmem:[%s7015 + $0x40] sm:$0xf]
    %v7033 = vld [vmem:[%s7015 + $0x44] sm:$0xf]
    %v7034 = vld [vmem:[%s7015 + $0x48] sm:$0xf]
    %v7035 = vld [vmem:[%s7015 + $0x4c] sm:$0xf]
    %v7036 = vld [vmem:[%s7015 + $0x50] sm:$0xf]
    %v7037 = vld [vmem:[%s7015 + $0x54] sm:$0xf]
    %v7038 = vld [vmem:[%s7015 + $0x58] sm:$0xf]
    %v7039 = vld [vmem:[%s7015 + $0x5c] sm:$0xf]
    %v7040 = vld [vmem:[%s7015 + $0x60] sm:$0xf]
    %v7041 = vld [vmem:[%s7015 + $0x64] sm:$0xf]
    %v7042 = vld [vmem:[%s7015 + $0x68] sm:$0xf]
    %v7043 = vld [vmem:[%s7015 + $0x6c] sm:$0xf]
    %v7044 = vld [vmem:[%s7015 + $0x70] sm:$0xf]
    %v7045 = vld [vmem:[%s7015 + $0x74] sm:$0xf]
    %v7046 = vld [vmem:[%s7015 + $0x78] sm:$0xf]
    %v7047 = vld [vmem:[%s7015 + $0x7c] sm:$0xf]
    %v7080 = vunpack.c.l.b16 %v7016
    %v7081 = vunpack.c.l.b16 %v7017
    %v7082 = vunpack.c.l.b16 %v7018
    %v7083 = vunpack.c.l.b16 %v7019
    %v7084 = vunpack.c.l.b16 %v7020
    %v7085 = vunpack.c.l.b16 %v7021
    %v7086 = vunpack.c.l.b16 %v7022
    %v7087 = vunpack.c.l.b16 %v7023
    %v7088 = vunpack.c.l.b16 %v7024
    %v7089 = vunpack.c.l.b16 %v7025
    %v7090 = vunpack.c.l.b16 %v7026
    %v7091 = vunpack.c.l.b16 %v7027
    %v7092 = vunpack.c.l.b16 %v7028
    %v7093 = vunpack.c.l.b16 %v7029
    %v7094 = vunpack.c.l.b16 %v7030
    %v7095 = vunpack.c.l.b16 %v7031
    %v7096 = vunpack.c.l.b16 %v7032
    %v7097 = vunpack.c.l.b16 %v7033
    %v7098 = vunpack.c.l.b16 %v7034
    %v7099 = vunpack.c.l.b16 %v7035
    %v7100 = vunpack.c.l.b16 %v7036
    %v7101 = vunpack.c.l.b16 %v7037
    %v7102 = vunpack.c.l.b16 %v7038
    %v7103 = vunpack.c.l.b16 %v7039
    %v7104 = vunpack.c.l.b16 %v7040
    %v7105 = vunpack.c.l.b16 %v7041
    %v7106 = vunpack.c.l.b16 %v7042
    %v7107 = vunpack.c.l.b16 %v7043
    %v7108 = vunpack.c.l.b16 %v7044
    %v7109 = vunpack.c.l.b16 %v7045
    %v7110 = vunpack.c.l.b16 %v7046
    %v7111 = vunpack.c.l.b16 %v7047
    %v7112 = vpack.c.b16 %v7081, %v7080
    %v7113 = vpack.c.b16 %v7083, %v7082
    %v7114 = vpack.c.b16 %v7085, %v7084
    %v7115 = vpack.c.b16 %v7087, %v7086
    %v7116 = vpack.c.b16 %v7089, %v7088
    %v7117 = vpack.c.b16 %v7091, %v7090
    %v7118 = vpack.c.b16 %v7093, %v7092
    %v7119 = vpack.c.b16 %v7095, %v7094
    %v7120 = vpack.c.b16 %v7097, %v7096
    %v7121 = vpack.c.b16 %v7099, %v7098
    %v7122 = vpack.c.b16 %v7101, %v7100
    %v7123 = vpack.c.b16 %v7103, %v7102
    %v7124 = vpack.c.b16 %v7105, %v7104
    %v7125 = vpack.c.b16 %v7107, %v7106
    %v7126 = vpack.c.b16 %v7109, %v7108
    %v7127 = vpack.c.b16 %v7111, %v7110
    %7144 = vmatprep.subr.bf16.mxu0 0
    %7145 = vmatpush1.bf16.msra.mxu0 %v7112
    %7146 = vmatprep.subr.bf16.mxu0 0
    %7147 = vmatpush1.bf16.msra.mxu0 %v7113
    %7148 = vmatprep.subr.bf16.mxu0 0
    %7149 = vmatpush1.bf16.msra.mxu0 %v7114
    %7150 = vmatprep.subr.bf16.mxu0 0
    %7151 = vmatpush1.bf16.msra.mxu0 %v7115
    %7152 = vmatprep.subr.bf16.mxu0 0
    %7153 = vmatpush1.bf16.msra.mxu0 %v7116
    %7154 = vmatprep.subr.bf16.mxu0 0
    %7155 = vmatpush1.bf16.msra.mxu0 %v7117
    %7156 = vmatprep.subr.bf16.mxu0 0
    %7157 = vmatpush1.bf16.msra.mxu0 %v7118
    %7158 = vmatprep.subr.bf16.mxu0 0
    %7159 = vmatpush1.bf16.msra.mxu0 %v7119
    %7160 = vmatprep.subr.bf16.mxu0 0
    %7161 = vmatpush1.bf16.msra.mxu0 %v7120
    %7162 = vmatprep.subr.bf16.mxu0 0
    %7163 = vmatpush1.bf16.msra.mxu0 %v7121
    %7164 = vmatprep.subr.bf16.mxu0 0
    %7165 = vmatpush1.bf16.msra.mxu0 %v7122
    %7166 = vmatprep.subr.bf16.mxu0 0
    %7167 = vmatpush1.bf16.msra.mxu0 %v7123
    %7168 = vmatprep.subr.bf16.mxu0 0
    %7169 = vmatpush1.bf16.msra.mxu0 %v7124
    %7170 = vmatprep.subr.bf16.mxu0 0
    %7171 = vmatpush1.bf16.msra.mxu0 %v7125
    %7172 = vmatprep.subr.bf16.mxu0 0
    %7173 = vmatpush1.bf16.msra.mxu0 %v7126
    %7174 = vmatprep.subr.bf16.mxu0 0
    %7175 = vmatpush1.bf16.msra.mxu0 %v7127
    %7176 = vmatprep.mubr.bf16.mxu0 %v7014
    %7177 = vmatmul.mubr.bf16.gmra.mrb[0].mxu0 %v7013
    %v7178 = vpop.f32.mrb[0].mxu0
    %v7179 = vadd.f32 0.0, %v7178
    %v7180 = vpop.f32.mrb[0].mxu0
    %v7181 = vpop.f32.mrb[0].mxu0
    %v7182 = vpop.f32.mrb[0].mxu0
    %7183 = vdwg.mxu0
    %7184 = vst [vmem:[%s8 + $0x18] sm:$0x3] %v7179
    %v7185 = vld [vmem:[#allocation3 + $0x280] sm:$0xff]
    %v7186 = vld [vmem:[#allocation3 + $0x288] sm:$0xff]
    %v7187 = vld [vmem:[#allocation3 + $0x290] sm:$0xff]
    %v7188 = vld [vmem:[#allocation3 + $0x298] sm:$0xff]
    %v7189 = vld [vmem:[#allocation3 + $0x2a0] sm:$0xff]
    %v7190 = vld [vmem:[#allocation3 + $0x2a8] sm:$0xff]
    %v7191 = vld [vmem:[#allocation3 + $0x2b0] sm:$0xff]
    %v7192 = vld [vmem:[#allocation3 + $0x2b8] sm:$0xff]
    %v7193 = vld [vmem:[#allocation3 + $0x2c0] sm:$0xff]
    %v7194 = vld [vmem:[#allocation3 + $0x2c8] sm:$0xff]
    %v7195 = vmax.f32 %v7185, %v7189
    %v7196 = vmax.f32 %v7187, %v7191
    %v7197 = vmax.f32 %v7195, %v7193
    %v7198 = vmax.f32 %v7197, %v7196
    %v7199 = vrot.slane %v7198, 4
    %v7200 = vmax.f32 %v7198, %v7199
    %v7201 = vrot.slane %v7200, 2
    %v7202 = vmax.f32 %v7200, %v7201
    %v7203 = vrot.slane %v7202, 1
    %v7204 = vmax.f32 %v7202, %v7203
    %v7205 = vmax.f32 %v7186, %v7190
    %v7206 = vmax.f32 %v7188, %v7192
    %v7207 = vmax.f32 %v7205, %v7194
    %v7208 = vmax.f32 %v7207, %v7206
    %v7209 = vrot.slane %v7208, 4
    %v7210 = vmax.f32 %v7208, %v7209
    %v7211 = vrot.slane %v7210, 2
    %v7212 = vmax.f32 %v7210, %v7211
    %v7213 = vrot.slane %v7212, 1
    %v7214 = vmax.f32 %v7212, %v7213
    %v7215 = vld [vmem:[#allocation3 + $0x550] sm:$0xff]
    %v7216 = vld [vmem:[#allocation3 + $0x558] sm:$0xff]
    %v7217 = vld [vmem:[#allocation3 + $0x560] sm:$0xff]
    %v7218 = vld [vmem:[#allocation3 + $0x568] sm:$0xff]
    %v7219 = vld [vmem:[#allocation3 + $0x570] sm:$0xff]
    %v7220 = vld [vmem:[#allocation3 + $0x578] sm:$0xff]
    %v7221 = vld [vmem:[#allocation3 + $0x580] sm:$0xff]
    %v7222 = vld [vmem:[#allocation3 + $0x588] sm:$0xff]
    %v7223 = vld [vmem:[#allocation3 + $0x590] sm:$0xff]
    %v7224 = vld [vmem:[#allocation3 + $0x598] sm:$0xff]
    %v7225 = vmax.f32 %v7215, %v7219
    %v7226 = vmax.f32 %v7217, %v7221
    %v7227 = vmax.f32 %v7225, %v7223
    %v7228 = vmax.f32 %v7227, %v7226
    %v7229 = vrot.slane %v7228, 4
    %v7230 = vmax.f32 %v7228, %v7229
    %v7231 = vrot.slane %v7230, 2
    %v7232 = vmax.f32 %v7230, %v7231
    %v7233 = vrot.slane %v7232, 1
    %v7234 = vmax.f32 %v7232, %v7233
    %v7235 = vmax.f32 %v7216, %v7220
    %v7236 = vmax.f32 %v7218, %v7222
    %v7237 = vmax.f32 %v7235, %v7224
    %v7238 = vmax.f32 %v7237, %v7236
    %v7239 = vrot.slane %v7238, 4
    %v7240 = vmax.f32 %v7238, %v7239
    %v7241 = vrot.slane %v7240, 2
    %v7242 = vmax.f32 %v7240, %v7241
    %v7243 = vrot.slane %v7242, 1
    %v7244 = vmax.f32 %v7242, %v7243
    %v7245 = vsel %vm4011, %v7204, %v7234
    %v7246 = vsel %vm4011, %v7214, %v7244
    %v7247 = vpack.c.bf16 %v7245, %v7245
    %v7248 = vpack.c.bf16 %v7246, %v7246
    %s7249 = scalar_lea.vmem %s4, 1664
    %v7250 = vld [vmem:[%s7249] sm:$0xf]
    %v7251 = vld [vmem:[%s7249 + $0x4] sm:$0xf]
    %v7252 = vld [vmem:[%s7249 + $0x8] sm:$0xf]
    %v7253 = vld [vmem:[%s7249 + $0xc] sm:$0xf]
    %v7254 = vld [vmem:[%s7249 + $0x10] sm:$0xf]
    %v7255 = vld [vmem:[%s7249 + $0x14] sm:$0xf]
    %v7256 = vld [vmem:[%s7249 + $0x18] sm:$0xf]
    %v7257 = vld [vmem:[%s7249 + $0x1c] sm:$0xf]
    %v7258 = vld [vmem:[%s7249 + $0x20] sm:$0xf]
    %v7259 = vld [vmem:[%s7249 + $0x24] sm:$0xf]
    %v7260 = vld [vmem:[%s7249 + $0x28] sm:$0xf]
    %v7261 = vld [vmem:[%s7249 + $0x2c] sm:$0xf]
    %v7262 = vld [vmem:[%s7249 + $0x30] sm:$0xf]
    %v7263 = vld [vmem:[%s7249 + $0x34] sm:$0xf]
    %v7264 = vld [vmem:[%s7249 + $0x38] sm:$0xf]
    %v7265 = vld [vmem:[%s7249 + $0x3c] sm:$0xf]
    %v7266 = vld [vmem:[%s7249 + $0x40] sm:$0xf]
    %v7267 = vld [vmem:[%s7249 + $0x44] sm:$0xf]
    %v7268 = vld [vmem:[%s7249 + $0x48] sm:$0xf]
    %v7269 = vld [vmem:[%s7249 + $0x4c] sm:$0xf]
    %v7270 = vld [vmem:[%s7249 + $0x50] sm:$0xf]
    %v7271 = vld [vmem:[%s7249 + $0x54] sm:$0xf]
    %v7272 = vld [vmem:[%s7249 + $0x58] sm:$0xf]
    %v7273 = vld [vmem:[%s7249 + $0x5c] sm:$0xf]
    %v7274 = vld [vmem:[%s7249 + $0x60] sm:$0xf]
    %v7275 = vld [vmem:[%s7249 + $0x64] sm:$0xf]
    %v7276 = vld [vmem:[%s7249 + $0x68] sm:$0xf]
    %v7277 = vld [vmem:[%s7249 + $0x6c] sm:$0xf]
    %v7278 = vld [vmem:[%s7249 + $0x70] sm:$0xf]
    %v7279 = vld [vmem:[%s7249 + $0x74] sm:$0xf]
    %v7280 = vld [vmem:[%s7249 + $0x78] sm:$0xf]
    %v7281 = vld [vmem:[%s7249 + $0x7c] sm:$0xf]
    %v7314 = vunpack.c.l.b16 %v7250
    %v7315 = vunpack.c.l.b16 %v7251
    %v7316 = vunpack.c.l.b16 %v7252
    %v7317 = vunpack.c.l.b16 %v7253
    %v7318 = vunpack.c.l.b16 %v7254
    %v7319 = vunpack.c.l.b16 %v7255
    %v7320 = vunpack.c.l.b16 %v7256
    %v7321 = vunpack.c.l.b16 %v7257
    %v7322 = vunpack.c.l.b16 %v7258
    %v7323 = vunpack.c.l.b16 %v7259
    %v7324 = vunpack.c.l.b16 %v7260
    %v7325 = vunpack.c.l.b16 %v7261
    %v7326 = vunpack.c.l.b16 %v7262
    %v7327 = vunpack.c.l.b16 %v7263
    %v7328 = vunpack.c.l.b16 %v7264
    %v7329 = vunpack.c.l.b16 %v7265
    %v7330 = vunpack.c.l.b16 %v7266
    %v7331 = vunpack.c.l.b16 %v7267
    %v7332 = vunpack.c.l.b16 %v7268
    %v7333 = vunpack.c.l.b16 %v7269
    %v7334 = vunpack.c.l.b16 %v7270
    %v7335 = vunpack.c.l.b16 %v7271
    %v7336 = vunpack.c.l.b16 %v7272
    %v7337 = vunpack.c.l.b16 %v7273
    %v7338 = vunpack.c.l.b16 %v7274
    %v7339 = vunpack.c.l.b16 %v7275
    %v7340 = vunpack.c.l.b16 %v7276
    %v7341 = vunpack.c.l.b16 %v7277
    %v7342 = vunpack.c.l.b16 %v7278
    %v7343 = vunpack.c.l.b16 %v7279
    %v7344 = vunpack.c.l.b16 %v7280
    %v7345 = vunpack.c.l.b16 %v7281
    %v7346 = vpack.c.b16 %v7315, %v7314
    %v7347 = vpack.c.b16 %v7317, %v7316
    %v7348 = vpack.c.b16 %v7319, %v7318
    %v7349 = vpack.c.b16 %v7321, %v7320
    %v7350 = vpack.c.b16 %v7323, %v7322
    %v7351 = vpack.c.b16 %v7325, %v7324
    %v7352 = vpack.c.b16 %v7327, %v7326
    %v7353 = vpack.c.b16 %v7329, %v7328
    %v7354 = vpack.c.b16 %v7331, %v7330
    %v7355 = vpack.c.b16 %v7333, %v7332
    %v7356 = vpack.c.b16 %v7335, %v7334
    %v7357 = vpack.c.b16 %v7337, %v7336
    %v7358 = vpack.c.b16 %v7339, %v7338
    %v7359 = vpack.c.b16 %v7341, %v7340
    %v7360 = vpack.c.b16 %v7343, %v7342
    %v7361 = vpack.c.b16 %v7345, %v7344
    %7378 = vmatprep.subr.bf16.mxu0 0
    %7379 = vmatpush1.bf16.msra.mxu0 %v7346
    %7380 = vmatprep.subr.bf16.mxu0 0
    %7381 = vmatpush1.bf16.msra.mxu0 %v7347
    %7382 = vmatprep.subr.bf16.mxu0 0
    %7383 = vmatpush1.bf16.msra.mxu0 %v7348
    %7384 = vmatprep.subr.bf16.mxu0 0
    %7385 = vmatpush1.bf16.msra.mxu0 %v7349
    %7386 = vmatprep.subr.bf16.mxu0 0
    %7387 = vmatpush1.bf16.msra.mxu0 %v7350
    %7388 = vmatprep.subr.bf16.mxu0 0
    %7389 = vmatpush1.bf16.msra.mxu0 %v7351
    %7390 = vmatprep.subr.bf16.mxu0 0
    %7391 = vmatpush1.bf16.msra.mxu0 %v7352
    %7392 = vmatprep.subr.bf16.mxu0 0
    %7393 = vmatpush1.bf16.msra.mxu0 %v7353
    %7394 = vmatprep.subr.bf16.mxu0 0
    %7395 = vmatpush1.bf16.msra.mxu0 %v7354
    %7396 = vmatprep.subr.bf16.mxu0 0
    %7397 = vmatpush1.bf16.msra.mxu0 %v7355
    %7398 = vmatprep.subr.bf16.mxu0 0
    %7399 = vmatpush1.bf16.msra.mxu0 %v7356
    %7400 = vmatprep.subr.bf16.mxu0 0
    %7401 = vmatpush1.bf16.msra.mxu0 %v7357
    %7402 = vmatprep.subr.bf16.mxu0 0
    %7403 = vmatpush1.bf16.msra.mxu0 %v7358
    %7404 = vmatprep.subr.bf16.mxu0 0
    %7405 = vmatpush1.bf16.msra.mxu0 %v7359
    %7406 = vmatprep.subr.bf16.mxu0 0
    %7407 = vmatpush1.bf16.msra.mxu0 %v7360
    %7408 = vmatprep.subr.bf16.mxu0 0
    %7409 = vmatpush1.bf16.msra.mxu0 %v7361
    %7410 = vmatprep.mubr.bf16.mxu0 %v7248
    %7411 = vmatmul.mubr.bf16.gmra.mrb[0].mxu0 %v7247
    %v7412 = vpop.f32.mrb[0].mxu0
    %v7413 = vadd.f32 0.0, %v7412
    %v7414 = vpop.f32.mrb[0].mxu0
    %v7415 = vpop.f32.mrb[0].mxu0
    %v7416 = vpop.f32.mrb[0].mxu0
    %7417 = vdwg.mxu0
    %7418 = vst [vmem:[%s8 + $0x1a] sm:$0x3] %v7413
    %v7419 = vld [vmem:[%s8] sm:$0xff]
    %v7420 = vld [vmem:[%s8 + $0x8] sm:$0xff]
    %v7421 = vld [vmem:[%s8 + $0x10] sm:$0xff]
    %v7422 = vld [vmem:[%s8 + $0x18] sm:$0xf]
    %v7427 = vcombine.high %v7419, %v7419
    %v7429 = vunpack.c.l.s4 1983009808
    %v7430 = vunpack.c.0.s8 %v7429
    %v7431 = vlaneseq
    %v7432 = vshrl.u32 %v7431, 7
    %v7433 = vsub.s32 %v7430, %v7432
    %v7434 = vrot.slane %v7419, %v7433
    %v7436 = vunpack.c.l.s4 1983009808
    %v7437 = vunpack.c.0.s8 %v7436
    %v7438 = vlaneseq
    %v7439 = vshrl.u32 %v7438, 7
    %v7440 = vsub.s32 %v7437, %v7439
    %v7441 = vrot.slane %v7427, %v7440
    %v7442 = vcombine.high %v7434, %v7434
    %v7443 = vcombine.high %v7441, %v7441
    %v7444 = vcombine.high %v7420, %v7420
    %v7446 = vunpack.c.l.s4 1983009808
    %v7447 = vunpack.c.0.s8 %v7446
    %v7448 = vlaneseq
    %v7449 = vshrl.u32 %v7448, 7
    %v7450 = vsub.s32 %v7447, %v7449
    %v7451 = vrot.slane %v7420, %v7450
    %v7453 = vunpack.c.l.s4 1983009808
    %v7454 = vunpack.c.0.s8 %v7453
    %v7455 = vlaneseq
    %v7456 = vshrl.u32 %v7455, 7
    %v7457 = vsub.s32 %v7454, %v7456
    %v7458 = vrot.slane %v7444, %v7457
    %v7459 = vcombine.high %v7451, %v7451
    %v7460 = vcombine.high %v7458, %v7458
    %v7461 = vcombine.high %v7421, %v7421
    %v7463 = vunpack.c.l.s4 1983009808
    %v7464 = vunpack.c.0.s8 %v7463
    %v7465 = vlaneseq
    %v7466 = vshrl.u32 %v7465, 7
    %v7467 = vsub.s32 %v7464, %v7466
    %v7468 = vrot.slane %v7421, %v7467
    %v7470 = vunpack.c.l.s4 1983009808
    %v7471 = vunpack.c.0.s8 %v7470
    %v7472 = vlaneseq
    %v7473 = vshrl.u32 %v7472, 7
    %v7474 = vsub.s32 %v7471, %v7473
    %v7475 = vrot.slane %v7461, %v7474
    %v7476 = vcombine.high %v7468, %v7468
    %v7477 = vcombine.high %v7475, %v7475
    %v7479 = vunpack.c.l.s4 1983009808
    %v7480 = vunpack.c.0.s8 %v7479
    %v7481 = vlaneseq
    %v7482 = vshrl.u32 %v7481, 7
    %v7483 = vsub.s32 %v7480, %v7482
    %v7484 = vrot.slane %v7422, %v7483
    %v7485 = vcombine.high %v7484, %v7484
    %vm7500 = vcmask 1041408
    %v7501 = vsel %vm7500, %v7434, 0.0
    %v7502 = vrot.slane %v7501, 4
    %v7503 = vadd.f32 %v7501, %v7502
    %v7504 = vrot.slane %v7503, 2
    %v7505 = vadd.f32 %v7503, %v7504
    %v7506 = vrot.slane %v7505, 1
    %v7507 = vadd.f32 %v7505, %v7506
    %v7508 = vsel %vm7500, %v7442, 0.0
    %v7509 = vrot.slane %v7508, 4
    %v7510 = vadd.f32 %v7508, %v7509
    %v7511 = vrot.slane %v7510, 2
    %v7512 = vadd.f32 %v7510, %v7511
    %v7513 = vrot.slane %v7512, 1
    %v7514 = vadd.f32 %v7512, %v7513
    %v7515 = vsel %vm7500, %v7441, 0.0
    %v7516 = vrot.slane %v7515, 4
    %v7517 = vadd.f32 %v7515, %v7516
    %v7518 = vrot.slane %v7517, 2
    %v7519 = vadd.f32 %v7517, %v7518
    %v7520 = vrot.slane %v7519, 1
    %v7521 = vadd.f32 %v7519, %v7520
    %v7522 = vsel %vm7500, %v7443, 0.0
    %v7523 = vrot.slane %v7522, 4
    %v7524 = vadd.f32 %v7522, %v7523
    %v7525 = vrot.slane %v7524, 2
    %v7526 = vadd.f32 %v7524, %v7525
    %v7527 = vrot.slane %v7526, 1
    %v7528 = vadd.f32 %v7526, %v7527
    %v7529 = vsel %vm7500, %v7451, 0.0
    %v7530 = vrot.slane %v7529, 4
    %v7531 = vadd.f32 %v7529, %v7530
    %v7532 = vrot.slane %v7531, 2
    %v7533 = vadd.f32 %v7531, %v7532
    %v7534 = vrot.slane %v7533, 1
    %v7535 = vadd.f32 %v7533, %v7534
    %v7536 = vsel %vm7500, %v7459, 0.0
    %v7537 = vrot.slane %v7536, 4
    %v7538 = vadd.f32 %v7536, %v7537
    %v7539 = vrot.slane %v7538, 2
    %v7540 = vadd.f32 %v7538, %v7539
    %v7541 = vrot.slane %v7540, 1
    %v7542 = vadd.f32 %v7540, %v7541
    %v7543 = vsel %vm7500, %v7458, 0.0
    %v7544 = vrot.slane %v7543, 4
    %v7545 = vadd.f32 %v7543, %v7544
    %v7546 = vrot.slane %v7545, 2
    %v7547 = vadd.f32 %v7545, %v7546
    %v7548 = vrot.slane %v7547, 1
    %v7549 = vadd.f32 %v7547, %v7548
    %v7550 = vsel %vm7500, %v7460, 0.0
    %v7551 = vrot.slane %v7550, 4
    %v7552 = vadd.f32 %v7550, %v7551
    %v7553 = vrot.slane %v7552, 2
    %v7554 = vadd.f32 %v7552, %v7553
    %v7555 = vrot.slane %v7554, 1
    %v7556 = vadd.f32 %v7554, %v7555
    %v7557 = vsel %vm7500, %v7468, 0.0
    %v7558 = vrot.slane %v7557, 4
    %v7559 = vadd.f32 %v7557, %v7558
    %v7560 = vrot.slane %v7559, 2
    %v7561 = vadd.f32 %v7559, %v7560
    %v7562 = vrot.slane %v7561, 1
    %v7563 = vadd.f32 %v7561, %v7562
    %v7564 = vsel %vm7500, %v7476, 0.0
    %v7565 = vrot.slane %v7564, 4
    %v7566 = vadd.f32 %v7564, %v7565
    %v7567 = vrot.slane %v7566, 2
    %v7568 = vadd.f32 %v7566, %v7567
    %v7569 = vrot.slane %v7568, 1
    %v7570 = vadd.f32 %v7568, %v7569
    %v7571 = vsel %vm7500, %v7475, 0.0
    %v7572 = vrot.slane %v7571, 4
    %v7573 = vadd.f32 %v7571, %v7572
    %v7574 = vrot.slane %v7573, 2
    %v7575 = vadd.f32 %v7573, %v7574
    %v7576 = vrot.slane %v7575, 1
    %v7577 = vadd.f32 %v7575, %v7576
    %v7578 = vsel %vm7500, %v7477, 0.0
    %v7579 = vrot.slane %v7578, 4
    %v7580 = vadd.f32 %v7578, %v7579
    %v7581 = vrot.slane %v7580, 2
    %v7582 = vadd.f32 %v7580, %v7581
    %v7583 = vrot.slane %v7582, 1
    %v7584 = vadd.f32 %v7582, %v7583
    %v7585 = vsel %vm7500, %v7484, 0.0
    %v7586 = vrot.slane %v7585, 4
    %v7587 = vadd.f32 %v7585, %v7586
    %v7588 = vrot.slane %v7587, 2
    %v7589 = vadd.f32 %v7587, %v7588
    %v7590 = vrot.slane %v7589, 1
    %v7591 = vadd.f32 %v7589, %v7590
    %v7592 = vsel %vm7500, %v7485, 0.0
    %v7593 = vrot.slane %v7592, 4
    %v7594 = vadd.f32 %v7592, %v7593
    %v7595 = vrot.slane %v7594, 2
    %v7596 = vadd.f32 %v7594, %v7595
    %v7597 = vrot.slane %v7596, 1
    %v7598 = vadd.f32 %v7596, %v7597
    %v7599 = vrcp.pop 2.0
    %v7600 = vmul.f32 %v7507, %v7599
    %v7601 = vmul.f32 %v7514, %v7599
    %v7602 = vmul.f32 %v7521, %v7599
    %v7603 = vmul.f32 %v7528, %v7599
    %v7604 = vmul.f32 %v7535, %v7599
    %v7605 = vmul.f32 %v7542, %v7599
    %v7606 = vmul.f32 %v7549, %v7599
    %v7607 = vmul.f32 %v7556, %v7599
    %v7608 = vmul.f32 %v7563, %v7599
    %v7609 = vmul.f32 %v7570, %v7599
    %v7610 = vmul.f32 %v7577, %v7599
    %v7611 = vmul.f32 %v7584, %v7599
    %v7612 = vmul.f32 %v7591, %v7599
    %v7613 = vmul.f32 %v7598, %v7599
    %v7628 = vcombine.low %v7600, %v7601
    %v7629 = vcombine.low %v7602, %v7603
    %v7631 = vunpack.c.l.s4 1983009808
    %v7632 = vunpack.c.0.s8 %v7631
    %v7633 = vlaneseq
    %v7634 = vshrl.u32 %v7633, 7
    %v7635 = vsub.s32 %v7632, %v7634
    %v7636 = vrot.slane %v7628, %v7635
    %v7638 = vunpack.c.l.s4 1983009808
    %v7639 = vunpack.c.0.s8 %v7638
    %v7640 = vlaneseq
    %v7641 = vshrl.u32 %v7640, 7
    %v7642 = vsub.s32 %v7639, %v7641
    %v7643 = vrot.slane %v7629, %v7642
    %v7644 = vcombine.low %v7636, %v7643
    %v7645 = vcombine.low %v7604, %v7605
    %v7646 = vcombine.low %v7606, %v7607
    %v7648 = vunpack.c.l.s4 1983009808
    %v7649 = vunpack.c.0.s8 %v7648
    %v7650 = vlaneseq
    %v7651 = vshrl.u32 %v7650, 7
    %v7652 = vsub.s32 %v7649, %v7651
    %v7653 = vrot.slane %v7645, %v7652
    %v7655 = vunpack.c.l.s4 1983009808
    %v7656 = vunpack.c.0.s8 %v7655
    %v7657 = vlaneseq
    %v7658 = vshrl.u32 %v7657, 7
    %v7659 = vsub.s32 %v7656, %v7658
    %v7660 = vrot.slane %v7646, %v7659
    %v7661 = vcombine.low %v7653, %v7660
    %v7662 = vcombine.low %v7608, %v7609
    %v7663 = vcombine.low %v7610, %v7611
    %v7665 = vunpack.c.l.s4 1983009808
    %v7666 = vunpack.c.0.s8 %v7665
    %v7667 = vlaneseq
    %v7668 = vshrl.u32 %v7667, 7
    %v7669 = vsub.s32 %v7666, %v7668
    %v7670 = vrot.slane %v7662, %v7669
    %v7672 = vunpack.c.l.s4 1983009808
    %v7673 = vunpack.c.0.s8 %v7672
    %v7674 = vlaneseq
    %v7675 = vshrl.u32 %v7674, 7
    %v7676 = vsub.s32 %v7673, %v7675
    %v7677 = vrot.slane %v7663, %v7676
    %v7678 = vcombine.low %v7670, %v7677
    %v7679 = vcombine.low %v7612, %v7613
    %v7681 = vunpack.c.l.s4 1983009808
    %v7682 = vunpack.c.0.s8 %v7681
    %v7683 = vlaneseq
    %v7684 = vshrl.u32 %v7683, 7
    %v7685 = vsub.s32 %v7682, %v7684
    %v7686 = vrot.slane %v7679, %v7685
    %v7691 = vsub.f32 %v7419, %v7644
    %v7692 = vsub.f32 %v7420, %v7661
    %v7693 = vsub.f32 %v7421, %v7678
    %v7694 = vsub.f32 %v7422, %v7686
    %v7695 = vmul.f32 %v7691, %v7691
    %v7696 = vmul.f32 %v7692, %v7692
    %v7697 = vmul.f32 %v7693, %v7693
    %v7698 = vmul.f32 %v7694, %v7694
    %v7703 = vcombine.high %v7695, %v7695
    %v7705 = vunpack.c.l.s4 1983009808
    %v7706 = vunpack.c.0.s8 %v7705
    %v7707 = vlaneseq
    %v7708 = vshrl.u32 %v7707, 7
    %v7709 = vsub.s32 %v7706, %v7708
    %v7710 = vrot.slane %v7695, %v7709
    %v7712 = vunpack.c.l.s4 1983009808
    %v7713 = vunpack.c.0.s8 %v7712
    %v7714 = vlaneseq
    %v7715 = vshrl.u32 %v7714, 7
    %v7716 = vsub.s32 %v7713, %v7715
    %v7717 = vrot.slane %v7703, %v7716
    %v7718 = vcombine.high %v7710, %v7710
    %v7719 = vcombine.high %v7717, %v7717
    %v7720 = vcombine.high %v7696, %v7696
    %v7722 = vunpack.c.l.s4 1983009808
    %v7723 = vunpack.c.0.s8 %v7722
    %v7724 = vlaneseq
    %v7725 = vshrl.u32 %v7724, 7
    %v7726 = vsub.s32 %v7723, %v7725
    %v7727 = vrot.slane %v7696, %v7726
    %v7729 = vunpack.c.l.s4 1983009808
    %v7730 = vunpack.c.0.s8 %v7729
    %v7731 = vlaneseq
    %v7732 = vshrl.u32 %v7731, 7
    %v7733 = vsub.s32 %v7730, %v7732
    %v7734 = vrot.slane %v7720, %v7733
    %v7735 = vcombine.high %v7727, %v7727
    %v7736 = vcombine.high %v7734, %v7734
    %v7737 = vcombine.high %v7697, %v7697
    %v7739 = vunpack.c.l.s4 1983009808
    %v7740 = vunpack.c.0.s8 %v7739
    %v7741 = vlaneseq
    %v7742 = vshrl.u32 %v7741, 7
    %v7743 = vsub.s32 %v7740, %v7742
    %v7744 = vrot.slane %v7697, %v7743
    %v7746 = vunpack.c.l.s4 1983009808
    %v7747 = vunpack.c.0.s8 %v7746
    %v7748 = vlaneseq
    %v7749 = vshrl.u32 %v7748, 7
    %v7750 = vsub.s32 %v7747, %v7749
    %v7751 = vrot.slane %v7737, %v7750
    %v7752 = vcombine.high %v7744, %v7744
    %v7753 = vcombine.high %v7751, %v7751
    %v7755 = vunpack.c.l.s4 1983009808
    %v7756 = vunpack.c.0.s8 %v7755
    %v7757 = vlaneseq
    %v7758 = vshrl.u32 %v7757, 7
    %v7759 = vsub.s32 %v7756, %v7758
    %v7760 = vrot.slane %v7698, %v7759
    %v7761 = vcombine.high %v7760, %v7760
    %v7776 = vsel %vm7500, %v7710, 0.0
    %v7777 = vrot.slane %v7776, 4
    %v7778 = vadd.f32 %v7776, %v7777
    %v7779 = vrot.slane %v7778, 2
    %v7780 = vadd.f32 %v7778, %v7779
    %v7781 = vrot.slane %v7780, 1
    %v7782 = vadd.f32 %v7780, %v7781
    %v7783 = vsel %vm7500, %v7718, 0.0
    %v7784 = vrot.slane %v7783, 4
    %v7785 = vadd.f32 %v7783, %v7784
    %v7786 = vrot.slane %v7785, 2
    %v7787 = vadd.f32 %v7785, %v7786
    %v7788 = vrot.slane %v7787, 1
    %v7789 = vadd.f32 %v7787, %v7788
    %v7790 = vsel %vm7500, %v7717, 0.0
    %v7791 = vrot.slane %v7790, 4
    %v7792 = vadd.f32 %v7790, %v7791
    %v7793 = vrot.slane %v7792, 2
    %v7794 = vadd.f32 %v7792, %v7793
    %v7795 = vrot.slane %v7794, 1
    %v7796 = vadd.f32 %v7794, %v7795
    %v7797 = vsel %vm7500, %v7719, 0.0
    %v7798 = vrot.slane %v7797, 4
    %v7799 = vadd.f32 %v7797, %v7798
    %v7800 = vrot.slane %v7799, 2
    %v7801 = vadd.f32 %v7799, %v7800
    %v7802 = vrot.slane %v7801, 1
    %v7803 = vadd.f32 %v7801, %v7802
    %v7804 = vsel %vm7500, %v7727, 0.0
    %v7805 = vrot.slane %v7804, 4
    %v7806 = vadd.f32 %v7804, %v7805
    %v7807 = vrot.slane %v7806, 2
    %v7808 = vadd.f32 %v7806, %v7807
    %v7809 = vrot.slane %v7808, 1
    %v7810 = vadd.f32 %v7808, %v7809
    %v7811 = vsel %vm7500, %v7735, 0.0
    %v7812 = vrot.slane %v7811, 4
    %v7813 = vadd.f32 %v7811, %v7812
    %v7814 = vrot.slane %v7813, 2
    %v7815 = vadd.f32 %v7813, %v7814
    %v7816 = vrot.slane %v7815, 1
    %v7817 = vadd.f32 %v7815, %v7816
    %v7818 = vsel %vm7500, %v7734, 0.0
    %v7819 = vrot.slane %v7818, 4
    %v7820 = vadd.f32 %v7818, %v7819
    %v7821 = vrot.slane %v7820, 2
    %v7822 = vadd.f32 %v7820, %v7821
    %v7823 = vrot.slane %v7822, 1
    %v7824 = vadd.f32 %v7822, %v7823
    %v7825 = vsel %vm7500, %v7736, 0.0
    %v7826 = vrot.slane %v7825, 4
    %v7827 = vadd.f32 %v7825, %v7826
    %v7828 = vrot.slane %v7827, 2
    %v7829 = vadd.f32 %v7827, %v7828
    %v7830 = vrot.slane %v7829, 1
    %v7831 = vadd.f32 %v7829, %v7830
    %v7832 = vsel %vm7500, %v7744, 0.0
    %v7833 = vrot.slane %v7832, 4
    %v7834 = vadd.f32 %v7832, %v7833
    %v7835 = vrot.slane %v7834, 2
    %v7836 = vadd.f32 %v7834, %v7835
    %v7837 = vrot.slane %v7836, 1
    %v7838 = vadd.f32 %v7836, %v7837
    %v7839 = vsel %vm7500, %v7752, 0.0
    %v7840 = vrot.slane %v7839, 4
    %v7841 = vadd.f32 %v7839, %v7840
    %v7842 = vrot.slane %v7841, 2
    %v7843 = vadd.f32 %v7841, %v7842
    %v7844 = vrot.slane %v7843, 1
    %v7845 = vadd.f32 %v7843, %v7844
    %v7846 = vsel %vm7500, %v7751, 0.0
    %v7847 = vrot.slane %v7846, 4
    %v7848 = vadd.f32 %v7846, %v7847
    %v7849 = vrot.slane %v7848, 2
    %v7850 = vadd.f32 %v7848, %v7849
    %v7851 = vrot.slane %v7850, 1
    %v7852 = vadd.f32 %v7850, %v7851
    %v7853 = vsel %vm7500, %v7753, 0.0
    %v7854 = vrot.slane %v7853, 4
    %v7855 = vadd.f32 %v7853, %v7854
    %v7856 = vrot.slane %v7855, 2
    %v7857 = vadd.f32 %v7855, %v7856
    %v7858 = vrot.slane %v7857, 1
    %v7859 = vadd.f32 %v7857, %v7858
    %v7860 = vsel %vm7500, %v7760, 0.0
    %v7861 = vrot.slane %v7860, 4
    %v7862 = vadd.f32 %v7860, %v7861
    %v7863 = vrot.slane %v7862, 2
    %v7864 = vadd.f32 %v7862, %v7863
    %v7865 = vrot.slane %v7864, 1
    %v7866 = vadd.f32 %v7864, %v7865
    %v7867 = vsel %vm7500, %v7761, 0.0
    %v7868 = vrot.slane %v7867, 4
    %v7869 = vadd.f32 %v7867, %v7868
    %v7870 = vrot.slane %v7869, 2
    %v7871 = vadd.f32 %v7869, %v7870
    %v7872 = vrot.slane %v7871, 1
    %v7873 = vadd.f32 %v7871, %v7872
    %v7874 = vmul.f32 %v7782, %v7599
    %v7875 = vmul.f32 %v7789, %v7599
    %v7876 = vmul.f32 %v7796, %v7599
    %v7877 = vmul.f32 %v7803, %v7599
    %v7878 = vmul.f32 %v7810, %v7599
    %v7879 = vmul.f32 %v7817, %v7599
    %v7880 = vmul.f32 %v7824, %v7599
    %v7881 = vmul.f32 %v7831, %v7599
    %v7882 = vmul.f32 %v7838, %v7599
    %v7883 = vmul.f32 %v7845, %v7599
    %v7884 = vmul.f32 %v7852, %v7599
    %v7885 = vmul.f32 %v7859, %v7599
    %v7886 = vmul.f32 %v7866, %v7599
    %v7887 = vmul.f32 %v7873, %v7599
    %v7888 = vadd.f32 %v7874, 1e-05
    %v7889 = vadd.f32 %v7875, 1e-05
    %v7890 = vadd.f32 %v7876, 1e-05
    %v7891 = vadd.f32 %v7877, 1e-05
    %v7892 = vadd.f32 %v7878, 1e-05
    %v7893 = vadd.f32 %v7879, 1e-05
    %v7894 = vadd.f32 %v7880, 1e-05
    %v7895 = vadd.f32 %v7881, 1e-05
    %v7896 = vadd.f32 %v7882, 1e-05
    %v7897 = vadd.f32 %v7883, 1e-05
    %v7898 = vadd.f32 %v7884, 1e-05
    %v7899 = vadd.f32 %v7885, 1e-05
    %v7900 = vadd.f32 %v7886, 1e-05
    %v7901 = vadd.f32 %v7887, 1e-05
    %v7902 = vrsqrt.pop %v7888
    %v7903 = vrsqrt.pop %v7889
    %v7904 = vrsqrt.pop %v7890
    %v7905 = vrsqrt.pop %v7891
    %v7906 = vrsqrt.pop %v7892
    %v7907 = vrsqrt.pop %v7893
    %v7908 = vrsqrt.pop %v7894
    %v7909 = vrsqrt.pop %v7895
    %v7910 = vrsqrt.pop %v7896
    %v7911 = vrsqrt.pop %v7897
    %v7912 = vrsqrt.pop %v7898
    %v7913 = vrsqrt.pop %v7899
    %v7914 = vrsqrt.pop %v7900
    %v7915 = vrsqrt.pop %v7901
    %v7930 = vcombine.low %v7902, %v7903
    %v7931 = vcombine.low %v7904, %v7905
    %v7933 = vunpack.c.l.s4 1983009808
    %v7934 = vunpack.c.0.s8 %v7933
    %v7935 = vlaneseq
    %v7936 = vshrl.u32 %v7935, 7
    %v7937 = vsub.s32 %v7934, %v7936
    %v7938 = vrot.slane %v7930, %v7937
    %v7940 = vunpack.c.l.s4 1983009808
    %v7941 = vunpack.c.0.s8 %v7940
    %v7942 = vlaneseq
    %v7943 = vshrl.u32 %v7942, 7
    %v7944 = vsub.s32 %v7941, %v7943
    %v7945 = vrot.slane %v7931, %v7944
    %v7946 = vcombine.low %v7938, %v7945
    %v7947 = vcombine.low %v7906, %v7907
    %v7948 = vcombine.low %v7908, %v7909
    %v7950 = vunpack.c.l.s4 1983009808
    %v7951 = vunpack.c.0.s8 %v7950
    %v7952 = vlaneseq
    %v7953 = vshrl.u32 %v7952, 7
    %v7954 = vsub.s32 %v7951, %v7953
    %v7955 = vrot.slane %v7947, %v7954
    %v7957 = vunpack.c.l.s4 1983009808
    %v7958 = vunpack.c.0.s8 %v7957
    %v7959 = vlaneseq
    %v7960 = vshrl.u32 %v7959, 7
    %v7961 = vsub.s32 %v7958, %v7960
    %v7962 = vrot.slane %v7948, %v7961
    %v7963 = vcombine.low %v7955, %v7962
    %v7964 = vcombine.low %v7910, %v7911
    %v7965 = vcombine.low %v7912, %v7913
    %v7967 = vunpack.c.l.s4 1983009808
    %v7968 = vunpack.c.0.s8 %v7967
    %v7969 = vlaneseq
    %v7970 = vshrl.u32 %v7969, 7
    %v7971 = vsub.s32 %v7968, %v7970
    %v7972 = vrot.slane %v7964, %v7971
    %v7974 = vunpack.c.l.s4 1983009808
    %v7975 = vunpack.c.0.s8 %v7974
    %v7976 = vlaneseq
    %v7977 = vshrl.u32 %v7976, 7
    %v7978 = vsub.s32 %v7975, %v7977
    %v7979 = vrot.slane %v7965, %v7978
    %v7980 = vcombine.low %v7972, %v7979
    %v7981 = vcombine.low %v7914, %v7915
    %v7983 = vunpack.c.l.s4 1983009808
    %v7984 = vunpack.c.0.s8 %v7983
    %v7985 = vlaneseq
    %v7986 = vshrl.u32 %v7985, 7
    %v7987 = vsub.s32 %v7984, %v7986
    %v7988 = vrot.slane %v7981, %v7987
    %v7993 = vmul.f32 %v7691, %v7946
    %v7994 = vmul.f32 %v7692, %v7963
    %v7995 = vmul.f32 %v7693, %v7980
    %v7996 = vmul.f32 %v7694, %v7988
    %v7997 = vld [vmem:[%s5] sm:$0xff]
    %v7998 = vld [vmem:[%s5 + $0x8] sm:$0x3f]
    %v8001 = vlaneseq
    %v8002 = vshrl.u32 %v8001, 7
    %v8003 = vsub.s32 0, %v8002
    %v8004 = vrot.slane %v7997, %v8003
    %v8005 = vlaneseq
    %v8006 = vshrl.u32 %v8005, 7
    %v8007 = vsub.s32 1, %v8006
    %v8008 = vrot.slane %v7997, %v8007
    %v8009 = vlaneseq
    %v8010 = vshrl.u32 %v8009, 7
    %v8011 = vsub.s32 2, %v8010
    %v8012 = vrot.slane %v7997, %v8011
    %v8013 = vlaneseq
    %v8014 = vshrl.u32 %v8013, 7
    %v8015 = vsub.s32 3, %v8014
    %v8016 = vrot.slane %v7997, %v8015
    %v8017 = vlaneseq
    %v8018 = vshrl.u32 %v8017, 7
    %v8019 = vsub.s32 4, %v8018
    %v8020 = vrot.slane %v7997, %v8019
    %v8021 = vlaneseq
    %v8022 = vshrl.u32 %v8021, 7
    %v8023 = vsub.s32 5, %v8022
    %v8024 = vrot.slane %v7997, %v8023
    %v8025 = vlaneseq
    %v8026 = vshrl.u32 %v8025, 7
    %v8027 = vsub.s32 6, %v8026
    %v8028 = vrot.slane %v7997, %v8027
    %v8029 = vlaneseq
    %v8030 = vshrl.u32 %v8029, 7
    %v8031 = vsub.s32 7, %v8030
    %v8032 = vrot.slane %v7997, %v8031
    %v8033 = vlaneseq
    %v8034 = vshrl.u32 %v8033, 7
    %v8035 = vsub.s32 0, %v8034
    %v8036 = vrot.slane %v7998, %v8035
    %v8037 = vlaneseq
    %v8038 = vshrl.u32 %v8037, 7
    %v8039 = vsub.s32 1, %v8038
    %v8040 = vrot.slane %v7998, %v8039
    %v8041 = vlaneseq
    %v8042 = vshrl.u32 %v8041, 7
    %v8043 = vsub.s32 2, %v8042
    %v8044 = vrot.slane %v7998, %v8043
    %v8045 = vlaneseq
    %v8046 = vshrl.u32 %v8045, 7
    %v8047 = vsub.s32 3, %v8046
    %v8048 = vrot.slane %v7998, %v8047
    %v8049 = vlaneseq
    %v8050 = vshrl.u32 %v8049, 7
    %v8051 = vsub.s32 4, %v8050
    %v8052 = vrot.slane %v7998, %v8051
    %v8053 = vlaneseq
    %v8054 = vshrl.u32 %v8053, 7
    %v8055 = vsub.s32 5, %v8054
    %v8056 = vrot.slane %v7998, %v8055
    %v8057 = vcombine.low %v8004, %v8008
    %v8058 = vcombine.low %v8012, %v8016
    %v8060 = vunpack.c.l.s4 1983009808
    %v8061 = vunpack.c.0.s8 %v8060
    %v8062 = vlaneseq
    %v8063 = vshrl.u32 %v8062, 7
    %v8064 = vsub.s32 %v8061, %v8063
    %v8065 = vrot.slane %v8057, %v8064
    %v8067 = vunpack.c.l.s4 1983009808
    %v8068 = vunpack.c.0.s8 %v8067
    %v8069 = vlaneseq
    %v8070 = vshrl.u32 %v8069, 7
    %v8071 = vsub.s32 %v8068, %v8070
    %v8072 = vrot.slane %v8058, %v8071
    %v8073 = vcombine.low %v8065, %v8072
    %v8074 = vcombine.low %v8020, %v8024
    %v8075 = vcombine.low %v8028, %v8032
    %v8077 = vunpack.c.l.s4 1983009808
    %v8078 = vunpack.c.0.s8 %v8077
    %v8079 = vlaneseq
    %v8080 = vshrl.u32 %v8079, 7
    %v8081 = vsub.s32 %v8078, %v8080
    %v8082 = vrot.slane %v8074, %v8081
    %v8084 = vunpack.c.l.s4 1983009808
    %v8085 = vunpack.c.0.s8 %v8084
    %v8086 = vlaneseq
    %v8087 = vshrl.u32 %v8086, 7
    %v8088 = vsub.s32 %v8085, %v8087
    %v8089 = vrot.slane %v8075, %v8088
    %v8090 = vcombine.low %v8082, %v8089
    %v8091 = vcombine.low %v8036, %v8040
    %v8092 = vcombine.low %v8044, %v8048
    %v8094 = vunpack.c.l.s4 1983009808
    %v8095 = vunpack.c.0.s8 %v8094
    %v8096 = vlaneseq
    %v8097 = vshrl.u32 %v8096, 7
    %v8098 = vsub.s32 %v8095, %v8097
    %v8099 = vrot.slane %v8091, %v8098
    %v8101 = vunpack.c.l.s4 1983009808
    %v8102 = vunpack.c.0.s8 %v8101
    %v8103 = vlaneseq
    %v8104 = vshrl.u32 %v8103, 7
    %v8105 = vsub.s32 %v8102, %v8104
    %v8106 = vrot.slane %v8092, %v8105
    %v8107 = vcombine.low %v8099, %v8106
    %v8108 = vcombine.low %v8052, %v8056
    %v8110 = vunpack.c.l.s4 1983009808
    %v8111 = vunpack.c.0.s8 %v8110
    %v8112 = vlaneseq
    %v8113 = vshrl.u32 %v8112, 7
    %v8114 = vsub.s32 %v8111, %v8113
    %v8115 = vrot.slane %v8108, %v8114
    %v8120 = vmul.f32 %v7993, %v8073
    %v8121 = vmul.f32 %v7994, %v8090
    %v8122 = vmul.f32 %v7995, %v8107
    %v8123 = vmul.f32 %v7996, %v8115
    %v8124 = vld [vmem:[%s6] sm:$0xff]
    %v8125 = vld [vmem:[%s6 + $0x8] sm:$0x3f]
    %v8128 = vlaneseq
    %v8129 = vshrl.u32 %v8128, 7
    %v8130 = vsub.s32 0, %v8129
    %v8131 = vrot.slane %v8124, %v8130
    %v8132 = vlaneseq
    %v8133 = vshrl.u32 %v8132, 7
    %v8134 = vsub.s32 1, %v8133
    %v8135 = vrot.slane %v8124, %v8134
    %v8136 = vlaneseq
    %v8137 = vshrl.u32 %v8136, 7
    %v8138 = vsub.s32 2, %v8137
    %v8139 = vrot.slane %v8124, %v8138
    %v8140 = vlaneseq
    %v8141 = vshrl.u32 %v8140, 7
    %v8142 = vsub.s32 3, %v8141
    %v8143 = vrot.slane %v8124, %v8142
    %v8144 = vlaneseq
    %v8145 = vshrl.u32 %v8144, 7
    %v8146 = vsub.s32 4, %v8145
    %v8147 = vrot.slane %v8124, %v8146
    %v8148 = vlaneseq
    %v8149 = vshrl.u32 %v8148, 7
    %v8150 = vsub.s32 5, %v8149
    %v8151 = vrot.slane %v8124, %v8150
    %v8152 = vlaneseq
    %v8153 = vshrl.u32 %v8152, 7
    %v8154 = vsub.s32 6, %v8153
    %v8155 = vrot.slane %v8124, %v8154
    %v8156 = vlaneseq
    %v8157 = vshrl.u32 %v8156, 7
    %v8158 = vsub.s32 7, %v8157
    %v8159 = vrot.slane %v8124, %v8158
    %v8160 = vlaneseq
    %v8161 = vshrl.u32 %v8160, 7
    %v8162 = vsub.s32 0, %v8161
    %v8163 = vrot.slane %v8125, %v8162
    %v8164 = vlaneseq
    %v8165 = vshrl.u32 %v8164, 7
    %v8166 = vsub.s32 1, %v8165
    %v8167 = vrot.slane %v8125, %v8166
    %v8168 = vlaneseq
    %v8169 = vshrl.u32 %v8168, 7
    %v8170 = vsub.s32 2, %v8169
    %v8171 = vrot.slane %v8125, %v8170
    %v8172 = vlaneseq
    %v8173 = vshrl.u32 %v8172, 7
    %v8174 = vsub.s32 3, %v8173
    %v8175 = vrot.slane %v8125, %v8174
    %v8176 = vlaneseq
    %v8177 = vshrl.u32 %v8176, 7
    %v8178 = vsub.s32 4, %v8177
    %v8179 = vrot.slane %v8125, %v8178
    %v8180 = vlaneseq
    %v8181 = vshrl.u32 %v8180, 7
    %v8182 = vsub.s32 5, %v8181
    %v8183 = vrot.slane %v8125, %v8182
    %v8184 = vcombine.low %v8131, %v8135
    %v8185 = vcombine.low %v8139, %v8143
    %v8187 = vunpack.c.l.s4 1983009808
    %v8188 = vunpack.c.0.s8 %v8187
    %v8189 = vlaneseq
    %v8190 = vshrl.u32 %v8189, 7
    %v8191 = vsub.s32 %v8188, %v8190
    %v8192 = vrot.slane %v8184, %v8191
    %v8194 = vunpack.c.l.s4 1983009808
    %v8195 = vunpack.c.0.s8 %v8194
    %v8196 = vlaneseq
    %v8197 = vshrl.u32 %v8196, 7
    %v8198 = vsub.s32 %v8195, %v8197
    %v8199 = vrot.slane %v8185, %v8198
    %v8200 = vcombine.low %v8192, %v8199
    %v8201 = vcombine.low %v8147, %v8151
    %v8202 = vcombine.low %v8155, %v8159
    %v8204 = vunpack.c.l.s4 1983009808
    %v8205 = vunpack.c.0.s8 %v8204
    %v8206 = vlaneseq
    %v8207 = vshrl.u32 %v8206, 7
    %v8208 = vsub.s32 %v8205, %v8207
    %v8209 = vrot.slane %v8201, %v8208
    %v8211 = vunpack.c.l.s4 1983009808
    %v8212 = vunpack.c.0.s8 %v8211
    %v8213 = vlaneseq
    %v8214 = vshrl.u32 %v8213, 7
    %v8215 = vsub.s32 %v8212, %v8214
    %v8216 = vrot.slane %v8202, %v8215
    %v8217 = vcombine.low %v8209, %v8216
    %v8218 = vcombine.low %v8163, %v8167
    %v8219 = vcombine.low %v8171, %v8175
    %v8221 = vunpack.c.l.s4 1983009808
    %v8222 = vunpack.c.0.s8 %v8221
    %v8223 = vlaneseq
    %v8224 = vshrl.u32 %v8223, 7
    %v8225 = vsub.s32 %v8222, %v8224
    %v8226 = vrot.slane %v8218, %v8225
    %v8228 = vunpack.c.l.s4 1983009808
    %v8229 = vunpack.c.0.s8 %v8228
    %v8230 = vlaneseq
    %v8231 = vshrl.u32 %v8230, 7
    %v8232 = vsub.s32 %v8229, %v8231
    %v8233 = vrot.slane %v8219, %v8232
    %v8234 = vcombine.low %v8226, %v8233
    %v8235 = vcombine.low %v8179, %v8183
    %v8237 = vunpack.c.l.s4 1983009808
    %v8238 = vunpack.c.0.s8 %v8237
    %v8239 = vlaneseq
    %v8240 = vshrl.u32 %v8239, 7
    %v8241 = vsub.s32 %v8238, %v8240
    %v8242 = vrot.slane %v8235, %v8241
    %v8247 = vadd.f32 %v8120, %v8200
    %v8248 = vadd.f32 %v8121, %v8217
    %v8249 = vadd.f32 %v8122, %v8234
    %v8250 = vadd.f32 %v8123, %v8242
    %8251 = vst [vmem:[#allocation4] sm:$0xff] %v8247
    %8252 = vst [vmem:[#allocation4 + $0x8] sm:$0xff] %v8248
    %8253 = vst [vmem:[#allocation4 + $0x10] sm:$0xff] %v8249
    %8254 = vst [vmem:[#allocation4 + $0x18] sm:$0xf] %v8250
    %v8259 = vcombine.high %v8247, %v8247
    %v8261 = vunpack.c.l.s4 1983009808
    %v8262 = vunpack.c.0.s8 %v8261
    %v8263 = vlaneseq
    %v8264 = vshrl.u32 %v8263, 7
    %v8265 = vsub.s32 %v8262, %v8264
    %v8266 = vrot.slane %v8247, %v8265
    %v8268 = vunpack.c.l.s4 1983009808
    %v8269 = vunpack.c.0.s8 %v8268
    %v8270 = vlaneseq
    %v8271 = vshrl.u32 %v8270, 7
    %v8272 = vsub.s32 %v8269, %v8271
    %v8273 = vrot.slane %v8259, %v8272
    %v8274 = vcombine.high %v8266, %v8266
    %v8275 = vcombine.high %v8273, %v8273
    %v8276 = vcombine.high %v8248, %v8248
    %v8278 = vunpack.c.l.s4 1983009808
    %v8279 = vunpack.c.0.s8 %v8278
    %v8280 = vlaneseq
    %v8281 = vshrl.u32 %v8280, 7
    %v8282 = vsub.s32 %v8279, %v8281
    %v8283 = vrot.slane %v8248, %v8282
    %v8285 = vunpack.c.l.s4 1983009808
    %v8286 = vunpack.c.0.s8 %v8285
    %v8287 = vlaneseq
    %v8288 = vshrl.u32 %v8287, 7
    %v8289 = vsub.s32 %v8286, %v8288
    %v8290 = vrot.slane %v8276, %v8289
    %v8291 = vcombine.high %v8283, %v8283
    %v8292 = vcombine.high %v8290, %v8290
    %v8293 = vcombine.high %v8249, %v8249
    %v8295 = vunpack.c.l.s4 1983009808
    %v8296 = vunpack.c.0.s8 %v8295
    %v8297 = vlaneseq
    %v8298 = vshrl.u32 %v8297, 7
    %v8299 = vsub.s32 %v8296, %v8298
    %v8300 = vrot.slane %v8249, %v8299
    %v8302 = vunpack.c.l.s4 1983009808
    %v8303 = vunpack.c.0.s8 %v8302
    %v8304 = vlaneseq
    %v8305 = vshrl.u32 %v8304, 7
    %v8306 = vsub.s32 %v8303, %v8305
    %v8307 = vrot.slane %v8293, %v8306
    %v8308 = vcombine.high %v8300, %v8300
    %v8309 = vcombine.high %v8307, %v8307
    %v8311 = vunpack.c.l.s4 1983009808
    %v8312 = vunpack.c.0.s8 %v8311
    %v8313 = vlaneseq
    %v8314 = vshrl.u32 %v8313, 7
    %v8315 = vsub.s32 %v8312, %v8314
    %v8316 = vrot.slane %v8250, %v8315
    %v8317 = vcombine.high %v8316, %v8316
    %v8332 = vpack.c.bf16 %v8266, %v8266
    %v8333 = vpack.c.bf16 %v8274, %v8274
    %v8334 = vpack.c.bf16 %v8273, %v8273
    %v8335 = vpack.c.bf16 %v8275, %v8275
    %v8336 = vpack.c.bf16 %v8283, %v8283
    %v8337 = vpack.c.bf16 %v8291, %v8291
    %v8338 = vpack.c.bf16 %v8290, %v8290
    %v8339 = vpack.c.bf16 %v8292, %v8292
    %v8340 = vpack.c.bf16 %v8300, %v8300
    %v8341 = vpack.c.bf16 %v8308, %v8308
    %v8342 = vpack.c.bf16 %v8307, %v8307
    %v8343 = vpack.c.bf16 %v8309, %v8309
    %v8344 = vpack.c.bf16 %v8316, %v8316
    %v8345 = vpack.c.bf16 %v8317, %v8317
    %v8346 = vld [vmem:[%s7] sm:$0xf]
    %v8347 = vld [vmem:[%s7 + $0x4] sm:$0xf]
    %v8348 = vld [vmem:[%s7 + $0x8] sm:$0xf]
    %v8349 = vld [vmem:[%s7 + $0xc] sm:$0xf]
    %v8350 = vld [vmem:[%s7 + $0x10] sm:$0xf]
    %v8351 = vld [vmem:[%s7 + $0x14] sm:$0xf]
    %v8352 = vld [vmem:[%s7 + $0x18] sm:$0xf]
    %v8353 = vld [vmem:[%s7 + $0x1c] sm:$0xf]
    %v8354 = vld [vmem:[%s7 + $0x20] sm:$0xf]
    %v8355 = vld [vmem:[%s7 + $0x24] sm:$0xf]
    %v8356 = vld [vmem:[%s7 + $0x28] sm:$0xf]
    %v8357 = vld [vmem:[%s7 + $0x2c] sm:$0xf]
    %v8358 = vld [vmem:[%s7 + $0x30] sm:$0xf]
    %v8359 = vld [vmem:[%s7 + $0x34] sm:$0xf]
    %v8360 = vld [vmem:[%s7 + $0x38] sm:$0xf]
    %v8361 = vld [vmem:[%s7 + $0x3c] sm:$0xf]
    %v8362 = vld [vmem:[%s7 + $0x40] sm:$0xf]
    %v8363 = vld [vmem:[%s7 + $0x44] sm:$0xf]
    %v8364 = vld [vmem:[%s7 + $0x48] sm:$0xf]
    %v8365 = vld [vmem:[%s7 + $0x4c] sm:$0xf]
    %v8366 = vld [vmem:[%s7 + $0x50] sm:$0xf]
    %v8367 = vld [vmem:[%s7 + $0x54] sm:$0xf]
    %v8368 = vld [vmem:[%s7 + $0x58] sm:$0xf]
    %v8369 = vld [vmem:[%s7 + $0x5c] sm:$0xf]
    %v8370 = vld [vmem:[%s7 + $0x60] sm:$0xf]
    %v8371 = vld [vmem:[%s7 + $0x64] sm:$0xf]
    %v8372 = vld [vmem:[%s7 + $0x68] sm:$0xf]
    %v8373 = vld [vmem:[%s7 + $0x6c] sm:$0xf]
    %v8374 = vld [vmem:[%s7 + $0x70] sm:$0xf]
    %v8375 = vld [vmem:[%s7 + $0x74] sm:$0xf]
    %v8376 = vld [vmem:[%s7 + $0x78] sm:$0xf]
    %v8377 = vld [vmem:[%s7 + $0x7c] sm:$0xf]
    %v8378 = vld [vmem:[%s7 + $0x80] sm:$0xf]
    %v8379 = vld [vmem:[%s7 + $0x84] sm:$0xf]
    %v8380 = vld [vmem:[%s7 + $0x88] sm:$0xf]
    %v8381 = vld [vmem:[%s7 + $0x8c] sm:$0xf]
    %v8382 = vld [vmem:[%s7 + $0x90] sm:$0xf]
    %v8383 = vld [vmem:[%s7 + $0x94] sm:$0xf]
    %v8384 = vld [vmem:[%s7 + $0x98] sm:$0xf]
    %v8385 = vld [vmem:[%s7 + $0x9c] sm:$0xf]
    %v8386 = vld [vmem:[%s7 + $0xa0] sm:$0xf]
    %v8387 = vld [vmem:[%s7 + $0xa4] sm:$0xf]
    %v8388 = vld [vmem:[%s7 + $0xa8] sm:$0xf]
    %v8389 = vld [vmem:[%s7 + $0xac] sm:$0xf]
    %v8390 = vld [vmem:[%s7 + $0xb0] sm:$0xf]
    %v8391 = vld [vmem:[%s7 + $0xb4] sm:$0xf]
    %v8392 = vld [vmem:[%s7 + $0xb8] sm:$0xf]
    %v8393 = vld [vmem:[%s7 + $0xbc] sm:$0xf]
    %v8394 = vld [vmem:[%s7 + $0xc0] sm:$0xf]
    %v8395 = vld [vmem:[%s7 + $0xc4] sm:$0xf]
    %v8396 = vld [vmem:[%s7 + $0xc8] sm:$0xf]
    %v8397 = vld [vmem:[%s7 + $0xcc] sm:$0xf]
    %v8398 = vld [vmem:[%s7 + $0xd0] sm:$0xf]
    %v8399 = vld [vmem:[%s7 + $0xd4] sm:$0xf]
    %v8400 = vld [vmem:[%s7 + $0xd8] sm:$0xf]
    %v8401 = vld [vmem:[%s7 + $0xdc] sm:$0xf]
    %v8402 = vld [vmem:[%s7 + $0xe0] sm:$0xf]
    %v8403 = vld [vmem:[%s7 + $0xe4] sm:$0xf]
    %v8404 = vld [vmem:[%s7 + $0xe8] sm:$0xf]
    %v8405 = vld [vmem:[%s7 + $0xec] sm:$0xf]
    %v8406 = vld [vmem:[%s7 + $0xf0] sm:$0xf]
    %v8407 = vld [vmem:[%s7 + $0xf4] sm:$0xf]
    %v8408 = vld [vmem:[%s7 + $0xf8] sm:$0xf]
    %v8409 = vld [vmem:[%s7 + $0xfc] sm:$0xf]
    %v8410 = vld [vmem:[%s7 + $0x100] sm:$0xf]
    %v8411 = vld [vmem:[%s7 + $0x104] sm:$0xf]
    %v8412 = vld [vmem:[%s7 + $0x108] sm:$0xf]
    %v8413 = vld [vmem:[%s7 + $0x10c] sm:$0xf]
    %v8414 = vld [vmem:[%s7 + $0x110] sm:$0xf]
    %v8415 = vld [vmem:[%s7 + $0x114] sm:$0xf]
    %v8416 = vld [vmem:[%s7 + $0x118] sm:$0xf]
    %v8417 = vld [vmem:[%s7 + $0x11c] sm:$0xf]
    %v8418 = vld [vmem:[%s7 + $0x120] sm:$0xf]
    %v8419 = vld [vmem:[%s7 + $0x124] sm:$0xf]
    %v8420 = vld [vmem:[%s7 + $0x128] sm:$0xf]
    %v8421 = vld [vmem:[%s7 + $0x12c] sm:$0xf]
    %v8422 = vld [vmem:[%s7 + $0x130] sm:$0xf]
    %v8423 = vld [vmem:[%s7 + $0x134] sm:$0xf]
    %v8424 = vld [vmem:[%s7 + $0x138] sm:$0xf]
    %v8425 = vld [vmem:[%s7 + $0x13c] sm:$0xf]
    %v8426 = vld [vmem:[%s7 + $0x140] sm:$0xf]
    %v8427 = vld [vmem:[%s7 + $0x144] sm:$0xf]
    %v8428 = vld [vmem:[%s7 + $0x148] sm:$0xf]
    %v8429 = vld [vmem:[%s7 + $0x14c] sm:$0xf]
    %v8430 = vld [vmem:[%s7 + $0x150] sm:$0xf]
    %v8431 = vld [vmem:[%s7 + $0x154] sm:$0xf]
    %v8432 = vld [vmem:[%s7 + $0x158] sm:$0xf]
    %v8433 = vld [vmem:[%s7 + $0x15c] sm:$0xf]
    %v8434 = vld [vmem:[%s7 + $0x160] sm:$0xf]
    %v8435 = vld [vmem:[%s7 + $0x164] sm:$0xf]
    %v8436 = vld [vmem:[%s7 + $0x168] sm:$0xf]
    %v8437 = vld [vmem:[%s7 + $0x16c] sm:$0xf]
    %v8438 = vld [vmem:[%s7 + $0x170] sm:$0xf]
    %v8439 = vld [vmem:[%s7 + $0x174] sm:$0xf]
    %v8440 = vld [vmem:[%s7 + $0x178] sm:$0xf]
    %v8441 = vld [vmem:[%s7 + $0x17c] sm:$0xf]
    %v8442 = vld [vmem:[%s7 + $0x180] sm:$0xf]
    %v8443 = vld [vmem:[%s7 + $0x184] sm:$0xf]
    %v8444 = vld [vmem:[%s7 + $0x188] sm:$0xf]
    %v8445 = vld [vmem:[%s7 + $0x18c] sm:$0xf]
    %v8446 = vld [vmem:[%s7 + $0x190] sm:$0xf]
    %v8447 = vld [vmem:[%s7 + $0x194] sm:$0xf]
    %v8448 = vld [vmem:[%s7 + $0x198] sm:$0xf]
    %v8449 = vld [vmem:[%s7 + $0x19c] sm:$0xf]
    %v8450 = vld [vmem:[%s7 + $0x1a0] sm:$0xf]
    %v8451 = vld [vmem:[%s7 + $0x1a4] sm:$0xf]
    %v8452 = vld [vmem:[%s7 + $0x1a8] sm:$0xf]
    %v8453 = vld [vmem:[%s7 + $0x1ac] sm:$0xf]
    %v8454 = vld [vmem:[%s7 + $0x1b0] sm:$0xf]
    %v8455 = vld [vmem:[%s7 + $0x1b4] sm:$0xf]
    %v8456 = vld [vmem:[%s7 + $0x1b8] sm:$0xf]
    %v8457 = vld [vmem:[%s7 + $0x1bc] sm:$0xf]
    %v8458 = vld [vmem:[%s7 + $0x1c0] sm:$0xf]
    %v8459 = vld [vmem:[%s7 + $0x1c4] sm:$0xf]
    %v8460 = vld [vmem:[%s7 + $0x1c8] sm:$0xf]
    %v8461 = vld [vmem:[%s7 + $0x1cc] sm:$0xf]
    %v8462 = vld [vmem:[%s7 + $0x1d0] sm:$0xf]
    %v8463 = vld [vmem:[%s7 + $0x1d4] sm:$0xf]
    %v8464 = vld [vmem:[%s7 + $0x1d8] sm:$0xf]
    %v8465 = vld [vmem:[%s7 + $0x1dc] sm:$0xf]
    %v8466 = vld [vmem:[%s7 + $0x1e0] sm:$0xf]
    %v8467 = vld [vmem:[%s7 + $0x1e4] sm:$0xf]
    %v8468 = vld [vmem:[%s7 + $0x1e8] sm:$0xf]
    %v8469 = vld [vmem:[%s7 + $0x1ec] sm:$0xf]
    %v8470 = vld [vmem:[%s7 + $0x1f0] sm:$0xf]
    %v8471 = vld [vmem:[%s7 + $0x1f4] sm:$0xf]
    %v8472 = vld [vmem:[%s7 + $0x1f8] sm:$0xf]
    %v8473 = vld [vmem:[%s7 + $0x1fc] sm:$0xf]
    %v8474 = vld [vmem:[%s7 + $0x200] sm:$0xf]
    %v8475 = vld [vmem:[%s7 + $0x204] sm:$0xf]
    %v8476 = vld [vmem:[%s7 + $0x208] sm:$0xf]
    %v8477 = vld [vmem:[%s7 + $0x20c] sm:$0xf]
    %v8478 = vld [vmem:[%s7 + $0x210] sm:$0xf]
    %v8479 = vld [vmem:[%s7 + $0x214] sm:$0xf]
    %v8480 = vld [vmem:[%s7 + $0x218] sm:$0xf]
    %v8481 = vld [vmem:[%s7 + $0x21c] sm:$0xf]
    %v8482 = vld [vmem:[%s7 + $0x220] sm:$0xf]
    %v8483 = vld [vmem:[%s7 + $0x224] sm:$0xf]
    %v8484 = vld [vmem:[%s7 + $0x228] sm:$0xf]
    %v8485 = vld [vmem:[%s7 + $0x22c] sm:$0xf]
    %v8486 = vld [vmem:[%s7 + $0x230] sm:$0xf]
    %v8487 = vld [vmem:[%s7 + $0x234] sm:$0xf]
    %v8488 = vld [vmem:[%s7 + $0x238] sm:$0xf]
    %v8489 = vld [vmem:[%s7 + $0x23c] sm:$0xf]
    %v8490 = vld [vmem:[%s7 + $0x240] sm:$0xf]
    %v8491 = vld [vmem:[%s7 + $0x244] sm:$0xf]
    %v8492 = vld [vmem:[%s7 + $0x248] sm:$0xf]
    %v8493 = vld [vmem:[%s7 + $0x24c] sm:$0xf]
    %v8494 = vld [vmem:[%s7 + $0x250] sm:$0xf]
    %v8495 = vld [vmem:[%s7 + $0x254] sm:$0xf]
    %v8496 = vld [vmem:[%s7 + $0x258] sm:$0xf]
    %v8497 = vld [vmem:[%s7 + $0x25c] sm:$0xf]
    %v8498 = vld [vmem:[%s7 + $0x260] sm:$0xf]
    %v8499 = vld [vmem:[%s7 + $0x264] sm:$0xf]
    %v8500 = vld [vmem:[%s7 + $0x268] sm:$0xf]
    %v8501 = vld [vmem:[%s7 + $0x26c] sm:$0xf]
    %v8502 = vld [vmem:[%s7 + $0x270] sm:$0xf]
    %v8503 = vld [vmem:[%s7 + $0x274] sm:$0xf]
    %v8504 = vld [vmem:[%s7 + $0x278] sm:$0xf]
    %v8505 = vld [vmem:[%s7 + $0x27c] sm:$0xf]
    %v8506 = vld [vmem:[%s7 + $0x280] sm:$0xf]
    %v8507 = vld [vmem:[%s7 + $0x284] sm:$0xf]
    %v8508 = vld [vmem:[%s7 + $0x288] sm:$0xf]
    %v8509 = vld [vmem:[%s7 + $0x28c] sm:$0xf]
    %v8510 = vld [vmem:[%s7 + $0x290] sm:$0xf]
    %v8511 = vld [vmem:[%s7 + $0x294] sm:$0xf]
    %v8512 = vld [vmem:[%s7 + $0x298] sm:$0xf]
    %v8513 = vld [vmem:[%s7 + $0x29c] sm:$0xf]
    %v8514 = vld [vmem:[%s7 + $0x2a0] sm:$0xf]
    %v8515 = vld [vmem:[%s7 + $0x2a4] sm:$0xf]
    %v8516 = vld [vmem:[%s7 + $0x2a8] sm:$0xf]
    %v8517 = vld [vmem:[%s7 + $0x2ac] sm:$0xf]
    %v8518 = vld [vmem:[%s7 + $0x2b0] sm:$0xf]
    %v8519 = vld [vmem:[%s7 + $0x2b4] sm:$0xf]
    %v8520 = vld [vmem:[%s7 + $0x2b8] sm:$0xf]
    %v8521 = vld [vmem:[%s7 + $0x2bc] sm:$0xf]
    %v8522 = vld [vmem:[%s7 + $0x2c0] sm:$0xf]
    %v8523 = vld [vmem:[%s7 + $0x2c4] sm:$0xf]
    %v8524 = vld [vmem:[%s7 + $0x2c8] sm:$0xf]
    %v8525 = vld [vmem:[%s7 + $0x2cc] sm:$0xf]
    %v8526 = vld [vmem:[%s7 + $0x2d0] sm:$0xf]
    %v8527 = vld [vmem:[%s7 + $0x2d4] sm:$0xf]
    %v8528 = vld [vmem:[%s7 + $0x2d8] sm:$0xf]
    %v8529 = vld [vmem:[%s7 + $0x2dc] sm:$0xf]
    %v8530 = vld [vmem:[%s7 + $0x2e0] sm:$0xf]
    %v8531 = vld [vmem:[%s7 + $0x2e4] sm:$0xf]
    %v8532 = vld [vmem:[%s7 + $0x2e8] sm:$0xf]
    %v8533 = vld [vmem:[%s7 + $0x2ec] sm:$0xf]
    %v8534 = vld [vmem:[%s7 + $0x2f0] sm:$0xf]
    %v8535 = vld [vmem:[%s7 + $0x2f4] sm:$0xf]
    %v8536 = vld [vmem:[%s7 + $0x2f8] sm:$0xf]
    %v8537 = vld [vmem:[%s7 + $0x2fc] sm:$0xf]
    %v8538 = vld [vmem:[%s7 + $0x300] sm:$0xf]
    %v8539 = vld [vmem:[%s7 + $0x304] sm:$0xf]
    %v8540 = vld [vmem:[%s7 + $0x308] sm:$0xf]
    %v8541 = vld [vmem:[%s7 + $0x30c] sm:$0xf]
    %v8542 = vld [vmem:[%s7 + $0x310] sm:$0xf]
    %v8543 = vld [vmem:[%s7 + $0x314] sm:$0xf]
    %v8544 = vld [vmem:[%s7 + $0x318] sm:$0xf]
    %v8545 = vld [vmem:[%s7 + $0x31c] sm:$0xf]
    %v8546 = vld [vmem:[%s7 + $0x320] sm:$0xf]
    %v8547 = vld [vmem:[%s7 + $0x324] sm:$0xf]
    %v8548 = vld [vmem:[%s7 + $0x328] sm:$0xf]
    %v8549 = vld [vmem:[%s7 + $0x32c] sm:$0xf]
    %v8550 = vld [vmem:[%s7 + $0x330] sm:$0xf]
    %v8551 = vld [vmem:[%s7 + $0x334] sm:$0xf]
    %v8552 = vld [vmem:[%s7 + $0x338] sm:$0xf]
    %v8553 = vld [vmem:[%s7 + $0x33c] sm:$0xf]
    %v8554 = vld [vmem:[%s7 + $0x340] sm:$0xf]
    %v8555 = vld [vmem:[%s7 + $0x344] sm:$0xf]
    %v8556 = vld [vmem:[%s7 + $0x348] sm:$0xf]
    %v8557 = vld [vmem:[%s7 + $0x34c] sm:$0xf]
    %v8558 = vld [vmem:[%s7 + $0x350] sm:$0xf]
    %v8559 = vld [vmem:[%s7 + $0x354] sm:$0xf]
    %v8560 = vld [vmem:[%s7 + $0x358] sm:$0xf]
    %v8561 = vld [vmem:[%s7 + $0x35c] sm:$0xf]
    %v8562 = vld [vmem:[%s7 + $0x360] sm:$0xf]
    %v8563 = vld [vmem:[%s7 + $0x364] sm:$0xf]
    %v8564 = vld [vmem:[%s7 + $0x368] sm:$0xf]
    %v8565 = vld [vmem:[%s7 + $0x36c] sm:$0xf]
    %v8566 = vld [vmem:[%s7 + $0x370] sm:$0xf]
    %v8567 = vld [vmem:[%s7 + $0x374] sm:$0xf]
    %v8568 = vld [vmem:[%s7 + $0x378] sm:$0xf]
    %v8569 = vld [vmem:[%s7 + $0x37c] sm:$0xf]
    %v8794 = vunpack.c.l.b16 %v8346
    %v8795 = vunpack.c.l.b16 %v8347
    %v8796 = vunpack.c.l.b16 %v8348
    %v8797 = vunpack.c.l.b16 %v8349
    %v8798 = vunpack.c.l.b16 %v8350
    %v8799 = vunpack.c.l.b16 %v8351
    %v8800 = vunpack.c.l.b16 %v8352
    %v8801 = vunpack.c.l.b16 %v8353
    %v8802 = vunpack.c.l.b16 %v8354
    %v8803 = vunpack.c.l.b16 %v8355
    %v8804 = vunpack.c.l.b16 %v8356
    %v8805 = vunpack.c.l.b16 %v8357
    %v8806 = vunpack.c.l.b16 %v8358
    %v8807 = vunpack.c.l.b16 %v8359
    %v8808 = vunpack.c.l.b16 %v8360
    %v8809 = vunpack.c.l.b16 %v8361
    %v8810 = vunpack.c.l.b16 %v8362
    %v8811 = vunpack.c.l.b16 %v8363
    %v8812 = vunpack.c.l.b16 %v8364
    %v8813 = vunpack.c.l.b16 %v8365
    %v8814 = vunpack.c.l.b16 %v8366
    %v8815 = vunpack.c.l.b16 %v8367
    %v8816 = vunpack.c.l.b16 %v8368
    %v8817 = vunpack.c.l.b16 %v8369
    %v8818 = vunpack.c.l.b16 %v8370
    %v8819 = vunpack.c.l.b16 %v8371
    %v8820 = vunpack.c.l.b16 %v8372
    %v8821 = vunpack.c.l.b16 %v8373
    %v8822 = vunpack.c.l.b16 %v8374
    %v8823 = vunpack.c.l.b16 %v8375
    %v8824 = vunpack.c.l.b16 %v8376
    %v8825 = vunpack.c.l.b16 %v8377
    %v8826 = vunpack.c.l.b16 %v8378
    %v8827 = vunpack.c.l.b16 %v8379
    %v8828 = vunpack.c.l.b16 %v8380
    %v8829 = vunpack.c.l.b16 %v8381
    %v8830 = vunpack.c.l.b16 %v8382
    %v8831 = vunpack.c.l.b16 %v8383
    %v8832 = vunpack.c.l.b16 %v8384
    %v8833 = vunpack.c.l.b16 %v8385
    %v8834 = vunpack.c.l.b16 %v8386
    %v8835 = vunpack.c.l.b16 %v8387
    %v8836 = vunpack.c.l.b16 %v8388
    %v8837 = vunpack.c.l.b16 %v8389
    %v8838 = vunpack.c.l.b16 %v8390
    %v8839 = vunpack.c.l.b16 %v8391
    %v8840 = vunpack.c.l.b16 %v8392
    %v8841 = vunpack.c.l.b16 %v8393
    %v8842 = vunpack.c.l.b16 %v8394
    %v8843 = vunpack.c.l.b16 %v8395
    %v8844 = vunpack.c.l.b16 %v8396
    %v8845 = vunpack.c.l.b16 %v8397
    %v8846 = vunpack.c.l.b16 %v8398
    %v8847 = vunpack.c.l.b16 %v8399
    %v8848 = vunpack.c.l.b16 %v8400
    %v8849 = vunpack.c.l.b16 %v8401
    %v8850 = vunpack.c.l.b16 %v8402
    %v8851 = vunpack.c.l.b16 %v8403
    %v8852 = vunpack.c.l.b16 %v8404
    %v8853 = vunpack.c.l.b16 %v8405
    %v8854 = vunpack.c.l.b16 %v8406
    %v8855 = vunpack.c.l.b16 %v8407
    %v8856 = vunpack.c.l.b16 %v8408
    %v8857 = vunpack.c.l.b16 %v8409
    %v8858 = vunpack.c.l.b16 %v8410
    %v8859 = vunpack.c.l.b16 %v8411
    %v8860 = vunpack.c.l.b16 %v8412
    %v8861 = vunpack.c.l.b16 %v8413
    %v8862 = vunpack.c.l.b16 %v8414
    %v8863 = vunpack.c.l.b16 %v8415
    %v8864 = vunpack.c.l.b16 %v8416
    %v8865 = vunpack.c.l.b16 %v8417
    %v8866 = vunpack.c.l.b16 %v8418
    %v8867 = vunpack.c.l.b16 %v8419
    %v8868 = vunpack.c.l.b16 %v8420
    %v8869 = vunpack.c.l.b16 %v8421
    %v8870 = vunpack.c.l.b16 %v8422
    %v8871 = vunpack.c.l.b16 %v8423
    %v8872 = vunpack.c.l.b16 %v8424
    %v8873 = vunpack.c.l.b16 %v8425
    %v8874 = vunpack.c.l.b16 %v8426
    %v8875 = vunpack.c.l.b16 %v8427
    %v8876 = vunpack.c.l.b16 %v8428
    %v8877 = vunpack.c.l.b16 %v8429
    %v8878 = vunpack.c.l.b16 %v8430
    %v8879 = vunpack.c.l.b16 %v8431
    %v8880 = vunpack.c.l.b16 %v8432
    %v8881 = vunpack.c.l.b16 %v8433
    %v8882 = vunpack.c.l.b16 %v8434
    %v8883 = vunpack.c.l.b16 %v8435
    %v8884 = vunpack.c.l.b16 %v8436
    %v8885 = vunpack.c.l.b16 %v8437
    %v8886 = vunpack.c.l.b16 %v8438
    %v8887 = vunpack.c.l.b16 %v8439
    %v8888 = vunpack.c.l.b16 %v8440
    %v8889 = vunpack.c.l.b16 %v8441
    %v8890 = vunpack.c.l.b16 %v8442
    %v8891 = vunpack.c.l.b16 %v8443
    %v8892 = vunpack.c.l.b16 %v8444
    %v8893 = vunpack.c.l.b16 %v8445
    %v8894 = vunpack.c.l.b16 %v8446
    %v8895 = vunpack.c.l.b16 %v8447
    %v8896 = vunpack.c.l.b16 %v8448
    %v8897 = vunpack.c.l.b16 %v8449
    %v8898 = vunpack.c.l.b16 %v8450
    %v8899 = vunpack.c.l.b16 %v8451
    %v8900 = vunpack.c.l.b16 %v8452
    %v8901 = vunpack.c.l.b16 %v8453
    %v8902 = vunpack.c.l.b16 %v8454
    %v8903 = vunpack.c.l.b16 %v8455
    %v8904 = vunpack.c.l.b16 %v8456
    %v8905 = vunpack.c.l.b16 %v8457
    %v8906 = vunpack.c.l.b16 %v8458
    %v8907 = vunpack.c.l.b16 %v8459
    %v8908 = vunpack.c.l.b16 %v8460
    %v8909 = vunpack.c.l.b16 %v8461
    %v8910 = vunpack.c.l.b16 %v8462
    %v8911 = vunpack.c.l.b16 %v8463
    %v8912 = vunpack.c.l.b16 %v8464
    %v8913 = vunpack.c.l.b16 %v8465
    %v8914 = vunpack.c.l.b16 %v8466
    %v8915 = vunpack.c.l.b16 %v8467
    %v8916 = vunpack.c.l.b16 %v8468
    %v8917 = vunpack.c.l.b16 %v8469
    %v8918 = vunpack.c.l.b16 %v8470
    %v8919 = vunpack.c.l.b16 %v8471
    %v8920 = vunpack.c.l.b16 %v8472
    %v8921 = vunpack.c.l.b16 %v8473
    %v8922 = vunpack.c.l.b16 %v8474
    %v8923 = vunpack.c.l.b16 %v8475
    %v8924 = vunpack.c.l.b16 %v8476
    %v8925 = vunpack.c.l.b16 %v8477
    %v8926 = vunpack.c.l.b16 %v8478
    %v8927 = vunpack.c.l.b16 %v8479
    %v8928 = vunpack.c.l.b16 %v8480
    %v8929 = vunpack.c.l.b16 %v8481
    %v8930 = vunpack.c.l.b16 %v8482
    %v8931 = vunpack.c.l.b16 %v8483
    %v8932 = vunpack.c.l.b16 %v8484
    %v8933 = vunpack.c.l.b16 %v8485
    %v8934 = vunpack.c.l.b16 %v8486
    %v8935 = vunpack.c.l.b16 %v8487
    %v8936 = vunpack.c.l.b16 %v8488
    %v8937 = vunpack.c.l.b16 %v8489
    %v8938 = vunpack.c.l.b16 %v8490
    %v8939 = vunpack.c.l.b16 %v8491
    %v8940 = vunpack.c.l.b16 %v8492
    %v8941 = vunpack.c.l.b16 %v8493
    %v8942 = vunpack.c.l.b16 %v8494
    %v8943 = vunpack.c.l.b16 %v8495
    %v8944 = vunpack.c.l.b16 %v8496
    %v8945 = vunpack.c.l.b16 %v8497
    %v8946 = vunpack.c.l.b16 %v8498
    %v8947 = vunpack.c.l.b16 %v8499
    %v8948 = vunpack.c.l.b16 %v8500
    %v8949 = vunpack.c.l.b16 %v8501
    %v8950 = vunpack.c.l.b16 %v8502
    %v8951 = vunpack.c.l.b16 %v8503
    %v8952 = vunpack.c.l.b16 %v8504
    %v8953 = vunpack.c.l.b16 %v8505
    %v8954 = vunpack.c.l.b16 %v8506
    %v8955 = vunpack.c.l.b16 %v8507
    %v8956 = vunpack.c.l.b16 %v8508
    %v8957 = vunpack.c.l.b16 %v8509
    %v8958 = vunpack.c.l.b16 %v8510
    %v8959 = vunpack.c.l.b16 %v8511
    %v8960 = vunpack.c.l.b16 %v8512
    %v8961 = vunpack.c.l.b16 %v8513
    %v8962 = vunpack.c.l.b16 %v8514
    %v8963 = vunpack.c.l.b16 %v8515
    %v8964 = vunpack.c.l.b16 %v8516
    %v8965 = vunpack.c.l.b16 %v8517
    %v8966 = vunpack.c.l.b16 %v8518
    %v8967 = vunpack.c.l.b16 %v8519
    %v8968 = vunpack.c.l.b16 %v8520
    %v8969 = vunpack.c.l.b16 %v8521
    %v8970 = vunpack.c.l.b16 %v8522
    %v8971 = vunpack.c.l.b16 %v8523
    %v8972 = vunpack.c.l.b16 %v8524
    %v8973 = vunpack.c.l.b16 %v8525
    %v8974 = vunpack.c.l.b16 %v8526
    %v8975 = vunpack.c.l.b16 %v8527
    %v8976 = vunpack.c.l.b16 %v8528
    %v8977 = vunpack.c.l.b16 %v8529
    %v8978 = vunpack.c.l.b16 %v8530
    %v8979 = vunpack.c.l.b16 %v8531
    %v8980 = vunpack.c.l.b16 %v8532
    %v8981 = vunpack.c.l.b16 %v8533
    %v8982 = vunpack.c.l.b16 %v8534
    %v8983 = vunpack.c.l.b16 %v8535
    %v8984 = vunpack.c.l.b16 %v8536
    %v8985 = vunpack.c.l.b16 %v8537
    %v8986 = vunpack.c.l.b16 %v8538
    %v8987 = vunpack.c.l.b16 %v8539
    %v8988 = vunpack.c.l.b16 %v8540
    %v8989 = vunpack.c.l.b16 %v8541
    %v8990 = vunpack.c.l.b16 %v8542
    %v8991 = vunpack.c.l.b16 %v8543
    %v8992 = vunpack.c.l.b16 %v8544
    %v8993 = vunpack.c.l.b16 %v8545
    %v8994 = vunpack.c.l.b16 %v8546
    %v8995 = vunpack.c.l.b16 %v8547
    %v8996 = vunpack.c.l.b16 %v8548
    %v8997 = vunpack.c.l.b16 %v8549
    %v8998 = vunpack.c.l.b16 %v8550
    %v8999 = vunpack.c.l.b16 %v8551
    %v9000 = vunpack.c.l.b16 %v8552
    %v9001 = vunpack.c.l.b16 %v8553
    %v9002 = vunpack.c.l.b16 %v8554
    %v9003 = vunpack.c.l.b16 %v8555
    %v9004 = vunpack.c.l.b16 %v8556
    %v9005 = vunpack.c.l.b16 %v8557
    %v9006 = vunpack.c.l.b16 %v8558
    %v9007 = vunpack.c.l.b16 %v8559
    %v9008 = vunpack.c.l.b16 %v8560
    %v9009 = vunpack.c.l.b16 %v8561
    %v9010 = vunpack.c.l.b16 %v8562
    %v9011 = vunpack.c.l.b16 %v8563
    %v9012 = vunpack.c.l.b16 %v8564
    %v9013 = vunpack.c.l.b16 %v8565
    %v9014 = vunpack.c.l.b16 %v8566
    %v9015 = vunpack.c.l.b16 %v8567
    %v9016 = vunpack.c.l.b16 %v8568
    %v9017 = vunpack.c.l.b16 %v8569
    %v9018 = vpack.c.b16 %v8795, %v8794
    %v9019 = vpack.c.b16 %v8797, %v8796
    %v9020 = vpack.c.b16 %v8799, %v8798
    %v9021 = vpack.c.b16 %v8801, %v8800
    %v9022 = vpack.c.b16 %v8803, %v8802
    %v9023 = vpack.c.b16 %v8805, %v8804
    %v9024 = vpack.c.b16 %v8807, %v8806
    %v9025 = vpack.c.b16 %v8809, %v8808
    %v9026 = vpack.c.b16 %v8811, %v8810
    %v9027 = vpack.c.b16 %v8813, %v8812
    %v9028 = vpack.c.b16 %v8815, %v8814
    %v9029 = vpack.c.b16 %v8817, %v8816
    %v9030 = vpack.c.b16 %v8819, %v8818
    %v9031 = vpack.c.b16 %v8821, %v8820
    %v9032 = vpack.c.b16 %v8823, %v8822
    %v9033 = vpack.c.b16 %v8825, %v8824
    %v9034 = vpack.c.b16 %v8827, %v8826
    %v9035 = vpack.c.b16 %v8829, %v8828
    %v9036 = vpack.c.b16 %v8831, %v8830
    %v9037 = vpack.c.b16 %v8833, %v8832
    %v9038 = vpack.c.b16 %v8835, %v8834
    %v9039 = vpack.c.b16 %v8837, %v8836
    %v9040 = vpack.c.b16 %v8839, %v8838
    %v9041 = vpack.c.b16 %v8841, %v8840
    %v9042 = vpack.c.b16 %v8843, %v8842
    %v9043 = vpack.c.b16 %v8845, %v8844
    %v9044 = vpack.c.b16 %v8847, %v8846
    %v9045 = vpack.c.b16 %v8849, %v8848
    %v9046 = vpack.c.b16 %v8851, %v8850
    %v9047 = vpack.c.b16 %v8853, %v8852
    %v9048 = vpack.c.b16 %v8855, %v8854
    %v9049 = vpack.c.b16 %v8857, %v8856
    %v9050 = vpack.c.b16 %v8859, %v8858
    %v9051 = vpack.c.b16 %v8861, %v8860
    %v9052 = vpack.c.b16 %v8863, %v8862
    %v9053 = vpack.c.b16 %v8865, %v8864
    %v9054 = vpack.c.b16 %v8867, %v8866
    %v9055 = vpack.c.b16 %v8869, %v8868
    %v9056 = vpack.c.b16 %v8871, %v8870
    %v9057 = vpack.c.b16 %v8873, %v8872
    %v9058 = vpack.c.b16 %v8875, %v8874
    %v9059 = vpack.c.b16 %v8877, %v8876
    %v9060 = vpack.c.b16 %v8879, %v8878
    %v9061 = vpack.c.b16 %v8881, %v8880
    %v9062 = vpack.c.b16 %v8883, %v8882
    %v9063 = vpack.c.b16 %v8885, %v8884
    %v9064 = vpack.c.b16 %v8887, %v8886
    %v9065 = vpack.c.b16 %v8889, %v8888
    %v9066 = vpack.c.b16 %v8891, %v8890
    %v9067 = vpack.c.b16 %v8893, %v8892
    %v9068 = vpack.c.b16 %v8895, %v8894
    %v9069 = vpack.c.b16 %v8897, %v8896
    %v9070 = vpack.c.b16 %v8899, %v8898
    %v9071 = vpack.c.b16 %v8901, %v8900
    %v9072 = vpack.c.b16 %v8903, %v8902
    %v9073 = vpack.c.b16 %v8905, %v8904
    %v9074 = vpack.c.b16 %v8907, %v8906
    %v9075 = vpack.c.b16 %v8909, %v8908
    %v9076 = vpack.c.b16 %v8911, %v8910
    %v9077 = vpack.c.b16 %v8913, %v8912
    %v9078 = vpack.c.b16 %v8915, %v8914
    %v9079 = vpack.c.b16 %v8917, %v8916
    %v9080 = vpack.c.b16 %v8919, %v8918
    %v9081 = vpack.c.b16 %v8921, %v8920
    %v9082 = vpack.c.b16 %v8923, %v8922
    %v9083 = vpack.c.b16 %v8925, %v8924
    %v9084 = vpack.c.b16 %v8927, %v8926
    %v9085 = vpack.c.b16 %v8929, %v8928
    %v9086 = vpack.c.b16 %v8931, %v8930
    %v9087 = vpack.c.b16 %v8933, %v8932
    %v9088 = vpack.c.b16 %v8935, %v8934
    %v9089 = vpack.c.b16 %v8937, %v8936
    %v9090 = vpack.c.b16 %v8939, %v8938
    %v9091 = vpack.c.b16 %v8941, %v8940
    %v9092 = vpack.c.b16 %v8943, %v8942
    %v9093 = vpack.c.b16 %v8945, %v8944
    %v9094 = vpack.c.b16 %v8947, %v8946
    %v9095 = vpack.c.b16 %v8949, %v8948
    %v9096 = vpack.c.b16 %v8951, %v8950
    %v9097 = vpack.c.b16 %v8953, %v8952
    %v9098 = vpack.c.b16 %v8955, %v8954
    %v9099 = vpack.c.b16 %v8957, %v8956
    %v9100 = vpack.c.b16 %v8959, %v8958
    %v9101 = vpack.c.b16 %v8961, %v8960
    %v9102 = vpack.c.b16 %v8963, %v8962
    %v9103 = vpack.c.b16 %v8965, %v8964
    %v9104 = vpack.c.b16 %v8967, %v8966
    %v9105 = vpack.c.b16 %v8969, %v8968
    %v9106 = vpack.c.b16 %v8971, %v8970
    %v9107 = vpack.c.b16 %v8973, %v8972
    %v9108 = vpack.c.b16 %v8975, %v8974
    %v9109 = vpack.c.b16 %v8977, %v8976
    %v9110 = vpack.c.b16 %v8979, %v8978
    %v9111 = vpack.c.b16 %v8981, %v8980
    %v9112 = vpack.c.b16 %v8983, %v8982
    %v9113 = vpack.c.b16 %v8985, %v8984
    %v9114 = vpack.c.b16 %v8987, %v8986
    %v9115 = vpack.c.b16 %v8989, %v8988
    %v9116 = vpack.c.b16 %v8991, %v8990
    %v9117 = vpack.c.b16 %v8993, %v8992
    %v9118 = vpack.c.b16 %v8995, %v8994
    %v9119 = vpack.c.b16 %v8997, %v8996
    %v9120 = vpack.c.b16 %v8999, %v8998
    %v9121 = vpack.c.b16 %v9001, %v9000
    %v9122 = vpack.c.b16 %v9003, %v9002
    %v9123 = vpack.c.b16 %v9005, %v9004
    %v9124 = vpack.c.b16 %v9007, %v9006
    %v9125 = vpack.c.b16 %v9009, %v9008
    %v9126 = vpack.c.b16 %v9011, %v9010
    %v9127 = vpack.c.b16 %v9013, %v9012
    %v9128 = vpack.c.b16 %v9015, %v9014
    %v9129 = vpack.c.b16 %v9017, %v9016
    %9242 = vmatprep.subr.bf16.mxu0 0
    %9243 = vmatpush1.bf16.msra.mxu0 %v9018
    %9244 = vmatprep.subr.bf16.mxu0 0
    %9245 = vmatpush1.bf16.msra.mxu0 %v9019
    %9246 = vmatprep.subr.bf16.mxu0 0
    %9247 = vmatpush1.bf16.msra.mxu0 %v9020
    %9248 = vmatprep.subr.bf16.mxu0 0
    %9249 = vmatpush1.bf16.msra.mxu0 %v9021
    %9250 = vmatprep.subr.bf16.mxu0 0
    %9251 = vmatpush1.bf16.msra.mxu0 %v9022
    %9252 = vmatprep.subr.bf16.mxu0 0
    %9253 = vmatpush1.bf16.msra.mxu0 %v9023
    %9254 = vmatprep.subr.bf16.mxu0 0
    %9255 = vmatpush1.bf16.msra.mxu0 %v9024
    %9256 = vmatprep.subr.bf16.mxu0 0
    %9257 = vmatpush1.bf16.msra.mxu0 %v9025
    %9258 = vmatprep.subr.bf16.mxu0 0
    %9259 = vmatpush1.bf16.msra.mxu0 %v9026
    %9260 = vmatprep.subr.bf16.mxu0 0
    %9261 = vmatpush1.bf16.msra.mxu0 %v9027
    %9262 = vmatprep.subr.bf16.mxu0 0
    %9263 = vmatpush1.bf16.msra.mxu0 %v9028
    %9264 = vmatprep.subr.bf16.mxu0 0
    %9265 = vmatpush1.bf16.msra.mxu0 %v9029
    %9266 = vmatprep.subr.bf16.mxu0 0
    %9267 = vmatpush1.bf16.msra.mxu0 %v9030
    %9268 = vmatprep.subr.bf16.mxu0 0
    %9269 = vmatpush1.bf16.msra.mxu0 %v9031
    %9270 = vmatprep.subr.bf16.mxu0 0
    %9271 = vmatpush1.bf16.msra.mxu0 %v9032
    %9272 = vmatprep.subr.bf16.mxu0 0
    %9273 = vmatpush1.bf16.msra.mxu0 %v9033
    %9274 = vmatprep.mubr.bf16.mxu0 %v8333
    %9275 = vmatmul.mubr.bf16.gmra.mrb[0].mxu0 %v8332
    %v9276 = vpop.f32.mrb[0].mxu0
    %v9277 = vadd.f32 0.0, %v9276
    %v9278 = vpop.f32.mrb[0].mxu0
    %v9279 = vpop.f32.mrb[0].mxu0
    %v9280 = vpop.f32.mrb[0].mxu0
    %9281 = vdwg.mxu0
    %9282 = vmatprep.subr.bf16.mxu0 0
    %9283 = vmatpush1.bf16.msra.mxu0 %v9034
    %9284 = vmatprep.subr.bf16.mxu0 0
    %9285 = vmatpush1.bf16.msra.mxu0 %v9035
    %9286 = vmatprep.subr.bf16.mxu0 0
    %9287 = vmatpush1.bf16.msra.mxu0 %v9036
    %9288 = vmatprep.subr.bf16.mxu0 0
    %9289 = vmatpush1.bf16.msra.mxu0 %v9037
    %9290 = vmatprep.subr.bf16.mxu0 0
    %9291 = vmatpush1.bf16.msra.mxu0 %v9038
    %9292 = vmatprep.subr.bf16.mxu0 0
    %9293 = vmatpush1.bf16.msra.mxu0 %v9039
    %9294 = vmatprep.subr.bf16.mxu0 0
    %9295 = vmatpush1.bf16.msra.mxu0 %v9040
    %9296 = vmatprep.subr.bf16.mxu0 0
    %9297 = vmatpush1.bf16.msra.mxu0 %v9041
    %9298 = vmatprep.subr.bf16.mxu0 0
    %9299 = vmatpush1.bf16.msra.mxu0 %v9042
    %9300 = vmatprep.subr.bf16.mxu0 0
    %9301 = vmatpush1.bf16.msra.mxu0 %v9043
    %9302 = vmatprep.subr.bf16.mxu0 0
    %9303 = vmatpush1.bf16.msra.mxu0 %v9044
    %9304 = vmatprep.subr.bf16.mxu0 0
    %9305 = vmatpush1.bf16.msra.mxu0 %v9045
    %9306 = vmatprep.subr.bf16.mxu0 0
    %9307 = vmatpush1.bf16.msra.mxu0 %v9046
    %9308 = vmatprep.subr.bf16.mxu0 0
    %9309 = vmatpush1.bf16.msra.mxu0 %v9047
    %9310 = vmatprep.subr.bf16.mxu0 0
    %9311 = vmatpush1.bf16.msra.mxu0 %v9048
    %9312 = vmatprep.subr.bf16.mxu0 0
    %9313 = vmatpush1.bf16.msra.mxu0 %v9049
    %9314 = vmatprep.mubr.bf16.mxu0 %v8335
    %9315 = vmatmul.mubr.bf16.gmra.mrb[0].mxu0 %v8334
    %v9316 = vpop.f32.mrb[0].mxu0
    %v9317 = vadd.f32 %v9277, %v9316
    %v9318 = vpop.f32.mrb[0].mxu0
    %v9319 = vpop.f32.mrb[0].mxu0
    %v9320 = vpop.f32.mrb[0].mxu0
    %9321 = vdwg.mxu0
    %9322 = vmatprep.subr.bf16.mxu0 0
    %9323 = vmatpush1.bf16.msra.mxu0 %v9050
    %9324 = vmatprep.subr.bf16.mxu0 0
    %9325 = vmatpush1.bf16.msra.mxu0 %v9051
    %9326 = vmatprep.subr.bf16.mxu0 0
    %9327 = vmatpush1.bf16.msra.mxu0 %v9052
    %9328 = vmatprep.subr.bf16.mxu0 0
    %9329 = vmatpush1.bf16.msra.mxu0 %v9053
    %9330 = vmatprep.subr.bf16.mxu0 0
    %9331 = vmatpush1.bf16.msra.mxu0 %v9054
    %9332 = vmatprep.subr.bf16.mxu0 0
    %9333 = vmatpush1.bf16.msra.mxu0 %v9055
    %9334 = vmatprep.subr.bf16.mxu0 0
    %9335 = vmatpush1.bf16.msra.mxu0 %v9056
    %9336 = vmatprep.subr.bf16.mxu0 0
    %9337 = vmatpush1.bf16.msra.mxu0 %v9057
    %9338 = vmatprep.subr.bf16.mxu0 0
    %9339 = vmatpush1.bf16.msra.mxu0 %v9058
    %9340 = vmatprep.subr.bf16.mxu0 0
    %9341 = vmatpush1.bf16.msra.mxu0 %v9059
    %9342 = vmatprep.subr.bf16.mxu0 0
    %9343 = vmatpush1.bf16.msra.mxu0 %v9060
    %9344 = vmatprep.subr.bf16.mxu0 0
    %9345 = vmatpush1.bf16.msra.mxu0 %v9061
    %9346 = vmatprep.subr.bf16.mxu0 0
    %9347 = vmatpush1.bf16.msra.mxu0 %v9062
    %9348 = vmatprep.subr.bf16.mxu0 0
    %9349 = vmatpush1.bf16.msra.mxu0 %v9063
    %9350 = vmatprep.subr.bf16.mxu0 0
    %9351 = vmatpush1.bf16.msra.mxu0 %v9064
    %9352 = vmatprep.subr.bf16.mxu0 0
    %9353 = vmatpush1.bf16.msra.mxu0 %v9065
    %9354 = vmatprep.mubr.bf16.mxu0 %v8337
    %9355 = vmatmul.mubr.bf16.gmra.mrb[0].mxu0 %v8336
    %v9356 = vpop.f32.mrb[0].mxu0
    %v9357 = vadd.f32 %v9317, %v9356
    %v9358 = vpop.f32.mrb[0].mxu0
    %v9359 = vpop.f32.mrb[0].mxu0
    %v9360 = vpop.f32.mrb[0].mxu0
    %9361 = vdwg.mxu0
    %9362 = vmatprep.subr.bf16.mxu0 0
    %9363 = vmatpush1.bf16.msra.mxu0 %v9066
    %9364 = vmatprep.subr.bf16.mxu0 0
    %9365 = vmatpush1.bf16.msra.mxu0 %v9067
    %9366 = vmatprep.subr.bf16.mxu0 0
    %9367 = vmatpush1.bf16.msra.mxu0 %v9068
    %9368 = vmatprep.subr.bf16.mxu0 0
    %9369 = vmatpush1.bf16.msra.mxu0 %v9069
    %9370 = vmatprep.subr.bf16.mxu0 0
    %9371 = vmatpush1.bf16.msra.mxu0 %v9070
    %9372 = vmatprep.subr.bf16.mxu0 0
    %9373 = vmatpush1.bf16.msra.mxu0 %v9071
    %9374 = vmatprep.subr.bf16.mxu0 0
    %9375 = vmatpush1.bf16.msra.mxu0 %v9072
    %9376 = vmatprep.subr.bf16.mxu0 0
    %9377 = vmatpush1.bf16.msra.mxu0 %v9073
    %9378 = vmatprep.subr.bf16.mxu0 0
    %9379 = vmatpush1.bf16.msra.mxu0 %v9074
    %9380 = vmatprep.subr.bf16.mxu0 0
    %9381 = vmatpush1.bf16.msra.mxu0 %v9075
    %9382 = vmatprep.subr.bf16.mxu0 0
    %9383 = vmatpush1.bf16.msra.mxu0 %v9076
    %9384 = vmatprep.subr.bf16.mxu0 0
    %9385 = vmatpush1.bf16.msra.mxu0 %v9077
    %9386 = vmatprep.subr.bf16.mxu0 0
    %9387 = vmatpush1.bf16.msra.mxu0 %v9078
    %9388 = vmatprep.subr.bf16.mxu0 0
    %9389 = vmatpush1.bf16.msra.mxu0 %v9079
    %9390 = vmatprep.subr.bf16.mxu0 0
    %9391 = vmatpush1.bf16.msra.mxu0 %v9080
    %9392 = vmatprep.subr.bf16.mxu0 0
    %9393 = vmatpush1.bf16.msra.mxu0 %v9081
    %9394 = vmatprep.mubr.bf16.mxu0 %v8339
    %9395 = vmatmul.mubr.bf16.gmra.mrb[0].mxu0 %v8338
    %v9396 = vpop.f32.mrb[0].mxu0
    %v9397 = vadd.f32 %v9357, %v9396
    %v9398 = vpop.f32.mrb[0].mxu0
    %v9399 = vpop.f32.mrb[0].mxu0
    %v9400 = vpop.f32.mrb[0].mxu0
    %9401 = vdwg.mxu0
    %9402 = vmatprep.subr.bf16.mxu0 0
    %9403 = vmatpush1.bf16.msra.mxu0 %v9082
    %9404 = vmatprep.subr.bf16.mxu0 0
    %9405 = vmatpush1.bf16.msra.mxu0 %v9083
    %9406 = vmatprep.subr.bf16.mxu0 0
    %9407 = vmatpush1.bf16.msra.mxu0 %v9084
    %9408 = vmatprep.subr.bf16.mxu0 0
    %9409 = vmatpush1.bf16.msra.mxu0 %v9085
    %9410 = vmatprep.subr.bf16.mxu0 0
    %9411 = vmatpush1.bf16.msra.mxu0 %v9086
    %9412 = vmatprep.subr.bf16.mxu0 0
    %9413 = vmatpush1.bf16.msra.mxu0 %v9087
    %9414 = vmatprep.subr.bf16.mxu0 0
    %9415 = vmatpush1.bf16.msra.mxu0 %v9088
    %9416 = vmatprep.subr.bf16.mxu0 0
    %9417 = vmatpush1.bf16.msra.mxu0 %v9089
    %9418 = vmatprep.subr.bf16.mxu0 0
    %9419 = vmatpush1.bf16.msra.mxu0 %v9090
    %9420 = vmatprep.subr.bf16.mxu0 0
    %9421 = vmatpush1.bf16.msra.mxu0 %v9091
    %9422 = vmatprep.subr.bf16.mxu0 0
    %9423 = vmatpush1.bf16.msra.mxu0 %v9092
    %9424 = vmatprep.subr.bf16.mxu0 0
    %9425 = vmatpush1.bf16.msra.mxu0 %v9093
    %9426 = vmatprep.subr.bf16.mxu0 0
    %9427 = vmatpush1.bf16.msra.mxu0 %v9094
    %9428 = vmatprep.subr.bf16.mxu0 0
    %9429 = vmatpush1.bf16.msra.mxu0 %v9095
    %9430 = vmatprep.subr.bf16.mxu0 0
    %9431 = vmatpush1.bf16.msra.mxu0 %v9096
    %9432 = vmatprep.subr.bf16.mxu0 0
    %9433 = vmatpush1.bf16.msra.mxu0 %v9097
    %9434 = vmatprep.mubr.bf16.mxu0 %v8341
    %9435 = vmatmul.mubr.bf16.gmra.mrb[0].mxu0 %v8340
    %v9436 = vpop.f32.mrb[0].mxu0
    %v9437 = vadd.f32 %v9397, %v9436
    %v9438 = vpop.f32.mrb[0].mxu0
    %v9439 = vpop.f32.mrb[0].mxu0
    %v9440 = vpop.f32.mrb[0].mxu0
    %9441 = vdwg.mxu0
    %9442 = vmatprep.subr.bf16.mxu0 0
    %9443 = vmatpush1.bf16.msra.mxu0 %v9098
    %9444 = vmatprep.subr.bf16.mxu0 0
    %9445 = vmatpush1.bf16.msra.mxu0 %v9099
    %9446 = vmatprep.subr.bf16.mxu0 0
    %9447 = vmatpush1.bf16.msra.mxu0 %v9100
    %9448 = vmatprep.subr.bf16.mxu0 0
    %9449 = vmatpush1.bf16.msra.mxu0 %v9101
    %9450 = vmatprep.subr.bf16.mxu0 0
    %9451 = vmatpush1.bf16.msra.mxu0 %v9102
    %9452 = vmatprep.subr.bf16.mxu0 0
    %9453 = vmatpush1.bf16.msra.mxu0 %v9103
    %9454 = vmatprep.subr.bf16.mxu0 0
    %9455 = vmatpush1.bf16.msra.mxu0 %v9104
    %9456 = vmatprep.subr.bf16.mxu0 0
    %9457 = vmatpush1.bf16.msra.mxu0 %v9105
    %9458 = vmatprep.subr.bf16.mxu0 0
    %9459 = vmatpush1.bf16.msra.mxu0 %v9106
    %9460 = vmatprep.subr.bf16.mxu0 0
    %9461 = vmatpush1.bf16.msra.mxu0 %v9107
    %9462 = vmatprep.subr.bf16.mxu0 0
    %9463 = vmatpush1.bf16.msra.mxu0 %v9108
    %9464 = vmatprep.subr.bf16.mxu0 0
    %9465 = vmatpush1.bf16.msra.mxu0 %v9109
    %9466 = vmatprep.subr.bf16.mxu0 0
    %9467 = vmatpush1.bf16.msra.mxu0 %v9110
    %9468 = vmatprep.subr.bf16.mxu0 0
    %9469 = vmatpush1.bf16.msra.mxu0 %v9111
    %9470 = vmatprep.subr.bf16.mxu0 0
    %9471 = vmatpush1.bf16.msra.mxu0 %v9112
    %9472 = vmatprep.subr.bf16.mxu0 0
    %9473 = vmatpush1.bf16.msra.mxu0 %v9113
    %9474 = vmatprep.mubr.bf16.mxu0 %v8343
    %9475 = vmatmul.mubr.bf16.gmra.mrb[0].mxu0 %v8342
    %v9476 = vpop.f32.mrb[0].mxu0
    %v9477 = vadd.f32 %v9437, %v9476
    %v9478 = vpop.f32.mrb[0].mxu0
    %v9479 = vpop.f32.mrb[0].mxu0
    %v9480 = vpop.f32.mrb[0].mxu0
    %9481 = vdwg.mxu0
    %9482 = vmatprep.subr.bf16.mxu0 0
    %9483 = vmatpush1.bf16.msra.mxu0 %v9114
    %9484 = vmatprep.subr.bf16.mxu0 0
    %9485 = vmatpush1.bf16.msra.mxu0 %v9115
    %9486 = vmatprep.subr.bf16.mxu0 0
    %9487 = vmatpush1.bf16.msra.mxu0 %v9116
    %9488 = vmatprep.subr.bf16.mxu0 0
    %9489 = vmatpush1.bf16.msra.mxu0 %v9117
    %9490 = vmatprep.subr.bf16.mxu0 0
    %9491 = vmatpush1.bf16.msra.mxu0 %v9118
    %9492 = vmatprep.subr.bf16.mxu0 0
    %9493 = vmatpush1.bf16.msra.mxu0 %v9119
    %9494 = vmatprep.subr.bf16.mxu0 0
    %9495 = vmatpush1.bf16.msra.mxu0 %v9120
    %9496 = vmatprep.subr.bf16.mxu0 0
    %9497 = vmatpush1.bf16.msra.mxu0 %v9121
    %9498 = vmatprep.subr.bf16.mxu0 0
    %9499 = vmatpush1.bf16.msra.mxu0 %v9122
    %9500 = vmatprep.subr.bf16.mxu0 0
    %9501 = vmatpush1.bf16.msra.mxu0 %v9123
    %9502 = vmatprep.subr.bf16.mxu0 0
    %9503 = vmatpush1.bf16.msra.mxu0 %v9124
    %9504 = vmatprep.subr.bf16.mxu0 0
    %9505 = vmatpush1.bf16.msra.mxu0 %v9125
    %9506 = vmatprep.subr.bf16.mxu0 0
    %9507 = vmatpush1.bf16.msra.mxu0 %v9126
    %9508 = vmatprep.subr.bf16.mxu0 0
    %9509 = vmatpush1.bf16.msra.mxu0 %v9127
    %9510 = vmatprep.subr.bf16.mxu0 0
    %9511 = vmatpush1.bf16.msra.mxu0 %v9128
    %9512 = vmatprep.subr.bf16.mxu0 0
    %9513 = vmatpush1.bf16.msra.mxu0 %v9129
    %9514 = vmatprep.mubr.bf16.mxu0 %v8345
    %9515 = vmatmul.mubr.bf16.gmra.mrb[0].mxu0 %v8344
    %v9516 = vpop.f32.mrb[0].mxu0
    %v9517 = vadd.f32 %v9477, %v9516
    %v9518 = vpop.f32.mrb[0].mxu0
    %v9519 = vpop.f32.mrb[0].mxu0
    %v9520 = vpop.f32.mrb[0].mxu0
    %9521 = vdwg.mxu0
    %9522 = vst [vmem:[%s10] sm:$0x3] %v9517
    // Predicated region
    $region34: #{spark1_forward.1} parent=1 // pred_check
      _
    $region35: #{spark1_forward.1} parent=1 // pred_check_branch
      %9524 = sbr.rel (0) target = $region37
    $region36: #{spark1_forward.1} parent=1 // pred_region
      _
    $region37: #{spark1_forward.1} parent=1 // pred_fallthru
      _
    // Predicated region
    $region38: #{spark1_forward.1} parent=1 // pred_check
      _
    $region39: #{spark1_forward.1} parent=1 // pred_check_branch
      %9526 = sbr.rel (0) target = $region41
    $region40: #{spark1_forward.1} parent=1 // pred_region
      %s9528 = ssub.s32 448, 448
      %9529 = vsyncadd [#allocation5], %s9528
      %s9531 = sshll.u32 [#allocation4], 4
      %s9532 = int_to_ptr.vmem [resolvable:$true] %s9531
      %9534 = dma.vmem_to_hbm [thread:$0]  %s9532, 448, %s9, [#allocation5]
    $region41: #{spark1_forward.1} parent=1 // pred_fallthru
      _
    // Predicated region
    $region42: #{spark1_forward.1} parent=1 // pred_check
      _
    $region43: #{spark1_forward.1} parent=1 // pred_check_branch
      %9536 = sbr.rel (0) target = $region45
    $region44: #{spark1_forward.1} parent=1 // pred_region
      _
    $region45: #{spark1_forward.1} parent=1 // pred_fallthru
      _
    // Predicated region
    $region46: #{spark1_forward.1} parent=1 // pred_check
      _
    $region47: #{spark1_forward.1} parent=1 // pred_check_branch
      %9538 = sbr.rel (0) target = $region49
    $region48: #{spark1_forward.1} parent=1 // pred_region
      _
    $region49: #{spark1_forward.1} parent=1 // pred_fallthru
      _
    // Predicated region
    $region50: #{spark1_forward.1} parent=1 // pred_check
      _
    $region51: #{spark1_forward.1} parent=1 // pred_check_branch
      %9540 = sbr.rel (0) target = $region53
    $region52: #{spark1_forward.1} parent=1 // pred_region
      %9541 = dma.done [#allocation5], 448
    $region53: #{spark1_forward.1} parent=1 // pred_fallthru
      _
    // Predicated region
    $region54: #{spark1_forward.1} parent=1 // pred_check
      _
    $region55: #{spark1_forward.1} parent=1 // pred_check_branch
      %9543 = sbr.rel (0) target = $region57
    $region56: #{spark1_forward.1} parent=1 // pred_region
      _
    $region57: #{spark1_forward.1} parent=1 // pred_fallthru
      _
    %9544 = vsyncpa [#allocation5], 1

</llo_original>
